<compile_context>
chip_gen: v7x
topology: tpu7x:2x2x1
jax: 0.10.0
libtpu: 0.0.40
codegen_flags: <defaults>
</compile_context>

<pallas_src>
import functools

import jax
import jax.numpy as jnp
from jax import lax
from jax.experimental import pallas as pl
from jax.experimental.pallas import tpu as pltpu

EPS = 0.25            # BasicNorm eps (exp(log 0.25), default init)
VMEM_TILE_BUDGET = 24 << 20   # target per-tile working set (fits v7x 64 MiB)


def _round_up(x, m):
    return ((x + m - 1) // m) * m


def _pick_tile(n, per_row_bytes, budget_bytes, max_tile):
    """Largest multiple-of-8 tile <= max_tile whose working set fits budget."""
    tile = max(8, min(max_tile, _round_up(n, 8)))
    tile = _round_up(tile, 8)
    while tile > 8 and tile * per_row_bytes > budget_bytes:
        tile = max(8, _round_up(tile // 2, 8))
    return tile


def _vmem_limit(working_bytes):
    # generous headroom, but stays below every generation's physical VMEM
    return int(min(56 << 20, max(24 << 20, int(1.5 * working_bytes) + (6 << 20))))


# ---------------- Kernel 1: Linear + BasicNorm (+ optional ReLU), row-tiled ---
def linear_norm_kernel(x_ref, w_ref, b_ref, o_ref, *, apply_relu, norm_dim):
    y = jnp.dot(x_ref[...], w_ref[...], preferred_element_type=jnp.float32)
    y = y + b_ref[...]
    # padded (zero) columns contribute 0; divide by the true feature count
    scale = lax.rsqrt(jnp.sum(y * y, axis=-1, keepdims=True) / norm_dim + EPS)
    y = y * scale
    if apply_relu:
        y = jnp.maximum(y, 0.0)
    o_ref[...] = y.astype(o_ref.dtype)


def pallas_linear_norm(x, w, b, apply_relu=False, max_row_tile=1024):
    m, f = x.shape
    d_out = w.shape[1]
    d_pad = _round_up(d_out, 128)            # lane-dense output slab
    if d_pad != d_out:
        w = jnp.pad(w, ((0, 0), (0, d_pad - d_out)))
        b = jnp.pad(b, ((0, 0), (0, d_pad - d_out)))

    per_row = 4 * (2 * f + 2 * d_pad)        # double-buffered in/out rows (f32)
    tile = _pick_tile(m, per_row, VMEM_TILE_BUDGET, max_row_tile)
    m_pad = _round_up(m, tile)
    if m_pad != m:
        x = jnp.pad(x, ((0, m_pad - m), (0, 0)))
    grid = (m_pad // tile,)

    working = tile * per_row + 2 * 4 * (f * d_pad + d_pad)
    cost = pl.CostEstimate(
        flops=2 * m_pad * f * d_pad,
        transcendentals=m_pad,
        bytes_accessed=4 * (m_pad * f + f * d_pad + d_pad + m_pad * d_pad),
    )
    out = pl.pallas_call(
        functools.partial(linear_norm_kernel, apply_relu=apply_relu, norm_dim=d_out),
        out_shape=jax.ShapeDtypeStruct((m_pad, d_pad), jnp.float32),
        grid=grid,
        in_specs=[
            pl.BlockSpec((tile, f), lambda i: (i, 0)),
            pl.BlockSpec((f, d_pad), lambda i: (0, 0)),
            pl.BlockSpec((1, d_pad), lambda i: (0, 0)),
        ],
        out_specs=pl.BlockSpec((tile, d_pad), lambda i: (i, 0)),
        compiler_params=pltpu.CompilerParams(
            dimension_semantics=("parallel",),
            vmem_limit_bytes=_vmem_limit(working)),
        cost_estimate=cost,
    )(x, w, b)
    return out[:m, :d_out]


# ---------------- LSTM cell helper (PyTorch gate order i, f, g, o) ------------
def _lstm_cell(gates, c, h_dim):
    i_g = jax.nn.sigmoid(gates[:, 0:h_dim])
    f_g = jax.nn.sigmoid(gates[:, h_dim:2 * h_dim])
    g_g = jnp.tanh(gates[:, 2 * h_dim:3 * h_dim])
    o_g = jax.nn.sigmoid(gates[:, 3 * h_dim:4 * h_dim])
    c_new = f_g * c + i_g * g_g
    h_new = o_g * jnp.tanh(c_new)
    return h_new, c_new


# ------- Kernel 2: fused bidirectional LSTM + residual + BasicNorm ------------
# TODO(synk): for non-128-multiple per-direction hidden sizes, the gate /
# hidden dims should be lane-padded to 128 (and the gate scratch kept in bf16
# on v7x) for fully unmasked stores; typical DPRNN configs (H=128, D=256) are
# already lane-aligned.
def bilstm_res_norm_kernel(x_ref, wih_ref, whh_ref, b_ref, o_ref,
                           gxf_ref, gxb_ref, hf_ref, hb_ref,
                           *, t_len, n_tile, h_dim):
    # x_ref: (T, n_tile, D) time-major, D = 2*h_dim.
    # wih_ref: (D, 8H) = [W_ih_fwd | W_ih_bwd]; whh_ref: blockdiag (2H, 8H);
    # b_ref: (1, 8H) combined (b_ih + b_hh) for both directions.
    d = x_ref.shape[-1]
    g4 = 4 * h_dim
    rows = t_len * n_tile

    # Hoisted input projection: one big MXU matmul covering both directions.
    x2 = x_ref[...].reshape(rows, d)
    gates = jnp.dot(x2, wih_ref[...], preferred_element_type=jnp.float32) + b_ref[...]
    gxf_ref[...] = gates[:, 0:g4]
    gxb_ref[...] = gates[:, g4:2 * g4]

    # Serial recurrence: one block-diag (n, 2H) @ (2H, 8H) MXU push per step,
    # loading only the 4H-wide gate slab each direction actually needs.
    def step(t, carry):
        hf, cf, hb, cb = carry
        rf = pl.multiple_of(t * n_tile, 8)
        rb = pl.multiple_of((t_len - 1 - t) * n_tile, 8)
        hcat = jnp.concatenate([hf, hb], axis=-1)
        gr = jnp.dot(hcat, whh_ref[...], preferred_element_type=jnp.float32)
        g_f = gxf_ref[pl.ds(rf, n_tile), :] + gr[:, 0:g4]
        g_b = gxb_ref[pl.ds(rb, n_tile), :] + gr[:, g4:2 * g4]
        hf_new, cf_new = _lstm_cell(g_f, cf, h_dim)
        hb_new, cb_new = _lstm_cell(g_b, cb, h_dim)
        hf_ref[pl.ds(rf, n_tile), :] = hf_new
        hb_ref[pl.ds(rb, n_tile), :] = hb_new
        return hf_new, cf_new, hb_new, cb_new

    z = jnp.zeros((n_tile, h_dim), jnp.float32)
    unroll = True if t_len <= 32 else 4
    lax.fori_loop(0, t_len, step, (z, z, z, z), unroll=unroll)

    # Fused residual + BasicNorm epilogue (dropout/balancer = identity in eval).
    xe = x_ref[...].reshape(rows, d)
    yf = hf_ref[...] + xe[:, 0:h_dim]
    yb = hb_ref[...] + xe[:, h_dim:d]
    ssq = (jnp.sum(yf * yf, axis=-1, keepdims=True)
           + jnp.sum(yb * yb, axis=-1, keepdims=True))
    scale = lax.rsqrt(ssq / d + EPS)
    y = jnp.concatenate([yf * scale, yb * scale], axis=-1)
    o_ref[...] = y.reshape(t_len, n_tile, d).astype(o_ref.dtype)


# ------- Kernel 3: fused unidirectional LSTM + residual + BasicNorm -----------
def lstm_res_norm_kernel(x_ref, wih_ref, whh_ref, b_ref, o_ref,
                         gx_ref, hs_ref, *, t_len, n_tile, h_dim):
    # x_ref: (T, n_tile, D) time-major; hidden == D (residual).
    d = x_ref.shape[-1]
    rows = t_len * n_tile

    x2 = x_ref[...].reshape(rows, d)
    gx_ref[...] = (
        jnp.dot(x2, wih_ref[...], preferred_element_type=jnp.float32) + b_ref[...]
    )

    def step(t, carry):
        h, c = carry
        r = pl.multiple_of(t * n_tile, 8)
        g = gx_ref[pl.ds(r, n_tile), :] + jnp.dot(
            h, whh_ref[...], preferred_element_type=jnp.float32)
        h_new, c_new = _lstm_cell(g, c, h_dim)
        hs_ref[pl.ds(r, n_tile), :] = h_new
        return h_new, c_new

    z = jnp.zeros((n_tile, h_dim), jnp.float32)
    unroll = True if t_len <= 32 else 4
    lax.fori_loop(0, t_len, step, (z, z), unroll=unroll)

    xe = x_ref[...].reshape(rows, d)
    y = hs_ref[...] + xe
    scale = lax.rsqrt(jnp.mean(y * y, axis=-1, keepdims=True) + EPS)
    o_ref[...] = (y * scale).reshape(t_len, n_tile, d).astype(o_ref.dtype)


# ---------------- Encoder-layer wrappers (time-major (T, N, D) inputs) --------
def bilstm_encoder_layer(x_tnd, p, max_batch_tile=512):
    """Bidirectional LSTM + residual + BasicNorm.  x_tnd: (T, N, D)."""
    t_len, n, d = x_tnd.shape
    h_dim = p["whh_f"].shape[0]
    assert 2 * h_dim == d, "residual requires hidden_size == input_size"

    # per batch-row VMEM (f32): x dbuf + out dbuf + 8H gate scratch + 2H hidden
    per_row = 4 * t_len * (2 * d + 2 * d + 8 * h_dim + 2 * h_dim)
    n_tile = _pick_tile(n, per_row, VMEM_TILE_BUDGET, max_batch_tile)
    n_pad = _round_up(n, n_tile)
    if n_pad != n:
        x_tnd = jnp.pad(x_tnd, ((0, 0), (0, n_pad - n), (0, 0)))
    grid = (n_pad // n_tile,)
    rows = t_len * n_pad

    # Pack both directions' input weights/biases -> one wide in-kernel matmul,
    # and build the block-diagonal recurrent weight for the fused per-step dot.
    wih = jnp.concatenate([p["wih_f"], p["wih_b"]], axis=1)       # (D, 8H)
    bias = jnp.concatenate([p["b_f"], p["b_b"]], axis=1)          # (1, 8H)
    zh = jnp.zeros((h_dim, 4 * h_dim), jnp.float32)
    whh_blk = jnp.concatenate(
        [jnp.concatenate([p["whh_f"], zh], axis=1),
         jnp.concatenate([zh, p["whh_b"]], axis=1)], axis=0)      # (2H, 8H)

    w_bytes = 4 * (d * 8 * h_dim + 2 * h_dim * 8 * h_dim + 8 * h_dim)
    working = n_tile * per_row + 2 * w_bytes
    cost = pl.CostEstimate(
        flops=2 * rows * d * 8 * h_dim + 2 * rows * 2 * h_dim * 8 * h_dim,
        transcendentals=rows * 10 * h_dim,
        bytes_accessed=4 * (2 * rows * d) + w_bytes,
    )
    out = pl.pallas_call(
        functools.partial(bilstm_res_norm_kernel,
                          t_len=t_len, n_tile=n_tile, h_dim=h_dim),
        out_shape=jax.ShapeDtypeStruct((t_len, n_pad, d), jnp.float32),
        grid=grid,
        in_specs=[
            pl.BlockSpec((t_len, n_tile, d), lambda i: (0, i, 0)),
            pl.BlockSpec((d, 8 * h_dim), lambda i: (0, 0)),
            pl.BlockSpec((2 * h_dim, 8 * h_dim), lambda i: (0, 0)),
            pl.BlockSpec((1, 8 * h_dim), lambda i: (0, 0)),
        ],
        out_specs=pl.BlockSpec((t_len, n_tile, d), lambda i: (0, i, 0)),
        scratch_shapes=[
            pltpu.VMEM((t_len * n_tile, 4 * h_dim), jnp.float32),  # gxf
            pltpu.VMEM((t_len * n_tile, 4 * h_dim), jnp.float32),  # gxb
            pltpu.VMEM((t_len * n_tile, h_dim), jnp.float32),      # fwd hidden
            pltpu.VMEM((t_len * n_tile, h_dim), jnp.float32),      # bwd hidden
        ],
        compiler_params=pltpu.CompilerParams(
            dimension_semantics=("parallel",),
            vmem_limit_bytes=_vmem_limit(working)),
        cost_estimate=cost,
    )(x_tnd, wih, whh_blk, bias)
    return out[:, :n, :] if n_pad != n else out


def lstm_encoder_layer(x_tnd, p, max_batch_tile=512):
    """Unidirectional LSTM + residual + BasicNorm.  x_tnd: (T, N, D)."""
    t_len, n, d = x_tnd.shape
    h_dim = p["whh"].shape[0]
    assert h_dim == d, "residual requires hidden_size == input_size"

    per_row = 4 * t_len * (2 * d + 2 * d + 4 * h_dim + h_dim)
    n_tile = _pick_tile(n, per_row, VMEM_TILE_BUDGET, max_batch_tile)
    n_pad = _round_up(n, n_tile)
    if n_pad != n:
        x_tnd = jnp.pad(x_tnd, ((0, 0), (0, n_pad - n), (0, 0)))
    grid = (n_pad // n_tile,)
    rows = t_len * n_pad

    w_bytes = 4 * (d * 4 * h_dim + h_dim * 4 * h_dim + 4 * h_dim)
    working = n_tile * per_row + 2 * w_bytes
    cost = pl.CostEstimate(
        flops=2 * rows * d * 4 * h_dim + 2 * rows * h_dim * 4 * h_dim,
        transcendentals=rows * 5 * h_dim,
        bytes_accessed=4 * (2 * rows * d) + w_bytes,
    )
    out = pl.pallas_call(
        functools.partial(lstm_res_norm_kernel,
                          t_len=t_len, n_tile=n_tile, h_dim=h_dim),
        out_shape=jax.ShapeDtypeStruct((t_len, n_pad, d), jnp.float32),
        grid=grid,
        in_specs=[
            pl.BlockSpec((t_len, n_tile, d), lambda i: (0, i, 0)),
            pl.BlockSpec((d, 4 * h_dim), lambda i: (0, 0)),
            pl.BlockSpec((h_dim, 4 * h_dim), lambda i: (0, 0)),
            pl.BlockSpec((1, 4 * h_dim), lambda i: (0, 0)),
        ],
        out_specs=pl.BlockSpec((t_len, n_tile, d), lambda i: (0, i, 0)),
        scratch_shapes=[
            pltpu.VMEM((t_len * n_tile, 4 * h_dim), jnp.float32),  # hoisted gates
            pltpu.VMEM((t_len * n_tile, h_dim), jnp.float32),      # hidden states
        ],
        compiler_params=pltpu.CompilerParams(
            dimension_semantics=("parallel",),
            vmem_limit_bytes=_vmem_limit(working)),
        cost_estimate=cost,
    )(x_tnd, p["wih"], p["whh"], p["b"])
    return out[:, :n, :] if n_pad != n else out


# ---------------- split / merge feature (pure reshapes; JAX glue) -------------
def split_feature(x, seg):
    # x: (B, D, T)  ->  (B, D, K=seg, S), rest
    b, d, t = x.shape
    p = seg // 2
    rest = seg - (p + t % seg) % seg
    if rest > 0:
        x = jnp.concatenate([x, jnp.zeros((b, d, rest), x.dtype)], axis=2)
    pad = jnp.zeros((b, d, p), x.dtype)
    x = jnp.concatenate([pad, x, pad], axis=2)
    seg1 = x[:, :, :-p].reshape(b, d, -1, seg)
    seg2 = x[:, :, p:].reshape(b, d, -1, seg)
    segs = jnp.concatenate([seg1, seg2], axis=3).reshape(b, d, -1, seg)
    segs = jnp.transpose(segs, (0, 1, 3, 2))  # (B, D, K, S)
    return segs, rest


def merge_feature(x, rest):
    # x: (B, D, K, S) -> (B, D, T)
    b, d, k, _ = x.shape
    p = k // 2
    x = jnp.transpose(x, (0, 1, 3, 2)).reshape(b, d, -1, 2 * k)
    x1 = x[:, :, :, :k].reshape(b, d, -1)[:, :, p:]
    x2 = x[:, :, :, k:].reshape(b, d, -1)[:, :, :-p]
    out = x1 + x2
    if rest > 0:
        out = out[:, :, :-rest]
    return out


# ---------------- DPRNN forward ------------------------------------------------
def dprnn_forward(params, x, segment_size):
    b, t, f = x.shape
    d = params["in_w"].shape[1]

    # input_embed
    h = pallas_linear_norm(x.reshape(b * t, f), params["in_w"], params["in_b"])
    h = h.reshape(b, t, d)

    # dual-path split:  (B, D, K, S)
    seg, rest = split_feature(jnp.transpose(h, (0, 2, 1)), segment_size)
    _, _, k, s = seg.shape

    # canonical time-major layout for the row path: (K, B, S, D)
    cur = jnp.transpose(seg, (2, 0, 3, 1))

    for blk in params["blocks"]:
        # row RNN: bidirectional over intra-segment axis K, batch = B*S
        row_out = bilstm_encoder_layer(cur.reshape(k, b * s, d), blk["row"])
        # TODO(synk): express this row<->col layout swap via a 4-D BlockSpec
        # index_map in the col/row kernels to avoid the two full HBM transposes
        # per block.
        col_in = jnp.transpose(row_out.reshape(k, b, s, d), (2, 1, 0, 3))
        col_out = lstm_encoder_layer(col_in.reshape(s, b * k, d), blk["col"])
        cur = jnp.transpose(col_out.reshape(s, b, k, d), (2, 1, 0, 3))

    out_bdks = jnp.transpose(cur, (1, 3, 0, 2))   # (B, D, K, S)
    merged = merge_feature(out_bdks, rest)        # (B, D, T)
    merged = jnp.transpose(merged, (0, 2, 1))     # (B, T, D)
    t_m = merged.shape[1]
    d_out = params["out_w"].shape[1]

    # out_embed + relu
    y = pallas_linear_norm(
        merged.reshape(b * t_m, d), params["out_w"], params["out_b"], apply_relu=True
    )
    return y.reshape(b, t_m, d_out)


# ---------------- deterministic parameter init --------------------------------
def init_params(key, feature_dim, input_size, hidden_size, output_size, num_blocks):
    keys = iter(jax.random.split(key, 128))

    def nrm(shape, scale=0.1):
        return scale * jax.random.normal(next(keys), shape, jnp.float32)

    params = {
        "in_w": nrm((feature_dim, input_size)),
        "in_b": nrm((1, input_size)),
        "out_w": nrm((input_size, output_size)),
        "out_b": nrm((1, output_size)),
        "blocks": [],
    }
    hb = hidden_size // 2  # per-direction hidden for the bidirectional row LSTM
    for _ in range(num_blocks):
        row = {
            "wih_f": nrm((input_size, 4 * hb)),
            "whh_f": nrm((hb, 4 * hb)),
            "b_f": nrm((1, 4 * hb)),      # combined b_ih + b_hh
            "wih_b": nrm((input_size, 4 * hb)),
            "whh_b": nrm((hb, 4 * hb)),
            "b_b": nrm((1, 4 * hb)),
        }
        col = {
            "wih": nrm((input_size, 4 * hidden_size)),
            "whh": nrm((hidden_size, 4 * hidden_size)),
            "b": nrm((1, 4 * hidden_size)),
        }
        params["blocks"].append({"row": row, "col": col})
    return params


if __name__ == "__main__":
    # Small shapes consistent with the module's forward.
    feature_dim, input_size, hidden_size, output_size = 16, 32, 32, 16
    num_blocks, segment_size = 1, 8
    B, T = 2, 32

    key = jax.random.PRNGKey(0)
    pkey, xkey = jax.random.split(key)
    params = init_params(pkey, feature_dim, input_size, hidden_size, output_size, num_blocks)
    x = jax.random.normal(xkey, (B, T, feature_dim), jnp.float32)

    fwd = jax.jit(dprnn_forward, static_argnums=2)
    y = fwd(params, x, segment_size)
    jax.block_until_ready(y)
    assert y.shape == (B, T, output_size)
    print("KERNEL_OK")
</pallas_src>

<mosaic_0001>
module attributes {stable_mosaic.version = 11 : i64} {
  func.func @linear_norm_kernel(%arg0: i32, %arg1: memref<64x16xf32, #tpu.memory_space<vmem>>, %arg2: memref<16x128xf32, #tpu.memory_space<vmem>>, %arg3: memref<1x128xf32, #tpu.memory_space<vmem>>, %arg4: memref<64x128xf32, #tpu.memory_space<vmem>>) attributes {dimension_semantics = [#tpu.dimension_semantics<parallel>], iteration_bounds = array<i64: 1>, scalar_prefetch = 0 : i64, scratch_operands = 0 : i64, tpu.core_type = #tpu.core_type<tc>, window_params = [{transform_indices = @transform_0, window_bounds = array<i64: 64, 16>}, {pipeline_mode = #tpu.pipeline_mode<synchronous>, transform_indices = @transform_1, window_bounds = array<i64: 16, 128>}, {pipeline_mode = #tpu.pipeline_mode<synchronous>, transform_indices = @transform_2, window_bounds = array<i64: 1, 128>}, {transform_indices = @transform_3, window_bounds = array<i64: 64, 128>}]} {
    %c0 = arith.constant 0 : index
    %c0_0 = arith.constant 0 : index
    %0 = vector.load %arg1[%c0, %c0_0] : memref<64x16xf32, #tpu.memory_space<vmem>>, vector<64x16xf32>
    %c0_1 = arith.constant 0 : index
    %c0_2 = arith.constant 0 : index
    %1 = vector.load %arg2[%c0_1, %c0_2] : memref<16x128xf32, #tpu.memory_space<vmem>>, vector<16x128xf32>
    %cst = arith.constant dense<0.000000e+00> : vector<64x128xf32>
    %2 = tpu.matmul %0, %1, %cst {dimension_numbers = #tpu.dot_dimension_numbers<[1], [0], [0], [1], [0, 0, 1, 1], [], []>} : vector<64x16xf32>, vector<16x128xf32>, vector<64x128xf32> -> vector<64x128xf32>
    %c0_3 = arith.constant 0 : index
    %c0_4 = arith.constant 0 : index
    %3 = vector.load %arg3[%c0_3, %c0_4] : memref<1x128xf32, #tpu.memory_space<vmem>>, vector<1x128xf32>
    %4 = vector.broadcast %3 : vector<1x128xf32> to vector<64x128xf32>
    %5 = arith.addf %2, %4 : vector<64x128xf32>
    %6 = arith.mulf %5, %5 : vector<64x128xf32>
    %cst_5 = arith.constant dense<0.000000e+00> : vector<64xf32>
    %7 = vector.multi_reduction <add>, %6, %cst_5 [1] : vector<64x128xf32> to vector<64xf32>
    %8 = vector.shape_cast %7 : vector<64xf32> to vector<64x1xf32>
    %cst_6 = arith.constant 3.200000e+01 : f32
    %9 = vector.broadcast %cst_6 : f32 to vector<64x1xf32>
    %10 = arith.divf %8, %9 : vector<64x1xf32>
    %cst_7 = arith.constant 2.500000e-01 : f32
    %11 = vector.broadcast %cst_7 : f32 to vector<64x1xf32>
    %12 = arith.addf %10, %11 : vector<64x1xf32>
    %13 = math.rsqrt %12 : vector<64x1xf32>
    %14 = vector.broadcast %13 : vector<64x1xf32> to vector<64x128xf32>
    %15 = arith.mulf %5, %14 : vector<64x128xf32>
    %c0_8 = arith.constant 0 : index
    %c0_9 = arith.constant 0 : index
    %16 = vector.load %arg4[%c0_8, %c0_9] : memref<64x128xf32, #tpu.memory_space<vmem>>, vector<64x128xf32>
    tpu.vector_store %arg4[%c0_8, %c0_9], %15 {strides = array<i32>} : memref<64x128xf32, #tpu.memory_space<vmem>>, vector<64x128xf32>,
    return
  }
  func.func @transform_0(%arg0: i32) -> (i32, i32) {
    %c0_i32 = arith.constant 0 : i32
    %c0_i32_0 = arith.constant 0 : i32
    return %arg0, %c0_i32 : i32, i32
  }
  func.func @transform_1(%arg0: i32) -> (i32, i32) {
    %c0_i32 = arith.constant 0 : i32
    %c0_i32_0 = arith.constant 0 : i32
    %c0_i32_1 = arith.constant 0 : i32
    return %c0_i32, %c0_i32_0 : i32, i32
  }
  func.func @transform_2(%arg0: i32) -> (i32, i32) {
    %c0_i32 = arith.constant 0 : i32
    %c0_i32_0 = arith.constant 0 : i32
    %c0_i32_1 = arith.constant 0 : i32
    return %c0_i32, %c0_i32_0 : i32, i32
  }
  func.func @transform_3(%arg0: i32) -> (i32, i32) {
    %c0_i32 = arith.constant 0 : i32
    %c0_i32_0 = arith.constant 0 : i32
    return %arg0, %c0_i32 : i32, i32
  }
}

module attributes {stable_mosaic.version = 11 : i64} {
  func.func @bilstm_res_norm_kernel(%arg0: i32, %arg1: memref<8x24x32xf32, #tpu.memory_space<vmem>>, %arg2: memref<32x128xf32, #tpu.memory_space<vmem>>, %arg3: memref<32x128xf32, #tpu.memory_space<vmem>>, %arg4: memref<1x128xf32, #tpu.memory_space<vmem>>, %arg5: memref<8x24x32xf32, #tpu.memory_space<vmem>>, %arg6: memref<192x64xf32, #tpu.memory_space<vmem>>, %arg7: memref<192x64xf32, #tpu.memory_space<vmem>>, %arg8: memref<192x16xf32, #tpu.memory_space<vmem>>, %arg9: memref<192x16xf32, #tpu.memory_space<vmem>>) attributes {dimension_semantics = [#tpu.dimension_semantics<parallel>], iteration_bounds = array<i64: 1>, scalar_prefetch = 0 : i64, scratch_operands = 4 : i64, tpu.core_type = #tpu.core_type<tc>, window_params = [{transform_indices = @transform_0, window_bounds = array<i64: 8, 24, 32>}, {pipeline_mode = #tpu.pipeline_mode<synchronous>, transform_indices = @transform_1, window_bounds = array<i64: 32, 128>}, {pipeline_mode = #tpu.pipeline_mode<synchronous>, transform_indices = @transform_2, window_bounds = array<i64: 32, 128>}, {pipeline_mode = #tpu.pipeline_mode<synchronous>, transform_indices = @transform_3, window_bounds = array<i64: 1, 128>}, {transform_indices = @transform_4, window_bounds = array<i64: 8, 24, 32>}]} {
    %c0 = arith.constant 0 : index
    %c0_0 = arith.constant 0 : index
    %c0_1 = arith.constant 0 : index
    %0 = vector.load %arg1[%c0, %c0_0, %c0_1] : memref<8x24x32xf32, #tpu.memory_space<vmem>>, vector<8x24x32xf32>
    %1 = vector.shape_cast %0 : vector<8x24x32xf32> to vector<192x32xf32>
    %c0_2 = arith.constant 0 : index
    %c0_3 = arith.constant 0 : index
    %2 = vector.load %arg2[%c0_2, %c0_3] : memref<32x128xf32, #tpu.memory_space<vmem>>, vector<32x128xf32>
    %cst = arith.constant dense<0.000000e+00> : vector<192x128xf32>
    %3 = tpu.matmul %1, %2, %cst {dimension_numbers = #tpu.dot_dimension_numbers<[1], [0], [0], [1], [0, 0, 1, 1], [], []>} : vector<192x32xf32>, vector<32x128xf32>, vector<192x128xf32> -> vector<192x128xf32>
    %c0_4 = arith.constant 0 : index
    %c0_5 = arith.constant 0 : index
    %4 = vector.load %arg4[%c0_4, %c0_5] : memref<1x128xf32, #tpu.memory_space<vmem>>, vector<1x128xf32>
    %5 = vector.broadcast %4 : vector<1x128xf32> to vector<192x128xf32>
    %6 = arith.addf %3, %5 : vector<192x128xf32>
    %7 = vector.extract_strided_slice %6 {offsets = [0, 0], sizes = [192, 64], strides = [1, 1]} : vector<192x128xf32> to vector<192x64xf32>
    %c0_6 = arith.constant 0 : index
    %c0_7 = arith.constant 0 : index
    %8 = vector.load %arg6[%c0_6, %c0_7] : memref<192x64xf32, #tpu.memory_space<vmem>>, vector<192x64xf32>
    tpu.vector_store %arg6[%c0_6, %c0_7], %7 {strides = array<i32>} : memref<192x64xf32, #tpu.memory_space<vmem>>, vector<192x64xf32>,
    %9 = vector.extract_strided_slice %6 {offsets = [0, 64], sizes = [192, 64], strides = [1, 1]} : vector<192x128xf32> to vector<192x64xf32>
    %c0_8 = arith.constant 0 : index
    %c0_9 = arith.constant 0 : index
    %10 = vector.load %arg7[%c0_8, %c0_9] : memref<192x64xf32, #tpu.memory_space<vmem>>, vector<192x64xf32>
    tpu.vector_store %arg7[%c0_8, %c0_9], %9 {strides = array<i32>} : memref<192x64xf32, #tpu.memory_space<vmem>>, vector<192x64xf32>,
    %cst_10 = arith.constant 0.000000e+00 : f32
    %11 = vector.broadcast %cst_10 : f32 to vector<24x16xf32>
    %c0_i32 = arith.constant 0 : i32
    %c24_i32 = arith.constant 24 : i32
    %12 = arith.muli %c0_i32, %c24_i32 : i32
    %13 = tpu.assume_multiple %12, 8 : i32
    %c7_i32 = arith.constant 7 : i32
    %14 = arith.subi %c7_i32, %c0_i32 : i32
    %c24_i32_11 = arith.constant 24 : i32
    %15 = arith.muli %14, %c24_i32_11 : i32
    %16 = tpu.assume_multiple %15, 8 : i32
    %17 = tpu.concatenate %11, %11 in 1 : vector<24x16xf32>, vector<24x16xf32> -> vector<24x32xf32>
    %c0_12 = arith.constant 0 : index
    %c0_13 = arith.constant 0 : index
    %18 = vector.load %arg3[%c0_12, %c0_13] : memref<32x128xf32, #tpu.memory_space<vmem>>, vector<32x128xf32>
    %cst_14 = arith.constant dense<0.000000e+00> : vector<24x128xf32>
    %19 = tpu.matmul %17, %18, %cst_14 {dimension_numbers = #tpu.dot_dimension_numbers<[1], [0], [0], [1], [0, 0, 1, 1], [], []>} : vector<24x32xf32>, vector<32x128xf32>, vector<24x128xf32> -> vector<24x128xf32>
    %20 = arith.index_cast %13 : i32 to index
    %c0_15 = arith.constant 0 : index
    %21 = vector.load %arg6[%20, %c0_15] : memref<192x64xf32, #tpu.memory_space<vmem>>, vector<24x64xf32>
    %22 = vector.extract_strided_slice %19 {offsets = [0, 0], sizes = [24, 64], strides = [1, 1]} : vector<24x128xf32> to vector<24x64xf32>
    %23 = arith.addf %21, %22 : vector<24x64xf32>
    %24 = arith.index_cast %16 : i32 to index
    %c0_16 = arith.constant 0 : index
    %25 = vector.load %arg7[%24, %c0_16] : memref<192x64xf32, #tpu.memory_space<vmem>>, vector<24x64xf32>
    %26 = vector.extract_strided_slice %19 {offsets = [0, 64], sizes = [24, 64], strides = [1, 1]} : vector<24x128xf32> to vector<24x64xf32>
    %27 = arith.addf %25, %26 : vector<24x64xf32>
    %28 = vector.extract_strided_slice %23 {offsets = [0, 0], sizes = [24, 16], strides = [1, 1]} : vector<24x64xf32> to vector<24x16xf32>
    %29 = arith.negf %28 : vector<24x16xf32>
    %30 = math.exp %29 : vector<24x16xf32>
    %cst_17 = arith.constant 1.000000e+00 : f32
    %31 = vector.broadcast %cst_17 : f32 to vector<24x16xf32>
    %32 = arith.addf %31, %30 : vector<24x16xf32>
    %33 = arith.divf %31, %32 : vector<24x16xf32>
    %34 = vector.extract_strided_slice %23 {offsets = [0, 16], sizes = [24, 16], strides = [1, 1]} : vector<24x64xf32> to vector<24x16xf32>
    %35 = arith.negf %34 : vector<24x16xf32>
    %36 = math.exp %35 : vector<24x16xf32>
    %cst_18 = arith.constant 1.000000e+00 : f32
    %37 = vector.broadcast %cst_18 : f32 to vector<24x16xf32>
    %38 = arith.addf %37, %36 : vector<24x16xf32>
    %39 = arith.divf %37, %38 : vector<24x16xf32>
    %40 = vector.extract_strided_slice %23 {offsets = [0, 32], sizes = [24, 16], strides = [1, 1]} : vector<24x64xf32> to vector<24x16xf32>
    %41 = math.tanh %40 : vector<24x16xf32>
    %42 = vector.extract_strided_slice %23 {offsets = [0, 48], sizes = [24, 16], strides = [1, 1]} : vector<24x64xf32> to vector<24x16xf32>
    %43 = arith.negf %42 : vector<24x16xf32>
    %44 = math.exp %43 : vector<24x16xf32>
    %cst_19 = arith.constant 1.000000e+00 : f32
    %45 = vector.broadcast %cst_19 : f32 to vector<24x16xf32>
    %46 = arith.addf %45, %44 : vector<24x16xf32>
    %47 = arith.divf %45, %46 : vector<24x16xf32>
    %48 = arith.mulf %39, %11 : vector<24x16xf32>
    %49 = arith.mulf %33, %41 : vector<24x16xf32>
    %50 = arith.addf %48, %49 : vector<24x16xf32>
    %51 = math.tanh %50 : vector<24x16xf32>
    %52 = arith.mulf %47, %51 : vector<24x16xf32>
    %53 = vector.extract_strided_slice %27 {offsets = [0, 0], sizes = [24, 16], strides = [1, 1]} : vector<24x64xf32> to vector<24x16xf32>
    %54 = arith.negf %53 : vector<24x16xf32>
    %55 = math.exp %54 : vector<24x16xf32>
    %cst_20 = arith.constant 1.000000e+00 : f32
    %56 = vector.broadcast %cst_20 : f32 to vector<24x16xf32>
    %57 = arith.addf %56, %55 : vector<24x16xf32>
    %58 = arith.divf %56, %57 : vector<24x16xf32>
    %59 = vector.extract_strided_slice %27 {offsets = [0, 16], sizes = [24, 16], strides = [1, 1]} : vector<24x64xf32> to vector<24x16xf32>
    %60 = arith.negf %59 : vector<24x16xf32>
    %61 = math.exp %60 : vector<24x16xf32>
    %cst_21 = arith.constant 1.000000e+00 : f32
    %62 = vector.broadcast %cst_21 : f32 to vector<24x16xf32>
    %63 = arith.addf %62, %61 : vector<24x16xf32>
    %64 = arith.divf %62, %63 : vector<24x16xf32>
    %65 = vector.extract_strided_slice %27 {offsets = [0, 32], sizes = [24, 16], strides = [1, 1]} : vector<24x64xf32> to vector<24x16xf32>
    %66 = math.tanh %65 : vector<24x16xf32>
    %67 = vector.extract_strided_slice %27 {offsets = [0, 48], sizes = [24, 16], strides = [1, 1]} : vector<24x64xf32> to vector<24x16xf32>
    %68 = arith.negf %67 : vector<24x16xf32>
    %69 = math.exp %68 : vector<24x16xf32>
    %cst_22 = arith.constant 1.000000e+00 : f32
    %70 = vector.broadcast %cst_22 : f32 to vector<24x16xf32>
    %71 = arith.addf %70, %69 : vector<24x16xf32>
    %72 = arith.divf %70, %71 : vector<24x16xf32>
    %73 = arith.mulf %64, %11 : vector<24x16xf32>
    %74 = arith.mulf %58, %66 : vector<24x16xf32>
    %75 = arith.addf %73, %74 : vector<24x16xf32>
    %76 = math.tanh %75 : vector<24x16xf32>
    %77 = arith.mulf %72, %76 : vector<24x16xf32>
    %78 = arith.index_cast %13 : i32 to index
    %c0_23 = arith.constant 0 : index
    %79 = vector.load %arg8[%78, %c0_23] : memref<192x16xf32, #tpu.memory_space<vmem>>, vector<24x16xf32>
    tpu.vector_store %arg8[%78, %c0_23], %52 {strides = array<i32>} : memref<192x16xf32, #tpu.memory_space<vmem>>, vector<24x16xf32>,
    %80 = arith.index_cast %16 : i32 to index
    %c0_24 = arith.constant 0 : index
    %81 = vector.load %arg9[%80, %c0_24] : memref<192x16xf32, #tpu.memory_space<vmem>>, vector<24x16xf32>
    tpu.vector_store %arg9[%80, %c0_24], %77 {strides = array<i32>} : memref<192x16xf32, #tpu.memory_space<vmem>>, vector<24x16xf32>,
    %c1_i32 = arith.constant 1 : i32
    %c24_i32_25 = arith.constant 24 : i32
    %82 = arith.muli %c1_i32, %c24_i32_25 : i32
    %83 = tpu.assume_multiple %82, 8 : i32
    %c7_i32_26 = arith.constant 7 : i32
    %84 = arith.subi %c7_i32_26, %c1_i32 : i32
    %c24_i32_27 = arith.constant 24 : i32
    %85 = arith.muli %84, %c24_i32_27 : i32
    %86 = tpu.assume_multiple %85, 8 : i32
    %87 = tpu.concatenate %52, %77 in 1 : vector<24x16xf32>, vector<24x16xf32> -> vector<24x32xf32>
    %c0_28 = arith.constant 0 : index
    %c0_29 = arith.constant 0 : index
    %88 = vector.load %arg3[%c0_28, %c0_29] : memref<32x128xf32, #tpu.memory_space<vmem>>, vector<32x128xf32>
    %cst_30 = arith.constant dense<0.000000e+00> : vector<24x128xf32>
    %89 = tpu.matmul %87, %88, %cst_30 {dimension_numbers = #tpu.dot_dimension_numbers<[1], [0], [0], [1], [0, 0, 1, 1], [], []>} : vector<24x32xf32>, vector<32x128xf32>, vector<24x128xf32> -> vector<24x128xf32>
    %90 = arith.index_cast %83 : i32 to index
    %c0_31 = arith.constant 0 : index
    %91 = vector.load %arg6[%90, %c0_31] : memref<192x64xf32, #tpu.memory_space<vmem>>, vector<24x64xf32>
    %92 = vector.extract_strided_slice %89 {offsets = [0, 0], sizes = [24, 64], strides = [1, 1]} : vector<24x128xf32> to vector<24x64xf32>
    %93 = arith.addf %91, %92 : vector<24x64xf32>
    %94 = arith.index_cast %86 : i32 to index
    %c0_32 = arith.constant 0 : index
    %95 = vector.load %arg7[%94, %c0_32] : memref<192x64xf32, #tpu.memory_space<vmem>>, vector<24x64xf32>
    %96 = vector.extract_strided_slice %89 {offsets = [0, 64], sizes = [24, 64], strides = [1, 1]} : vector<24x128xf32> to vector<24x64xf32>
    %97 = arith.addf %95, %96 : vector<24x64xf32>
    %98 = vector.extract_strided_slice %93 {offsets = [0, 0], sizes = [24, 16], strides = [1, 1]} : vector<24x64xf32> to vector<24x16xf32>
    %99 = arith.negf %98 : vector<24x16xf32>
    %100 = math.exp %99 : vector<24x16xf32>
    %cst_33 = arith.constant 1.000000e+00 : f32
    %101 = vector.broadcast %cst_33 : f32 to vector<24x16xf32>
    %102 = arith.addf %101, %100 : vector<24x16xf32>
    %103 = arith.divf %101, %102 : vector<24x16xf32>
    %104 = vector.extract_strided_slice %93 {offsets = [0, 16], sizes = [24, 16], strides = [1, 1]} : vector<24x64xf32> to vector<24x16xf32>
    %105 = arith.negf %104 : vector<24x16xf32>
    %106 = math.exp %105 : vector<24x16xf32>
    %cst_34 = arith.constant 1.000000e+00 : f32
    %107 = vector.broadcast %cst_34 : f32 to vector<24x16xf32>
    %108 = arith.addf %107, %106 : vector<24x16xf32>
    %109 = arith.divf %107, %108 : vector<24x16xf32>
    %110 = vector.extract_strided_slice %93 {offsets = [0, 32], sizes = [24, 16], strides = [1, 1]} : vector<24x64xf32> to vector<24x16xf32>
    %111 = math.tanh %110 : vector<24x16xf32>
    %112 = vector.extract_strided_slice %93 {offsets = [0, 48], sizes = [24, 16], strides = [1, 1]} : vector<24x64xf32> to vector<24x16xf32>
    %113 = arith.negf %112 : vector<24x16xf32>
    %114 = math.exp %113 : vector<24x16xf32>
    %cst_35 = arith.constant 1.000000e+00 : f32
    %115 = vector.broadcast %cst_35 : f32 to vector<24x16xf32>
    %116 = arith.addf %115, %114 : vector<24x16xf32>
    %117 = arith.divf %115, %116 : vector<24x16xf32>
    %118 = arith.mulf %109, %50 : vector<24x16xf32>
    %119 = arith.mulf %103, %111 : vector<24x16xf32>
    %120 = arith.addf %118, %119 : vector<24x16xf32>
    %121 = math.tanh %120 : vector<24x16xf32>
    %122 = arith.mulf %117, %121 : vector<24x16xf32>
    %123 = vector.extract_strided_slice %97 {offsets = [0, 0], sizes = [24, 16], strides = [1, 1]} : vector<24x64xf32> to vector<24x16xf32>
    %124 = arith.negf %123 : vector<24x16xf32>
    %125 = math.exp %124 : vector<24x16xf32>
    %cst_36 = arith.constant 1.000000e+00 : f32
    %126 = vector.broadcast %cst_36 : f32 to vector<24x16xf32>
    %127 = arith.addf %126, %125 : vector<24x16xf32>
    %128 = arith.divf %126, %127 : vector<24x16xf32>
    %129 = vector.extract_strided_slice %97 {offsets = [0, 16], sizes = [24, 16], strides = [1, 1]} : vector<24x64xf32> to vector<24x16xf32>
    %130 = arith.negf %129 : vector<24x16xf32>
    %131 = math.exp %130 : vector<24x16xf32>
    %cst_37 = arith.constant 1.000000e+00 : f32
    %132 = vector.broadcast %cst_37 : f32 to vector<24x16xf32>
    %133 = arith.addf %132, %131 : vector<24x16xf32>
    %134 = arith.divf %132, %133 : vector<24x16xf32>
    %135 = vector.extract_strided_slice %97 {offsets = [0, 32], sizes = [24, 16], strides = [1, 1]} : vector<24x64xf32> to vector<24x16xf32>
    %136 = math.tanh %135 : vector<24x16xf32>
    %137 = vector.extract_strided_slice %97 {offsets = [0, 48], sizes = [24, 16], strides = [1, 1]} : vector<24x64xf32> to vector<24x16xf32>
    %138 = arith.negf %137 : vector<24x16xf32>
    %139 = math.exp %138 : vector<24x16xf32>
    %cst_38 = arith.constant 1.000000e+00 : f32
    %140 = vector.broadcast %cst_38 : f32 to vector<24x16xf32>
    %141 = arith.addf %140, %139 : vector<24x16xf32>
    %142 = arith.divf %140, %141 : vector<24x16xf32>
    %143 = arith.mulf %134, %75 : vector<24x16xf32>
    %144 = arith.mulf %128, %136 : vector<24x16xf32>
    %145 = arith.addf %143, %144 : vector<24x16xf32>
    %146 = math.tanh %145 : vector<24x16xf32>
    %147 = arith.mulf %142, %146 : vector<24x16xf32>
    %148 = arith.index_cast %83 : i32 to index
    %c0_39 = arith.constant 0 : index
    %149 = vector.load %arg8[%148, %c0_39] : memref<192x16xf32, #tpu.memory_space<vmem>>, vector<24x16xf32>
    tpu.vector_store %arg8[%148, %c0_39], %122 {strides = array<i32>} : memref<192x16xf32, #tpu.memory_space<vmem>>, vector<24x16xf32>,
    %150 = arith.index_cast %86 : i32 to index
    %c0_40 = arith.constant 0 : index
    %151 = vector.load %arg9[%150, %c0_40] : memref<192x16xf32, #tpu.memory_space<vmem>>, vector<24x16xf32>
    tpu.vector_store %arg9[%150, %c0_40], %147 {strides = array<i32>} : memref<192x16xf32, #tpu.memory_space<vmem>>, vector<24x16xf32>,
    %c2_i32 = arith.constant 2 : i32
    %c24_i32_41 = arith.constant 24 : i32
    %152 = arith.muli %c2_i32, %c24_i32_41 : i32
    %153 = tpu.assume_multiple %152, 8 : i32
    %c7_i32_42 = arith.constant 7 : i32
    %154 = arith.subi %c7_i32_42, %c2_i32 : i32
    %c24_i32_43 = arith.constant 24 : i32
    %155 = arith.muli %154, %c24_i32_43 : i32
    %156 = tpu.assume_multiple %155, 8 : i32
    %157 = tpu.concatenate %122, %147 in 1 : vector<24x16xf32>, vector<24x16xf32> -> vector<24x32xf32>
    %c0_44 = arith.constant 0 : index
    %c0_45 = arith.constant 0 : index
    %158 = vector.load %arg3[%c0_44, %c0_45] : memref<32x128xf32, #tpu.memory_space<vmem>>, vector<32x128xf32>
    %cst_46 = arith.constant dense<0.000000e+00> : vector<24x128xf32>
    %159 = tpu.matmul %157, %158, %cst_46 {dimension_numbers = #tpu.dot_dimension_numbers<[1], [0], [0], [1], [0, 0, 1, 1], [], []>} : vector<24x32xf32>, vector<32x128xf32>, vector<24x128xf32> -> vector<24x128xf32>
    %160 = arith.index_cast %153 : i32 to index
    %c0_47 = arith.constant 0 : index
    %161 = vector.load %arg6[%160, %c0_47] : memref<192x64xf32, #tpu.memory_space<vmem>>, vector<24x64xf32>
    %162 = vector.extract_strided_slice %159 {offsets = [0, 0], sizes = [24, 64], strides = [1, 1]} : vector<24x128xf32> to vector<24x64xf32>
    %163 = arith.addf %161, %162 : vector<24x64xf32>
    %164 = arith.index_cast %156 : i32 to index
    %c0_48 = arith.constant 0 : index
    %165 = vector.load %arg7[%164, %c0_48] : memref<192x64xf32, #tpu.memory_space<vmem>>, vector<24x64xf32>
    %166 = vector.extract_strided_slice %159 {offsets = [0, 64], sizes = [24, 64], strides = [1, 1]} : vector<24x128xf32> to vector<24x64xf32>
    %167 = arith.addf %165, %166 : vector<24x64xf32>
    %168 = vector.extract_strided_slice %163 {offsets = [0, 0], sizes = [24, 16], strides = [1, 1]} : vector<24x64xf32> to vector<24x16xf32>
    %169 = arith.negf %168 : vector<24x16xf32>
    %170 = math.exp %169 : vector<24x16xf32>
    %cst_49 = arith.constant 1.000000e+00 : f32
    %171 = vector.broadcast %cst_49 : f32 to vector<24x16xf32>
    %172 = arith.addf %171, %170 : vector<24x16xf32>
    %173 = arith.divf %171, %172 : vector<24x16xf32>
    %174 = vector.extract_strided_slice %163 {offsets = [0, 16], sizes = [24, 16], strides = [1, 1]} : vector<24x64xf32> to vector<24x16xf32>
    %175 = arith.negf %174 : vector<24x16xf32>
    %176 = math.exp %175 : vector<24x16xf32>
    %cst_50 = arith.constant 1.000000e+00 : f32
    %177 = vector.broadcast %cst_50 : f32 to vector<24x16xf32>
    %178 = arith.addf %177, %176 : vector<24x16xf32>
    %179 = arith.divf %177, %178 : vector<24x16xf32>
    %180 = vector.extract_strided_slice %163 {offsets = [0, 32], sizes = [24, 16], strides = [1, 1]} : vector<24x64xf32> to vector<24x16xf32>
    %181 = math.tanh %180 : vector<24x16xf32>
    %182 = vector.extract_strided_slice %163 {offsets = [0, 48], sizes = [24, 16], strides = [1, 1]} : vector<24x64xf32> to vector<24x16xf32>
    %183 = arith.negf %182 : vector<24x16xf32>
    %184 = math.exp %183 : vector<24x16xf32>
    %cst_51 = arith.constant 1.000000e+00 : f32
    %185 = vector.broadcast %cst_51 : f32 to vector<24x16xf32>
    %186 = arith.addf %185, %184 : vector<24x16xf32>
    %187 = arith.divf %185, %186 : vector<24x16xf32>
    %188 = arith.mulf %179, %120 : vector<24x16xf32>
    %189 = arith.mulf %173, %181 : vector<24x16xf32>
    %190 = arith.addf %188, %189 : vector<24x16xf32>
    %191 = math.tanh %190 : vector<24x16xf32>
    %192 = arith.mulf %187, %191 : vector<24x16xf32>
    %193 = vector.extract_strided_slice %167 {offsets = [0, 0], sizes = [24, 16], strides = [1, 1]} : vector<24x64xf32> to vector<24x16xf32>
    %194 = arith.negf %193 : vector<24x16xf32>
    %195 = math.exp %194 : vector<24x16xf32>
    %cst_52 = arith.constant 1.000000e+00 : f32
    %196 = vector.broadcast %cst_52 : f32 to vector<24x16xf32>
    %197 = arith.addf %196, %195 : vector<24x16xf32>
    %198 = arith.divf %196, %197 : vector<24x16xf32>
    %199 = vector.extract_strided_slice %167 {offsets = [0, 16], sizes = [24, 16], strides = [1, 1]} : vector<24x64xf32> to vector<24x16xf32>
    %200 = arith.negf %199 : vector<24x16xf32>
    %201 = math.exp %200 : vector<24x16xf32>
    %cst_53 = arith.constant 1.000000e+00 : f32
    %202 = vector.broadcast %cst_53 : f32 to vector<24x16xf32>
    %203 = arith.addf %202, %201 : vector<24x16xf32>
    %204 = arith.divf %202, %203 : vector<24x16xf32>
    %205 = vector.extract_strided_slice %167 {offsets = [0, 32], sizes = [24, 16], strides = [1, 1]} : vector<24x64xf32> to vector<24x16xf32>
    %206 = math.tanh %205 : vector<24x16xf32>
    %207 = vector.extract_strided_slice %167 {offsets = [0, 48], sizes = [24, 16], strides = [1, 1]} : vector<24x64xf32> to vector<24x16xf32>
    %208 = arith.negf %207 : vector<24x16xf32>
    %209 = math.exp %208 : vector<24x16xf32>
    %cst_54 = arith.constant 1.000000e+00 : f32
    %210 = vector.broadcast %cst_54 : f32 to vector<24x16xf32>
    %211 = arith.addf %210, %209 : vector<24x16xf32>
    %212 = arith.divf %210, %211 : vector<24x16xf32>
    %213 = arith.mulf %204, %145 : vector<24x16xf32>
    %214 = arith.mulf %198, %206 : vector<24x16xf32>
    %215 = arith.addf %213, %214 : vector<24x16xf32>
    %216 = math.tanh %215 : vector<24x16xf32>
    %217 = arith.mulf %212, %216 : vector<24x16xf32>
    %218 = arith.index_cast %153 : i32 to index
    %c0_55 = arith.constant 0 : index
    %219 = vector.load %arg8[%218, %c0_55] : memref<192x16xf32, #tpu.memory_space<vmem>>, vector<24x16xf32>
    tpu.vector_store %arg8[%218, %c0_55], %192 {strides = array<i32>} : memref<192x16xf32, #tpu.memory_space<vmem>>, vector<24x16xf32>,
    %220 = arith.index_cast %156 : i32 to index
    %c0_56 = arith.constant 0 : index
    %221 = vector.load %arg9[%220, %c0_56] : memref<192x16xf32, #tpu.memory_space<vmem>>, vector<24x16xf32>
    tpu.vector_store %arg9[%220, %c0_56], %217 {strides = array<i32>} : memref<192x16xf32, #tpu.memory_space<vmem>>, vector<24x16xf32>,
    %c3_i32 = arith.constant 3 : i32
    %c24_i32_57 = arith.constant 24 : i32
    %222 = arith.muli %c3_i32, %c24_i32_57 : i32
    %223 = tpu.assume_multiple %222, 8 : i32
    %c7_i32_58 = arith.constant 7 : i32
    %224 = arith.subi %c7_i32_58, %c3_i32 : i32
    %c24_i32_59 = arith.constant 24 : i32
    %225 = arith.muli %224, %c24_i32_59 : i32
    %226 = tpu.assume_multiple %225, 8 : i32
    %227 = tpu.concatenate %192, %217 in 1 : vector<24x16xf32>, vector<24x16xf32> -> vector<24x32xf32>
    %c0_60 = arith.constant 0 : index
    %c0_61 = arith.constant 0 : index
    %228 = vector.load %arg3[%c0_60, %c0_61] : memref<32x128xf32, #tpu.memory_space<vmem>>, vector<32x128xf32>
    %cst_62 = arith.constant dense<0.000000e+00> : vector<24x128xf32>
    %229 = tpu.matmul %227, %228, %cst_62 {dimension_numbers = #tpu.dot_dimension_numbers<[1], [0], [0], [1], [0, 0, 1, 1], [], []>} : vector<24x32xf32>, vector<32x128xf32>, vector<24x128xf32> -> vector<24x128xf32>
    %230 = arith.index_cast %223 : i32 to index
    %c0_63 = arith.constant 0 : index
    %231 = vector.load %arg6[%230, %c0_63] : memref<192x64xf32, #tpu.memory_space<vmem>>, vector<24x64xf32>
    %232 = vector.extract_strided_slice %229 {offsets = [0, 0], sizes = [24, 64], strides = [1, 1]} : vector<24x128xf32> to vector<24x64xf32>
    %233 = arith.addf %231, %232 : vector<24x64xf32>
    %234 = arith.index_cast %226 : i32 to index
    %c0_64 = arith.constant 0 : index
    %235 = vector.load %arg7[%234, %c0_64] : memref<192x64xf32, #tpu.memory_space<vmem>>, vector<24x64xf32>
    %236 = vector.extract_strided_slice %229 {offsets = [0, 64], sizes = [24, 64], strides = [1, 1]} : vector<24x128xf32> to vector<24x64xf32>
    %237 = arith.addf %235, %236 : vector<24x64xf32>
    %238 = vector.extract_strided_slice %233 {offsets = [0, 0], sizes = [24, 16], strides = [1, 1]} : vector<24x64xf32> to vector<24x16xf32>
    %239 = arith.negf %238 : vector<24x16xf32>
    %240 = math.exp %239 : vector<24x16xf32>
    %cst_65 = arith.constant 1.000000e+00 : f32
    %241 = vector.broadcast %cst_65 : f32 to vector<24x16xf32>
    %242 = arith.addf %241, %240 : vector<24x16xf32>
    %243 = arith.divf %241, %242 : vector<24x16xf32>
    %244 = vector.extract_strided_slice %233 {offsets = [0, 16], sizes = [24, 16], strides = [1, 1]} : vector<24x64xf32> to vector<24x16xf32>
    %245 = arith.negf %244 : vector<24x16xf32>
    %246 = math.exp %245 : vector<24x16xf32>
    %cst_66 = arith.constant 1.000000e+00 : f32
    %247 = vector.broadcast %cst_66 : f32 to vector<24x16xf32>
    %248 = arith.addf %247, %246 : vector<24x16xf32>
    %249 = arith.divf %247, %248 : vector<24x16xf32>
    %250 = vector.extract_strided_slice %233 {offsets = [0, 32], sizes = [24, 16], strides = [1, 1]} : vector<24x64xf32> to vector<24x16xf32>
    %251 = math.tanh %250 : vector<24x16xf32>
    %252 = vector.extract_strided_slice %233 {offsets = [0, 48], sizes = [24, 16], strides = [1, 1]} : vector<24x64xf32> to vector<24x16xf32>
    %253 = arith.negf %252 : vector<24x16xf32>
    %254 = math.exp %253 : vector<24x16xf32>
    %cst_67 = arith.constant 1.000000e+00 : f32
    %255 = vector.broadcast %cst_67 : f32 to vector<24x16xf32>
    %256 = arith.addf %255, %254 : vector<24x16xf32>
    %257 = arith.divf %255, %256 : vector<24x16xf32>
    %258 = arith.mulf %249, %190 : vector<24x16xf32>
    %259 = arith.mulf %243, %251 : vector<24x16xf32>
    %260 = arith.addf %258, %259 : vector<24x16xf32>
    %261 = math.tanh %260 : vector<24x16xf32>
    %262 = arith.mulf %257, %261 : vector<24x16xf32>
    %263 = vector.extract_strided_slice %237 {offsets = [0, 0], sizes = [24, 16], strides = [1, 1]} : vector<24x64xf32> to vector<24x16xf32>
    %264 = arith.negf %263 : vector<24x16xf32>
    %265 = math.exp %264 : vector<24x16xf32>
    %cst_68 = arith.constant 1.000000e+00 : f32
    %266 = vector.broadcast %cst_68 : f32 to vector<24x16xf32>
    %267 = arith.addf %266, %265 : vector<24x16xf32>
    %268 = arith.divf %266, %267 : vector<24x16xf32>
    %269 = vector.extract_strided_slice %237 {offsets = [0, 16], sizes = [24, 16], strides = [1, 1]} : vector<24x64xf32> to vector<24x16xf32>
    %270 = arith.negf %269 : vector<24x16xf32>
    %271 = math.exp %270 : vector<24x16xf32>
    %cst_69 = arith.constant 1.000000e+00 : f32
    %272 = vector.broadcast %cst_69 : f32 to vector<24x16xf32>
    %273 = arith.addf %272, %271 : vector<24x16xf32>
    %274 = arith.divf %272, %273 : vector<24x16xf32>
    %275 = vector.extract_strided_slice %237 {offsets = [0, 32], sizes = [24, 16], strides = [1, 1]} : vector<24x64xf32> to vector<24x16xf32>
    %276 = math.tanh %275 : vector<24x16xf32>
    %277 = vector.extract_strided_slice %237 {offsets = [0, 48], sizes = [24, 16], strides = [1, 1]} : vector<24x64xf32> to vector<24x16xf32>
    %278 = arith.negf %277 : vector<24x16xf32>
    %279 = math.exp %278 : vector<24x16xf32>
    %cst_70 = arith.constant 1.000000e+00 : f32
    %280 = vector.broadcast %cst_70 : f32 to vector<24x16xf32>
    %281 = arith.addf %280, %279 : vector<24x16xf32>
    %282 = arith.divf %280, %281 : vector<24x16xf32>
    %283 = arith.mulf %274, %215 : vector<24x16xf32>
    %284 = arith.mulf %268, %276 : vector<24x16xf32>
    %285 = arith.addf %283, %284 : vector<24x16xf32>
    %286 = math.tanh %285 : vector<24x16xf32>
    %287 = arith.mulf %282, %286 : vector<24x16xf32>
    %288 = arith.index_cast %223 : i32 to index
    %c0_71 = arith.constant 0 : index
    %289 = vector.load %arg8[%288, %c0_71] : memref<192x16xf32, #tpu.memory_space<vmem>>, vector<24x16xf32>
    tpu.vector_store %arg8[%288, %c0_71], %262 {strides = array<i32>} : memref<192x16xf32, #tpu.memory_space<vmem>>, vector<24x16xf32>,
    %290 = arith.index_cast %226 : i32 to index
    %c0_72 = arith.constant 0 : index
    %291 = vector.load %arg9[%290, %c0_72] : memref<192x16xf32, #tpu.memory_space<vmem>>, vector<24x16xf32>
    tpu.vector_store %arg9[%290, %c0_72], %287 {strides = array<i32>} : memref<192x16xf32, #tpu.memory_space<vmem>>, vector<24x16xf32>,
    %c4_i32 = arith.constant 4 : i32
    %c24_i32_73 = arith.constant 24 : i32
    %292 = arith.muli %c4_i32, %c24_i32_73 : i32
    %293 = tpu.assume_multiple %292, 8 : i32
    %c7_i32_74 = arith.constant 7 : i32
    %294 = arith.subi %c7_i32_74, %c4_i32 : i32
    %c24_i32_75 = arith.constant 24 : i32
    %295 = arith.muli %294, %c24_i32_75 : i32
    %296 = tpu.assume_multiple %295, 8 : i32
    %297 = tpu.concatenate %262, %287 in 1 : vector<24x16xf32>, vector<24x16xf32> -> vector<24x32xf32>
    %c0_76 = arith.constant 0 : index
    %c0_77 = arith.constant 0 : index
    %298 = vector.load %arg3[%c0_76, %c0_77] : memref<32x128xf32, #tpu.memory_space<vmem>>, vector<32x128xf32>
    %cst_78 = arith.constant dense<0.000000e+00> : vector<24x128xf32>
    %299 = tpu.matmul %297, %298, %cst_78 {dimension_numbers = #tpu.dot_dimension_numbers<[1], [0], [0], [1], [0, 0, 1, 1], [], []>} : vector<24x32xf32>, vector<32x128xf32>, vector<24x128xf32> -> vector<24x128xf32>
    %300 = arith.index_cast %293 : i32 to index
    %c0_79 = arith.constant 0 : index
    %301 = vector.load %arg6[%300, %c0_79] : memref<192x64xf32, #tpu.memory_space<vmem>>, vector<24x64xf32>
    %302 = vector.extract_strided_slice %299 {offsets = [0, 0], sizes = [24, 64], strides = [1, 1]} : vector<24x128xf32> to vector<24x64xf32>
    %303 = arith.addf %301, %302 : vector<24x64xf32>
    %304 = arith.index_cast %296 : i32 to index
    %c0_80 = arith.constant 0 : index
    %305 = vector.load %arg7[%304, %c0_80] : memref<192x64xf32, #tpu.memory_space<vmem>>, vector<24x64xf32>
    %306 = vector.extract_strided_slice %299 {offsets = [0, 64], sizes = [24, 64], strides = [1, 1]} : vector<24x128xf32> to vector<24x64xf32>
    %307 = arith.addf %305, %306 : vector<24x64xf32>
    %308 = vector.extract_strided_slice %303 {offsets = [0, 0], sizes = [24, 16], strides = [1, 1]} : vector<24x64xf32> to vector<24x16xf32>
    %309 = arith.negf %308 : vector<24x16xf32>
    %310 = math.exp %309 : vector<24x16xf32>
    %cst_81 = arith.constant 1.000000e+00 : f32
    %311 = vector.broadcast %cst_81 : f32 to vector<24x16xf32>
    %312 = arith.addf %311, %310 : vector<24x16xf32>
    %313 = arith.divf %311, %312 : vector<24x16xf32>
    %314 = vector.extract_strided_slice %303 {offsets = [0, 16], sizes = [24, 16], strides = [1, 1]} : vector<24x64xf32> to vector<24x16xf32>
    %315 = arith.negf %314 : vector<24x16xf32>
    %316 = math.exp %315 : vector<24x16xf32>
    %cst_82 = arith.constant 1.000000e+00 : f32
    %317 = vector.broadcast %cst_82 : f32 to vector<24x16xf32>
    %318 = arith.addf %317, %316 : vector<24x16xf32>
    %319 = arith.divf %317, %318 : vector<24x16xf32>
    %320 = vector.extract_strided_slice %303 {offsets = [0, 32], sizes = [24, 16], strides = [1, 1]} : vector<24x64xf32> to vector<24x16xf32>
    %321 = math.tanh %320 : vector<24x16xf32>
    %322 = vector.extract_strided_slice %303 {offsets = [0, 48], sizes = [24, 16], strides = [1, 1]} : vector<24x64xf32> to vector<24x16xf32>
    %323 = arith.negf %322 : vector<24x16xf32>
    %324 = math.exp %323 : vector<24x16xf32>
    %cst_83 = arith.constant 1.000000e+00 : f32
    %325 = vector.broadcast %cst_83 : f32 to vector<24x16xf32>
    %326 = arith.addf %325, %324 : vector<24x16xf32>
    %327 = arith.divf %325, %326 : vector<24x16xf32>
    %328 = arith.mulf %319, %260 : vector<24x16xf32>
    %329 = arith.mulf %313, %321 : vector<24x16xf32>
    %330 = arith.addf %328, %329 : vector<24x16xf32>
    %331 = math.tanh %330 : vector<24x16xf32>
    %332 = arith.mulf %327, %331 : vector<24x16xf32>
    %333 = vector.extract_strided_slice %307 {offsets = [0, 0], sizes = [24, 16], strides = [1, 1]} : vector<24x64xf32> to vector<24x16xf32>
    %334 = arith.negf %333 : vector<24x16xf32>
    %335 = math.exp %334 : vector<24x16xf32>
    %cst_84 = arith.constant 1.000000e+00 : f32
    %336 = vector.broadcast %cst_84 : f32 to vector<24x16xf32>
    %337 = arith.addf %336, %335 : vector<24x16xf32>
    %338 = arith.divf %336, %337 : vector<24x16xf32>
    %339 = vector.extract_strided_slice %307 {offsets = [0, 16], sizes = [24, 16], strides = [1, 1]} : vector<24x64xf32> to vector<24x16xf32>
    %340 = arith.negf %339 : vector<24x16xf32>
    %341 = math.exp %340 : vector<24x16xf32>
    %cst_85 = arith.constant 1.000000e+00 : f32
    %342 = vector.broadcast %cst_85 : f32 to vector<24x16xf32>
    %343 = arith.addf %342, %341 : vector<24x16xf32>
    %344 = arith.divf %342, %343 : vector<24x16xf32>
    %345 = vector.extract_strided_slice %307 {offsets = [0, 32], sizes = [24, 16], strides = [1, 1]} : vector<24x64xf32> to vector<24x16xf32>
    %346 = math.tanh %345 : vector<24x16xf32>
    %347 = vector.extract_strided_slice %307 {offsets = [0, 48], sizes = [24, 16], strides = [1, 1]} : vector<24x64xf32> to vector<24x16xf32>
    %348 = arith.negf %347 : vector<24x16xf32>
    %349 = math.exp %348 : vector<24x16xf32>
    %cst_86 = arith.constant 1.000000e+00 : f32
    %350 = vector.broadcast %cst_86 : f32 to vector<24x16xf32>
    %351 = arith.addf %350, %349 : vector<24x16xf32>
    %352 = arith.divf %350, %351 : vector<24x16xf32>
    %353 = arith.mulf %344, %285 : vector<24x16xf32>
    %354 = arith.mulf %338, %346 : vector<24x16xf32>
    %355 = arith.addf %353, %354 : vector<24x16xf32>
    %356 = math.tanh %355 : vector<24x16xf32>
    %357 = arith.mulf %352, %356 : vector<24x16xf32>
    %358 = arith.index_cast %293 : i32 to index
    %c0_87 = arith.constant 0 : index
    %359 = vector.load %arg8[%358, %c0_87] : memref<192x16xf32, #tpu.memory_space<vmem>>, vector<24x16xf32>
    tpu.vector_store %arg8[%358, %c0_87], %332 {strides = array<i32>} : memref<192x16xf32, #tpu.memory_space<vmem>>, vector<24x16xf32>,
    %360 = arith.index_cast %296 : i32 to index
    %c0_88 = arith.constant 0 : index
    %361 = vector.load %arg9[%360, %c0_88] : memref<192x16xf32, #tpu.memory_space<vmem>>, vector<24x16xf32>
    tpu.vector_store %arg9[%360, %c0_88], %357 {strides = array<i32>} : memref<192x16xf32, #tpu.memory_space<vmem>>, vector<24x16xf32>,
    %c5_i32 = arith.constant 5 : i32
    %c24_i32_89 = arith.constant 24 : i32
    %362 = arith.muli %c5_i32, %c24_i32_89 : i32
    %363 = tpu.assume_multiple %362, 8 : i32
    %c7_i32_90 = arith.constant 7 : i32
    %364 = arith.subi %c7_i32_90, %c5_i32 : i32
    %c24_i32_91 = arith.constant 24 : i32
    %365 = arith.muli %364, %c24_i32_91 : i32
    %366 = tpu.assume_multiple %365, 8 : i32
    %367 = tpu.concatenate %332, %357 in 1 : vector<24x16xf32>, vector<24x16xf32> -> vector<24x32xf32>
    %c0_92 = arith.constant 0 : index
    %c0_93 = arith.constant 0 : index
    %368 = vector.load %arg3[%c0_92, %c0_93] : memref<32x128xf32, #tpu.memory_space<vmem>>, vector<32x128xf32>
    %cst_94 = arith.constant dense<0.000000e+00> : vector<24x128xf32>
    %369 = tpu.matmul %367, %368, %cst_94 {dimension_numbers = #tpu.dot_dimension_numbers<[1], [0], [0], [1], [0, 0, 1, 1], [], []>} : vector<24x32xf32>, vector<32x128xf32>, vector<24x128xf32> -> vector<24x128xf32>
    %370 = arith.index_cast %363 : i32 to index
    %c0_95 = arith.constant 0 : index
    %371 = vector.load %arg6[%370, %c0_95] : memref<192x64xf32, #tpu.memory_space<vmem>>, vector<24x64xf32>
    %372 = vector.extract_strided_slice %369 {offsets = [0, 0], sizes = [24, 64], strides = [1, 1]} : vector<24x128xf32> to vector<24x64xf32>
    %373 = arith.addf %371, %372 : vector<24x64xf32>
    %374 = arith.index_cast %366 : i32 to index
    %c0_96 = arith.constant 0 : index
    %375 = vector.load %arg7[%374, %c0_96] : memref<192x64xf32, #tpu.memory_space<vmem>>, vector<24x64xf32>
    %376 = vector.extract_strided_slice %369 {offsets = [0, 64], sizes = [24, 64], strides = [1, 1]} : vector<24x128xf32> to vector<24x64xf32>
    %377 = arith.addf %375, %376 : vector<24x64xf32>
    %378 = vector.extract_strided_slice %373 {offsets = [0, 0], sizes = [24, 16], strides = [1, 1]} : vector<24x64xf32> to vector<24x16xf32>
    %379 = arith.negf %378 : vector<24x16xf32>
    %380 = math.exp %379 : vector<24x16xf32>
    %cst_97 = arith.constant 1.000000e+00 : f32
    %381 = vector.broadcast %cst_97 : f32 to vector<24x16xf32>
    %382 = arith.addf %381, %380 : vector<24x16xf32>
    %383 = arith.divf %381, %382 : vector<24x16xf32>
    %384 = vector.extract_strided_slice %373 {offsets = [0, 16], sizes = [24, 16], strides = [1, 1]} : vector<24x64xf32> to vector<24x16xf32>
    %385 = arith.negf %384 : vector<24x16xf32>
    %386 = math.exp %385 : vector<24x16xf32>
    %cst_98 = arith.constant 1.000000e+00 : f32
    %387 = vector.broadcast %cst_98 : f32 to vector<24x16xf32>
    %388 = arith.addf %387, %386 : vector<24x16xf32>
    %389 = arith.divf %387, %388 : vector<24x16xf32>
    %390 = vector.extract_strided_slice %373 {offsets = [0, 32], sizes = [24, 16], strides = [1, 1]} : vector<24x64xf32> to vector<24x16xf32>
    %391 = math.tanh %390 : vector<24x16xf32>
    %392 = vector.extract_strided_slice %373 {offsets = [0, 48], sizes = [24, 16], strides = [1, 1]} : vector<24x64xf32> to vector<24x16xf32>
    %393 = arith.negf %392 : vector<24x16xf32>
    %394 = math.exp %393 : vector<24x16xf32>
    %cst_99 = arith.constant 1.000000e+00 : f32
    %395 = vector.broadcast %cst_99 : f32 to vector<24x16xf32>
    %396 = arith.addf %395, %394 : vector<24x16xf32>
    %397 = arith.divf %395, %396 : vector<24x16xf32>
    %398 = arith.mulf %389, %330 : vector<24x16xf32>
    %399 = arith.mulf %383, %391 : vector<24x16xf32>
    %400 = arith.addf %398, %399 : vector<24x16xf32>
    %401 = math.tanh %400 : vector<24x16xf32>
    %402 = arith.mulf %397, %401 : vector<24x16xf32>
    %403 = vector.extract_strided_slice %377 {offsets = [0, 0], sizes = [24, 16], strides = [1, 1]} : vector<24x64xf32> to vector<24x16xf32>
    %404 = arith.negf %403 : vector<24x16xf32>
    %405 = math.exp %404 : vector<24x16xf32>
    %cst_100 = arith.constant 1.000000e+00 : f32
    %406 = vector.broadcast %cst_100 : f32 to vector<24x16xf32>
    %407 = arith.addf %406, %405 : vector<24x16xf32>
    %408 = arith.divf %406, %407 : vector<24x16xf32>
    %409 = vector.extract_strided_slice %377 {offsets = [0, 16], sizes = [24, 16], strides = [1, 1]} : vector<24x64xf32> to vector<24x16xf32>
    %410 = arith.negf %409 : vector<24x16xf32>
    %411 = math.exp %410 : vector<24x16xf32>
    %cst_101 = arith.constant 1.000000e+00 : f32
    %412 = vector.broadcast %cst_101 : f32 to vector<24x16xf32>
    %413 = arith.addf %412, %411 : vector<24x16xf32>
    %414 = arith.divf %412, %413 : vector<24x16xf32>
    %415 = vector.extract_strided_slice %377 {offsets = [0, 32], sizes = [24, 16], strides = [1, 1]} : vector<24x64xf32> to vector<24x16xf32>
    %416 = math.tanh %415 : vector<24x16xf32>
    %417 = vector.extract_strided_slice %377 {offsets = [0, 48], sizes = [24, 16], strides = [1, 1]} : vector<24x64xf32> to vector<24x16xf32>
    %418 = arith.negf %417 : vector<24x16xf32>
    %419 = math.exp %418 : vector<24x16xf32>
    %cst_102 = arith.constant 1.000000e+00 : f32
    %420 = vector.broadcast %cst_102 : f32 to vector<24x16xf32>
    %421 = arith.addf %420, %419 : vector<24x16xf32>
    %422 = arith.divf %420, %421 : vector<24x16xf32>
    %423 = arith.mulf %414, %355 : vector<24x16xf32>
    %424 = arith.mulf %408, %416 : vector<24x16xf32>
    %425 = arith.addf %423, %424 : vector<24x16xf32>
    %426 = math.tanh %425 : vector<24x16xf32>
    %427 = arith.mulf %422, %426 : vector<24x16xf32>
    %428 = arith.index_cast %363 : i32 to index
    %c0_103 = arith.constant 0 : index
    %429 = vector.load %arg8[%428, %c0_103] : memref<192x16xf32, #tpu.memory_space<vmem>>, vector<24x16xf32>
    tpu.vector_store %arg8[%428, %c0_103], %402 {strides = array<i32>} : memref<192x16xf32, #tpu.memory_space<vmem>>, vector<24x16xf32>,
    %430 = arith.index_cast %366 : i32 to index
    %c0_104 = arith.constant 0 : index
    %431 = vector.load %arg9[%430, %c0_104] : memref<192x16xf32, #tpu.memory_space<vmem>>, vector<24x16xf32>
    tpu.vector_store %arg9[%430, %c0_104], %427 {strides = array<i32>} : memref<192x16xf32, #tpu.memory_space<vmem>>, vector<24x16xf32>,
    %c6_i32 = arith.constant 6 : i32
    %c24_i32_105 = arith.constant 24 : i32
    %432 = arith.muli %c6_i32, %c24_i32_105 : i32
    %433 = tpu.assume_multiple %432, 8 : i32
    %c7_i32_106 = arith.constant 7 : i32
    %434 = arith.subi %c7_i32_106, %c6_i32 : i32
    %c24_i32_107 = arith.constant 24 : i32
    %435 = arith.muli %434, %c24_i32_107 : i32
    %436 = tpu.assume_multiple %435, 8 : i32
    %437 = tpu.concatenate %402, %427 in 1 : vector<24x16xf32>, vector<24x16xf32> -> vector<24x32xf32>
    %c0_108 = arith.constant 0 : index
    %c0_109 = arith.constant 0 : index
    %438 = vector.load %arg3[%c0_108, %c0_109] : memref<32x128xf32, #tpu.memory_space<vmem>>, vector<32x128xf32>
    %cst_110 = arith.constant dense<0.000000e+00> : vector<24x128xf32>
    %439 = tpu.matmul %437, %438, %cst_110 {dimension_numbers = #tpu.dot_dimension_numbers<[1], [0], [0], [1], [0, 0, 1, 1], [], []>} : vector<24x32xf32>, vector<32x128xf32>, vector<24x128xf32> -> vector<24x128xf32>
    %440 = arith.index_cast %433 : i32 to index
    %c0_111 = arith.constant 0 : index
    %441 = vector.load %arg6[%440, %c0_111] : memref<192x64xf32, #tpu.memory_space<vmem>>, vector<24x64xf32>
    %442 = vector.extract_strided_slice %439 {offsets = [0, 0], sizes = [24, 64], strides = [1, 1]} : vector<24x128xf32> to vector<24x64xf32>
    %443 = arith.addf %441, %442 : vector<24x64xf32>
    %444 = arith.index_cast %436 : i32 to index
    %c0_112 = arith.constant 0 : index
    %445 = vector.load %arg7[%444, %c0_112] : memref<192x64xf32, #tpu.memory_space<vmem>>, vector<24x64xf32>
    %446 = vector.extract_strided_slice %439 {offsets = [0, 64], sizes = [24, 64], strides = [1, 1]} : vector<24x128xf32> to vector<24x64xf32>
    %447 = arith.addf %445, %446 : vector<24x64xf32>
    %448 = vector.extract_strided_slice %443 {offsets = [0, 0], sizes = [24, 16], strides = [1, 1]} : vector<24x64xf32> to vector<24x16xf32>
    %449 = arith.negf %448 : vector<24x16xf32>
    %450 = math.exp %449 : vector<24x16xf32>
    %cst_113 = arith.constant 1.000000e+00 : f32
    %451 = vector.broadcast %cst_113 : f32 to vector<24x16xf32>
    %452 = arith.addf %451, %450 : vector<24x16xf32>
    %453 = arith.divf %451, %452 : vector<24x16xf32>
    %454 = vector.extract_strided_slice %443 {offsets = [0, 16], sizes = [24, 16], strides = [1, 1]} : vector<24x64xf32> to vector<24x16xf32>
    %455 = arith.negf %454 : vector<24x16xf32>
    %456 = math.exp %455 : vector<24x16xf32>
    %cst_114 = arith.constant 1.000000e+00 : f32
    %457 = vector.broadcast %cst_114 : f32 to vector<24x16xf32>
    %458 = arith.addf %457, %456 : vector<24x16xf32>
    %459 = arith.divf %457, %458 : vector<24x16xf32>
    %460 = vector.extract_strided_slice %443 {offsets = [0, 32], sizes = [24, 16], strides = [1, 1]} : vector<24x64xf32> to vector<24x16xf32>
    %461 = math.tanh %460 : vector<24x16xf32>
    %462 = vector.extract_strided_slice %443 {offsets = [0, 48], sizes = [24, 16], strides = [1, 1]} : vector<24x64xf32> to vector<24x16xf32>
    %463 = arith.negf %462 : vector<24x16xf32>
    %464 = math.exp %463 : vector<24x16xf32>
    %cst_115 = arith.constant 1.000000e+00 : f32
    %465 = vector.broadcast %cst_115 : f32 to vector<24x16xf32>
    %466 = arith.addf %465, %464 : vector<24x16xf32>
    %467 = arith.divf %465, %466 : vector<24x16xf32>
    %468 = arith.mulf %459, %400 : vector<24x16xf32>
    %469 = arith.mulf %453, %461 : vector<24x16xf32>
    %470 = arith.addf %468, %469 : vector<24x16xf32>
    %471 = math.tanh %470 : vector<24x16xf32>
    %472 = arith.mulf %467, %471 : vector<24x16xf32>
    %473 = vector.extract_strided_slice %447 {offsets = [0, 0], sizes = [24, 16], strides = [1, 1]} : vector<24x64xf32> to vector<24x16xf32>
    %474 = arith.negf %473 : vector<24x16xf32>
    %475 = math.exp %474 : vector<24x16xf32>
    %cst_116 = arith.constant 1.000000e+00 : f32
    %476 = vector.broadcast %cst_116 : f32 to vector<24x16xf32>
    %477 = arith.addf %476, %475 : vector<24x16xf32>
    %478 = arith.divf %476, %477 : vector<24x16xf32>
    %479 = vector.extract_strided_slice %447 {offsets = [0, 16], sizes = [24, 16], strides = [1, 1]} : vector<24x64xf32> to vector<24x16xf32>
    %480 = arith.negf %479 : vector<24x16xf32>
    %481 = math.exp %480 : vector<24x16xf32>
    %cst_117 = arith.constant 1.000000e+00 : f32
    %482 = vector.broadcast %cst_117 : f32 to vector<24x16xf32>
    %483 = arith.addf %482, %481 : vector<24x16xf32>
    %484 = arith.divf %482, %483 : vector<24x16xf32>
    %485 = vector.extract_strided_slice %447 {offsets = [0, 32], sizes = [24, 16], strides = [1, 1]} : vector<24x64xf32> to vector<24x16xf32>
    %486 = math.tanh %485 : vector<24x16xf32>
    %487 = vector.extract_strided_slice %447 {offsets = [0, 48], sizes = [24, 16], strides = [1, 1]} : vector<24x64xf32> to vector<24x16xf32>
    %488 = arith.negf %487 : vector<24x16xf32>
    %489 = math.exp %488 : vector<24x16xf32>
    %cst_118 = arith.constant 1.000000e+00 : f32
    %490 = vector.broadcast %cst_118 : f32 to vector<24x16xf32>
    %491 = arith.addf %490, %489 : vector<24x16xf32>
    %492 = arith.divf %490, %491 : vector<24x16xf32>
    %493 = arith.mulf %484, %425 : vector<24x16xf32>
    %494 = arith.mulf %478, %486 : vector<24x16xf32>
    %495 = arith.addf %493, %494 : vector<24x16xf32>
    %496 = math.tanh %495 : vector<24x16xf32>
    %497 = arith.mulf %492, %496 : vector<24x16xf32>
    %498 = arith.index_cast %433 : i32 to index
    %c0_119 = arith.constant 0 : index
    %499 = vector.load %arg8[%498, %c0_119] : memref<192x16xf32, #tpu.memory_space<vmem>>, vector<24x16xf32>
    tpu.vector_store %arg8[%498, %c0_119], %472 {strides = array<i32>} : memref<192x16xf32, #tpu.memory_space<vmem>>, vector<24x16xf32>,
    %500 = arith.index_cast %436 : i32 to index
    %c0_120 = arith.constant 0 : index
    %501 = vector.load %arg9[%500, %c0_120] : memref<192x16xf32, #tpu.memory_space<vmem>>, vector<24x16xf32>
    tpu.vector_store %arg9[%500, %c0_120], %497 {strides = array<i32>} : memref<192x16xf32, #tpu.memory_space<vmem>>, vector<24x16xf32>,
    %c7_i32_121 = arith.constant 7 : i32
    %c24_i32_122 = arith.constant 24 : i32
    %502 = arith.muli %c7_i32_121, %c24_i32_122 : i32
    %503 = tpu.assume_multiple %502, 8 : i32
    %c7_i32_123 = arith.constant 7 : i32
    %504 = arith.subi %c7_i32_123, %c7_i32_121 : i32
    %c24_i32_124 = arith.constant 24 : i32
    %505 = arith.muli %504, %c24_i32_124 : i32
    %506 = tpu.assume_multiple %505, 8 : i32
    %507 = tpu.concatenate %472, %497 in 1 : vector<24x16xf32>, vector<24x16xf32> -> vector<24x32xf32>
    %c0_125 = arith.constant 0 : index
    %c0_126 = arith.constant 0 : index
    %508 = vector.load %arg3[%c0_125, %c0_126] : memref<32x128xf32, #tpu.memory_space<vmem>>, vector<32x128xf32>
    %cst_127 = arith.constant dense<0.000000e+00> : vector<24x128xf32>
    %509 = tpu.matmul %507, %508, %cst_127 {dimension_numbers = #tpu.dot_dimension_numbers<[1], [0], [0], [1], [0, 0, 1, 1], [], []>} : vector<24x32xf32>, vector<32x128xf32>, vector<24x128xf32> -> vector<24x128xf32>
    %510 = arith.index_cast %503 : i32 to index
    %c0_128 = arith.constant 0 : index
    %511 = vector.load %arg6[%510, %c0_128] : memref<192x64xf32, #tpu.memory_space<vmem>>, vector<24x64xf32>
    %512 = vector.extract_strided_slice %509 {offsets = [0, 0], sizes = [24, 64], strides = [1, 1]} : vector<24x128xf32> to vector<24x64xf32>
    %513 = arith.addf %511, %512 : vector<24x64xf32>
    %514 = arith.index_cast %506 : i32 to index
    %c0_129 = arith.constant 0 : index
    %515 = vector.load %arg7[%514, %c0_129] : memref<192x64xf32, #tpu.memory_space<vmem>>, vector<24x64xf32>
    %516 = vector.extract_strided_slice %509 {offsets = [0, 64], sizes = [24, 64], strides = [1, 1]} : vector<24x128xf32> to vector<24x64xf32>
    %517 = arith.addf %515, %516 : vector<24x64xf32>
    %518 = vector.extract_strided_slice %513 {offsets = [0, 0], sizes = [24, 16], strides = [1, 1]} : vector<24x64xf32> to vector<24x16xf32>
    %519 = arith.negf %518 : vector<24x16xf32>
    %520 = math.exp %519 : vector<24x16xf32>
    %cst_130 = arith.constant 1.000000e+00 : f32
    %521 = vector.broadcast %cst_130 : f32 to vector<24x16xf32>
    %522 = arith.addf %521, %520 : vector<24x16xf32>
    %523 = arith.divf %521, %522 : vector<24x16xf32>
    %524 = vector.extract_strided_slice %513 {offsets = [0, 16], sizes = [24, 16], strides = [1, 1]} : vector<24x64xf32> to vector<24x16xf32>
    %525 = arith.negf %524 : vector<24x16xf32>
    %526 = math.exp %525 : vector<24x16xf32>
    %cst_131 = arith.constant 1.000000e+00 : f32
    %527 = vector.broadcast %cst_131 : f32 to vector<24x16xf32>
    %528 = arith.addf %527, %526 : vector<24x16xf32>
    %529 = arith.divf %527, %528 : vector<24x16xf32>
    %530 = vector.extract_strided_slice %513 {offsets = [0, 32], sizes = [24, 16], strides = [1, 1]} : vector<24x64xf32> to vector<24x16xf32>
    %531 = math.tanh %530 : vector<24x16xf32>
    %532 = vector.extract_strided_slice %513 {offsets = [0, 48], sizes = [24, 16], strides = [1, 1]} : vector<24x64xf32> to vector<24x16xf32>
    %533 = arith.negf %532 : vector<24x16xf32>
    %534 = math.exp %533 : vector<24x16xf32>
    %cst_132 = arith.constant 1.000000e+00 : f32
    %535 = vector.broadcast %cst_132 : f32 to vector<24x16xf32>
    %536 = arith.addf %535, %534 : vector<24x16xf32>
    %537 = arith.divf %535, %536 : vector<24x16xf32>
    %538 = arith.mulf %529, %470 : vector<24x16xf32>
    %539 = arith.mulf %523, %531 : vector<24x16xf32>
    %540 = arith.addf %538, %539 : vector<24x16xf32>
    %541 = math.tanh %540 : vector<24x16xf32>
    %542 = arith.mulf %537, %541 : vector<24x16xf32>
    %543 = vector.extract_strided_slice %517 {offsets = [0, 0], sizes = [24, 16], strides = [1, 1]} : vector<24x64xf32> to vector<24x16xf32>
    %544 = arith.negf %543 : vector<24x16xf32>
    %545 = math.exp %544 : vector<24x16xf32>
    %cst_133 = arith.constant 1.000000e+00 : f32
    %546 = vector.broadcast %cst_133 : f32 to vector<24x16xf32>
    %547 = arith.addf %546, %545 : vector<24x16xf32>
    %548 = arith.divf %546, %547 : vector<24x16xf32>
    %549 = vector.extract_strided_slice %517 {offsets = [0, 16], sizes = [24, 16], strides = [1, 1]} : vector<24x64xf32> to vector<24x16xf32>
    %550 = arith.negf %549 : vector<24x16xf32>
    %551 = math.exp %550 : vector<24x16xf32>
    %cst_134 = arith.constant 1.000000e+00 : f32
    %552 = vector.broadcast %cst_134 : f32 to vector<24x16xf32>
    %553 = arith.addf %552, %551 : vector<24x16xf32>
    %554 = arith.divf %552, %553 : vector<24x16xf32>
    %555 = vector.extract_strided_slice %517 {offsets = [0, 32], sizes = [24, 16], strides = [1, 1]} : vector<24x64xf32> to vector<24x16xf32>
    %556 = math.tanh %555 : vector<24x16xf32>
    %557 = vector.extract_strided_slice %517 {offsets = [0, 48], sizes = [24, 16], strides = [1, 1]} : vector<24x64xf32> to vector<24x16xf32>
    %558 = arith.negf %557 : vector<24x16xf32>
    %559 = math.exp %558 : vector<24x16xf32>
    %cst_135 = arith.constant 1.000000e+00 : f32
    %560 = vector.broadcast %cst_135 : f32 to vector<24x16xf32>
    %561 = arith.addf %560, %559 : vector<24x16xf32>
    %562 = arith.divf %560, %561 : vector<24x16xf32>
    %563 = arith.mulf %554, %495 : vector<24x16xf32>
    %564 = arith.mulf %548, %556 : vector<24x16xf32>
    %565 = arith.addf %563, %564 : vector<24x16xf32>
    %566 = math.tanh %565 : vector<24x16xf32>
    %567 = arith.mulf %562, %566 : vector<24x16xf32>
    %568 = arith.index_cast %503 : i32 to index
    %c0_136 = arith.constant 0 : index
    %569 = vector.load %arg8[%568, %c0_136] : memref<192x16xf32, #tpu.memory_space<vmem>>, vector<24x16xf32>
    tpu.vector_store %arg8[%568, %c0_136], %542 {strides = array<i32>} : memref<192x16xf32, #tpu.memory_space<vmem>>, vector<24x16xf32>,
    %570 = arith.index_cast %506 : i32 to index
    %c0_137 = arith.constant 0 : index
    %571 = vector.load %arg9[%570, %c0_137] : memref<192x16xf32, #tpu.memory_space<vmem>>, vector<24x16xf32>
    tpu.vector_store %arg9[%570, %c0_137], %567 {strides = array<i32>} : memref<192x16xf32, #tpu.memory_space<vmem>>, vector<24x16xf32>,
    %c8_i32 = arith.constant 8 : i32
    %c0_138 = arith.constant 0 : index
    %c0_139 = arith.constant 0 : index
    %c0_140 = arith.constant 0 : index
    %572 = vector.load %arg1[%c0_138, %c0_139, %c0_140] : memref<8x24x32xf32, #tpu.memory_space<vmem>>, vector<8x24x32xf32>
    %573 = vector.shape_cast %572 : vector<8x24x32xf32> to vector<192x32xf32>
    %c0_141 = arith.constant 0 : index
    %c0_142 = arith.constant 0 : index
    %574 = vector.load %arg8[%c0_141, %c0_142] : memref<192x16xf32, #tpu.memory_space<vmem>>, vector<192x16xf32>
    %575 = vector.extract_strided_slice %573 {offsets = [0, 0], sizes = [192, 16], strides = [1, 1]} : vector<192x32xf32> to vector<192x16xf32>
    %576 = arith.addf %574, %575 : vector<192x16xf32>
    %c0_143 = arith.constant 0 : index
    %c0_144 = arith.constant 0 : index
    %577 = vector.load %arg9[%c0_143, %c0_144] : memref<192x16xf32, #tpu.memory_space<vmem>>, vector<192x16xf32>
    %578 = vector.extract_strided_slice %573 {offsets = [0, 16], sizes = [192, 16], strides = [1, 1]} : vector<192x32xf32> to vector<192x16xf32>
    %579 = arith.addf %577, %578 : vector<192x16xf32>
    %580 = arith.mulf %576, %576 : vector<192x16xf32>
    %cst_145 = arith.constant dense<0.000000e+00> : vector<192xf32>
    %581 = vector.multi_reduction <add>, %580, %cst_145 [1] : vector<192x16xf32> to vector<192xf32>
    %582 = vector.shape_cast %581 : vector<192xf32> to vector<192x1xf32>
    %583 = arith.mulf %579, %579 : vector<192x16xf32>
    %cst_146 = arith.constant dense<0.000000e+00> : vector<192xf32>
    %584 = vector.multi_reduction <add>, %583, %cst_146 [1] : vector<192x16xf32> to vector<192xf32>
    %585 = vector.shape_cast %584 : vector<192xf32> to vector<192x1xf32>
    %586 = arith.addf %582, %585 : vector<192x1xf32>
    %cst_147 = arith.constant 3.200000e+01 : f32
    %587 = vector.broadcast %cst_147 : f32 to vector<192x1xf32>
    %588 = arith.divf %586, %587 : vector<192x1xf32>
    %cst_148 = arith.constant 2.500000e-01 : f32
    %589 = vector.broadcast %cst_148 : f32 to vector<192x1xf32>
    %590 = arith.addf %588, %589 : vector<192x1xf32>
    %591 = math.rsqrt %590 : vector<192x1xf32>
    %592 = vector.broadcast %591 : vector<192x1xf32> to vector<192x16xf32>
    %593 = arith.mulf %576, %592 : vector<192x16xf32>
    %594 = vector.broadcast %591 : vector<192x1xf32> to vector<192x16xf32>
    %595 = arith.mulf %579, %594 : vector<192x16xf32>
    %596 = tpu.concatenate %593, %595 in 1 : vector<192x16xf32>, vector<192x16xf32> -> vector<192x32xf32>
    %597 = vector.shape_cast %596 : vector<192x32xf32> to vector<8x24x32xf32>
    %c0_149 = arith.constant 0 : index
    %c0_150 = arith.constant 0 : index
    %c0_151 = arith.constant 0 : index
    %598 = vector.load %arg5[%c0_149, %c0_150, %c0_151] : memref<8x24x32xf32, #tpu.memory_space<vmem>>, vector<8x24x32xf32>
    tpu.vector_store %arg5[%c0_149, %c0_150, %c0_151], %597 {strides = array<i32>} : memref<8x24x32xf32, #tpu.memory_space<vmem>>, vector<8x24x32xf32>,
    return
  }
  func.func @transform_0(%arg0: i32) -> (i32, i32, i32) {
    %c0_i32 = arith.constant 0 : i32
    %c0_i32_0 = arith.constant 0 : i32
    %c0_i32_1 = arith.constant 0 : i32
    return %c0_i32, %arg0, %c0_i32_0 : i32, i32, i32
  }
  func.func @transform_1(%arg0: i32) -> (i32, i32) {
    %c0_i32 = arith.constant 0 : i32
    %c0_i32_0 = arith.constant 0 : i32
    %c0_i32_1 = arith.constant 0 : i32
    return %c0_i32, %c0_i32_0 : i32, i32
  }
  func.func @transform_2(%arg0: i32) -> (i32, i32) {
    %c0_i32 = arith.constant 0 : i32
    %c0_i32_0 = arith.constant 0 : i32
    %c0_i32_1 = arith.constant 0 : i32
    return %c0_i32, %c0_i32_0 : i32, i32
  }
  func.func @transform_3(%arg0: i32) -> (i32, i32) {
    %c0_i32 = arith.constant 0 : i32
    %c0_i32_0 = arith.constant 0 : i32
    %c0_i32_1 = arith.constant 0 : i32
    return %c0_i32, %c0_i32_0 : i32, i32
  }
  func.func @transform_4(%arg0: i32) -> (i32, i32, i32) {
    %c0_i32 = arith.constant 0 : i32
    %c0_i32_0 = arith.constant 0 : i32
    %c0_i32_1 = arith.constant 0 : i32
    return %c0_i32, %arg0, %c0_i32_0 : i32, i32, i32
  }
}

module attributes {stable_mosaic.version = 11 : i64} {
  func.func @lstm_res_norm_kernel(%arg0: i32, %arg1: memref<10x16x32xf32, #tpu.memory_space<vmem>>, %arg2: memref<32x128xf32, #tpu.memory_space<vmem>>, %arg3: memref<32x128xf32, #tpu.memory_space<vmem>>, %arg4: memref<1x128xf32, #tpu.memory_space<vmem>>, %arg5: memref<10x16x32xf32, #tpu.memory_space<vmem>>, %arg6: memref<160x128xf32, #tpu.memory_space<vmem>>, %arg7: memref<160x32xf32, #tpu.memory_space<vmem>>) attributes {dimension_semantics = [#tpu.dimension_semantics<parallel>], iteration_bounds = array<i64: 1>, scalar_prefetch = 0 : i64, scratch_operands = 2 : i64, tpu.core_type = #tpu.core_type<tc>, window_params = [{transform_indices = @transform_0, window_bounds = array<i64: 10, 16, 32>}, {pipeline_mode = #tpu.pipeline_mode<synchronous>, transform_indices = @transform_1, window_bounds = array<i64: 32, 128>}, {pipeline_mode = #tpu.pipeline_mode<synchronous>, transform_indices = @transform_2, window_bounds = array<i64: 32, 128>}, {pipeline_mode = #tpu.pipeline_mode<synchronous>, transform_indices = @transform_3, window_bounds = array<i64: 1, 128>}, {transform_indices = @transform_4, window_bounds = array<i64: 10, 16, 32>}]} {
    %c0 = arith.constant 0 : index
    %c0_0 = arith.constant 0 : index
    %c0_1 = arith.constant 0 : index
    %0 = vector.load %arg1[%c0, %c0_0, %c0_1] : memref<10x16x32xf32, #tpu.memory_space<vmem>>, vector<10x16x32xf32>
    %1 = vector.shape_cast %0 : vector<10x16x32xf32> to vector<160x32xf32>
    %c0_2 = arith.constant 0 : index
    %c0_3 = arith.constant 0 : index
    %2 = vector.load %arg2[%c0_2, %c0_3] : memref<32x128xf32, #tpu.memory_space<vmem>>, vector<32x128xf32>
    %cst = arith.constant dense<0.000000e+00> : vector<160x128xf32>
    %3 = tpu.matmul %1, %2, %cst {dimension_numbers = #tpu.dot_dimension_numbers<[1], [0], [0], [1], [0, 0, 1, 1], [], []>} : vector<160x32xf32>, vector<32x128xf32>, vector<160x128xf32> -> vector<160x128xf32>
    %c0_4 = arith.constant 0 : index
    %c0_5 = arith.constant 0 : index
    %4 = vector.load %arg4[%c0_4, %c0_5] : memref<1x128xf32, #tpu.memory_space<vmem>>, vector<1x128xf32>
    %5 = vector.broadcast %4 : vector<1x128xf32> to vector<160x128xf32>
    %6 = arith.addf %3, %5 : vector<160x128xf32>
    %c0_6 = arith.constant 0 : index
    %c0_7 = arith.constant 0 : index
    %7 = vector.load %arg6[%c0_6, %c0_7] : memref<160x128xf32, #tpu.memory_space<vmem>>, vector<160x128xf32>
    tpu.vector_store %arg6[%c0_6, %c0_7], %6 {strides = array<i32>} : memref<160x128xf32, #tpu.memory_space<vmem>>, vector<160x128xf32>,
    %cst_8 = arith.constant 0.000000e+00 : f32
    %8 = vector.broadcast %cst_8 : f32 to vector<16x32xf32>
    %c0_i32 = arith.constant 0 : i32
    %c16_i32 = arith.constant 16 : i32
    %9 = arith.muli %c0_i32, %c16_i32 : i32
    %10 = tpu.assume_multiple %9, 8 : i32
    %11 = arith.index_cast %10 : i32 to index
    %c0_9 = arith.constant 0 : index
    %12 = vector.load %arg6[%11, %c0_9] : memref<160x128xf32, #tpu.memory_space<vmem>>, vector<16x128xf32>
    %c0_10 = arith.constant 0 : index
    %c0_11 = arith.constant 0 : index
    %13 = vector.load %arg3[%c0_10, %c0_11] : memref<32x128xf32, #tpu.memory_space<vmem>>, vector<32x128xf32>
    %cst_12 = arith.constant dense<0.000000e+00> : vector<16x128xf32>
    %14 = tpu.matmul %8, %13, %cst_12 {dimension_numbers = #tpu.dot_dimension_numbers<[1], [0], [0], [1], [0, 0, 1, 1], [], []>} : vector<16x32xf32>, vector<32x128xf32>, vector<16x128xf32> -> vector<16x128xf32>
    %15 = arith.addf %12, %14 : vector<16x128xf32>
    %16 = vector.extract_strided_slice %15 {offsets = [0, 0], sizes = [16, 32], strides = [1, 1]} : vector<16x128xf32> to vector<16x32xf32>
    %17 = arith.negf %16 : vector<16x32xf32>
    %18 = math.exp %17 : vector<16x32xf32>
    %cst_13 = arith.constant 1.000000e+00 : f32
    %19 = vector.broadcast %cst_13 : f32 to vector<16x32xf32>
    %20 = arith.addf %19, %18 : vector<16x32xf32>
    %21 = arith.divf %19, %20 : vector<16x32xf32>
    %22 = vector.extract_strided_slice %15 {offsets = [0, 32], sizes = [16, 32], strides = [1, 1]} : vector<16x128xf32> to vector<16x32xf32>
    %23 = arith.negf %22 : vector<16x32xf32>
    %24 = math.exp %23 : vector<16x32xf32>
    %cst_14 = arith.constant 1.000000e+00 : f32
    %25 = vector.broadcast %cst_14 : f32 to vector<16x32xf32>
    %26 = arith.addf %25, %24 : vector<16x32xf32>
    %27 = arith.divf %25, %26 : vector<16x32xf32>
    %28 = vector.extract_strided_slice %15 {offsets = [0, 64], sizes = [16, 32], strides = [1, 1]} : vector<16x128xf32> to vector<16x32xf32>
    %29 = math.tanh %28 : vector<16x32xf32>
    %30 = vector.extract_strided_slice %15 {offsets = [0, 96], sizes = [16, 32], strides = [1, 1]} : vector<16x128xf32> to vector<16x32xf32>
    %31 = arith.negf %30 : vector<16x32xf32>
    %32 = math.exp %31 : vector<16x32xf32>
    %cst_15 = arith.constant 1.000000e+00 : f32
    %33 = vector.broadcast %cst_15 : f32 to vector<16x32xf32>
    %34 = arith.addf %33, %32 : vector<16x32xf32>
    %35 = arith.divf %33, %34 : vector<16x32xf32>
    %36 = arith.mulf %27, %8 : vector<16x32xf32>
    %37 = arith.mulf %21, %29 : vector<16x32xf32>
    %38 = arith.addf %36, %37 : vector<16x32xf32>
    %39 = math.tanh %38 : vector<16x32xf32>
    %40 = arith.mulf %35, %39 : vector<16x32xf32>
    %41 = arith.index_cast %10 : i32 to index
    %c0_16 = arith.constant 0 : index
    %42 = vector.load %arg7[%41, %c0_16] : memref<160x32xf32, #tpu.memory_space<vmem>>, vector<16x32xf32>
    tpu.vector_store %arg7[%41, %c0_16], %40 {strides = array<i32>} : memref<160x32xf32, #tpu.memory_space<vmem>>, vector<16x32xf32>,
    %c1_i32 = arith.constant 1 : i32
    %c16_i32_17 = arith.constant 16 : i32
    %43 = arith.muli %c1_i32, %c16_i32_17 : i32
    %44 = tpu.assume_multiple %43, 8 : i32
    %45 = arith.index_cast %44 : i32 to index
    %c0_18 = arith.constant 0 : index
    %46 = vector.load %arg6[%45, %c0_18] : memref<160x128xf32, #tpu.memory_space<vmem>>, vector<16x128xf32>
    %c0_19 = arith.constant 0 : index
    %c0_20 = arith.constant 0 : index
    %47 = vector.load %arg3[%c0_19, %c0_20] : memref<32x128xf32, #tpu.memory_space<vmem>>, vector<32x128xf32>
    %cst_21 = arith.constant dense<0.000000e+00> : vector<16x128xf32>
    %48 = tpu.matmul %40, %47, %cst_21 {dimension_numbers = #tpu.dot_dimension_numbers<[1], [0], [0], [1], [0, 0, 1, 1], [], []>} : vector<16x32xf32>, vector<32x128xf32>, vector<16x128xf32> -> vector<16x128xf32>
    %49 = arith.addf %46, %48 : vector<16x128xf32>
    %50 = vector.extract_strided_slice %49 {offsets = [0, 0], sizes = [16, 32], strides = [1, 1]} : vector<16x128xf32> to vector<16x32xf32>
    %51 = arith.negf %50 : vector<16x32xf32>
    %52 = math.exp %51 : vector<16x32xf32>
    %cst_22 = arith.constant 1.000000e+00 : f32
    %53 = vector.broadcast %cst_22 : f32 to vector<16x32xf32>
    %54 = arith.addf %53, %52 : vector<16x32xf32>
    %55 = arith.divf %53, %54 : vector<16x32xf32>
    %56 = vector.extract_strided_slice %49 {offsets = [0, 32], sizes = [16, 32], strides = [1, 1]} : vector<16x128xf32> to vector<16x32xf32>
    %57 = arith.negf %56 : vector<16x32xf32>
    %58 = math.exp %57 : vector<16x32xf32>
    %cst_23 = arith.constant 1.000000e+00 : f32
    %59 = vector.broadcast %cst_23 : f32 to vector<16x32xf32>
    %60 = arith.addf %59, %58 : vector<16x32xf32>
    %61 = arith.divf %59, %60 : vector<16x32xf32>
    %62 = vector.extract_strided_slice %49 {offsets = [0, 64], sizes = [16, 32], strides = [1, 1]} : vector<16x128xf32> to vector<16x32xf32>
    %63 = math.tanh %62 : vector<16x32xf32>
    %64 = vector.extract_strided_slice %49 {offsets = [0, 96], sizes = [16, 32], strides = [1, 1]} : vector<16x128xf32> to vector<16x32xf32>
    %65 = arith.negf %64 : vector<16x32xf32>
    %66 = math.exp %65 : vector<16x32xf32>
    %cst_24 = arith.constant 1.000000e+00 : f32
    %67 = vector.broadcast %cst_24 : f32 to vector<16x32xf32>
    %68 = arith.addf %67, %66 : vector<16x32xf32>
    %69 = arith.divf %67, %68 : vector<16x32xf32>
    %70 = arith.mulf %61, %38 : vector<16x32xf32>
    %71 = arith.mulf %55, %63 : vector<16x32xf32>
    %72 = arith.addf %70, %71 : vector<16x32xf32>
    %73 = math.tanh %72 : vector<16x32xf32>
    %74 = arith.mulf %69, %73 : vector<16x32xf32>
    %75 = arith.index_cast %44 : i32 to index
    %c0_25 = arith.constant 0 : index
    %76 = vector.load %arg7[%75, %c0_25] : memref<160x32xf32, #tpu.memory_space<vmem>>, vector<16x32xf32>
    tpu.vector_store %arg7[%75, %c0_25], %74 {strides = array<i32>} : memref<160x32xf32, #tpu.memory_space<vmem>>, vector<16x32xf32>,
    %c2_i32 = arith.constant 2 : i32
    %c16_i32_26 = arith.constant 16 : i32
    %77 = arith.muli %c2_i32, %c16_i32_26 : i32
    %78 = tpu.assume_multiple %77, 8 : i32
    %79 = arith.index_cast %78 : i32 to index
    %c0_27 = arith.constant 0 : index
    %80 = vector.load %arg6[%79, %c0_27] : memref<160x128xf32, #tpu.memory_space<vmem>>, vector<16x128xf32>
    %c0_28 = arith.constant 0 : index
    %c0_29 = arith.constant 0 : index
    %81 = vector.load %arg3[%c0_28, %c0_29] : memref<32x128xf32, #tpu.memory_space<vmem>>, vector<32x128xf32>
    %cst_30 = arith.constant dense<0.000000e+00> : vector<16x128xf32>
    %82 = tpu.matmul %74, %81, %cst_30 {dimension_numbers = #tpu.dot_dimension_numbers<[1], [0], [0], [1], [0, 0, 1, 1], [], []>} : vector<16x32xf32>, vector<32x128xf32>, vector<16x128xf32> -> vector<16x128xf32>
    %83 = arith.addf %80, %82 : vector<16x128xf32>
    %84 = vector.extract_strided_slice %83 {offsets = [0, 0], sizes = [16, 32], strides = [1, 1]} : vector<16x128xf32> to vector<16x32xf32>
    %85 = arith.negf %84 : vector<16x32xf32>
    %86 = math.exp %85 : vector<16x32xf32>
    %cst_31 = arith.constant 1.000000e+00 : f32
    %87 = vector.broadcast %cst_31 : f32 to vector<16x32xf32>
    %88 = arith.addf %87, %86 : vector<16x32xf32>
    %89 = arith.divf %87, %88 : vector<16x32xf32>
    %90 = vector.extract_strided_slice %83 {offsets = [0, 32], sizes = [16, 32], strides = [1, 1]} : vector<16x128xf32> to vector<16x32xf32>
    %91 = arith.negf %90 : vector<16x32xf32>
    %92 = math.exp %91 : vector<16x32xf32>
    %cst_32 = arith.constant 1.000000e+00 : f32
    %93 = vector.broadcast %cst_32 : f32 to vector<16x32xf32>
    %94 = arith.addf %93, %92 : vector<16x32xf32>
    %95 = arith.divf %93, %94 : vector<16x32xf32>
    %96 = vector.extract_strided_slice %83 {offsets = [0, 64], sizes = [16, 32], strides = [1, 1]} : vector<16x128xf32> to vector<16x32xf32>
    %97 = math.tanh %96 : vector<16x32xf32>
    %98 = vector.extract_strided_slice %83 {offsets = [0, 96], sizes = [16, 32], strides = [1, 1]} : vector<16x128xf32> to vector<16x32xf32>
    %99 = arith.negf %98 : vector<16x32xf32>
    %100 = math.exp %99 : vector<16x32xf32>
    %cst_33 = arith.constant 1.000000e+00 : f32
    %101 = vector.broadcast %cst_33 : f32 to vector<16x32xf32>
    %102 = arith.addf %101, %100 : vector<16x32xf32>
    %103 = arith.divf %101, %102 : vector<16x32xf32>
    %104 = arith.mulf %95, %72 : vector<16x32xf32>
    %105 = arith.mulf %89, %97 : vector<16x32xf32>
    %106 = arith.addf %104, %105 : vector<16x32xf32>
    %107 = math.tanh %106 : vector<16x32xf32>
    %108 = arith.mulf %103, %107 : vector<16x32xf32>
    %109 = arith.index_cast %78 : i32 to index
    %c0_34 = arith.constant 0 : index
    %110 = vector.load %arg7[%109, %c0_34] : memref<160x32xf32, #tpu.memory_space<vmem>>, vector<16x32xf32>
    tpu.vector_store %arg7[%109, %c0_34], %108 {strides = array<i32>} : memref<160x32xf32, #tpu.memory_space<vmem>>, vector<16x32xf32>,
    %c3_i32 = arith.constant 3 : i32
    %c16_i32_35 = arith.constant 16 : i32
    %111 = arith.muli %c3_i32, %c16_i32_35 : i32
    %112 = tpu.assume_multiple %111, 8 : i32
    %113 = arith.index_cast %112 : i32 to index
    %c0_36 = arith.constant 0 : index
    %114 = vector.load %arg6[%113, %c0_36] : memref<160x128xf32, #tpu.memory_space<vmem>>, vector<16x128xf32>
    %c0_37 = arith.constant 0 : index
    %c0_38 = arith.constant 0 : index
    %115 = vector.load %arg3[%c0_37, %c0_38] : memref<32x128xf32, #tpu.memory_space<vmem>>, vector<32x128xf32>
    %cst_39 = arith.constant dense<0.000000e+00> : vector<16x128xf32>
    %116 = tpu.matmul %108, %115, %cst_39 {dimension_numbers = #tpu.dot_dimension_numbers<[1], [0], [0], [1], [0, 0, 1, 1], [], []>} : vector<16x32xf32>, vector<32x128xf32>, vector<16x128xf32> -> vector<16x128xf32>
    %117 = arith.addf %114, %116 : vector<16x128xf32>
    %118 = vector.extract_strided_slice %117 {offsets = [0, 0], sizes = [16, 32], strides = [1, 1]} : vector<16x128xf32> to vector<16x32xf32>
    %119 = arith.negf %118 : vector<16x32xf32>
    %120 = math.exp %119 : vector<16x32xf32>
    %cst_40 = arith.constant 1.000000e+00 : f32
    %121 = vector.broadcast %cst_40 : f32 to vector<16x32xf32>
    %122 = arith.addf %121, %120 : vector<16x32xf32>
    %123 = arith.divf %121, %122 : vector<16x32xf32>
    %124 = vector.extract_strided_slice %117 {offsets = [0, 32], sizes = [16, 32], strides = [1, 1]} : vector<16x128xf32> to vector<16x32xf32>
    %125 = arith.negf %124 : vector<16x32xf32>
    %126 = math.exp %125 : vector<16x32xf32>
    %cst_41 = arith.constant 1.000000e+00 : f32
    %127 = vector.broadcast %cst_41 : f32 to vector<16x32xf32>
    %128 = arith.addf %127, %126 : vector<16x32xf32>
    %129 = arith.divf %127, %128 : vector<16x32xf32>
    %130 = vector.extract_strided_slice %117 {offsets = [0, 64], sizes = [16, 32], strides = [1, 1]} : vector<16x128xf32> to vector<16x32xf32>
    %131 = math.tanh %130 : vector<16x32xf32>
    %132 = vector.extract_strided_slice %117 {offsets = [0, 96], sizes = [16, 32], strides = [1, 1]} : vector<16x128xf32> to vector<16x32xf32>
    %133 = arith.negf %132 : vector<16x32xf32>
    %134 = math.exp %133 : vector<16x32xf32>
    %cst_42 = arith.constant 1.000000e+00 : f32
    %135 = vector.broadcast %cst_42 : f32 to vector<16x32xf32>
    %136 = arith.addf %135, %134 : vector<16x32xf32>
    %137 = arith.divf %135, %136 : vector<16x32xf32>
    %138 = arith.mulf %129, %106 : vector<16x32xf32>
    %139 = arith.mulf %123, %131 : vector<16x32xf32>
    %140 = arith.addf %138, %139 : vector<16x32xf32>
    %141 = math.tanh %140 : vector<16x32xf32>
    %142 = arith.mulf %137, %141 : vector<16x32xf32>
    %143 = arith.index_cast %112 : i32 to index
    %c0_43 = arith.constant 0 : index
    %144 = vector.load %arg7[%143, %c0_43] : memref<160x32xf32, #tpu.memory_space<vmem>>, vector<16x32xf32>
    tpu.vector_store %arg7[%143, %c0_43], %142 {strides = array<i32>} : memref<160x32xf32, #tpu.memory_space<vmem>>, vector<16x32xf32>,
    %c4_i32 = arith.constant 4 : i32
    %c16_i32_44 = arith.constant 16 : i32
    %145 = arith.muli %c4_i32, %c16_i32_44 : i32
    %146 = tpu.assume_multiple %145, 8 : i32
    %147 = arith.index_cast %146 : i32 to index
    %c0_45 = arith.constant 0 : index
    %148 = vector.load %arg6[%147, %c0_45] : memref<160x128xf32, #tpu.memory_space<vmem>>, vector<16x128xf32>
    %c0_46 = arith.constant 0 : index
    %c0_47 = arith.constant 0 : index
    %149 = vector.load %arg3[%c0_46, %c0_47] : memref<32x128xf32, #tpu.memory_space<vmem>>, vector<32x128xf32>
    %cst_48 = arith.constant dense<0.000000e+00> : vector<16x128xf32>
    %150 = tpu.matmul %142, %149, %cst_48 {dimension_numbers = #tpu.dot_dimension_numbers<[1], [0], [0], [1], [0, 0, 1, 1], [], []>} : vector<16x32xf32>, vector<32x128xf32>, vector<16x128xf32> -> vector<16x128xf32>
    %151 = arith.addf %148, %150 : vector<16x128xf32>
    %152 = vector.extract_strided_slice %151 {offsets = [0, 0], sizes = [16, 32], strides = [1, 1]} : vector<16x128xf32> to vector<16x32xf32>
    %153 = arith.negf %152 : vector<16x32xf32>
    %154 = math.exp %153 : vector<16x32xf32>
    %cst_49 = arith.constant 1.000000e+00 : f32
    %155 = vector.broadcast %cst_49 : f32 to vector<16x32xf32>
    %156 = arith.addf %155, %154 : vector<16x32xf32>
    %157 = arith.divf %155, %156 : vector<16x32xf32>
    %158 = vector.extract_strided_slice %151 {offsets = [0, 32], sizes = [16, 32], strides = [1, 1]} : vector<16x128xf32> to vector<16x32xf32>
    %159 = arith.negf %158 : vector<16x32xf32>
    %160 = math.exp %159 : vector<16x32xf32>
    %cst_50 = arith.constant 1.000000e+00 : f32
    %161 = vector.broadcast %cst_50 : f32 to vector<16x32xf32>
    %162 = arith.addf %161, %160 : vector<16x32xf32>
    %163 = arith.divf %161, %162 : vector<16x32xf32>
    %164 = vector.extract_strided_slice %151 {offsets = [0, 64], sizes = [16, 32], strides = [1, 1]} : vector<16x128xf32> to vector<16x32xf32>
    %165 = math.tanh %164 : vector<16x32xf32>
    %166 = vector.extract_strided_slice %151 {offsets = [0, 96], sizes = [16, 32], strides = [1, 1]} : vector<16x128xf32> to vector<16x32xf32>
    %167 = arith.negf %166 : vector<16x32xf32>
    %168 = math.exp %167 : vector<16x32xf32>
    %cst_51 = arith.constant 1.000000e+00 : f32
    %169 = vector.broadcast %cst_51 : f32 to vector<16x32xf32>
    %170 = arith.addf %169, %168 : vector<16x32xf32>
    %171 = arith.divf %169, %170 : vector<16x32xf32>
    %172 = arith.mulf %163, %140 : vector<16x32xf32>
    %173 = arith.mulf %157, %165 : vector<16x32xf32>
    %174 = arith.addf %172, %173 : vector<16x32xf32>
    %175 = math.tanh %174 : vector<16x32xf32>
    %176 = arith.mulf %171, %175 : vector<16x32xf32>
    %177 = arith.index_cast %146 : i32 to index
    %c0_52 = arith.constant 0 : index
    %178 = vector.load %arg7[%177, %c0_52] : memref<160x32xf32, #tpu.memory_space<vmem>>, vector<16x32xf32>
    tpu.vector_store %arg7[%177, %c0_52], %176 {strides = array<i32>} : memref<160x32xf32, #tpu.memory_space<vmem>>, vector<16x32xf32>,
    %c5_i32 = arith.constant 5 : i32
    %c16_i32_53 = arith.constant 16 : i32
    %179 = arith.muli %c5_i32, %c16_i32_53 : i32
    %180 = tpu.assume_multiple %179, 8 : i32
    %181 = arith.index_cast %180 : i32 to index
    %c0_54 = arith.constant 0 : index
    %182 = vector.load %arg6[%181, %c0_54] : memref<160x128xf32, #tpu.memory_space<vmem>>, vector<16x128xf32>
    %c0_55 = arith.constant 0 : index
    %c0_56 = arith.constant 0 : index
    %183 = vector.load %arg3[%c0_55, %c0_56] : memref<32x128xf32, #tpu.memory_space<vmem>>, vector<32x128xf32>
    %cst_57 = arith.constant dense<0.000000e+00> : vector<16x128xf32>
    %184 = tpu.matmul %176, %183, %cst_57 {dimension_numbers = #tpu.dot_dimension_numbers<[1], [0], [0], [1], [0, 0, 1, 1], [], []>} : vector<16x32xf32>, vector<32x128xf32>, vector<16x128xf32> -> vector<16x128xf32>
    %185 = arith.addf %182, %184 : vector<16x128xf32>
    %186 = vector.extract_strided_slice %185 {offsets = [0, 0], sizes = [16, 32], strides = [1, 1]} : vector<16x128xf32> to vector<16x32xf32>
    %187 = arith.negf %186 : vector<16x32xf32>
    %188 = math.exp %187 : vector<16x32xf32>
    %cst_58 = arith.constant 1.000000e+00 : f32
    %189 = vector.broadcast %cst_58 : f32 to vector<16x32xf32>
    %190 = arith.addf %189, %188 : vector<16x32xf32>
    %191 = arith.divf %189, %190 : vector<16x32xf32>
    %192 = vector.extract_strided_slice %185 {offsets = [0, 32], sizes = [16, 32], strides = [1, 1]} : vector<16x128xf32> to vector<16x32xf32>
    %193 = arith.negf %192 : vector<16x32xf32>
    %194 = math.exp %193 : vector<16x32xf32>
    %cst_59 = arith.constant 1.000000e+00 : f32
    %195 = vector.broadcast %cst_59 : f32 to vector<16x32xf32>
    %196 = arith.addf %195, %194 : vector<16x32xf32>
    %197 = arith.divf %195, %196 : vector<16x32xf32>
    %198 = vector.extract_strided_slice %185 {offsets = [0, 64], sizes = [16, 32], strides = [1, 1]} : vector<16x128xf32> to vector<16x32xf32>
    %199 = math.tanh %198 : vector<16x32xf32>
    %200 = vector.extract_strided_slice %185 {offsets = [0, 96], sizes = [16, 32], strides = [1, 1]} : vector<16x128xf32> to vector<16x32xf32>
    %201 = arith.negf %200 : vector<16x32xf32>
    %202 = math.exp %201 : vector<16x32xf32>
    %cst_60 = arith.constant 1.000000e+00 : f32
    %203 = vector.broadcast %cst_60 : f32 to vector<16x32xf32>
    %204 = arith.addf %203, %202 : vector<16x32xf32>
    %205 = arith.divf %203, %204 : vector<16x32xf32>
    %206 = arith.mulf %197, %174 : vector<16x32xf32>
    %207 = arith.mulf %191, %199 : vector<16x32xf32>
    %208 = arith.addf %206, %207 : vector<16x32xf32>
    %209 = math.tanh %208 : vector<16x32xf32>
    %210 = arith.mulf %205, %209 : vector<16x32xf32>
    %211 = arith.index_cast %180 : i32 to index
    %c0_61 = arith.constant 0 : index
    %212 = vector.load %arg7[%211, %c0_61] : memref<160x32xf32, #tpu.memory_space<vmem>>, vector<16x32xf32>
    tpu.vector_store %arg7[%211, %c0_61], %210 {strides = array<i32>} : memref<160x32xf32, #tpu.memory_space<vmem>>, vector<16x32xf32>,
    %c6_i32 = arith.constant 6 : i32
    %c16_i32_62 = arith.constant 16 : i32
    %213 = arith.muli %c6_i32, %c16_i32_62 : i32
    %214 = tpu.assume_multiple %213, 8 : i32
    %215 = arith.index_cast %214 : i32 to index
    %c0_63 = arith.constant 0 : index
    %216 = vector.load %arg6[%215, %c0_63] : memref<160x128xf32, #tpu.memory_space<vmem>>, vector<16x128xf32>
    %c0_64 = arith.constant 0 : index
    %c0_65 = arith.constant 0 : index
    %217 = vector.load %arg3[%c0_64, %c0_65] : memref<32x128xf32, #tpu.memory_space<vmem>>, vector<32x128xf32>
    %cst_66 = arith.constant dense<0.000000e+00> : vector<16x128xf32>
    %218 = tpu.matmul %210, %217, %cst_66 {dimension_numbers = #tpu.dot_dimension_numbers<[1], [0], [0], [1], [0, 0, 1, 1], [], []>} : vector<16x32xf32>, vector<32x128xf32>, vector<16x128xf32> -> vector<16x128xf32>
    %219 = arith.addf %216, %218 : vector<16x128xf32>
    %220 = vector.extract_strided_slice %219 {offsets = [0, 0], sizes = [16, 32], strides = [1, 1]} : vector<16x128xf32> to vector<16x32xf32>
    %221 = arith.negf %220 : vector<16x32xf32>
    %222 = math.exp %221 : vector<16x32xf32>
    %cst_67 = arith.constant 1.000000e+00 : f32
    %223 = vector.broadcast %cst_67 : f32 to vector<16x32xf32>
    %224 = arith.addf %223, %222 : vector<16x32xf32>
    %225 = arith.divf %223, %224 : vector<16x32xf32>
    %226 = vector.extract_strided_slice %219 {offsets = [0, 32], sizes = [16, 32], strides = [1, 1]} : vector<16x128xf32> to vector<16x32xf32>
    %227 = arith.negf %226 : vector<16x32xf32>
    %228 = math.exp %227 : vector<16x32xf32>
    %cst_68 = arith.constant 1.000000e+00 : f32
    %229 = vector.broadcast %cst_68 : f32 to vector<16x32xf32>
    %230 = arith.addf %229, %228 : vector<16x32xf32>
    %231 = arith.divf %229, %230 : vector<16x32xf32>
    %232 = vector.extract_strided_slice %219 {offsets = [0, 64], sizes = [16, 32], strides = [1, 1]} : vector<16x128xf32> to vector<16x32xf32>
    %233 = math.tanh %232 : vector<16x32xf32>
    %234 = vector.extract_strided_slice %219 {offsets = [0, 96], sizes = [16, 32], strides = [1, 1]} : vector<16x128xf32> to vector<16x32xf32>
    %235 = arith.negf %234 : vector<16x32xf32>
    %236 = math.exp %235 : vector<16x32xf32>
    %cst_69 = arith.constant 1.000000e+00 : f32
    %237 = vector.broadcast %cst_69 : f32 to vector<16x32xf32>
    %238 = arith.addf %237, %236 : vector<16x32xf32>
    %239 = arith.divf %237, %238 : vector<16x32xf32>
    %240 = arith.mulf %231, %208 : vector<16x32xf32>
    %241 = arith.mulf %225, %233 : vector<16x32xf32>
    %242 = arith.addf %240, %241 : vector<16x32xf32>
    %243 = math.tanh %242 : vector<16x32xf32>
    %244 = arith.mulf %239, %243 : vector<16x32xf32>
    %245 = arith.index_cast %214 : i32 to index
    %c0_70 = arith.constant 0 : index
    %246 = vector.load %arg7[%245, %c0_70] : memref<160x32xf32, #tpu.memory_space<vmem>>, vector<16x32xf32>
    tpu.vector_store %arg7[%245, %c0_70], %244 {strides = array<i32>} : memref<160x32xf32, #tpu.memory_space<vmem>>, vector<16x32xf32>,
    %c7_i32 = arith.constant 7 : i32
    %c16_i32_71 = arith.constant 16 : i32
    %247 = arith.muli %c7_i32, %c16_i32_71 : i32
    %248 = tpu.assume_multiple %247, 8 : i32
    %249 = arith.index_cast %248 : i32 to index
    %c0_72 = arith.constant 0 : index
    %250 = vector.load %arg6[%249, %c0_72] : memref<160x128xf32, #tpu.memory_space<vmem>>, vector<16x128xf32>
    %c0_73 = arith.constant 0 : index
    %c0_74 = arith.constant 0 : index
    %251 = vector.load %arg3[%c0_73, %c0_74] : memref<32x128xf32, #tpu.memory_space<vmem>>, vector<32x128xf32>
    %cst_75 = arith.constant dense<0.000000e+00> : vector<16x128xf32>
    %252 = tpu.matmul %244, %251, %cst_75 {dimension_numbers = #tpu.dot_dimension_numbers<[1], [0], [0], [1], [0, 0, 1, 1], [], []>} : vector<16x32xf32>, vector<32x128xf32>, vector<16x128xf32> -> vector<16x128xf32>
    %253 = arith.addf %250, %252 : vector<16x128xf32>
    %254 = vector.extract_strided_slice %253 {offsets = [0, 0], sizes = [16, 32], strides = [1, 1]} : vector<16x128xf32> to vector<16x32xf32>
    %255 = arith.negf %254 : vector<16x32xf32>
    %256 = math.exp %255 : vector<16x32xf32>
    %cst_76 = arith.constant 1.000000e+00 : f32
    %257 = vector.broadcast %cst_76 : f32 to vector<16x32xf32>
    %258 = arith.addf %257, %256 : vector<16x32xf32>
    %259 = arith.divf %257, %258 : vector<16x32xf32>
    %260 = vector.extract_strided_slice %253 {offsets = [0, 32], sizes = [16, 32], strides = [1, 1]} : vector<16x128xf32> to vector<16x32xf32>
    %261 = arith.negf %260 : vector<16x32xf32>
    %262 = math.exp %261 : vector<16x32xf32>
    %cst_77 = arith.constant 1.000000e+00 : f32
    %263 = vector.broadcast %cst_77 : f32 to vector<16x32xf32>
    %264 = arith.addf %263, %262 : vector<16x32xf32>
    %265 = arith.divf %263, %264 : vector<16x32xf32>
    %266 = vector.extract_strided_slice %253 {offsets = [0, 64], sizes = [16, 32], strides = [1, 1]} : vector<16x128xf32> to vector<16x32xf32>
    %267 = math.tanh %266 : vector<16x32xf32>
    %268 = vector.extract_strided_slice %253 {offsets = [0, 96], sizes = [16, 32], strides = [1, 1]} : vector<16x128xf32> to vector<16x32xf32>
    %269 = arith.negf %268 : vector<16x32xf32>
    %270 = math.exp %269 : vector<16x32xf32>
    %cst_78 = arith.constant 1.000000e+00 : f32
    %271 = vector.broadcast %cst_78 : f32 to vector<16x32xf32>
    %272 = arith.addf %271, %270 : vector<16x32xf32>
    %273 = arith.divf %271, %272 : vector<16x32xf32>
    %274 = arith.mulf %265, %242 : vector<16x32xf32>
    %275 = arith.mulf %259, %267 : vector<16x32xf32>
    %276 = arith.addf %274, %275 : vector<16x32xf32>
    %277 = math.tanh %276 : vector<16x32xf32>
    %278 = arith.mulf %273, %277 : vector<16x32xf32>
    %279 = arith.index_cast %248 : i32 to index
    %c0_79 = arith.constant 0 : index
    %280 = vector.load %arg7[%279, %c0_79] : memref<160x32xf32, #tpu.memory_space<vmem>>, vector<16x32xf32>
    tpu.vector_store %arg7[%279, %c0_79], %278 {strides = array<i32>} : memref<160x32xf32, #tpu.memory_space<vmem>>, vector<16x32xf32>,
    %c8_i32 = arith.constant 8 : i32
    %c16_i32_80 = arith.constant 16 : i32
    %281 = arith.muli %c8_i32, %c16_i32_80 : i32
    %282 = tpu.assume_multiple %281, 8 : i32
    %283 = arith.index_cast %282 : i32 to index
    %c0_81 = arith.constant 0 : index
    %284 = vector.load %arg6[%283, %c0_81] : memref<160x128xf32, #tpu.memory_space<vmem>>, vector<16x128xf32>
    %c0_82 = arith.constant 0 : index
    %c0_83 = arith.constant 0 : index
    %285 = vector.load %arg3[%c0_82, %c0_83] : memref<32x128xf32, #tpu.memory_space<vmem>>, vector<32x128xf32>
    %cst_84 = arith.constant dense<0.000000e+00> : vector<16x128xf32>
    %286 = tpu.matmul %278, %285, %cst_84 {dimension_numbers = #tpu.dot_dimension_numbers<[1], [0], [0], [1], [0, 0, 1, 1], [], []>} : vector<16x32xf32>, vector<32x128xf32>, vector<16x128xf32> -> vector<16x128xf32>
    %287 = arith.addf %284, %286 : vector<16x128xf32>
    %288 = vector.extract_strided_slice %287 {offsets = [0, 0], sizes = [16, 32], strides = [1, 1]} : vector<16x128xf32> to vector<16x32xf32>
    %289 = arith.negf %288 : vector<16x32xf32>
    %290 = math.exp %289 : vector<16x32xf32>
    %cst_85 = arith.constant 1.000000e+00 : f32
    %291 = vector.broadcast %cst_85 : f32 to vector<16x32xf32>
    %292 = arith.addf %291, %290 : vector<16x32xf32>
    %293 = arith.divf %291, %292 : vector<16x32xf32>
    %294 = vector.extract_strided_slice %287 {offsets = [0, 32], sizes = [16, 32], strides = [1, 1]} : vector<16x128xf32> to vector<16x32xf32>
    %295 = arith.negf %294 : vector<16x32xf32>
    %296 = math.exp %295 : vector<16x32xf32>
    %cst_86 = arith.constant 1.000000e+00 : f32
    %297 = vector.broadcast %cst_86 : f32 to vector<16x32xf32>
    %298 = arith.addf %297, %296 : vector<16x32xf32>
    %299 = arith.divf %297, %298 : vector<16x32xf32>
    %300 = vector.extract_strided_slice %287 {offsets = [0, 64], sizes = [16, 32], strides = [1, 1]} : vector<16x128xf32> to vector<16x32xf32>
    %301 = math.tanh %300 : vector<16x32xf32>
    %302 = vector.extract_strided_slice %287 {offsets = [0, 96], sizes = [16, 32], strides = [1, 1]} : vector<16x128xf32> to vector<16x32xf32>
    %303 = arith.negf %302 : vector<16x32xf32>
    %304 = math.exp %303 : vector<16x32xf32>
    %cst_87 = arith.constant 1.000000e+00 : f32
    %305 = vector.broadcast %cst_87 : f32 to vector<16x32xf32>
    %306 = arith.addf %305, %304 : vector<16x32xf32>
    %307 = arith.divf %305, %306 : vector<16x32xf32>
    %308 = arith.mulf %299, %276 : vector<16x32xf32>
    %309 = arith.mulf %293, %301 : vector<16x32xf32>
    %310 = arith.addf %308, %309 : vector<16x32xf32>
    %311 = math.tanh %310 : vector<16x32xf32>
    %312 = arith.mulf %307, %311 : vector<16x32xf32>
    %313 = arith.index_cast %282 : i32 to index
    %c0_88 = arith.constant 0 : index
    %314 = vector.load %arg7[%313, %c0_88] : memref<160x32xf32, #tpu.memory_space<vmem>>, vector<16x32xf32>
    tpu.vector_store %arg7[%313, %c0_88], %312 {strides = array<i32>} : memref<160x32xf32, #tpu.memory_space<vmem>>, vector<16x32xf32>,
    %c9_i32 = arith.constant 9 : i32
    %c16_i32_89 = arith.constant 16 : i32
    %315 = arith.muli %c9_i32, %c16_i32_89 : i32
    %316 = tpu.assume_multiple %315, 8 : i32
    %317 = arith.index_cast %316 : i32 to index
    %c0_90 = arith.constant 0 : index
    %318 = vector.load %arg6[%317, %c0_90] : memref<160x128xf32, #tpu.memory_space<vmem>>, vector<16x128xf32>
    %c0_91 = arith.constant 0 : index
    %c0_92 = arith.constant 0 : index
    %319 = vector.load %arg3[%c0_91, %c0_92] : memref<32x128xf32, #tpu.memory_space<vmem>>, vector<32x128xf32>
    %cst_93 = arith.constant dense<0.000000e+00> : vector<16x128xf32>
    %320 = tpu.matmul %312, %319, %cst_93 {dimension_numbers = #tpu.dot_dimension_numbers<[1], [0], [0], [1], [0, 0, 1, 1], [], []>} : vector<16x32xf32>, vector<32x128xf32>, vector<16x128xf32> -> vector<16x128xf32>
    %321 = arith.addf %318, %320 : vector<16x128xf32>
    %322 = vector.extract_strided_slice %321 {offsets = [0, 0], sizes = [16, 32], strides = [1, 1]} : vector<16x128xf32> to vector<16x32xf32>
    %323 = arith.negf %322 : vector<16x32xf32>
    %324 = math.exp %323 : vector<16x32xf32>
    %cst_94 = arith.constant 1.000000e+00 : f32
    %325 = vector.broadcast %cst_94 : f32 to vector<16x32xf32>
    %326 = arith.addf %325, %324 : vector<16x32xf32>
    %327 = arith.divf %325, %326 : vector<16x32xf32>
    %328 = vector.extract_strided_slice %321 {offsets = [0, 32], sizes = [16, 32], strides = [1, 1]} : vector<16x128xf32> to vector<16x32xf32>
    %329 = arith.negf %328 : vector<16x32xf32>
    %330 = math.exp %329 : vector<16x32xf32>
    %cst_95 = arith.constant 1.000000e+00 : f32
    %331 = vector.broadcast %cst_95 : f32 to vector<16x32xf32>
    %332 = arith.addf %331, %330 : vector<16x32xf32>
    %333 = arith.divf %331, %332 : vector<16x32xf32>
    %334 = vector.extract_strided_slice %321 {offsets = [0, 64], sizes = [16, 32], strides = [1, 1]} : vector<16x128xf32> to vector<16x32xf32>
    %335 = math.tanh %334 : vector<16x32xf32>
    %336 = vector.extract_strided_slice %321 {offsets = [0, 96], sizes = [16, 32], strides = [1, 1]} : vector<16x128xf32> to vector<16x32xf32>
    %337 = arith.negf %336 : vector<16x32xf32>
    %338 = math.exp %337 : vector<16x32xf32>
    %cst_96 = arith.constant 1.000000e+00 : f32
    %339 = vector.broadcast %cst_96 : f32 to vector<16x32xf32>
    %340 = arith.addf %339, %338 : vector<16x32xf32>
    %341 = arith.divf %339, %340 : vector<16x32xf32>
    %342 = arith.mulf %333, %310 : vector<16x32xf32>
    %343 = arith.mulf %327, %335 : vector<16x32xf32>
    %344 = arith.addf %342, %343 : vector<16x32xf32>
    %345 = math.tanh %344 : vector<16x32xf32>
    %346 = arith.mulf %341, %345 : vector<16x32xf32>
    %347 = arith.index_cast %316 : i32 to index
    %c0_97 = arith.constant 0 : index
    %348 = vector.load %arg7[%347, %c0_97] : memref<160x32xf32, #tpu.memory_space<vmem>>, vector<16x32xf32>
    tpu.vector_store %arg7[%347, %c0_97], %346 {strides = array<i32>} : memref<160x32xf32, #tpu.memory_space<vmem>>, vector<16x32xf32>,
    %c10_i32 = arith.constant 10 : i32
    %c0_98 = arith.constant 0 : index
    %c0_99 = arith.constant 0 : index
    %c0_100 = arith.constant 0 : index
    %349 = vector.load %arg1[%c0_98, %c0_99, %c0_100] : memref<10x16x32xf32, #tpu.memory_space<vmem>>, vector<10x16x32xf32>
    %350 = vector.shape_cast %349 : vector<10x16x32xf32> to vector<160x32xf32>
    %c0_101 = arith.constant 0 : index
    %c0_102 = arith.constant 0 : index
    %351 = vector.load %arg7[%c0_101, %c0_102] : memref<160x32xf32, #tpu.memory_space<vmem>>, vector<160x32xf32>
    %352 = arith.addf %351, %350 : vector<160x32xf32>
    %353 = arith.mulf %352, %352 : vector<160x32xf32>
    %cst_103 = arith.constant dense<0.000000e+00> : vector<160xf32>
    %354 = vector.multi_reduction <add>, %353, %cst_103 [1] : vector<160x32xf32> to vector<160xf32>
    %355 = vector.shape_cast %354 : vector<160xf32> to vector<160x1xf32>
    %cst_104 = arith.constant 3.200000e+01 : f32
    %356 = vector.broadcast %cst_104 : f32 to vector<160x1xf32>
    %357 = arith.divf %355, %356 : vector<160x1xf32>
    %cst_105 = arith.constant 2.500000e-01 : f32
    %358 = vector.broadcast %cst_105 : f32 to vector<160x1xf32>
    %359 = arith.addf %357, %358 : vector<160x1xf32>
    %360 = math.rsqrt %359 : vector<160x1xf32>
    %361 = vector.broadcast %360 : vector<160x1xf32> to vector<160x32xf32>
    %362 = arith.mulf %352, %361 : vector<160x32xf32>
    %363 = vector.shape_cast %362 : vector<160x32xf32> to vector<10x16x32xf32>
    %c0_106 = arith.constant 0 : index
    %c0_107 = arith.constant 0 : index
    %c0_108 = arith.constant 0 : index
    %364 = vector.load %arg5[%c0_106, %c0_107, %c0_108] : memref<10x16x32xf32, #tpu.memory_space<vmem>>, vector<10x16x32xf32>
    tpu.vector_store %arg5[%c0_106, %c0_107, %c0_108], %363 {strides = array<i32>} : memref<10x16x32xf32, #tpu.memory_space<vmem>>, vector<10x16x32xf32>,
    return
  }
  func.func @transform_0(%arg0: i32) -> (i32, i32, i32) {
    %c0_i32 = arith.constant 0 : i32
    %c0_i32_0 = arith.constant 0 : i32
    %c0_i32_1 = arith.constant 0 : i32
    return %c0_i32, %arg0, %c0_i32_0 : i32, i32, i32
  }
  func.func @transform_1(%arg0: i32) -> (i32, i32) {
    %c0_i32 = arith.constant 0 : i32
    %c0_i32_0 = arith.constant 0 : i32
    %c0_i32_1 = arith.constant 0 : i32
    return %c0_i32, %c0_i32_0 : i32, i32
  }
  func.func @transform_2(%arg0: i32) -> (i32, i32) {
    %c0_i32 = arith.constant 0 : i32
    %c0_i32_0 = arith.constant 0 : i32
    %c0_i32_1 = arith.constant 0 : i32
    return %c0_i32, %c0_i32_0 : i32, i32
  }
  func.func @transform_3(%arg0: i32) -> (i32, i32) {
    %c0_i32 = arith.constant 0 : i32
    %c0_i32_0 = arith.constant 0 : i32
    %c0_i32_1 = arith.constant 0 : i32
    return %c0_i32, %c0_i32_0 : i32, i32
  }
  func.func @transform_4(%arg0: i32) -> (i32, i32, i32) {
    %c0_i32 = arith.constant 0 : i32
    %c0_i32_0 = arith.constant 0 : i32
    %c0_i32_1 = arith.constant 0 : i32
    return %c0_i32, %arg0, %c0_i32_0 : i32, i32, i32
  }
}

module attributes {stable_mosaic.version = 11 : i64} {
  func.func @linear_norm_kernel(%arg0: i32, %arg1: memref<64x32xf32, #tpu.memory_space<vmem>>, %arg2: memref<32x128xf32, #tpu.memory_space<vmem>>, %arg3: memref<1x128xf32, #tpu.memory_space<vmem>>, %arg4: memref<64x128xf32, #tpu.memory_space<vmem>>) attributes {dimension_semantics = [#tpu.dimension_semantics<parallel>], iteration_bounds = array<i64: 1>, scalar_prefetch = 0 : i64, scratch_operands = 0 : i64, tpu.core_type = #tpu.core_type<tc>, window_params = [{transform_indices = @transform_0, window_bounds = array<i64: 64, 32>}, {pipeline_mode = #tpu.pipeline_mode<synchronous>, transform_indices = @transform_1, window_bounds = array<i64: 32, 128>}, {pipeline_mode = #tpu.pipeline_mode<synchronous>, transform_indices = @transform_2, window_bounds = array<i64: 1, 128>}, {transform_indices = @transform_3, window_bounds = array<i64: 64, 128>}]} {
    %c0 = arith.constant 0 : index
    %c0_0 = arith.constant 0 : index
    %0 = vector.load %arg1[%c0, %c0_0] : memref<64x32xf32, #tpu.memory_space<vmem>>, vector<64x32xf32>
    %c0_1 = arith.constant 0 : index
    %c0_2 = arith.constant 0 : index
    %1 = vector.load %arg2[%c0_1, %c0_2] : memref<32x128xf32, #tpu.memory_space<vmem>>, vector<32x128xf32>
    %cst = arith.constant dense<0.000000e+00> : vector<64x128xf32>
    %2 = tpu.matmul %0, %1, %cst {dimension_numbers = #tpu.dot_dimension_numbers<[1], [0], [0], [1], [0, 0, 1, 1], [], []>} : vector<64x32xf32>, vector<32x128xf32>, vector<64x128xf32> -> vector<64x128xf32>
    %c0_3 = arith.constant 0 : index
    %c0_4 = arith.constant 0 : index
    %3 = vector.load %arg3[%c0_3, %c0_4] : memref<1x128xf32, #tpu.memory_space<vmem>>, vector<1x128xf32>
    %4 = vector.broadcast %3 : vector<1x128xf32> to vector<64x128xf32>
    %5 = arith.addf %2, %4 : vector<64x128xf32>
    %6 = arith.mulf %5, %5 : vector<64x128xf32>
    %cst_5 = arith.constant dense<0.000000e+00> : vector<64xf32>
    %7 = vector.multi_reduction <add>, %6, %cst_5 [1] : vector<64x128xf32> to vector<64xf32>
    %8 = vector.shape_cast %7 : vector<64xf32> to vector<64x1xf32>
    %cst_6 = arith.constant 1.600000e+01 : f32
    %9 = vector.broadcast %cst_6 : f32 to vector<64x1xf32>
    %10 = arith.divf %8, %9 : vector<64x1xf32>
    %cst_7 = arith.constant 2.500000e-01 : f32
    %11 = vector.broadcast %cst_7 : f32 to vector<64x1xf32>
    %12 = arith.addf %10, %11 : vector<64x1xf32>
    %13 = math.rsqrt %12 : vector<64x1xf32>
    %14 = vector.broadcast %13 : vector<64x1xf32> to vector<64x128xf32>
    %15 = arith.mulf %5, %14 : vector<64x128xf32>
    %cst_8 = arith.constant 0.000000e+00 : f32
    %16 = vector.broadcast %cst_8 : f32 to vector<64x128xf32>
    %17 = arith.maximumf %15, %16 : vector<64x128xf32>
    %c0_9 = arith.constant 0 : index
    %c0_10 = arith.constant 0 : index
    %18 = vector.load %arg4[%c0_9, %c0_10] : memref<64x128xf32, #tpu.memory_space<vmem>>, vector<64x128xf32>
    tpu.vector_store %arg4[%c0_9, %c0_10], %17 {strides = array<i32>} : memref<64x128xf32, #tpu.memory_space<vmem>>, vector<64x128xf32>,
    return
  }
  func.func @transform_0(%arg0: i32) -> (i32, i32) {
    %c0_i32 = arith.constant 0 : i32
    %c0_i32_0 = arith.constant 0 : i32
    return %arg0, %c0_i32 : i32, i32
  }
  func.func @transform_1(%arg0: i32) -> (i32, i32) {
    %c0_i32 = arith.constant 0 : i32
    %c0_i32_0 = arith.constant 0 : i32
    %c0_i32_1 = arith.constant 0 : i32
    return %c0_i32, %c0_i32_0 : i32, i32
  }
  func.func @transform_2(%arg0: i32) -> (i32, i32) {
    %c0_i32 = arith.constant 0 : i32
    %c0_i32_0 = arith.constant 0 : i32
    %c0_i32_1 = arith.constant 0 : i32
    return %c0_i32, %c0_i32_0 : i32, i32
  }
  func.func @transform_3(%arg0: i32) -> (i32, i32) {
    %c0_i32 = arith.constant 0 : i32
    %c0_i32_0 = arith.constant 0 : i32
    return %arg0, %c0_i32 : i32, i32
  }
}

</mosaic_0001>

<llo_original>
// kernel: dprnn_forward.4
$region0: #{dprnn_forward.4}
  #allocation0 [shape = 'u32[]', space=smem, size = 0x4, offset = 0x4, fixed_abs, tag = 'smem constant byte address 0x4 - core index']
  #allocation1 [shape = 'u32[144,128]{1,0:T(1,128)}', space=vmem, size = 0x12000, scoped, tag = 'internal scratch']
  %s0 = inlined_call_operand.vmem [shape: f32[64,16], index: 0, kind: input, shape index: {}]
  %s1 = inlined_call_operand.vmem [shape: f32[16,128], index: 1, kind: input, shape index: {}]
  %s2 = inlined_call_operand.vmem [shape: f32[1,128], index: 2, kind: input, shape index: {}]
  %s3 = inlined_call_operand.vmem [shape: f32[64,128], index: 3, kind: output, shape index: {}]
  %s4 = sld [smem:[#allocation0]]
  $region22: #{dprnn_forward.4} parent=0
    _
  %s6 = ssub.s32 1, %s4
  %s7 = scalar_select 0, %s6, %s4
  // Predicated region
  $region2: #{dprnn_forward.4} parent=0 // pred_check
    _
  $region3: #{dprnn_forward.4} parent=0 // pred_check_branch
    %9 = sbr.rel (0) target = $region5
  $region4: #{dprnn_forward.4} parent=0 // pred_region
    _
  $region5: #{dprnn_forward.4} parent=0 // pred_fallthru
    _
  // Predicated region
  $region6: #{dprnn_forward.4} parent=0 // pred_check
    _
  $region7: #{dprnn_forward.4} parent=0 // pred_check_branch
    %11 = sbr.rel (0) target = $region9
  $region8: #{dprnn_forward.4} parent=0 // pred_region
    _
  $region9: #{dprnn_forward.4} parent=0 // pred_fallthru
    _
  // Predicated region
  $region10: #{dprnn_forward.4} parent=0 // pred_check
    _
  $region11: #{dprnn_forward.4} parent=0 // pred_check_branch
    %13 = sbr.rel (0) target = $region13
  $region12: #{dprnn_forward.4} parent=0 // pred_region
    _
  $region13: #{dprnn_forward.4} parent=0 // pred_fallthru
    _
  %v14 = vld [vmem:[%s0] sm:$0xff]
  %v15 = vld [vmem:[%s0 + $0x8] sm:$0xff]
  %v16 = vld [vmem:[%s0 + $0x10] sm:$0xff]
  %v17 = vld [vmem:[%s0 + $0x18] sm:$0xff]
  %v18 = vld [vmem:[%s0 + $0x20] sm:$0xff]
  %v19 = vld [vmem:[%s0 + $0x28] sm:$0xff]
  %v20 = vld [vmem:[%s0 + $0x30] sm:$0xff]
  %v21 = vld [vmem:[%s0 + $0x38] sm:$0xff]
  %v22 = vld [vmem:[%s1] sm:$0xff]
  %v23 = vld [vmem:[%s1 + $0x8] sm:$0xff]
  %v24 = vld [vmem:[%s2] sm:$0x1]
  %v26 = vlaneseq
  %v27 = vshrl.u32 %v26, 7
  %v28 = vsub.s32 0, %v27
  %v29 = vrot.slane %v24, %v28
  %vm31 = vcmask 130048
  %v33 = vsel %vm31, %v14, 0
  %v36 = vsel %vm31, %v15, 0
  %v39 = vsel %vm31, %v16, 0
  %v42 = vsel %vm31, %v17, 0
  %v45 = vsel %vm31, %v18, 0
  %v48 = vsel %vm31, %v19, 0
  %v51 = vsel %vm31, %v20, 0
  %v54 = vsel %vm31, %v21, 0
  %56 = vmatprep.subr.mxu0 0.0
  %57 = vmatpush1.msra.mxu0 %v22
  %58 = vmatprep.subr.mxu0 0.0
  %59 = vmatpush1.msra.mxu0 %v23
  %60 = vmatprep.subr.mxu0 0.0
  %61 = vmatpush1.msra.mxu0 0.0
  %62 = vmatprep.subr.mxu0 0.0
  %63 = vmatpush1.msra.mxu0 0.0
  %64 = vmatprep.subr.mxu0 0.0
  %65 = vmatpush1.msra.mxu0 0.0
  %66 = vmatprep.subr.mxu0 0.0
  %67 = vmatpush1.msra.mxu0 0.0
  %68 = vmatprep.subr.mxu0 0.0
  %69 = vmatpush1.msra.mxu0 0.0
  %70 = vmatprep.subr.mxu0 0.0
  %71 = vmatpush1.msra.mxu0 0.0
  %72 = vmatprep.subr.mxu0 0.0
  %73 = vmatpush1.msra.mxu0 0.0
  %74 = vmatprep.subr.mxu0 0.0
  %75 = vmatpush1.msra.mxu0 0.0
  %76 = vmatprep.subr.mxu0 0.0
  %77 = vmatpush1.msra.mxu0 0.0
  %78 = vmatprep.subr.mxu0 0.0
  %79 = vmatpush1.msra.mxu0 0.0
  %80 = vmatprep.subr.mxu0 0.0
  %81 = vmatpush1.msra.mxu0 0.0
  %82 = vmatprep.subr.mxu0 0.0
  %83 = vmatpush1.msra.mxu0 0.0
  %84 = vmatprep.subr.mxu0 0.0
  %85 = vmatpush1.msra.mxu0 0.0
  %86 = vmatprep.subr.mxu0 0.0
  %87 = vmatpush1.msra.mxu0 0.0
  %88 = vmatprep.subr.mxu0 0.0
  %89 = vmatpush1.msra.mxu0 0.0
  %90 = vmatprep.subr.mxu0 0.0
  %91 = vmatpush1.msra.mxu0 0.0
  %92 = vmatprep.subr.mxu0 0.0
  %93 = vmatpush1.msra.mxu0 0.0
  %94 = vmatprep.subr.mxu0 0.0
  %95 = vmatpush1.msra.mxu0 0.0
  %96 = vmatprep.subr.mxu0 0.0
  %97 = vmatpush1.msra.mxu0 0.0
  %98 = vmatprep.subr.mxu0 0.0
  %99 = vmatpush1.msra.mxu0 0.0
  %100 = vmatprep.subr.mxu0 0.0
  %101 = vmatpush1.msra.mxu0 0.0
  %102 = vmatprep.subr.mxu0 0.0
  %103 = vmatpush1.msra.mxu0 0.0
  %104 = vmatprep.subr.mxu0 0.0
  %105 = vmatpush1.msra.mxu0 0.0
  %106 = vmatprep.subr.mxu0 0.0
  %107 = vmatpush1.msra.mxu0 0.0
  %108 = vmatprep.subr.mxu0 0.0
  %109 = vmatpush1.msra.mxu0 0.0
  %110 = vmatprep.subr.mxu0 0.0
  %111 = vmatpush1.msra.mxu0 0.0
  %112 = vmatprep.subr.mxu0 0.0
  %113 = vmatpush1.msra.mxu0 0.0
  %114 = vmatprep.subr.mxu0 0.0
  %115 = vmatpush1.msra.mxu0 0.0
  %116 = vmatprep.subr.mxu0 0.0
  %117 = vmatpush1.msra.mxu0 0.0
  %118 = vmatprep.subr.mxu0 0.0
  %119 = vmatpush1.msra.mxu0 0.0
  %120 = vmatprep.mubr.f32.mxu0 0.0
  %121 = vmatmul.mubr.f32.gmra.mrb[0].mxu0 %v33
  %v122 = vpop.f32.mrb[0].mxu0
  %v123 = vadd.f32 %v29, %v122
  %v124 = vpop.f32.mrb[0].mxu0
  %125 = vmatprep.mubr.f32.mxu0 0.0
  %126 = vmatmul.mubr.f32.gmra.mrb[0].mxu0 %v36
  %v127 = vpop.f32.mrb[0].mxu0
  %v128 = vadd.f32 %v29, %v127
  %v129 = vpop.f32.mrb[0].mxu0
  %130 = vmatprep.mubr.f32.mxu0 0.0
  %131 = vmatmul.mubr.f32.gmra.mrb[0].mxu0 %v39
  %v132 = vpop.f32.mrb[0].mxu0
  %v133 = vadd.f32 %v29, %v132
  %v134 = vpop.f32.mrb[0].mxu0
  %135 = vmatprep.mubr.f32.mxu0 0.0
  %136 = vmatmul.mubr.f32.gmra.mrb[0].mxu0 %v42
  %v137 = vpop.f32.mrb[0].mxu0
  %v138 = vadd.f32 %v29, %v137
  %v139 = vpop.f32.mrb[0].mxu0
  %140 = vmatprep.mubr.f32.mxu0 0.0
  %141 = vmatmul.mubr.f32.gmra.mrb[0].mxu0 %v45
  %v142 = vpop.f32.mrb[0].mxu0
  %v143 = vadd.f32 %v29, %v142
  %v144 = vpop.f32.mrb[0].mxu0
  %145 = vmatprep.mubr.f32.mxu0 0.0
  %146 = vmatmul.mubr.f32.gmra.mrb[0].mxu0 %v48
  %v147 = vpop.f32.mrb[0].mxu0
  %v148 = vadd.f32 %v29, %v147
  %v149 = vpop.f32.mrb[0].mxu0
  %150 = vmatprep.mubr.f32.mxu0 0.0
  %151 = vmatmul.mubr.f32.gmra.mrb[0].mxu0 %v51
  %v152 = vpop.f32.mrb[0].mxu0
  %v153 = vadd.f32 %v29, %v152
  %v154 = vpop.f32.mrb[0].mxu0
  %155 = vmatprep.mubr.f32.mxu0 0.0
  %156 = vmatmul.mubr.f32.gmra.mrb[0].mxu0 %v54
  %v157 = vpop.f32.mrb[0].mxu0
  %v158 = vadd.f32 %v29, %v157
  %v159 = vpop.f32.mrb[0].mxu0
  %160 = vdwg.mxu0
  %v161 = vmul.f32 %v123, %v123
  %v162 = vmul.f32 %v128, %v128
  %v163 = vmul.f32 %v133, %v133
  %v164 = vmul.f32 %v138, %v138
  %v165 = vmul.f32 %v143, %v143
  %v166 = vmul.f32 %v148, %v148
  %v167 = vmul.f32 %v153, %v153
  %v168 = vmul.f32 %v158, %v158
  %169 = vadd.xlane.f32.xlu0 %v161
  %v170 = vpop.xlane.xlu0 %169
  %171 = vadd.xlane.f32.xlu0 %v162
  %v172 = vpop.xlane.xlu0 %171
  %173 = vadd.xlane.f32.xlu0 %v163
  %v174 = vpop.xlane.xlu0 %173
  %175 = vadd.xlane.f32.xlu0 %v164
  %v176 = vpop.xlane.xlu0 %175
  %177 = vadd.xlane.f32.xlu0 %v165
  %v178 = vpop.xlane.xlu0 %177
  %179 = vadd.xlane.f32.xlu0 %v166
  %v180 = vpop.xlane.xlu0 %179
  %181 = vadd.xlane.f32.xlu0 %v167
  %v182 = vpop.xlane.xlu0 %181
  %183 = vadd.xlane.f32.xlu0 %v168
  %v184 = vpop.xlane.xlu0 %183
  %v185 = vrcp.pop 32.0
  %v186 = vmul.f32 %v170, %v185
  %v187 = vmul.f32 %v172, %v185
  %v188 = vmul.f32 %v174, %v185
  %v189 = vmul.f32 %v176, %v185
  %v190 = vmul.f32 %v178, %v185
  %v191 = vmul.f32 %v180, %v185
  %v192 = vmul.f32 %v182, %v185
  %v193 = vmul.f32 %v184, %v185
  %v194 = vadd.f32 %v186, 0.25
  %v195 = vadd.f32 %v187, 0.25
  %v196 = vadd.f32 %v188, 0.25
  %v197 = vadd.f32 %v189, 0.25
  %v198 = vadd.f32 %v190, 0.25
  %v199 = vadd.f32 %v191, 0.25
  %v200 = vadd.f32 %v192, 0.25
  %v201 = vadd.f32 %v193, 0.25
  %v202 = vrsqrt.pop %v194
  %v203 = vrsqrt.pop %v195
  %v204 = vrsqrt.pop %v196
  %v205 = vrsqrt.pop %v197
  %v206 = vrsqrt.pop %v198
  %v207 = vrsqrt.pop %v199
  %v208 = vrsqrt.pop %v200
  %v209 = vrsqrt.pop %v201
  %v210 = vmul.f32 %v123, %v202
  %v211 = vmul.f32 %v128, %v203
  %v212 = vmul.f32 %v133, %v204
  %v213 = vmul.f32 %v138, %v205
  %v214 = vmul.f32 %v143, %v206
  %v215 = vmul.f32 %v148, %v207
  %v216 = vmul.f32 %v153, %v208
  %v217 = vmul.f32 %v158, %v209
  %218 = vst [vmem:[%s3] sm:$0xff] %v210
  %219 = vst [vmem:[%s3 + $0x8] sm:$0xff] %v211
  %220 = vst [vmem:[%s3 + $0x10] sm:$0xff] %v212
  %221 = vst [vmem:[%s3 + $0x18] sm:$0xff] %v213
  %222 = vst [vmem:[%s3 + $0x20] sm:$0xff] %v214
  %223 = vst [vmem:[%s3 + $0x28] sm:$0xff] %v215
  %224 = vst [vmem:[%s3 + $0x30] sm:$0xff] %v216
  %225 = vst [vmem:[%s3 + $0x38] sm:$0xff] %v217
  // Predicated region
  $region14: #{dprnn_forward.4} parent=0 // pred_check
    _
  $region15: #{dprnn_forward.4} parent=0 // pred_check_branch
    %227 = sbr.rel (0) target = $region17
  $region16: #{dprnn_forward.4} parent=0 // pred_region
    _
  $region17: #{dprnn_forward.4} parent=0 // pred_fallthru
    _
  // Predicated region
  $region18: #{dprnn_forward.4} parent=0 // pred_check
    _
  $region19: #{dprnn_forward.4} parent=0 // pred_check_branch
    %229 = sbr.rel (0) target = $region21
  $region20: #{dprnn_forward.4} parent=0 // pred_region
    _
  $region21: #{dprnn_forward.4} parent=0 // pred_fallthru
    _

// kernel: dprnn_forward.7
$region0: #{dprnn_forward.7}
  #allocation0 [shape = 'u32[]', space=smem, size = 0x4, offset = 0x4, fixed_abs, tag = 'smem constant byte address 0x4 - core index']
  #allocation1 [shape = 'u32[144,128]{1,0:T(1,128)}', space=vmem, size = 0x12000, scoped, tag = 'internal scratch']
  %s0 = inlined_call_operand.vmem [shape: f32[64,32], index: 0, kind: input, shape index: {}]
  %s1 = inlined_call_operand.vmem [shape: f32[32,128], index: 1, kind: input, shape index: {}]
  %s2 = inlined_call_operand.vmem [shape: f32[1,128], index: 2, kind: input, shape index: {}]
  %s3 = inlined_call_operand.vmem [shape: f32[64,128], index: 3, kind: output, shape index: {}]
  %s4 = sld [smem:[#allocation0]]
  $region22: #{dprnn_forward.7} parent=0
    _
  %s6 = ssub.s32 1, %s4
  %s7 = scalar_select 0, %s6, %s4
  // Predicated region
  $region2: #{dprnn_forward.7} parent=0 // pred_check
    _
  $region3: #{dprnn_forward.7} parent=0 // pred_check_branch
    %9 = sbr.rel (0) target = $region5
  $region4: #{dprnn_forward.7} parent=0 // pred_region
    _
  $region5: #{dprnn_forward.7} parent=0 // pred_fallthru
    _
  // Predicated region
  $region6: #{dprnn_forward.7} parent=0 // pred_check
    _
  $region7: #{dprnn_forward.7} parent=0 // pred_check_branch
    %11 = sbr.rel (0) target = $region9
  $region8: #{dprnn_forward.7} parent=0 // pred_region
    _
  $region9: #{dprnn_forward.7} parent=0 // pred_fallthru
    _
  // Predicated region
  $region10: #{dprnn_forward.7} parent=0 // pred_check
    _
  $region11: #{dprnn_forward.7} parent=0 // pred_check_branch
    %13 = sbr.rel (0) target = $region13
  $region12: #{dprnn_forward.7} parent=0 // pred_region
    _
  $region13: #{dprnn_forward.7} parent=0 // pred_fallthru
    _
  %v14 = vld [vmem:[%s0] sm:$0xff]
  %v15 = vld [vmem:[%s0 + $0x8] sm:$0xff]
  %v16 = vld [vmem:[%s0 + $0x10] sm:$0xff]
  %v17 = vld [vmem:[%s0 + $0x18] sm:$0xff]
  %v18 = vld [vmem:[%s0 + $0x20] sm:$0xff]
  %v19 = vld [vmem:[%s0 + $0x28] sm:$0xff]
  %v20 = vld [vmem:[%s0 + $0x30] sm:$0xff]
  %v21 = vld [vmem:[%s0 + $0x38] sm:$0xff]
  %v22 = vld [vmem:[%s1] sm:$0xff]
  %v23 = vld [vmem:[%s1 + $0x8] sm:$0xff]
  %v24 = vld [vmem:[%s1 + $0x10] sm:$0xff]
  %v25 = vld [vmem:[%s1 + $0x18] sm:$0xff]
  %v26 = vld [vmem:[%s2] sm:$0x1]
  %v28 = vlaneseq
  %v29 = vshrl.u32 %v28, 7
  %v30 = vsub.s32 0, %v29
  %v31 = vrot.slane %v26, %v30
  %vm33 = vcmask 261120
  %v35 = vsel %vm33, %v14, 0
  %v38 = vsel %vm33, %v15, 0
  %v41 = vsel %vm33, %v16, 0
  %v44 = vsel %vm33, %v17, 0
  %v47 = vsel %vm33, %v18, 0
  %v50 = vsel %vm33, %v19, 0
  %v53 = vsel %vm33, %v20, 0
  %v56 = vsel %vm33, %v21, 0
  %58 = vmatprep.subr.mxu0 0.0
  %59 = vmatpush1.msra.mxu0 %v22
  %60 = vmatprep.subr.mxu0 0.0
  %61 = vmatpush1.msra.mxu0 %v23
  %62 = vmatprep.subr.mxu0 0.0
  %63 = vmatpush1.msra.mxu0 %v24
  %64 = vmatprep.subr.mxu0 0.0
  %65 = vmatpush1.msra.mxu0 %v25
  %66 = vmatprep.subr.mxu0 0.0
  %67 = vmatpush1.msra.mxu0 0.0
  %68 = vmatprep.subr.mxu0 0.0
  %69 = vmatpush1.msra.mxu0 0.0
  %70 = vmatprep.subr.mxu0 0.0
  %71 = vmatpush1.msra.mxu0 0.0
  %72 = vmatprep.subr.mxu0 0.0
  %73 = vmatpush1.msra.mxu0 0.0
  %74 = vmatprep.subr.mxu0 0.0
  %75 = vmatpush1.msra.mxu0 0.0
  %76 = vmatprep.subr.mxu0 0.0
  %77 = vmatpush1.msra.mxu0 0.0
  %78 = vmatprep.subr.mxu0 0.0
  %79 = vmatpush1.msra.mxu0 0.0
  %80 = vmatprep.subr.mxu0 0.0
  %81 = vmatpush1.msra.mxu0 0.0
  %82 = vmatprep.subr.mxu0 0.0
  %83 = vmatpush1.msra.mxu0 0.0
  %84 = vmatprep.subr.mxu0 0.0
  %85 = vmatpush1.msra.mxu0 0.0
  %86 = vmatprep.subr.mxu0 0.0
  %87 = vmatpush1.msra.mxu0 0.0
  %88 = vmatprep.subr.mxu0 0.0
  %89 = vmatpush1.msra.mxu0 0.0
  %90 = vmatprep.subr.mxu0 0.0
  %91 = vmatpush1.msra.mxu0 0.0
  %92 = vmatprep.subr.mxu0 0.0
  %93 = vmatpush1.msra.mxu0 0.0
  %94 = vmatprep.subr.mxu0 0.0
  %95 = vmatpush1.msra.mxu0 0.0
  %96 = vmatprep.subr.mxu0 0.0
  %97 = vmatpush1.msra.mxu0 0.0
  %98 = vmatprep.subr.mxu0 0.0
  %99 = vmatpush1.msra.mxu0 0.0
  %100 = vmatprep.subr.mxu0 0.0
  %101 = vmatpush1.msra.mxu0 0.0
  %102 = vmatprep.subr.mxu0 0.0
  %103 = vmatpush1.msra.mxu0 0.0
  %104 = vmatprep.subr.mxu0 0.0
  %105 = vmatpush1.msra.mxu0 0.0
  %106 = vmatprep.subr.mxu0 0.0
  %107 = vmatpush1.msra.mxu0 0.0
  %108 = vmatprep.subr.mxu0 0.0
  %109 = vmatpush1.msra.mxu0 0.0
  %110 = vmatprep.subr.mxu0 0.0
  %111 = vmatpush1.msra.mxu0 0.0
  %112 = vmatprep.subr.mxu0 0.0
  %113 = vmatpush1.msra.mxu0 0.0
  %114 = vmatprep.subr.mxu0 0.0
  %115 = vmatpush1.msra.mxu0 0.0
  %116 = vmatprep.subr.mxu0 0.0
  %117 = vmatpush1.msra.mxu0 0.0
  %118 = vmatprep.subr.mxu0 0.0
  %119 = vmatpush1.msra.mxu0 0.0
  %120 = vmatprep.subr.mxu0 0.0
  %121 = vmatpush1.msra.mxu0 0.0
  %122 = vmatprep.mubr.f32.mxu0 0.0
  %123 = vmatmul.mubr.f32.gmra.mrb[0].mxu0 %v35
  %v124 = vpop.f32.mrb[0].mxu0
  %v125 = vadd.f32 %v31, %v124
  %v126 = vpop.f32.mrb[0].mxu0
  %127 = vmatprep.mubr.f32.mxu0 0.0
  %128 = vmatmul.mubr.f32.gmra.mrb[0].mxu0 %v38
  %v129 = vpop.f32.mrb[0].mxu0
  %v130 = vadd.f32 %v31, %v129
  %v131 = vpop.f32.mrb[0].mxu0
  %132 = vmatprep.mubr.f32.mxu0 0.0
  %133 = vmatmul.mubr.f32.gmra.mrb[0].mxu0 %v41
  %v134 = vpop.f32.mrb[0].mxu0
  %v135 = vadd.f32 %v31, %v134
  %v136 = vpop.f32.mrb[0].mxu0
  %137 = vmatprep.mubr.f32.mxu0 0.0
  %138 = vmatmul.mubr.f32.gmra.mrb[0].mxu0 %v44
  %v139 = vpop.f32.mrb[0].mxu0
  %v140 = vadd.f32 %v31, %v139
  %v141 = vpop.f32.mrb[0].mxu0
  %142 = vmatprep.mubr.f32.mxu0 0.0
  %143 = vmatmul.mubr.f32.gmra.mrb[0].mxu0 %v47
  %v144 = vpop.f32.mrb[0].mxu0
  %v145 = vadd.f32 %v31, %v144
  %v146 = vpop.f32.mrb[0].mxu0
  %147 = vmatprep.mubr.f32.mxu0 0.0
  %148 = vmatmul.mubr.f32.gmra.mrb[0].mxu0 %v50
  %v149 = vpop.f32.mrb[0].mxu0
  %v150 = vadd.f32 %v31, %v149
  %v151 = vpop.f32.mrb[0].mxu0
  %152 = vmatprep.mubr.f32.mxu0 0.0
  %153 = vmatmul.mubr.f32.gmra.mrb[0].mxu0 %v53
  %v154 = vpop.f32.mrb[0].mxu0
  %v155 = vadd.f32 %v31, %v154
  %v156 = vpop.f32.mrb[0].mxu0
  %157 = vmatprep.mubr.f32.mxu0 0.0
  %158 = vmatmul.mubr.f32.gmra.mrb[0].mxu0 %v56
  %v159 = vpop.f32.mrb[0].mxu0
  %v160 = vadd.f32 %v31, %v159
  %v161 = vpop.f32.mrb[0].mxu0
  %162 = vdwg.mxu0
  %v163 = vmul.f32 %v125, %v125
  %v164 = vmul.f32 %v130, %v130
  %v165 = vmul.f32 %v135, %v135
  %v166 = vmul.f32 %v140, %v140
  %v167 = vmul.f32 %v145, %v145
  %v168 = vmul.f32 %v150, %v150
  %v169 = vmul.f32 %v155, %v155
  %v170 = vmul.f32 %v160, %v160
  %171 = vadd.xlane.f32.xlu0 %v163
  %v172 = vpop.xlane.xlu0 %171
  %173 = vadd.xlane.f32.xlu0 %v164
  %v174 = vpop.xlane.xlu0 %173
  %175 = vadd.xlane.f32.xlu0 %v165
  %v176 = vpop.xlane.xlu0 %175
  %177 = vadd.xlane.f32.xlu0 %v166
  %v178 = vpop.xlane.xlu0 %177
  %179 = vadd.xlane.f32.xlu0 %v167
  %v180 = vpop.xlane.xlu0 %179
  %181 = vadd.xlane.f32.xlu0 %v168
  %v182 = vpop.xlane.xlu0 %181
  %183 = vadd.xlane.f32.xlu0 %v169
  %v184 = vpop.xlane.xlu0 %183
  %185 = vadd.xlane.f32.xlu0 %v170
  %v186 = vpop.xlane.xlu0 %185
  %v187 = vrcp.pop 16.0
  %v188 = vmul.f32 %v172, %v187
  %v189 = vmul.f32 %v174, %v187
  %v190 = vmul.f32 %v176, %v187
  %v191 = vmul.f32 %v178, %v187
  %v192 = vmul.f32 %v180, %v187
  %v193 = vmul.f32 %v182, %v187
  %v194 = vmul.f32 %v184, %v187
  %v195 = vmul.f32 %v186, %v187
  %v196 = vadd.f32 %v188, 0.25
  %v197 = vadd.f32 %v189, 0.25
  %v198 = vadd.f32 %v190, 0.25
  %v199 = vadd.f32 %v191, 0.25
  %v200 = vadd.f32 %v192, 0.25
  %v201 = vadd.f32 %v193, 0.25
  %v202 = vadd.f32 %v194, 0.25
  %v203 = vadd.f32 %v195, 0.25
  %v204 = vrsqrt.pop %v196
  %v205 = vrsqrt.pop %v197
  %v206 = vrsqrt.pop %v198
  %v207 = vrsqrt.pop %v199
  %v208 = vrsqrt.pop %v200
  %v209 = vrsqrt.pop %v201
  %v210 = vrsqrt.pop %v202
  %v211 = vrsqrt.pop %v203
  %v212 = vmul.f32 %v125, %v204
  %v213 = vmul.f32 %v130, %v205
  %v214 = vmul.f32 %v135, %v206
  %v215 = vmul.f32 %v140, %v207
  %v216 = vmul.f32 %v145, %v208
  %v217 = vmul.f32 %v150, %v209
  %v218 = vmul.f32 %v155, %v210
  %v219 = vmul.f32 %v160, %v211
  %v220 = vmax.f32 %v212, 0.0
  %v221 = vmax.f32 %v213, 0.0
  %v222 = vmax.f32 %v214, 0.0
  %v223 = vmax.f32 %v215, 0.0
  %v224 = vmax.f32 %v216, 0.0
  %v225 = vmax.f32 %v217, 0.0
  %v226 = vmax.f32 %v218, 0.0
  %v227 = vmax.f32 %v219, 0.0
  %228 = vst [vmem:[%s3] sm:$0xff] %v220
  %229 = vst [vmem:[%s3 + $0x8] sm:$0xff] %v221
  %230 = vst [vmem:[%s3 + $0x10] sm:$0xff] %v222
  %231 = vst [vmem:[%s3 + $0x18] sm:$0xff] %v223
  %232 = vst [vmem:[%s3 + $0x20] sm:$0xff] %v224
  %233 = vst [vmem:[%s3 + $0x28] sm:$0xff] %v225
  %234 = vst [vmem:[%s3 + $0x30] sm:$0xff] %v226
  %235 = vst [vmem:[%s3 + $0x38] sm:$0xff] %v227
  // Predicated region
  $region14: #{dprnn_forward.7} parent=0 // pred_check
    _
  $region15: #{dprnn_forward.7} parent=0 // pred_check_branch
    %237 = sbr.rel (0) target = $region17
  $region16: #{dprnn_forward.7} parent=0 // pred_region
    _
  $region17: #{dprnn_forward.7} parent=0 // pred_fallthru
    _
  // Predicated region
  $region18: #{dprnn_forward.7} parent=0 // pred_check
    _
  $region19: #{dprnn_forward.7} parent=0 // pred_check_branch
    %239 = sbr.rel (0) target = $region21
  $region20: #{dprnn_forward.7} parent=0 // pred_region
    _
  $region21: #{dprnn_forward.7} parent=0 // pred_fallthru
    _

// kernel: dprnn_forward.6
$region0: #{dprnn_forward.6}
  #allocation0 [shape = 'u32[]', space=smem, size = 0x4, offset = 0x4, fixed_abs, tag = 'smem constant byte address 0x4 - core index']
  #allocation1 [shape = 'u32[144,128]{1,0:T(1,128)}', space=vmem, size = 0x12000, scoped, tag = 'internal scratch']
  #allocation2 [shape = 'f32[160,128]{1,0:T(8,128)}', space=vmem, size = 0x14000, scoped, tag = 'scratch operand']
  #allocation3 [shape = 'f32[160,32]{1,0:T(8,128)}', space=vmem, size = 0x14000, scoped, tag = 'scratch operand']
  %s0 = inlined_call_operand.vmem [shape: f32[10,16,32], index: 0, kind: input, shape index: {}]
  %s1 = inlined_call_operand.vmem [shape: f32[32,128], index: 1, kind: input, shape index: {}]
  %s2 = inlined_call_operand.vmem [shape: f32[32,128], index: 2, kind: input, shape index: {}]
  %s3 = inlined_call_operand.vmem [shape: f32[1,128], index: 3, kind: input, shape index: {}]
  %s4 = inlined_call_operand.vmem [shape: f32[10,16,32], index: 4, kind: output, shape index: {}]
  %s5 = sld [smem:[#allocation0]]
  $region26: #{dprnn_forward.6} parent=0
    _
  %s7 = ssub.s32 1, %s5
  %s8 = scalar_select 0, %s7, %s5
  // Predicated region
  $region2: #{dprnn_forward.6} parent=0 // pred_check
    _
  $region3: #{dprnn_forward.6} parent=0 // pred_check_branch
    %10 = sbr.rel (0) target = $region5
  $region4: #{dprnn_forward.6} parent=0 // pred_region
    _
  $region5: #{dprnn_forward.6} parent=0 // pred_fallthru
    _
  // Predicated region
  $region6: #{dprnn_forward.6} parent=0 // pred_check
    _
  $region7: #{dprnn_forward.6} parent=0 // pred_check_branch
    %12 = sbr.rel (0) target = $region9
  $region8: #{dprnn_forward.6} parent=0 // pred_region
    _
  $region9: #{dprnn_forward.6} parent=0 // pred_fallthru
    _
  // Predicated region
  $region10: #{dprnn_forward.6} parent=0 // pred_check
    _
  $region11: #{dprnn_forward.6} parent=0 // pred_check_branch
    %14 = sbr.rel (0) target = $region13
  $region12: #{dprnn_forward.6} parent=0 // pred_region
    _
  $region13: #{dprnn_forward.6} parent=0 // pred_fallthru
    _
  // Predicated region
  $region14: #{dprnn_forward.6} parent=0 // pred_check
    _
  $region15: #{dprnn_forward.6} parent=0 // pred_check_branch
    %16 = sbr.rel (0) target = $region17
  $region16: #{dprnn_forward.6} parent=0 // pred_region
    _
  $region17: #{dprnn_forward.6} parent=0 // pred_fallthru
    _
  %v17 = vld [vmem:[%s0] sm:$0xff]
  %v18 = vld [vmem:[%s0 + $0x8] sm:$0xff]
  %v19 = vld [vmem:[%s0 + $0x10] sm:$0xff]
  %v20 = vld [vmem:[%s0 + $0x18] sm:$0xff]
  %v21 = vld [vmem:[%s0 + $0x20] sm:$0xff]
  %v22 = vld [vmem:[%s0 + $0x28] sm:$0xff]
  %v23 = vld [vmem:[%s0 + $0x30] sm:$0xff]
  %v24 = vld [vmem:[%s0 + $0x38] sm:$0xff]
  %v25 = vld [vmem:[%s0 + $0x40] sm:$0xff]
  %v26 = vld [vmem:[%s0 + $0x48] sm:$0xff]
  %v27 = vld [vmem:[%s0 + $0x50] sm:$0xff]
  %v28 = vld [vmem:[%s0 + $0x58] sm:$0xff]
  %v29 = vld [vmem:[%s0 + $0x60] sm:$0xff]
  %v30 = vld [vmem:[%s0 + $0x68] sm:$0xff]
  %v31 = vld [vmem:[%s0 + $0x70] sm:$0xff]
  %v32 = vld [vmem:[%s0 + $0x78] sm:$0xff]
  %v33 = vld [vmem:[%s0 + $0x80] sm:$0xff]
  %v34 = vld [vmem:[%s0 + $0x88] sm:$0xff]
  %v35 = vld [vmem:[%s0 + $0x90] sm:$0xff]
  %v36 = vld [vmem:[%s0 + $0x98] sm:$0xff]
  %v37 = vld [vmem:[%s1] sm:$0xff]
  %v38 = vld [vmem:[%s1 + $0x8] sm:$0xff]
  %v39 = vld [vmem:[%s1 + $0x10] sm:$0xff]
  %v40 = vld [vmem:[%s1 + $0x18] sm:$0xff]
  %v41 = vld [vmem:[%s3] sm:$0x1]
  %v43 = vlaneseq
  %v44 = vshrl.u32 %v43, 7
  %v45 = vsub.s32 0, %v44
  %v46 = vrot.slane %v41, %v45
  %vm48 = vcmask 261120
  %v50 = vsel %vm48, %v17, 0
  %v53 = vsel %vm48, %v18, 0
  %v56 = vsel %vm48, %v19, 0
  %v59 = vsel %vm48, %v20, 0
  %v62 = vsel %vm48, %v21, 0
  %v65 = vsel %vm48, %v22, 0
  %v68 = vsel %vm48, %v23, 0
  %v71 = vsel %vm48, %v24, 0
  %v74 = vsel %vm48, %v25, 0
  %v77 = vsel %vm48, %v26, 0
  %v80 = vsel %vm48, %v27, 0
  %v83 = vsel %vm48, %v28, 0
  %v86 = vsel %vm48, %v29, 0
  %v89 = vsel %vm48, %v30, 0
  %v92 = vsel %vm48, %v31, 0
  %v95 = vsel %vm48, %v32, 0
  %v98 = vsel %vm48, %v33, 0
  %v101 = vsel %vm48, %v34, 0
  %v104 = vsel %vm48, %v35, 0
  %v107 = vsel %vm48, %v36, 0
  %109 = vmatprep.subr.mxu0 0.0
  %110 = vmatpush1.msra.mxu0 %v37
  %111 = vmatprep.subr.mxu0 0.0
  %112 = vmatpush1.msra.mxu0 %v38
  %113 = vmatprep.subr.mxu0 0.0
  %114 = vmatpush1.msra.mxu0 %v39
  %115 = vmatprep.subr.mxu0 0.0
  %116 = vmatpush1.msra.mxu0 %v40
  %117 = vmatprep.subr.mxu0 0.0
  %118 = vmatpush1.msra.mxu0 0.0
  %119 = vmatprep.subr.mxu0 0.0
  %120 = vmatpush1.msra.mxu0 0.0
  %121 = vmatprep.subr.mxu0 0.0
  %122 = vmatpush1.msra.mxu0 0.0
  %123 = vmatprep.subr.mxu0 0.0
  %124 = vmatpush1.msra.mxu0 0.0
  %125 = vmatprep.subr.mxu0 0.0
  %126 = vmatpush1.msra.mxu0 0.0
  %127 = vmatprep.subr.mxu0 0.0
  %128 = vmatpush1.msra.mxu0 0.0
  %129 = vmatprep.subr.mxu0 0.0
  %130 = vmatpush1.msra.mxu0 0.0
  %131 = vmatprep.subr.mxu0 0.0
  %132 = vmatpush1.msra.mxu0 0.0
  %133 = vmatprep.subr.mxu0 0.0
  %134 = vmatpush1.msra.mxu0 0.0
  %135 = vmatprep.subr.mxu0 0.0
  %136 = vmatpush1.msra.mxu0 0.0
  %137 = vmatprep.subr.mxu0 0.0
  %138 = vmatpush1.msra.mxu0 0.0
  %139 = vmatprep.subr.mxu0 0.0
  %140 = vmatpush1.msra.mxu0 0.0
  %141 = vmatprep.subr.mxu0 0.0
  %142 = vmatpush1.msra.mxu0 0.0
  %143 = vmatprep.subr.mxu0 0.0
  %144 = vmatpush1.msra.mxu0 0.0
  %145 = vmatprep.subr.mxu0 0.0
  %146 = vmatpush1.msra.mxu0 0.0
  %147 = vmatprep.subr.mxu0 0.0
  %148 = vmatpush1.msra.mxu0 0.0
  %149 = vmatprep.subr.mxu0 0.0
  %150 = vmatpush1.msra.mxu0 0.0
  %151 = vmatprep.subr.mxu0 0.0
  %152 = vmatpush1.msra.mxu0 0.0
  %153 = vmatprep.subr.mxu0 0.0
  %154 = vmatpush1.msra.mxu0 0.0
  %155 = vmatprep.subr.mxu0 0.0
  %156 = vmatpush1.msra.mxu0 0.0
  %157 = vmatprep.subr.mxu0 0.0
  %158 = vmatpush1.msra.mxu0 0.0
  %159 = vmatprep.subr.mxu0 0.0
  %160 = vmatpush1.msra.mxu0 0.0
  %161 = vmatprep.subr.mxu0 0.0
  %162 = vmatpush1.msra.mxu0 0.0
  %163 = vmatprep.subr.mxu0 0.0
  %164 = vmatpush1.msra.mxu0 0.0
  %165 = vmatprep.subr.mxu0 0.0
  %166 = vmatpush1.msra.mxu0 0.0
  %167 = vmatprep.subr.mxu0 0.0
  %168 = vmatpush1.msra.mxu0 0.0
  %169 = vmatprep.subr.mxu0 0.0
  %170 = vmatpush1.msra.mxu0 0.0
  %171 = vmatprep.subr.mxu0 0.0
  %172 = vmatpush1.msra.mxu0 0.0
  %173 = vmatprep.mubr.f32.mxu0 0.0
  %174 = vmatmul.mubr.f32.gmra.mrb[0].mxu0 %v50
  %v175 = vpop.f32.mrb[0].mxu0
  %v176 = vadd.f32 %v46, %v175
  %v177 = vpop.f32.mrb[0].mxu0
  %178 = vmatprep.mubr.f32.mxu0 0.0
  %179 = vmatmul.mubr.f32.gmra.mrb[0].mxu0 %v53
  %v180 = vpop.f32.mrb[0].mxu0
  %v181 = vadd.f32 %v46, %v180
  %v182 = vpop.f32.mrb[0].mxu0
  %183 = vmatprep.mubr.f32.mxu0 0.0
  %184 = vmatmul.mubr.f32.gmra.mrb[0].mxu0 %v56
  %v185 = vpop.f32.mrb[0].mxu0
  %v186 = vadd.f32 %v46, %v185
  %v187 = vpop.f32.mrb[0].mxu0
  %188 = vmatprep.mubr.f32.mxu0 0.0
  %189 = vmatmul.mubr.f32.gmra.mrb[0].mxu0 %v59
  %v190 = vpop.f32.mrb[0].mxu0
  %v191 = vadd.f32 %v46, %v190
  %v192 = vpop.f32.mrb[0].mxu0
  %193 = vmatprep.mubr.f32.mxu0 0.0
  %194 = vmatmul.mubr.f32.gmra.mrb[0].mxu0 %v62
  %v195 = vpop.f32.mrb[0].mxu0
  %v196 = vadd.f32 %v46, %v195
  %v197 = vpop.f32.mrb[0].mxu0
  %198 = vmatprep.mubr.f32.mxu0 0.0
  %199 = vmatmul.mubr.f32.gmra.mrb[0].mxu0 %v65
  %v200 = vpop.f32.mrb[0].mxu0
  %v201 = vadd.f32 %v46, %v200
  %v202 = vpop.f32.mrb[0].mxu0
  %203 = vmatprep.mubr.f32.mxu0 0.0
  %204 = vmatmul.mubr.f32.gmra.mrb[0].mxu0 %v68
  %v205 = vpop.f32.mrb[0].mxu0
  %v206 = vadd.f32 %v46, %v205
  %v207 = vpop.f32.mrb[0].mxu0
  %208 = vmatprep.mubr.f32.mxu0 0.0
  %209 = vmatmul.mubr.f32.gmra.mrb[0].mxu0 %v71
  %v210 = vpop.f32.mrb[0].mxu0
  %v211 = vadd.f32 %v46, %v210
  %v212 = vpop.f32.mrb[0].mxu0
  %213 = vmatprep.mubr.f32.mxu0 0.0
  %214 = vmatmul.mubr.f32.gmra.mrb[0].mxu0 %v74
  %v215 = vpop.f32.mrb[0].mxu0
  %v216 = vadd.f32 %v46, %v215
  %v217 = vpop.f32.mrb[0].mxu0
  %218 = vmatprep.mubr.f32.mxu0 0.0
  %219 = vmatmul.mubr.f32.gmra.mrb[0].mxu0 %v77
  %v220 = vpop.f32.mrb[0].mxu0
  %v221 = vadd.f32 %v46, %v220
  %v222 = vpop.f32.mrb[0].mxu0
  %223 = vmatprep.mubr.f32.mxu0 0.0
  %224 = vmatmul.mubr.f32.gmra.mrb[0].mxu0 %v80
  %v225 = vpop.f32.mrb[0].mxu0
  %v226 = vadd.f32 %v46, %v225
  %v227 = vpop.f32.mrb[0].mxu0
  %228 = vmatprep.mubr.f32.mxu0 0.0
  %229 = vmatmul.mubr.f32.gmra.mrb[0].mxu0 %v83
  %v230 = vpop.f32.mrb[0].mxu0
  %v231 = vadd.f32 %v46, %v230
  %v232 = vpop.f32.mrb[0].mxu0
  %233 = vmatprep.mubr.f32.mxu0 0.0
  %234 = vmatmul.mubr.f32.gmra.mrb[0].mxu0 %v86
  %v235 = vpop.f32.mrb[0].mxu0
  %v236 = vadd.f32 %v46, %v235
  %v237 = vpop.f32.mrb[0].mxu0
  %238 = vmatprep.mubr.f32.mxu0 0.0
  %239 = vmatmul.mubr.f32.gmra.mrb[0].mxu0 %v89
  %v240 = vpop.f32.mrb[0].mxu0
  %v241 = vadd.f32 %v46, %v240
  %v242 = vpop.f32.mrb[0].mxu0
  %243 = vmatprep.mubr.f32.mxu0 0.0
  %244 = vmatmul.mubr.f32.gmra.mrb[0].mxu0 %v92
  %v245 = vpop.f32.mrb[0].mxu0
  %v246 = vadd.f32 %v46, %v245
  %v247 = vpop.f32.mrb[0].mxu0
  %248 = vmatprep.mubr.f32.mxu0 0.0
  %249 = vmatmul.mubr.f32.gmra.mrb[0].mxu0 %v95
  %v250 = vpop.f32.mrb[0].mxu0
  %v251 = vadd.f32 %v46, %v250
  %v252 = vpop.f32.mrb[0].mxu0
  %253 = vmatprep.mubr.f32.mxu0 0.0
  %254 = vmatmul.mubr.f32.gmra.mrb[0].mxu0 %v98
  %v255 = vpop.f32.mrb[0].mxu0
  %v256 = vadd.f32 %v46, %v255
  %v257 = vpop.f32.mrb[0].mxu0
  %258 = vmatprep.mubr.f32.mxu0 0.0
  %259 = vmatmul.mubr.f32.gmra.mrb[0].mxu0 %v101
  %v260 = vpop.f32.mrb[0].mxu0
  %v261 = vadd.f32 %v46, %v260
  %v262 = vpop.f32.mrb[0].mxu0
  %263 = vmatprep.mubr.f32.mxu0 0.0
  %264 = vmatmul.mubr.f32.gmra.mrb[0].mxu0 %v104
  %v265 = vpop.f32.mrb[0].mxu0
  %v266 = vadd.f32 %v46, %v265
  %v267 = vpop.f32.mrb[0].mxu0
  %268 = vmatprep.mubr.f32.mxu0 0.0
  %269 = vmatmul.mubr.f32.gmra.mrb[0].mxu0 %v107
  %v270 = vpop.f32.mrb[0].mxu0
  %v271 = vadd.f32 %v46, %v270
  %v272 = vpop.f32.mrb[0].mxu0
  %273 = vdwg.mxu0
  %274 = vst [vmem:[#allocation2] sm:$0xff] %v176
  %275 = vst [vmem:[#allocation2 + $0x8] sm:$0xff] %v181
  %276 = vst [vmem:[#allocation2 + $0x10] sm:$0xff] %v186
  %277 = vst [vmem:[#allocation2 + $0x18] sm:$0xff] %v191
  %278 = vst [vmem:[#allocation2 + $0x20] sm:$0xff] %v196
  %279 = vst [vmem:[#allocation2 + $0x28] sm:$0xff] %v201
  %280 = vst [vmem:[#allocation2 + $0x30] sm:$0xff] %v206
  %281 = vst [vmem:[#allocation2 + $0x38] sm:$0xff] %v211
  %282 = vst [vmem:[#allocation2 + $0x40] sm:$0xff] %v216
  %283 = vst [vmem:[#allocation2 + $0x48] sm:$0xff] %v221
  %284 = vst [vmem:[#allocation2 + $0x50] sm:$0xff] %v226
  %285 = vst [vmem:[#allocation2 + $0x58] sm:$0xff] %v231
  %286 = vst [vmem:[#allocation2 + $0x60] sm:$0xff] %v236
  %287 = vst [vmem:[#allocation2 + $0x68] sm:$0xff] %v241
  %288 = vst [vmem:[#allocation2 + $0x70] sm:$0xff] %v246
  %289 = vst [vmem:[#allocation2 + $0x78] sm:$0xff] %v251
  %290 = vst [vmem:[#allocation2 + $0x80] sm:$0xff] %v256
  %291 = vst [vmem:[#allocation2 + $0x88] sm:$0xff] %v261
  %292 = vst [vmem:[#allocation2 + $0x90] sm:$0xff] %v266
  %293 = vst [vmem:[#allocation2 + $0x98] sm:$0xff] %v271
  %v294 = vld [vmem:[#allocation2] sm:$0xff]
  %v295 = vld [vmem:[#allocation2 + $0x8] sm:$0xff]
  %v296 = vld [vmem:[%s2] sm:$0xff]
  %v297 = vld [vmem:[%s2 + $0x8] sm:$0xff]
  %v298 = vld [vmem:[%s2 + $0x10] sm:$0xff]
  %v299 = vld [vmem:[%s2 + $0x18] sm:$0xff]
  %v301 = vsel %vm48, 0.0, 0
  %303 = vmatprep.subr.mxu0 0.0
  %304 = vmatpush1.msra.mxu0 %v296
  %305 = vmatprep.subr.mxu0 0.0
  %306 = vmatpush1.msra.mxu0 %v297
  %307 = vmatprep.subr.mxu0 0.0
  %308 = vmatpush1.msra.mxu0 %v298
  %309 = vmatprep.subr.mxu0 0.0
  %310 = vmatpush1.msra.mxu0 %v299
  %311 = vmatprep.subr.mxu0 0.0
  %312 = vmatpush1.msra.mxu0 0.0
  %313 = vmatprep.subr.mxu0 0.0
  %314 = vmatpush1.msra.mxu0 0.0
  %315 = vmatprep.subr.mxu0 0.0
  %316 = vmatpush1.msra.mxu0 0.0
  %317 = vmatprep.subr.mxu0 0.0
  %318 = vmatpush1.msra.mxu0 0.0
  %319 = vmatprep.subr.mxu0 0.0
  %320 = vmatpush1.msra.mxu0 0.0
  %321 = vmatprep.subr.mxu0 0.0
  %322 = vmatpush1.msra.mxu0 0.0
  %323 = vmatprep.subr.mxu0 0.0
  %324 = vmatpush1.msra.mxu0 0.0
  %325 = vmatprep.subr.mxu0 0.0
  %326 = vmatpush1.msra.mxu0 0.0
  %327 = vmatprep.subr.mxu0 0.0
  %328 = vmatpush1.msra.mxu0 0.0
  %329 = vmatprep.subr.mxu0 0.0
  %330 = vmatpush1.msra.mxu0 0.0
  %331 = vmatprep.subr.mxu0 0.0
  %332 = vmatpush1.msra.mxu0 0.0
  %333 = vmatprep.subr.mxu0 0.0
  %334 = vmatpush1.msra.mxu0 0.0
  %335 = vmatprep.subr.mxu0 0.0
  %336 = vmatpush1.msra.mxu0 0.0
  %337 = vmatprep.subr.mxu0 0.0
  %338 = vmatpush1.msra.mxu0 0.0
  %339 = vmatprep.subr.mxu0 0.0
  %340 = vmatpush1.msra.mxu0 0.0
  %341 = vmatprep.subr.mxu0 0.0
  %342 = vmatpush1.msra.mxu0 0.0
  %343 = vmatprep.subr.mxu0 0.0
  %344 = vmatpush1.msra.mxu0 0.0
  %345 = vmatprep.subr.mxu0 0.0
  %346 = vmatpush1.msra.mxu0 0.0
  %347 = vmatprep.subr.mxu0 0.0
  %348 = vmatpush1.msra.mxu0 0.0
  %349 = vmatprep.subr.mxu0 0.0
  %350 = vmatpush1.msra.mxu0 0.0
  %351 = vmatprep.subr.mxu0 0.0
  %352 = vmatpush1.msra.mxu0 0.0
  %353 = vmatprep.subr.mxu0 0.0
  %354 = vmatpush1.msra.mxu0 0.0
  %355 = vmatprep.subr.mxu0 0.0
  %356 = vmatpush1.msra.mxu0 0.0
  %357 = vmatprep.subr.mxu0 0.0
  %358 = vmatpush1.msra.mxu0 0.0
  %359 = vmatprep.subr.mxu0 0.0
  %360 = vmatpush1.msra.mxu0 0.0
  %361 = vmatprep.subr.mxu0 0.0
  %362 = vmatpush1.msra.mxu0 0.0
  %363 = vmatprep.subr.mxu0 0.0
  %364 = vmatpush1.msra.mxu0 0.0
  %365 = vmatprep.subr.mxu0 0.0
  %366 = vmatpush1.msra.mxu0 0.0
  %367 = vmatprep.mubr.f32.mxu0 0.0
  %368 = vmatmul.mubr.f32.gmra.mrb[0].mxu0 %v301
  %v369 = vpop.f32.mrb[0].mxu0
  %v370 = vadd.f32 0.0, %v369
  %v371 = vpop.f32.mrb[0].mxu0
  %372 = vmatprep.mubr.f32.mxu0 0.0
  %373 = vmatmul.mubr.f32.gmra.mrb[0].mxu0 %v301
  %v374 = vpop.f32.mrb[0].mxu0
  %v375 = vadd.f32 0.0, %v374
  %v376 = vpop.f32.mrb[0].mxu0
  %377 = vdwg.mxu0
  %v378 = vadd.f32 %v294, %v370
  %v379 = vadd.f32 %v295, %v375
  %v380 = vxor.u32 %v378, 2147483648
  %v381 = vxor.u32 %v379, 2147483648
  %v382 = vmul.f32 %v380, 1.442695
  %v383 = vpow.pop %v382
  %v384 = vmul.f32 %v381, 1.442695
  %v385 = vpow.pop %v384
  %v386 = vadd.f32 %v383, 1.0
  %v387 = vadd.f32 %v385, 1.0
  %v388 = vrcp.pop %v386
  %v389 = vmul.f32 1.0, %v388
  %v390 = vrcp.pop %v387
  %v391 = vmul.f32 1.0, %v390
  %v392 = vtanh.pop %v378
  %v393 = vtanh.pop %v379
  %v394 = vmul.f32 %v389, 0.0
  %v395 = vmul.f32 %v391, 0.0
  %398 = vrot.lane.b32.xlu0 %v392, 64
  %v399 = vpop.permute.xlu0 %398
  %400 = vrot.lane.b32.xlu0 %v393, 64
  %v401 = vpop.permute.xlu0 %400
  %v404 = vmul.f32 %v389, %v399
  %v405 = vmul.f32 %v391, %v401
  %408 = vrot.lane.b32.xlu0 %v404, 32
  %v409 = vpop.permute.xlu0 %408
  %410 = vrot.lane.b32.xlu0 %v405, 32
  %v411 = vpop.permute.xlu0 %410
  %v414 = vadd.f32 %v394, %v409
  %v415 = vadd.f32 %v395, %v411
  %v416 = vtanh.pop %v414
  %v417 = vtanh.pop %v415
  %420 = vrot.lane.b32.xlu0 %v416, 64
  %v421 = vpop.permute.xlu0 %420
  %422 = vrot.lane.b32.xlu0 %v417, 64
  %v423 = vpop.permute.xlu0 %422
  %v426 = vmul.f32 %v389, %v421
  %v427 = vmul.f32 %v391, %v423
  %430 = vrot.lane.b32.xlu0 %v426, 32
  %v431 = vpop.permute.xlu0 %430
  %432 = vrot.lane.b32.xlu0 %v427, 32
  %v433 = vpop.permute.xlu0 %432
  %436 = vst.msk [vmem:[#allocation3] sm:$0xff] %vm48, %v431
  %437 = vst.msk [vmem:[#allocation3 + $0x8] sm:$0xff] %vm48, %v433
  %s438 = scalar_lea.vmem [#allocation2], 16
  %v439 = vld [vmem:[%s438] sm:$0xff]
  %v440 = vld [vmem:[%s438 + $0x8] sm:$0xff]
  %v441 = vld [vmem:[%s2] sm:$0xff]
  %v442 = vld [vmem:[%s2 + $0x8] sm:$0xff]
  %v443 = vld [vmem:[%s2 + $0x10] sm:$0xff]
  %v444 = vld [vmem:[%s2 + $0x18] sm:$0xff]
  %v445 = vsel %vm48, %v431, 0
  %v447 = vsel %vm48, %v433, 0
  %449 = vmatprep.subr.mxu0 0.0
  %450 = vmatpush1.msra.mxu0 %v441
  %451 = vmatprep.subr.mxu0 0.0
  %452 = vmatpush1.msra.mxu0 %v442
  %453 = vmatprep.subr.mxu0 0.0
  %454 = vmatpush1.msra.mxu0 %v443
  %455 = vmatprep.subr.mxu0 0.0
  %456 = vmatpush1.msra.mxu0 %v444
  %457 = vmatprep.subr.mxu0 0.0
  %458 = vmatpush1.msra.mxu0 0.0
  %459 = vmatprep.subr.mxu0 0.0
  %460 = vmatpush1.msra.mxu0 0.0
  %461 = vmatprep.subr.mxu0 0.0
  %462 = vmatpush1.msra.mxu0 0.0
  %463 = vmatprep.subr.mxu0 0.0
  %464 = vmatpush1.msra.mxu0 0.0
  %465 = vmatprep.subr.mxu0 0.0
  %466 = vmatpush1.msra.mxu0 0.0
  %467 = vmatprep.subr.mxu0 0.0
  %468 = vmatpush1.msra.mxu0 0.0
  %469 = vmatprep.subr.mxu0 0.0
  %470 = vmatpush1.msra.mxu0 0.0
  %471 = vmatprep.subr.mxu0 0.0
  %472 = vmatpush1.msra.mxu0 0.0
  %473 = vmatprep.subr.mxu0 0.0
  %474 = vmatpush1.msra.mxu0 0.0
  %475 = vmatprep.subr.mxu0 0.0
  %476 = vmatpush1.msra.mxu0 0.0
  %477 = vmatprep.subr.mxu0 0.0
  %478 = vmatpush1.msra.mxu0 0.0
  %479 = vmatprep.subr.mxu0 0.0
  %480 = vmatpush1.msra.mxu0 0.0
  %481 = vmatprep.subr.mxu0 0.0
  %482 = vmatpush1.msra.mxu0 0.0
  %483 = vmatprep.subr.mxu0 0.0
  %484 = vmatpush1.msra.mxu0 0.0
  %485 = vmatprep.subr.mxu0 0.0
  %486 = vmatpush1.msra.mxu0 0.0
  %487 = vmatprep.subr.mxu0 0.0
  %488 = vmatpush1.msra.mxu0 0.0
  %489 = vmatprep.subr.mxu0 0.0
  %490 = vmatpush1.msra.mxu0 0.0
  %491 = vmatprep.subr.mxu0 0.0
  %492 = vmatpush1.msra.mxu0 0.0
  %493 = vmatprep.subr.mxu0 0.0
  %494 = vmatpush1.msra.mxu0 0.0
  %495 = vmatprep.subr.mxu0 0.0
  %496 = vmatpush1.msra.mxu0 0.0
  %497 = vmatprep.subr.mxu0 0.0
  %498 = vmatpush1.msra.mxu0 0.0
  %499 = vmatprep.subr.mxu0 0.0
  %500 = vmatpush1.msra.mxu0 0.0
  %501 = vmatprep.subr.mxu0 0.0
  %502 = vmatpush1.msra.mxu0 0.0
  %503 = vmatprep.subr.mxu0 0.0
  %504 = vmatpush1.msra.mxu0 0.0
  %505 = vmatprep.subr.mxu0 0.0
  %506 = vmatpush1.msra.mxu0 0.0
  %507 = vmatprep.subr.mxu0 0.0
  %508 = vmatpush1.msra.mxu0 0.0
  %509 = vmatprep.subr.mxu0 0.0
  %510 = vmatpush1.msra.mxu0 0.0
  %511 = vmatprep.subr.mxu0 0.0
  %512 = vmatpush1.msra.mxu0 0.0
  %513 = vmatprep.mubr.f32.mxu0 0.0
  %514 = vmatmul.mubr.f32.gmra.mrb[0].mxu0 %v445
  %v515 = vpop.f32.mrb[0].mxu0
  %v516 = vadd.f32 0.0, %v515
  %v517 = vpop.f32.mrb[0].mxu0
  %518 = vmatprep.mubr.f32.mxu0 0.0
  %519 = vmatmul.mubr.f32.gmra.mrb[0].mxu0 %v447
  %v520 = vpop.f32.mrb[0].mxu0
  %v521 = vadd.f32 0.0, %v520
  %v522 = vpop.f32.mrb[0].mxu0
  %523 = vdwg.mxu0
  %v524 = vadd.f32 %v439, %v516
  %v525 = vadd.f32 %v440, %v521
  %v526 = vxor.u32 %v524, 2147483648
  %v527 = vxor.u32 %v525, 2147483648
  %v528 = vmul.f32 %v526, 1.442695
  %v529 = vpow.pop %v528
  %v530 = vmul.f32 %v527, 1.442695
  %v531 = vpow.pop %v530
  %v532 = vadd.f32 %v529, 1.0
  %v533 = vadd.f32 %v531, 1.0
  %v534 = vrcp.pop %v532
  %v535 = vmul.f32 1.0, %v534
  %v536 = vrcp.pop %v533
  %v537 = vmul.f32 1.0, %v536
  %v538 = vtanh.pop %v524
  %v539 = vtanh.pop %v525
  %v540 = vmul.f32 %v535, %v414
  %v541 = vmul.f32 %v537, %v415
  %544 = vrot.lane.b32.xlu0 %v538, 64
  %v545 = vpop.permute.xlu0 %544
  %546 = vrot.lane.b32.xlu0 %v539, 64
  %v547 = vpop.permute.xlu0 %546
  %v550 = vmul.f32 %v535, %v545
  %v551 = vmul.f32 %v537, %v547
  %554 = vrot.lane.b32.xlu0 %v550, 32
  %v555 = vpop.permute.xlu0 %554
  %556 = vrot.lane.b32.xlu0 %v551, 32
  %v557 = vpop.permute.xlu0 %556
  %v560 = vadd.f32 %v540, %v555
  %v561 = vadd.f32 %v541, %v557
  %v562 = vtanh.pop %v560
  %v563 = vtanh.pop %v561
  %566 = vrot.lane.b32.xlu0 %v562, 64
  %v567 = vpop.permute.xlu0 %566
  %568 = vrot.lane.b32.xlu0 %v563, 64
  %v569 = vpop.permute.xlu0 %568
  %v572 = vmul.f32 %v535, %v567
  %v573 = vmul.f32 %v537, %v569
  %576 = vrot.lane.b32.xlu0 %v572, 32
  %v577 = vpop.permute.xlu0 %576
  %578 = vrot.lane.b32.xlu0 %v573, 32
  %v579 = vpop.permute.xlu0 %578
  %s582 = scalar_lea.vmem [#allocation3], 16
  %583 = vst.msk [vmem:[%s582] sm:$0xff] %vm48, %v577
  %584 = vst.msk [vmem:[%s582 + $0x8] sm:$0xff] %vm48, %v579
  %s585 = scalar_lea.vmem [#allocation2], 32
  %v586 = vld [vmem:[%s585] sm:$0xff]
  %v587 = vld [vmem:[%s585 + $0x8] sm:$0xff]
  %v588 = vld [vmem:[%s2] sm:$0xff]
  %v589 = vld [vmem:[%s2 + $0x8] sm:$0xff]
  %v590 = vld [vmem:[%s2 + $0x10] sm:$0xff]
  %v591 = vld [vmem:[%s2 + $0x18] sm:$0xff]
  %v592 = vsel %vm48, %v577, 0
  %v594 = vsel %vm48, %v579, 0
  %596 = vmatprep.subr.mxu0 0.0
  %597 = vmatpush1.msra.mxu0 %v588
  %598 = vmatprep.subr.mxu0 0.0
  %599 = vmatpush1.msra.mxu0 %v589
  %600 = vmatprep.subr.mxu0 0.0
  %601 = vmatpush1.msra.mxu0 %v590
  %602 = vmatprep.subr.mxu0 0.0
  %603 = vmatpush1.msra.mxu0 %v591
  %604 = vmatprep.subr.mxu0 0.0
  %605 = vmatpush1.msra.mxu0 0.0
  %606 = vmatprep.subr.mxu0 0.0
  %607 = vmatpush1.msra.mxu0 0.0
  %608 = vmatprep.subr.mxu0 0.0
  %609 = vmatpush1.msra.mxu0 0.0
  %610 = vmatprep.subr.mxu0 0.0
  %611 = vmatpush1.msra.mxu0 0.0
  %612 = vmatprep.subr.mxu0 0.0
  %613 = vmatpush1.msra.mxu0 0.0
  %614 = vmatprep.subr.mxu0 0.0
  %615 = vmatpush1.msra.mxu0 0.0
  %616 = vmatprep.subr.mxu0 0.0
  %617 = vmatpush1.msra.mxu0 0.0
  %618 = vmatprep.subr.mxu0 0.0
  %619 = vmatpush1.msra.mxu0 0.0
  %620 = vmatprep.subr.mxu0 0.0
  %621 = vmatpush1.msra.mxu0 0.0
  %622 = vmatprep.subr.mxu0 0.0
  %623 = vmatpush1.msra.mxu0 0.0
  %624 = vmatprep.subr.mxu0 0.0
  %625 = vmatpush1.msra.mxu0 0.0
  %626 = vmatprep.subr.mxu0 0.0
  %627 = vmatpush1.msra.mxu0 0.0
  %628 = vmatprep.subr.mxu0 0.0
  %629 = vmatpush1.msra.mxu0 0.0
  %630 = vmatprep.subr.mxu0 0.0
  %631 = vmatpush1.msra.mxu0 0.0
  %632 = vmatprep.subr.mxu0 0.0
  %633 = vmatpush1.msra.mxu0 0.0
  %634 = vmatprep.subr.mxu0 0.0
  %635 = vmatpush1.msra.mxu0 0.0
  %636 = vmatprep.subr.mxu0 0.0
  %637 = vmatpush1.msra.mxu0 0.0
  %638 = vmatprep.subr.mxu0 0.0
  %639 = vmatpush1.msra.mxu0 0.0
  %640 = vmatprep.subr.mxu0 0.0
  %641 = vmatpush1.msra.mxu0 0.0
  %642 = vmatprep.subr.mxu0 0.0
  %643 = vmatpush1.msra.mxu0 0.0
  %644 = vmatprep.subr.mxu0 0.0
  %645 = vmatpush1.msra.mxu0 0.0
  %646 = vmatprep.subr.mxu0 0.0
  %647 = vmatpush1.msra.mxu0 0.0
  %648 = vmatprep.subr.mxu0 0.0
  %649 = vmatpush1.msra.mxu0 0.0
  %650 = vmatprep.subr.mxu0 0.0
  %651 = vmatpush1.msra.mxu0 0.0
  %652 = vmatprep.subr.mxu0 0.0
  %653 = vmatpush1.msra.mxu0 0.0
  %654 = vmatprep.subr.mxu0 0.0
  %655 = vmatpush1.msra.mxu0 0.0
  %656 = vmatprep.subr.mxu0 0.0
  %657 = vmatpush1.msra.mxu0 0.0
  %658 = vmatprep.subr.mxu0 0.0
  %659 = vmatpush1.msra.mxu0 0.0
  %660 = vmatprep.mubr.f32.mxu0 0.0
  %661 = vmatmul.mubr.f32.gmra.mrb[0].mxu0 %v592
  %v662 = vpop.f32.mrb[0].mxu0
  %v663 = vadd.f32 0.0, %v662
  %v664 = vpop.f32.mrb[0].mxu0
  %665 = vmatprep.mubr.f32.mxu0 0.0
  %666 = vmatmul.mubr.f32.gmra.mrb[0].mxu0 %v594
  %v667 = vpop.f32.mrb[0].mxu0
  %v668 = vadd.f32 0.0, %v667
  %v669 = vpop.f32.mrb[0].mxu0
  %670 = vdwg.mxu0
  %v671 = vadd.f32 %v586, %v663
  %v672 = vadd.f32 %v587, %v668
  %v673 = vxor.u32 %v671, 2147483648
  %v674 = vxor.u32 %v672, 2147483648
  %v675 = vmul.f32 %v673, 1.442695
  %v676 = vpow.pop %v675
  %v677 = vmul.f32 %v674, 1.442695
  %v678 = vpow.pop %v677
  %v679 = vadd.f32 %v676, 1.0
  %v680 = vadd.f32 %v678, 1.0
  %v681 = vrcp.pop %v679
  %v682 = vmul.f32 1.0, %v681
  %v683 = vrcp.pop %v680
  %v684 = vmul.f32 1.0, %v683
  %v685 = vtanh.pop %v671
  %v686 = vtanh.pop %v672
  %v687 = vmul.f32 %v682, %v560
  %v688 = vmul.f32 %v684, %v561
  %691 = vrot.lane.b32.xlu0 %v685, 64
  %v692 = vpop.permute.xlu0 %691
  %693 = vrot.lane.b32.xlu0 %v686, 64
  %v694 = vpop.permute.xlu0 %693
  %v697 = vmul.f32 %v682, %v692
  %v698 = vmul.f32 %v684, %v694
  %701 = vrot.lane.b32.xlu0 %v697, 32
  %v702 = vpop.permute.xlu0 %701
  %703 = vrot.lane.b32.xlu0 %v698, 32
  %v704 = vpop.permute.xlu0 %703
  %v707 = vadd.f32 %v687, %v702
  %v708 = vadd.f32 %v688, %v704
  %v709 = vtanh.pop %v707
  %v710 = vtanh.pop %v708
  %713 = vrot.lane.b32.xlu0 %v709, 64
  %v714 = vpop.permute.xlu0 %713
  %715 = vrot.lane.b32.xlu0 %v710, 64
  %v716 = vpop.permute.xlu0 %715
  %v719 = vmul.f32 %v682, %v714
  %v720 = vmul.f32 %v684, %v716
  %723 = vrot.lane.b32.xlu0 %v719, 32
  %v724 = vpop.permute.xlu0 %723
  %725 = vrot.lane.b32.xlu0 %v720, 32
  %v726 = vpop.permute.xlu0 %725
  %s729 = scalar_lea.vmem [#allocation3], 32
  %730 = vst.msk [vmem:[%s729] sm:$0xff] %vm48, %v724
  %731 = vst.msk [vmem:[%s729 + $0x8] sm:$0xff] %vm48, %v726
  %s732 = scalar_lea.vmem [#allocation2], 48
  %v733 = vld [vmem:[%s732] sm:$0xff]
  %v734 = vld [vmem:[%s732 + $0x8] sm:$0xff]
  %v735 = vld [vmem:[%s2] sm:$0xff]
  %v736 = vld [vmem:[%s2 + $0x8] sm:$0xff]
  %v737 = vld [vmem:[%s2 + $0x10] sm:$0xff]
  %v738 = vld [vmem:[%s2 + $0x18] sm:$0xff]
  %v739 = vsel %vm48, %v724, 0
  %v741 = vsel %vm48, %v726, 0
  %743 = vmatprep.subr.mxu0 0.0
  %744 = vmatpush1.msra.mxu0 %v735
  %745 = vmatprep.subr.mxu0 0.0
  %746 = vmatpush1.msra.mxu0 %v736
  %747 = vmatprep.subr.mxu0 0.0
  %748 = vmatpush1.msra.mxu0 %v737
  %749 = vmatprep.subr.mxu0 0.0
  %750 = vmatpush1.msra.mxu0 %v738
  %751 = vmatprep.subr.mxu0 0.0
  %752 = vmatpush1.msra.mxu0 0.0
  %753 = vmatprep.subr.mxu0 0.0
  %754 = vmatpush1.msra.mxu0 0.0
  %755 = vmatprep.subr.mxu0 0.0
  %756 = vmatpush1.msra.mxu0 0.0
  %757 = vmatprep.subr.mxu0 0.0
  %758 = vmatpush1.msra.mxu0 0.0
  %759 = vmatprep.subr.mxu0 0.0
  %760 = vmatpush1.msra.mxu0 0.0
  %761 = vmatprep.subr.mxu0 0.0
  %762 = vmatpush1.msra.mxu0 0.0
  %763 = vmatprep.subr.mxu0 0.0
  %764 = vmatpush1.msra.mxu0 0.0
  %765 = vmatprep.subr.mxu0 0.0
  %766 = vmatpush1.msra.mxu0 0.0
  %767 = vmatprep.subr.mxu0 0.0
  %768 = vmatpush1.msra.mxu0 0.0
  %769 = vmatprep.subr.mxu0 0.0
  %770 = vmatpush1.msra.mxu0 0.0
  %771 = vmatprep.subr.mxu0 0.0
  %772 = vmatpush1.msra.mxu0 0.0
  %773 = vmatprep.subr.mxu0 0.0
  %774 = vmatpush1.msra.mxu0 0.0
  %775 = vmatprep.subr.mxu0 0.0
  %776 = vmatpush1.msra.mxu0 0.0
  %777 = vmatprep.subr.mxu0 0.0
  %778 = vmatpush1.msra.mxu0 0.0
  %779 = vmatprep.subr.mxu0 0.0
  %780 = vmatpush1.msra.mxu0 0.0
  %781 = vmatprep.subr.mxu0 0.0
  %782 = vmatpush1.msra.mxu0 0.0
  %783 = vmatprep.subr.mxu0 0.0
  %784 = vmatpush1.msra.mxu0 0.0
  %785 = vmatprep.subr.mxu0 0.0
  %786 = vmatpush1.msra.mxu0 0.0
  %787 = vmatprep.subr.mxu0 0.0
  %788 = vmatpush1.msra.mxu0 0.0
  %789 = vmatprep.subr.mxu0 0.0
  %790 = vmatpush1.msra.mxu0 0.0
  %791 = vmatprep.subr.mxu0 0.0
  %792 = vmatpush1.msra.mxu0 0.0
  %793 = vmatprep.subr.mxu0 0.0
  %794 = vmatpush1.msra.mxu0 0.0
  %795 = vmatprep.subr.mxu0 0.0
  %796 = vmatpush1.msra.mxu0 0.0
  %797 = vmatprep.subr.mxu0 0.0
  %798 = vmatpush1.msra.mxu0 0.0
  %799 = vmatprep.subr.mxu0 0.0
  %800 = vmatpush1.msra.mxu0 0.0
  %801 = vmatprep.subr.mxu0 0.0
  %802 = vmatpush1.msra.mxu0 0.0
  %803 = vmatprep.subr.mxu0 0.0
  %804 = vmatpush1.msra.mxu0 0.0
  %805 = vmatprep.subr.mxu0 0.0
  %806 = vmatpush1.msra.mxu0 0.0
  %807 = vmatprep.mubr.f32.mxu0 0.0
  %808 = vmatmul.mubr.f32.gmra.mrb[0].mxu0 %v739
  %v809 = vpop.f32.mrb[0].mxu0
  %v810 = vadd.f32 0.0, %v809
  %v811 = vpop.f32.mrb[0].mxu0
  %812 = vmatprep.mubr.f32.mxu0 0.0
  %813 = vmatmul.mubr.f32.gmra.mrb[0].mxu0 %v741
  %v814 = vpop.f32.mrb[0].mxu0
  %v815 = vadd.f32 0.0, %v814
  %v816 = vpop.f32.mrb[0].mxu0
  %817 = vdwg.mxu0
  %v818 = vadd.f32 %v733, %v810
  %v819 = vadd.f32 %v734, %v815
  %v820 = vxor.u32 %v818, 2147483648
  %v821 = vxor.u32 %v819, 2147483648
  %v822 = vmul.f32 %v820, 1.442695
  %v823 = vpow.pop %v822
  %v824 = vmul.f32 %v821, 1.442695
  %v825 = vpow.pop %v824
  %v826 = vadd.f32 %v823, 1.0
  %v827 = vadd.f32 %v825, 1.0
  %v828 = vrcp.pop %v826
  %v829 = vmul.f32 1.0, %v828
  %v830 = vrcp.pop %v827
  %v831 = vmul.f32 1.0, %v830
  %v832 = vtanh.pop %v818
  %v833 = vtanh.pop %v819
  %v834 = vmul.f32 %v829, %v707
  %v835 = vmul.f32 %v831, %v708
  %838 = vrot.lane.b32.xlu0 %v832, 64
  %v839 = vpop.permute.xlu0 %838
  %840 = vrot.lane.b32.xlu0 %v833, 64
  %v841 = vpop.permute.xlu0 %840
  %v844 = vmul.f32 %v829, %v839
  %v845 = vmul.f32 %v831, %v841
  %848 = vrot.lane.b32.xlu0 %v844, 32
  %v849 = vpop.permute.xlu0 %848
  %850 = vrot.lane.b32.xlu0 %v845, 32
  %v851 = vpop.permute.xlu0 %850
  %v854 = vadd.f32 %v834, %v849
  %v855 = vadd.f32 %v835, %v851
  %v856 = vtanh.pop %v854
  %v857 = vtanh.pop %v855
  %860 = vrot.lane.b32.xlu0 %v856, 64
  %v861 = vpop.permute.xlu0 %860
  %862 = vrot.lane.b32.xlu0 %v857, 64
  %v863 = vpop.permute.xlu0 %862
  %v866 = vmul.f32 %v829, %v861
  %v867 = vmul.f32 %v831, %v863
  %870 = vrot.lane.b32.xlu0 %v866, 32
  %v871 = vpop.permute.xlu0 %870
  %872 = vrot.lane.b32.xlu0 %v867, 32
  %v873 = vpop.permute.xlu0 %872
  %s876 = scalar_lea.vmem [#allocation3], 48
  %877 = vst.msk [vmem:[%s876] sm:$0xff] %vm48, %v871
  %878 = vst.msk [vmem:[%s876 + $0x8] sm:$0xff] %vm48, %v873
  %s879 = scalar_lea.vmem [#allocation2], 64
  %v880 = vld [vmem:[%s879] sm:$0xff]
  %v881 = vld [vmem:[%s879 + $0x8] sm:$0xff]
  %v882 = vld [vmem:[%s2] sm:$0xff]
  %v883 = vld [vmem:[%s2 + $0x8] sm:$0xff]
  %v884 = vld [vmem:[%s2 + $0x10] sm:$0xff]
  %v885 = vld [vmem:[%s2 + $0x18] sm:$0xff]
  %v886 = vsel %vm48, %v871, 0
  %v888 = vsel %vm48, %v873, 0
  %890 = vmatprep.subr.mxu0 0.0
  %891 = vmatpush1.msra.mxu0 %v882
  %892 = vmatprep.subr.mxu0 0.0
  %893 = vmatpush1.msra.mxu0 %v883
  %894 = vmatprep.subr.mxu0 0.0
  %895 = vmatpush1.msra.mxu0 %v884
  %896 = vmatprep.subr.mxu0 0.0
  %897 = vmatpush1.msra.mxu0 %v885
  %898 = vmatprep.subr.mxu0 0.0
  %899 = vmatpush1.msra.mxu0 0.0
  %900 = vmatprep.subr.mxu0 0.0
  %901 = vmatpush1.msra.mxu0 0.0
  %902 = vmatprep.subr.mxu0 0.0
  %903 = vmatpush1.msra.mxu0 0.0
  %904 = vmatprep.subr.mxu0 0.0
  %905 = vmatpush1.msra.mxu0 0.0
  %906 = vmatprep.subr.mxu0 0.0
  %907 = vmatpush1.msra.mxu0 0.0
  %908 = vmatprep.subr.mxu0 0.0
  %909 = vmatpush1.msra.mxu0 0.0
  %910 = vmatprep.subr.mxu0 0.0
  %911 = vmatpush1.msra.mxu0 0.0
  %912 = vmatprep.subr.mxu0 0.0
  %913 = vmatpush1.msra.mxu0 0.0
  %914 = vmatprep.subr.mxu0 0.0
  %915 = vmatpush1.msra.mxu0 0.0
  %916 = vmatprep.subr.mxu0 0.0
  %917 = vmatpush1.msra.mxu0 0.0
  %918 = vmatprep.subr.mxu0 0.0
  %919 = vmatpush1.msra.mxu0 0.0
  %920 = vmatprep.subr.mxu0 0.0
  %921 = vmatpush1.msra.mxu0 0.0
  %922 = vmatprep.subr.mxu0 0.0
  %923 = vmatpush1.msra.mxu0 0.0
  %924 = vmatprep.subr.mxu0 0.0
  %925 = vmatpush1.msra.mxu0 0.0
  %926 = vmatprep.subr.mxu0 0.0
  %927 = vmatpush1.msra.mxu0 0.0
  %928 = vmatprep.subr.mxu0 0.0
  %929 = vmatpush1.msra.mxu0 0.0
  %930 = vmatprep.subr.mxu0 0.0
  %931 = vmatpush1.msra.mxu0 0.0
  %932 = vmatprep.subr.mxu0 0.0
  %933 = vmatpush1.msra.mxu0 0.0
  %934 = vmatprep.subr.mxu0 0.0
  %935 = vmatpush1.msra.mxu0 0.0
  %936 = vmatprep.subr.mxu0 0.0
  %937 = vmatpush1.msra.mxu0 0.0
  %938 = vmatprep.subr.mxu0 0.0
  %939 = vmatpush1.msra.mxu0 0.0
  %940 = vmatprep.subr.mxu0 0.0
  %941 = vmatpush1.msra.mxu0 0.0
  %942 = vmatprep.subr.mxu0 0.0
  %943 = vmatpush1.msra.mxu0 0.0
  %944 = vmatprep.subr.mxu0 0.0
  %945 = vmatpush1.msra.mxu0 0.0
  %946 = vmatprep.subr.mxu0 0.0
  %947 = vmatpush1.msra.mxu0 0.0
  %948 = vmatprep.subr.mxu0 0.0
  %949 = vmatpush1.msra.mxu0 0.0
  %950 = vmatprep.subr.mxu0 0.0
  %951 = vmatpush1.msra.mxu0 0.0
  %952 = vmatprep.subr.mxu0 0.0
  %953 = vmatpush1.msra.mxu0 0.0
  %954 = vmatprep.mubr.f32.mxu0 0.0
  %955 = vmatmul.mubr.f32.gmra.mrb[0].mxu0 %v886
  %v956 = vpop.f32.mrb[0].mxu0
  %v957 = vadd.f32 0.0, %v956
  %v958 = vpop.f32.mrb[0].mxu0
  %959 = vmatprep.mubr.f32.mxu0 0.0
  %960 = vmatmul.mubr.f32.gmra.mrb[0].mxu0 %v888
  %v961 = vpop.f32.mrb[0].mxu0
  %v962 = vadd.f32 0.0, %v961
  %v963 = vpop.f32.mrb[0].mxu0
  %964 = vdwg.mxu0
  %v965 = vadd.f32 %v880, %v957
  %v966 = vadd.f32 %v881, %v962
  %v967 = vxor.u32 %v965, 2147483648
  %v968 = vxor.u32 %v966, 2147483648
  %v969 = vmul.f32 %v967, 1.442695
  %v970 = vpow.pop %v969
  %v971 = vmul.f32 %v968, 1.442695
  %v972 = vpow.pop %v971
  %v973 = vadd.f32 %v970, 1.0
  %v974 = vadd.f32 %v972, 1.0
  %v975 = vrcp.pop %v973
  %v976 = vmul.f32 1.0, %v975
  %v977 = vrcp.pop %v974
  %v978 = vmul.f32 1.0, %v977
  %v979 = vtanh.pop %v965
  %v980 = vtanh.pop %v966
  %v981 = vmul.f32 %v976, %v854
  %v982 = vmul.f32 %v978, %v855
  %985 = vrot.lane.b32.xlu0 %v979, 64
  %v986 = vpop.permute.xlu0 %985
  %987 = vrot.lane.b32.xlu0 %v980, 64
  %v988 = vpop.permute.xlu0 %987
  %v991 = vmul.f32 %v976, %v986
  %v992 = vmul.f32 %v978, %v988
  %995 = vrot.lane.b32.xlu0 %v991, 32
  %v996 = vpop.permute.xlu0 %995
  %997 = vrot.lane.b32.xlu0 %v992, 32
  %v998 = vpop.permute.xlu0 %997
  %v1001 = vadd.f32 %v981, %v996
  %v1002 = vadd.f32 %v982, %v998
  %v1003 = vtanh.pop %v1001
  %v1004 = vtanh.pop %v1002
  %1007 = vrot.lane.b32.xlu0 %v1003, 64
  %v1008 = vpop.permute.xlu0 %1007
  %1009 = vrot.lane.b32.xlu0 %v1004, 64
  %v1010 = vpop.permute.xlu0 %1009
  %v1013 = vmul.f32 %v976, %v1008
  %v1014 = vmul.f32 %v978, %v1010
  %1017 = vrot.lane.b32.xlu0 %v1013, 32
  %v1018 = vpop.permute.xlu0 %1017
  %1019 = vrot.lane.b32.xlu0 %v1014, 32
  %v1020 = vpop.permute.xlu0 %1019
  %s1023 = scalar_lea.vmem [#allocation3], 64
  %1024 = vst.msk [vmem:[%s1023] sm:$0xff] %vm48, %v1018
  %1025 = vst.msk [vmem:[%s1023 + $0x8] sm:$0xff] %vm48, %v1020
  %s1026 = scalar_lea.vmem [#allocation2], 80
  %v1027 = vld [vmem:[%s1026] sm:$0xff]
  %v1028 = vld [vmem:[%s1026 + $0x8] sm:$0xff]
  %v1029 = vld [vmem:[%s2] sm:$0xff]
  %v1030 = vld [vmem:[%s2 + $0x8] sm:$0xff]
  %v1031 = vld [vmem:[%s2 + $0x10] sm:$0xff]
  %v1032 = vld [vmem:[%s2 + $0x18] sm:$0xff]
  %v1033 = vsel %vm48, %v1018, 0
  %v1035 = vsel %vm48, %v1020, 0
  %1037 = vmatprep.subr.mxu0 0.0
  %1038 = vmatpush1.msra.mxu0 %v1029
  %1039 = vmatprep.subr.mxu0 0.0
  %1040 = vmatpush1.msra.mxu0 %v1030
  %1041 = vmatprep.subr.mxu0 0.0
  %1042 = vmatpush1.msra.mxu0 %v1031
  %1043 = vmatprep.subr.mxu0 0.0
  %1044 = vmatpush1.msra.mxu0 %v1032
  %1045 = vmatprep.subr.mxu0 0.0
  %1046 = vmatpush1.msra.mxu0 0.0
  %1047 = vmatprep.subr.mxu0 0.0
  %1048 = vmatpush1.msra.mxu0 0.0
  %1049 = vmatprep.subr.mxu0 0.0
  %1050 = vmatpush1.msra.mxu0 0.0
  %1051 = vmatprep.subr.mxu0 0.0
  %1052 = vmatpush1.msra.mxu0 0.0
  %1053 = vmatprep.subr.mxu0 0.0
  %1054 = vmatpush1.msra.mxu0 0.0
  %1055 = vmatprep.subr.mxu0 0.0
  %1056 = vmatpush1.msra.mxu0 0.0
  %1057 = vmatprep.subr.mxu0 0.0
  %1058 = vmatpush1.msra.mxu0 0.0
  %1059 = vmatprep.subr.mxu0 0.0
  %1060 = vmatpush1.msra.mxu0 0.0
  %1061 = vmatprep.subr.mxu0 0.0
  %1062 = vmatpush1.msra.mxu0 0.0
  %1063 = vmatprep.subr.mxu0 0.0
  %1064 = vmatpush1.msra.mxu0 0.0
  %1065 = vmatprep.subr.mxu0 0.0
  %1066 = vmatpush1.msra.mxu0 0.0
  %1067 = vmatprep.subr.mxu0 0.0
  %1068 = vmatpush1.msra.mxu0 0.0
  %1069 = vmatprep.subr.mxu0 0.0
  %1070 = vmatpush1.msra.mxu0 0.0
  %1071 = vmatprep.subr.mxu0 0.0
  %1072 = vmatpush1.msra.mxu0 0.0
  %1073 = vmatprep.subr.mxu0 0.0
  %1074 = vmatpush1.msra.mxu0 0.0
  %1075 = vmatprep.subr.mxu0 0.0
  %1076 = vmatpush1.msra.mxu0 0.0
  %1077 = vmatprep.subr.mxu0 0.0
  %1078 = vmatpush1.msra.mxu0 0.0
  %1079 = vmatprep.subr.mxu0 0.0
  %1080 = vmatpush1.msra.mxu0 0.0
  %1081 = vmatprep.subr.mxu0 0.0
  %1082 = vmatpush1.msra.mxu0 0.0
  %1083 = vmatprep.subr.mxu0 0.0
  %1084 = vmatpush1.msra.mxu0 0.0
  %1085 = vmatprep.subr.mxu0 0.0
  %1086 = vmatpush1.msra.mxu0 0.0
  %1087 = vmatprep.subr.mxu0 0.0
  %1088 = vmatpush1.msra.mxu0 0.0
  %1089 = vmatprep.subr.mxu0 0.0
  %1090 = vmatpush1.msra.mxu0 0.0
  %1091 = vmatprep.subr.mxu0 0.0
  %1092 = vmatpush1.msra.mxu0 0.0
  %1093 = vmatprep.subr.mxu0 0.0
  %1094 = vmatpush1.msra.mxu0 0.0
  %1095 = vmatprep.subr.mxu0 0.0
  %1096 = vmatpush1.msra.mxu0 0.0
  %1097 = vmatprep.subr.mxu0 0.0
  %1098 = vmatpush1.msra.mxu0 0.0
  %1099 = vmatprep.subr.mxu0 0.0
  %1100 = vmatpush1.msra.mxu0 0.0
  %1101 = vmatprep.mubr.f32.mxu0 0.0
  %1102 = vmatmul.mubr.f32.gmra.mrb[0].mxu0 %v1033
  %v1103 = vpop.f32.mrb[0].mxu0
  %v1104 = vadd.f32 0.0, %v1103
  %v1105 = vpop.f32.mrb[0].mxu0
  %1106 = vmatprep.mubr.f32.mxu0 0.0
  %1107 = vmatmul.mubr.f32.gmra.mrb[0].mxu0 %v1035
  %v1108 = vpop.f32.mrb[0].mxu0
  %v1109 = vadd.f32 0.0, %v1108
  %v1110 = vpop.f32.mrb[0].mxu0
  %1111 = vdwg.mxu0
  %v1112 = vadd.f32 %v1027, %v1104
  %v1113 = vadd.f32 %v1028, %v1109
  %v1114 = vxor.u32 %v1112, 2147483648
  %v1115 = vxor.u32 %v1113, 2147483648
  %v1116 = vmul.f32 %v1114, 1.442695
  %v1117 = vpow.pop %v1116
  %v1118 = vmul.f32 %v1115, 1.442695
  %v1119 = vpow.pop %v1118
  %v1120 = vadd.f32 %v1117, 1.0
  %v1121 = vadd.f32 %v1119, 1.0
  %v1122 = vrcp.pop %v1120
  %v1123 = vmul.f32 1.0, %v1122
  %v1124 = vrcp.pop %v1121
  %v1125 = vmul.f32 1.0, %v1124
  %v1126 = vtanh.pop %v1112
  %v1127 = vtanh.pop %v1113
  %v1128 = vmul.f32 %v1123, %v1001
  %v1129 = vmul.f32 %v1125, %v1002
  %1132 = vrot.lane.b32.xlu0 %v1126, 64
  %v1133 = vpop.permute.xlu0 %1132
  %1134 = vrot.lane.b32.xlu0 %v1127, 64
  %v1135 = vpop.permute.xlu0 %1134
  %v1138 = vmul.f32 %v1123, %v1133
  %v1139 = vmul.f32 %v1125, %v1135
  %1142 = vrot.lane.b32.xlu0 %v1138, 32
  %v1143 = vpop.permute.xlu0 %1142
  %1144 = vrot.lane.b32.xlu0 %v1139, 32
  %v1145 = vpop.permute.xlu0 %1144
  %v1148 = vadd.f32 %v1128, %v1143
  %v1149 = vadd.f32 %v1129, %v1145
  %v1150 = vtanh.pop %v1148
  %v1151 = vtanh.pop %v1149
  %1154 = vrot.lane.b32.xlu0 %v1150, 64
  %v1155 = vpop.permute.xlu0 %1154
  %1156 = vrot.lane.b32.xlu0 %v1151, 64
  %v1157 = vpop.permute.xlu0 %1156
  %v1160 = vmul.f32 %v1123, %v1155
  %v1161 = vmul.f32 %v1125, %v1157
  %1164 = vrot.lane.b32.xlu0 %v1160, 32
  %v1165 = vpop.permute.xlu0 %1164
  %1166 = vrot.lane.b32.xlu0 %v1161, 32
  %v1167 = vpop.permute.xlu0 %1166
  %s1170 = scalar_lea.vmem [#allocation3], 80
  %1171 = vst.msk [vmem:[%s1170] sm:$0xff] %vm48, %v1165
  %1172 = vst.msk [vmem:[%s1170 + $0x8] sm:$0xff] %vm48, %v1167
  %s1173 = scalar_lea.vmem [#allocation2], 96
  %v1174 = vld [vmem:[%s1173] sm:$0xff]
  %v1175 = vld [vmem:[%s1173 + $0x8] sm:$0xff]
  %v1176 = vld [vmem:[%s2] sm:$0xff]
  %v1177 = vld [vmem:[%s2 + $0x8] sm:$0xff]
  %v1178 = vld [vmem:[%s2 + $0x10] sm:$0xff]
  %v1179 = vld [vmem:[%s2 + $0x18] sm:$0xff]
  %v1180 = vsel %vm48, %v1165, 0
  %v1182 = vsel %vm48, %v1167, 0
  %1184 = vmatprep.subr.mxu0 0.0
  %1185 = vmatpush1.msra.mxu0 %v1176
  %1186 = vmatprep.subr.mxu0 0.0
  %1187 = vmatpush1.msra.mxu0 %v1177
  %1188 = vmatprep.subr.mxu0 0.0
  %1189 = vmatpush1.msra.mxu0 %v1178
  %1190 = vmatprep.subr.mxu0 0.0
  %1191 = vmatpush1.msra.mxu0 %v1179
  %1192 = vmatprep.subr.mxu0 0.0
  %1193 = vmatpush1.msra.mxu0 0.0
  %1194 = vmatprep.subr.mxu0 0.0
  %1195 = vmatpush1.msra.mxu0 0.0
  %1196 = vmatprep.subr.mxu0 0.0
  %1197 = vmatpush1.msra.mxu0 0.0
  %1198 = vmatprep.subr.mxu0 0.0
  %1199 = vmatpush1.msra.mxu0 0.0
  %1200 = vmatprep.subr.mxu0 0.0
  %1201 = vmatpush1.msra.mxu0 0.0
  %1202 = vmatprep.subr.mxu0 0.0
  %1203 = vmatpush1.msra.mxu0 0.0
  %1204 = vmatprep.subr.mxu0 0.0
  %1205 = vmatpush1.msra.mxu0 0.0
  %1206 = vmatprep.subr.mxu0 0.0
  %1207 = vmatpush1.msra.mxu0 0.0
  %1208 = vmatprep.subr.mxu0 0.0
  %1209 = vmatpush1.msra.mxu0 0.0
  %1210 = vmatprep.subr.mxu0 0.0
  %1211 = vmatpush1.msra.mxu0 0.0
  %1212 = vmatprep.subr.mxu0 0.0
  %1213 = vmatpush1.msra.mxu0 0.0
  %1214 = vmatprep.subr.mxu0 0.0
  %1215 = vmatpush1.msra.mxu0 0.0
  %1216 = vmatprep.subr.mxu0 0.0
  %1217 = vmatpush1.msra.mxu0 0.0
  %1218 = vmatprep.subr.mxu0 0.0
  %1219 = vmatpush1.msra.mxu0 0.0
  %1220 = vmatprep.subr.mxu0 0.0
  %1221 = vmatpush1.msra.mxu0 0.0
  %1222 = vmatprep.subr.mxu0 0.0
  %1223 = vmatpush1.msra.mxu0 0.0
  %1224 = vmatprep.subr.mxu0 0.0
  %1225 = vmatpush1.msra.mxu0 0.0
  %1226 = vmatprep.subr.mxu0 0.0
  %1227 = vmatpush1.msra.mxu0 0.0
  %1228 = vmatprep.subr.mxu0 0.0
  %1229 = vmatpush1.msra.mxu0 0.0
  %1230 = vmatprep.subr.mxu0 0.0
  %1231 = vmatpush1.msra.mxu0 0.0
  %1232 = vmatprep.subr.mxu0 0.0
  %1233 = vmatpush1.msra.mxu0 0.0
  %1234 = vmatprep.subr.mxu0 0.0
  %1235 = vmatpush1.msra.mxu0 0.0
  %1236 = vmatprep.subr.mxu0 0.0
  %1237 = vmatpush1.msra.mxu0 0.0
  %1238 = vmatprep.subr.mxu0 0.0
  %1239 = vmatpush1.msra.mxu0 0.0
  %1240 = vmatprep.subr.mxu0 0.0
  %1241 = vmatpush1.msra.mxu0 0.0
  %1242 = vmatprep.subr.mxu0 0.0
  %1243 = vmatpush1.msra.mxu0 0.0
  %1244 = vmatprep.subr.mxu0 0.0
  %1245 = vmatpush1.msra.mxu0 0.0
  %1246 = vmatprep.subr.mxu0 0.0
  %1247 = vmatpush1.msra.mxu0 0.0
  %1248 = vmatprep.mubr.f32.mxu0 0.0
  %1249 = vmatmul.mubr.f32.gmra.mrb[0].mxu0 %v1180
  %v1250 = vpop.f32.mrb[0].mxu0
  %v1251 = vadd.f32 0.0, %v1250
  %v1252 = vpop.f32.mrb[0].mxu0
  %1253 = vmatprep.mubr.f32.mxu0 0.0
  %1254 = vmatmul.mubr.f32.gmra.mrb[0].mxu0 %v1182
  %v1255 = vpop.f32.mrb[0].mxu0
  %v1256 = vadd.f32 0.0, %v1255
  %v1257 = vpop.f32.mrb[0].mxu0
  %1258 = vdwg.mxu0
  %v1259 = vadd.f32 %v1174, %v1251
  %v1260 = vadd.f32 %v1175, %v1256
  %v1261 = vxor.u32 %v1259, 2147483648
  %v1262 = vxor.u32 %v1260, 2147483648
  %v1263 = vmul.f32 %v1261, 1.442695
  %v1264 = vpow.pop %v1263
  %v1265 = vmul.f32 %v1262, 1.442695
  %v1266 = vpow.pop %v1265
  %v1267 = vadd.f32 %v1264, 1.0
  %v1268 = vadd.f32 %v1266, 1.0
  %v1269 = vrcp.pop %v1267
  %v1270 = vmul.f32 1.0, %v1269
  %v1271 = vrcp.pop %v1268
  %v1272 = vmul.f32 1.0, %v1271
  %v1273 = vtanh.pop %v1259
  %v1274 = vtanh.pop %v1260
  %v1275 = vmul.f32 %v1270, %v1148
  %v1276 = vmul.f32 %v1272, %v1149
  %1279 = vrot.lane.b32.xlu0 %v1273, 64
  %v1280 = vpop.permute.xlu0 %1279
  %1281 = vrot.lane.b32.xlu0 %v1274, 64
  %v1282 = vpop.permute.xlu0 %1281
  %v1285 = vmul.f32 %v1270, %v1280
  %v1286 = vmul.f32 %v1272, %v1282
  %1289 = vrot.lane.b32.xlu0 %v1285, 32
  %v1290 = vpop.permute.xlu0 %1289
  %1291 = vrot.lane.b32.xlu0 %v1286, 32
  %v1292 = vpop.permute.xlu0 %1291
  %v1295 = vadd.f32 %v1275, %v1290
  %v1296 = vadd.f32 %v1276, %v1292
  %v1297 = vtanh.pop %v1295
  %v1298 = vtanh.pop %v1296
  %1301 = vrot.lane.b32.xlu0 %v1297, 64
  %v1302 = vpop.permute.xlu0 %1301
  %1303 = vrot.lane.b32.xlu0 %v1298, 64
  %v1304 = vpop.permute.xlu0 %1303
  %v1307 = vmul.f32 %v1270, %v1302
  %v1308 = vmul.f32 %v1272, %v1304
  %1311 = vrot.lane.b32.xlu0 %v1307, 32
  %v1312 = vpop.permute.xlu0 %1311
  %1313 = vrot.lane.b32.xlu0 %v1308, 32
  %v1314 = vpop.permute.xlu0 %1313
  %s1317 = scalar_lea.vmem [#allocation3], 96
  %1318 = vst.msk [vmem:[%s1317] sm:$0xff] %vm48, %v1312
  %1319 = vst.msk [vmem:[%s1317 + $0x8] sm:$0xff] %vm48, %v1314
  %s1320 = scalar_lea.vmem [#allocation2], 112
  %v1321 = vld [vmem:[%s1320] sm:$0xff]
  %v1322 = vld [vmem:[%s1320 + $0x8] sm:$0xff]
  %v1323 = vld [vmem:[%s2] sm:$0xff]
  %v1324 = vld [vmem:[%s2 + $0x8] sm:$0xff]
  %v1325 = vld [vmem:[%s2 + $0x10] sm:$0xff]
  %v1326 = vld [vmem:[%s2 + $0x18] sm:$0xff]
  %v1327 = vsel %vm48, %v1312, 0
  %v1329 = vsel %vm48, %v1314, 0
  %1331 = vmatprep.subr.mxu0 0.0
  %1332 = vmatpush1.msra.mxu0 %v1323
  %1333 = vmatprep.subr.mxu0 0.0
  %1334 = vmatpush1.msra.mxu0 %v1324
  %1335 = vmatprep.subr.mxu0 0.0
  %1336 = vmatpush1.msra.mxu0 %v1325
  %1337 = vmatprep.subr.mxu0 0.0
  %1338 = vmatpush1.msra.mxu0 %v1326
  %1339 = vmatprep.subr.mxu0 0.0
  %1340 = vmatpush1.msra.mxu0 0.0
  %1341 = vmatprep.subr.mxu0 0.0
  %1342 = vmatpush1.msra.mxu0 0.0
  %1343 = vmatprep.subr.mxu0 0.0
  %1344 = vmatpush1.msra.mxu0 0.0
  %1345 = vmatprep.subr.mxu0 0.0
  %1346 = vmatpush1.msra.mxu0 0.0
  %1347 = vmatprep.subr.mxu0 0.0
  %1348 = vmatpush1.msra.mxu0 0.0
  %1349 = vmatprep.subr.mxu0 0.0
  %1350 = vmatpush1.msra.mxu0 0.0
  %1351 = vmatprep.subr.mxu0 0.0
  %1352 = vmatpush1.msra.mxu0 0.0
  %1353 = vmatprep.subr.mxu0 0.0
  %1354 = vmatpush1.msra.mxu0 0.0
  %1355 = vmatprep.subr.mxu0 0.0
  %1356 = vmatpush1.msra.mxu0 0.0
  %1357 = vmatprep.subr.mxu0 0.0
  %1358 = vmatpush1.msra.mxu0 0.0
  %1359 = vmatprep.subr.mxu0 0.0
  %1360 = vmatpush1.msra.mxu0 0.0
  %1361 = vmatprep.subr.mxu0 0.0
  %1362 = vmatpush1.msra.mxu0 0.0
  %1363 = vmatprep.subr.mxu0 0.0
  %1364 = vmatpush1.msra.mxu0 0.0
  %1365 = vmatprep.subr.mxu0 0.0
  %1366 = vmatpush1.msra.mxu0 0.0
  %1367 = vmatprep.subr.mxu0 0.0
  %1368 = vmatpush1.msra.mxu0 0.0
  %1369 = vmatprep.subr.mxu0 0.0
  %1370 = vmatpush1.msra.mxu0 0.0
  %1371 = vmatprep.subr.mxu0 0.0
  %1372 = vmatpush1.msra.mxu0 0.0
  %1373 = vmatprep.subr.mxu0 0.0
  %1374 = vmatpush1.msra.mxu0 0.0
  %1375 = vmatprep.subr.mxu0 0.0
  %1376 = vmatpush1.msra.mxu0 0.0
  %1377 = vmatprep.subr.mxu0 0.0
  %1378 = vmatpush1.msra.mxu0 0.0
  %1379 = vmatprep.subr.mxu0 0.0
  %1380 = vmatpush1.msra.mxu0 0.0
  %1381 = vmatprep.subr.mxu0 0.0
  %1382 = vmatpush1.msra.mxu0 0.0
  %1383 = vmatprep.subr.mxu0 0.0
  %1384 = vmatpush1.msra.mxu0 0.0
  %1385 = vmatprep.subr.mxu0 0.0
  %1386 = vmatpush1.msra.mxu0 0.0
  %1387 = vmatprep.subr.mxu0 0.0
  %1388 = vmatpush1.msra.mxu0 0.0
  %1389 = vmatprep.subr.mxu0 0.0
  %1390 = vmatpush1.msra.mxu0 0.0
  %1391 = vmatprep.subr.mxu0 0.0
  %1392 = vmatpush1.msra.mxu0 0.0
  %1393 = vmatprep.subr.mxu0 0.0
  %1394 = vmatpush1.msra.mxu0 0.0
  %1395 = vmatprep.mubr.f32.mxu0 0.0
  %1396 = vmatmul.mubr.f32.gmra.mrb[0].mxu0 %v1327
  %v1397 = vpop.f32.mrb[0].mxu0
  %v1398 = vadd.f32 0.0, %v1397
  %v1399 = vpop.f32.mrb[0].mxu0
  %1400 = vmatprep.mubr.f32.mxu0 0.0
  %1401 = vmatmul.mubr.f32.gmra.mrb[0].mxu0 %v1329
  %v1402 = vpop.f32.mrb[0].mxu0
  %v1403 = vadd.f32 0.0, %v1402
  %v1404 = vpop.f32.mrb[0].mxu0
  %1405 = vdwg.mxu0
  %v1406 = vadd.f32 %v1321, %v1398
  %v1407 = vadd.f32 %v1322, %v1403
  %v1408 = vxor.u32 %v1406, 2147483648
  %v1409 = vxor.u32 %v1407, 2147483648
  %v1410 = vmul.f32 %v1408, 1.442695
  %v1411 = vpow.pop %v1410
  %v1412 = vmul.f32 %v1409, 1.442695
  %v1413 = vpow.pop %v1412
  %v1414 = vadd.f32 %v1411, 1.0
  %v1415 = vadd.f32 %v1413, 1.0
  %v1416 = vrcp.pop %v1414
  %v1417 = vmul.f32 1.0, %v1416
  %v1418 = vrcp.pop %v1415
  %v1419 = vmul.f32 1.0, %v1418
  %v1420 = vtanh.pop %v1406
  %v1421 = vtanh.pop %v1407
  %v1422 = vmul.f32 %v1417, %v1295
  %v1423 = vmul.f32 %v1419, %v1296
  %1426 = vrot.lane.b32.xlu0 %v1420, 64
  %v1427 = vpop.permute.xlu0 %1426
  %1428 = vrot.lane.b32.xlu0 %v1421, 64
  %v1429 = vpop.permute.xlu0 %1428
  %v1432 = vmul.f32 %v1417, %v1427
  %v1433 = vmul.f32 %v1419, %v1429
  %1436 = vrot.lane.b32.xlu0 %v1432, 32
  %v1437 = vpop.permute.xlu0 %1436
  %1438 = vrot.lane.b32.xlu0 %v1433, 32
  %v1439 = vpop.permute.xlu0 %1438
  %v1442 = vadd.f32 %v1422, %v1437
  %v1443 = vadd.f32 %v1423, %v1439
  %v1444 = vtanh.pop %v1442
  %v1445 = vtanh.pop %v1443
  %1448 = vrot.lane.b32.xlu0 %v1444, 64
  %v1449 = vpop.permute.xlu0 %1448
  %1450 = vrot.lane.b32.xlu0 %v1445, 64
  %v1451 = vpop.permute.xlu0 %1450
  %v1454 = vmul.f32 %v1417, %v1449
  %v1455 = vmul.f32 %v1419, %v1451
  %1458 = vrot.lane.b32.xlu0 %v1454, 32
  %v1459 = vpop.permute.xlu0 %1458
  %1460 = vrot.lane.b32.xlu0 %v1455, 32
  %v1461 = vpop.permute.xlu0 %1460
  %s1464 = scalar_lea.vmem [#allocation3], 112
  %1465 = vst.msk [vmem:[%s1464] sm:$0xff] %vm48, %v1459
  %1466 = vst.msk [vmem:[%s1464 + $0x8] sm:$0xff] %vm48, %v1461
  %s1467 = scalar_lea.vmem [#allocation2], 128
  %v1468 = vld [vmem:[%s1467] sm:$0xff]
  %v1469 = vld [vmem:[%s1467 + $0x8] sm:$0xff]
  %v1470 = vld [vmem:[%s2] sm:$0xff]
  %v1471 = vld [vmem:[%s2 + $0x8] sm:$0xff]
  %v1472 = vld [vmem:[%s2 + $0x10] sm:$0xff]
  %v1473 = vld [vmem:[%s2 + $0x18] sm:$0xff]
  %v1474 = vsel %vm48, %v1459, 0
  %v1476 = vsel %vm48, %v1461, 0
  %1478 = vmatprep.subr.mxu0 0.0
  %1479 = vmatpush1.msra.mxu0 %v1470
  %1480 = vmatprep.subr.mxu0 0.0
  %1481 = vmatpush1.msra.mxu0 %v1471
  %1482 = vmatprep.subr.mxu0 0.0
  %1483 = vmatpush1.msra.mxu0 %v1472
  %1484 = vmatprep.subr.mxu0 0.0
  %1485 = vmatpush1.msra.mxu0 %v1473
  %1486 = vmatprep.subr.mxu0 0.0
  %1487 = vmatpush1.msra.mxu0 0.0
  %1488 = vmatprep.subr.mxu0 0.0
  %1489 = vmatpush1.msra.mxu0 0.0
  %1490 = vmatprep.subr.mxu0 0.0
  %1491 = vmatpush1.msra.mxu0 0.0
  %1492 = vmatprep.subr.mxu0 0.0
  %1493 = vmatpush1.msra.mxu0 0.0
  %1494 = vmatprep.subr.mxu0 0.0
  %1495 = vmatpush1.msra.mxu0 0.0
  %1496 = vmatprep.subr.mxu0 0.0
  %1497 = vmatpush1.msra.mxu0 0.0
  %1498 = vmatprep.subr.mxu0 0.0
  %1499 = vmatpush1.msra.mxu0 0.0
  %1500 = vmatprep.subr.mxu0 0.0
  %1501 = vmatpush1.msra.mxu0 0.0
  %1502 = vmatprep.subr.mxu0 0.0
  %1503 = vmatpush1.msra.mxu0 0.0
  %1504 = vmatprep.subr.mxu0 0.0
  %1505 = vmatpush1.msra.mxu0 0.0
  %1506 = vmatprep.subr.mxu0 0.0
  %1507 = vmatpush1.msra.mxu0 0.0
  %1508 = vmatprep.subr.mxu0 0.0
  %1509 = vmatpush1.msra.mxu0 0.0
  %1510 = vmatprep.subr.mxu0 0.0
  %1511 = vmatpush1.msra.mxu0 0.0
  %1512 = vmatprep.subr.mxu0 0.0
  %1513 = vmatpush1.msra.mxu0 0.0
  %1514 = vmatprep.subr.mxu0 0.0
  %1515 = vmatpush1.msra.mxu0 0.0
  %1516 = vmatprep.subr.mxu0 0.0
  %1517 = vmatpush1.msra.mxu0 0.0
  %1518 = vmatprep.subr.mxu0 0.0
  %1519 = vmatpush1.msra.mxu0 0.0
  %1520 = vmatprep.subr.mxu0 0.0
  %1521 = vmatpush1.msra.mxu0 0.0
  %1522 = vmatprep.subr.mxu0 0.0
  %1523 = vmatpush1.msra.mxu0 0.0
  %1524 = vmatprep.subr.mxu0 0.0
  %1525 = vmatpush1.msra.mxu0 0.0
  %1526 = vmatprep.subr.mxu0 0.0
  %1527 = vmatpush1.msra.mxu0 0.0
  %1528 = vmatprep.subr.mxu0 0.0
  %1529 = vmatpush1.msra.mxu0 0.0
  %1530 = vmatprep.subr.mxu0 0.0
  %1531 = vmatpush1.msra.mxu0 0.0
  %1532 = vmatprep.subr.mxu0 0.0
  %1533 = vmatpush1.msra.mxu0 0.0
  %1534 = vmatprep.subr.mxu0 0.0
  %1535 = vmatpush1.msra.mxu0 0.0
  %1536 = vmatprep.subr.mxu0 0.0
  %1537 = vmatpush1.msra.mxu0 0.0
  %1538 = vmatprep.subr.mxu0 0.0
  %1539 = vmatpush1.msra.mxu0 0.0
  %1540 = vmatprep.subr.mxu0 0.0
  %1541 = vmatpush1.msra.mxu0 0.0
  %1542 = vmatprep.mubr.f32.mxu0 0.0
  %1543 = vmatmul.mubr.f32.gmra.mrb[0].mxu0 %v1474
  %v1544 = vpop.f32.mrb[0].mxu0
  %v1545 = vadd.f32 0.0, %v1544
  %v1546 = vpop.f32.mrb[0].mxu0
  %1547 = vmatprep.mubr.f32.mxu0 0.0
  %1548 = vmatmul.mubr.f32.gmra.mrb[0].mxu0 %v1476
  %v1549 = vpop.f32.mrb[0].mxu0
  %v1550 = vadd.f32 0.0, %v1549
  %v1551 = vpop.f32.mrb[0].mxu0
  %1552 = vdwg.mxu0
  %v1553 = vadd.f32 %v1468, %v1545
  %v1554 = vadd.f32 %v1469, %v1550
  %v1555 = vxor.u32 %v1553, 2147483648
  %v1556 = vxor.u32 %v1554, 2147483648
  %v1557 = vmul.f32 %v1555, 1.442695
  %v1558 = vpow.pop %v1557
  %v1559 = vmul.f32 %v1556, 1.442695
  %v1560 = vpow.pop %v1559
  %v1561 = vadd.f32 %v1558, 1.0
  %v1562 = vadd.f32 %v1560, 1.0
  %v1563 = vrcp.pop %v1561
  %v1564 = vmul.f32 1.0, %v1563
  %v1565 = vrcp.pop %v1562
  %v1566 = vmul.f32 1.0, %v1565
  %v1567 = vtanh.pop %v1553
  %v1568 = vtanh.pop %v1554
  %v1569 = vmul.f32 %v1564, %v1442
  %v1570 = vmul.f32 %v1566, %v1443
  %1573 = vrot.lane.b32.xlu0 %v1567, 64
  %v1574 = vpop.permute.xlu0 %1573
  %1575 = vrot.lane.b32.xlu0 %v1568, 64
  %v1576 = vpop.permute.xlu0 %1575
  %v1579 = vmul.f32 %v1564, %v1574
  %v1580 = vmul.f32 %v1566, %v1576
  %1583 = vrot.lane.b32.xlu0 %v1579, 32
  %v1584 = vpop.permute.xlu0 %1583
  %1585 = vrot.lane.b32.xlu0 %v1580, 32
  %v1586 = vpop.permute.xlu0 %1585
  %v1589 = vadd.f32 %v1569, %v1584
  %v1590 = vadd.f32 %v1570, %v1586
  %v1591 = vtanh.pop %v1589
  %v1592 = vtanh.pop %v1590
  %1595 = vrot.lane.b32.xlu0 %v1591, 64
  %v1596 = vpop.permute.xlu0 %1595
  %1597 = vrot.lane.b32.xlu0 %v1592, 64
  %v1598 = vpop.permute.xlu0 %1597
  %v1601 = vmul.f32 %v1564, %v1596
  %v1602 = vmul.f32 %v1566, %v1598
  %1605 = vrot.lane.b32.xlu0 %v1601, 32
  %v1606 = vpop.permute.xlu0 %1605
  %1607 = vrot.lane.b32.xlu0 %v1602, 32
  %v1608 = vpop.permute.xlu0 %1607
  %s1611 = scalar_lea.vmem [#allocation3], 128
  %1612 = vst.msk [vmem:[%s1611] sm:$0xff] %vm48, %v1606
  %1613 = vst.msk [vmem:[%s1611 + $0x8] sm:$0xff] %vm48, %v1608
  %s1614 = scalar_lea.vmem [#allocation2], 144
  %v1615 = vld [vmem:[%s1614] sm:$0xff]
  %v1616 = vld [vmem:[%s1614 + $0x8] sm:$0xff]
  %v1617 = vld [vmem:[%s2] sm:$0xff]
  %v1618 = vld [vmem:[%s2 + $0x8] sm:$0xff]
  %v1619 = vld [vmem:[%s2 + $0x10] sm:$0xff]
  %v1620 = vld [vmem:[%s2 + $0x18] sm:$0xff]
  %v1621 = vsel %vm48, %v1606, 0
  %v1623 = vsel %vm48, %v1608, 0
  %1625 = vmatprep.subr.mxu0 0.0
  %1626 = vmatpush1.msra.mxu0 %v1617
  %1627 = vmatprep.subr.mxu0 0.0
  %1628 = vmatpush1.msra.mxu0 %v1618
  %1629 = vmatprep.subr.mxu0 0.0
  %1630 = vmatpush1.msra.mxu0 %v1619
  %1631 = vmatprep.subr.mxu0 0.0
  %1632 = vmatpush1.msra.mxu0 %v1620
  %1633 = vmatprep.subr.mxu0 0.0
  %1634 = vmatpush1.msra.mxu0 0.0
  %1635 = vmatprep.subr.mxu0 0.0
  %1636 = vmatpush1.msra.mxu0 0.0
  %1637 = vmatprep.subr.mxu0 0.0
  %1638 = vmatpush1.msra.mxu0 0.0
  %1639 = vmatprep.subr.mxu0 0.0
  %1640 = vmatpush1.msra.mxu0 0.0
  %1641 = vmatprep.subr.mxu0 0.0
  %1642 = vmatpush1.msra.mxu0 0.0
  %1643 = vmatprep.subr.mxu0 0.0
  %1644 = vmatpush1.msra.mxu0 0.0
  %1645 = vmatprep.subr.mxu0 0.0
  %1646 = vmatpush1.msra.mxu0 0.0
  %1647 = vmatprep.subr.mxu0 0.0
  %1648 = vmatpush1.msra.mxu0 0.0
  %1649 = vmatprep.subr.mxu0 0.0
  %1650 = vmatpush1.msra.mxu0 0.0
  %1651 = vmatprep.subr.mxu0 0.0
  %1652 = vmatpush1.msra.mxu0 0.0
  %1653 = vmatprep.subr.mxu0 0.0
  %1654 = vmatpush1.msra.mxu0 0.0
  %1655 = vmatprep.subr.mxu0 0.0
  %1656 = vmatpush1.msra.mxu0 0.0
  %1657 = vmatprep.subr.mxu0 0.0
  %1658 = vmatpush1.msra.mxu0 0.0
  %1659 = vmatprep.subr.mxu0 0.0
  %1660 = vmatpush1.msra.mxu0 0.0
  %1661 = vmatprep.subr.mxu0 0.0
  %1662 = vmatpush1.msra.mxu0 0.0
  %1663 = vmatprep.subr.mxu0 0.0
  %1664 = vmatpush1.msra.mxu0 0.0
  %1665 = vmatprep.subr.mxu0 0.0
  %1666 = vmatpush1.msra.mxu0 0.0
  %1667 = vmatprep.subr.mxu0 0.0
  %1668 = vmatpush1.msra.mxu0 0.0
  %1669 = vmatprep.subr.mxu0 0.0
  %1670 = vmatpush1.msra.mxu0 0.0
  %1671 = vmatprep.subr.mxu0 0.0
  %1672 = vmatpush1.msra.mxu0 0.0
  %1673 = vmatprep.subr.mxu0 0.0
  %1674 = vmatpush1.msra.mxu0 0.0
  %1675 = vmatprep.subr.mxu0 0.0
  %1676 = vmatpush1.msra.mxu0 0.0
  %1677 = vmatprep.subr.mxu0 0.0
  %1678 = vmatpush1.msra.mxu0 0.0
  %1679 = vmatprep.subr.mxu0 0.0
  %1680 = vmatpush1.msra.mxu0 0.0
  %1681 = vmatprep.subr.mxu0 0.0
  %1682 = vmatpush1.msra.mxu0 0.0
  %1683 = vmatprep.subr.mxu0 0.0
  %1684 = vmatpush1.msra.mxu0 0.0
  %1685 = vmatprep.subr.mxu0 0.0
  %1686 = vmatpush1.msra.mxu0 0.0
  %1687 = vmatprep.subr.mxu0 0.0
  %1688 = vmatpush1.msra.mxu0 0.0
  %1689 = vmatprep.mubr.f32.mxu0 0.0
  %1690 = vmatmul.mubr.f32.gmra.mrb[0].mxu0 %v1621
  %v1691 = vpop.f32.mrb[0].mxu0
  %v1692 = vadd.f32 0.0, %v1691
  %v1693 = vpop.f32.mrb[0].mxu0
  %1694 = vmatprep.mubr.f32.mxu0 0.0
  %1695 = vmatmul.mubr.f32.gmra.mrb[0].mxu0 %v1623
  %v1696 = vpop.f32.mrb[0].mxu0
  %v1697 = vadd.f32 0.0, %v1696
  %v1698 = vpop.f32.mrb[0].mxu0
  %1699 = vdwg.mxu0
  %v1700 = vadd.f32 %v1615, %v1692
  %v1701 = vadd.f32 %v1616, %v1697
  %v1702 = vxor.u32 %v1700, 2147483648
  %v1703 = vxor.u32 %v1701, 2147483648
  %v1704 = vmul.f32 %v1702, 1.442695
  %v1705 = vpow.pop %v1704
  %v1706 = vmul.f32 %v1703, 1.442695
  %v1707 = vpow.pop %v1706
  %v1708 = vadd.f32 %v1705, 1.0
  %v1709 = vadd.f32 %v1707, 1.0
  %v1710 = vrcp.pop %v1708
  %v1711 = vmul.f32 1.0, %v1710
  %v1712 = vrcp.pop %v1709
  %v1713 = vmul.f32 1.0, %v1712
  %v1714 = vtanh.pop %v1700
  %v1715 = vtanh.pop %v1701
  %v1716 = vmul.f32 %v1711, %v1589
  %v1717 = vmul.f32 %v1713, %v1590
  %1720 = vrot.lane.b32.xlu0 %v1714, 64
  %v1721 = vpop.permute.xlu0 %1720
  %1722 = vrot.lane.b32.xlu0 %v1715, 64
  %v1723 = vpop.permute.xlu0 %1722
  %v1726 = vmul.f32 %v1711, %v1721
  %v1727 = vmul.f32 %v1713, %v1723
  %1730 = vrot.lane.b32.xlu0 %v1726, 32
  %v1731 = vpop.permute.xlu0 %1730
  %1732 = vrot.lane.b32.xlu0 %v1727, 32
  %v1733 = vpop.permute.xlu0 %1732
  %v1736 = vadd.f32 %v1716, %v1731
  %v1737 = vadd.f32 %v1717, %v1733
  %v1738 = vtanh.pop %v1736
  %v1739 = vtanh.pop %v1737
  %1742 = vrot.lane.b32.xlu0 %v1738, 64
  %v1743 = vpop.permute.xlu0 %1742
  %1744 = vrot.lane.b32.xlu0 %v1739, 64
  %v1745 = vpop.permute.xlu0 %1744
  %v1748 = vmul.f32 %v1711, %v1743
  %v1749 = vmul.f32 %v1713, %v1745
  %1752 = vrot.lane.b32.xlu0 %v1748, 32
  %v1753 = vpop.permute.xlu0 %1752
  %1754 = vrot.lane.b32.xlu0 %v1749, 32
  %v1755 = vpop.permute.xlu0 %1754
  %s1758 = scalar_lea.vmem [#allocation3], 144
  %1759 = vst.msk [vmem:[%s1758] sm:$0xff] %vm48, %v1753
  %1760 = vst.msk [vmem:[%s1758 + $0x8] sm:$0xff] %vm48, %v1755
  %v1761 = vld [vmem:[%s0] sm:$0xff]
  %v1762 = vld [vmem:[%s0 + $0x8] sm:$0xff]
  %v1763 = vld [vmem:[%s0 + $0x10] sm:$0xff]
  %v1764 = vld [vmem:[%s0 + $0x18] sm:$0xff]
  %v1765 = vld [vmem:[%s0 + $0x20] sm:$0xff]
  %v1766 = vld [vmem:[%s0 + $0x28] sm:$0xff]
  %v1767 = vld [vmem:[%s0 + $0x30] sm:$0xff]
  %v1768 = vld [vmem:[%s0 + $0x38] sm:$0xff]
  %v1769 = vld [vmem:[%s0 + $0x40] sm:$0xff]
  %v1770 = vld [vmem:[%s0 + $0x48] sm:$0xff]
  %v1771 = vld [vmem:[%s0 + $0x50] sm:$0xff]
  %v1772 = vld [vmem:[%s0 + $0x58] sm:$0xff]
  %v1773 = vld [vmem:[%s0 + $0x60] sm:$0xff]
  %v1774 = vld [vmem:[%s0 + $0x68] sm:$0xff]
  %v1775 = vld [vmem:[%s0 + $0x70] sm:$0xff]
  %v1776 = vld [vmem:[%s0 + $0x78] sm:$0xff]
  %v1777 = vld [vmem:[%s0 + $0x80] sm:$0xff]
  %v1778 = vld [vmem:[%s0 + $0x88] sm:$0xff]
  %v1779 = vld [vmem:[%s0 + $0x90] sm:$0xff]
  %v1780 = vld [vmem:[%s0 + $0x98] sm:$0xff]
  %v1781 = vld [vmem:[#allocation3] sm:$0xff]
  %v1782 = vld [vmem:[#allocation3 + $0x8] sm:$0xff]
  %v1783 = vld [vmem:[#allocation3 + $0x10] sm:$0xff]
  %v1784 = vld [vmem:[#allocation3 + $0x18] sm:$0xff]
  %v1785 = vld [vmem:[#allocation3 + $0x20] sm:$0xff]
  %v1786 = vld [vmem:[#allocation3 + $0x28] sm:$0xff]
  %v1787 = vld [vmem:[#allocation3 + $0x30] sm:$0xff]
  %v1788 = vld [vmem:[#allocation3 + $0x38] sm:$0xff]
  %v1789 = vld [vmem:[#allocation3 + $0x40] sm:$0xff]
  %v1790 = vld [vmem:[#allocation3 + $0x48] sm:$0xff]
  %v1791 = vld [vmem:[#allocation3 + $0x50] sm:$0xff]
  %v1792 = vld [vmem:[#allocation3 + $0x58] sm:$0xff]
  %v1793 = vld [vmem:[#allocation3 + $0x60] sm:$0xff]
  %v1794 = vld [vmem:[#allocation3 + $0x68] sm:$0xff]
  %v1795 = vld [vmem:[#allocation3 + $0x70] sm:$0xff]
  %v1796 = vld [vmem:[#allocation3 + $0x78] sm:$0xff]
  %v1797 = vld [vmem:[#allocation3 + $0x80] sm:$0xff]
  %v1798 = vld [vmem:[#allocation3 + $0x88] sm:$0xff]
  %v1799 = vld [vmem:[#allocation3 + $0x90] sm:$0xff]
  %v1800 = vld [vmem:[#allocation3 + $0x98] sm:$0xff]
  %v1801 = vadd.f32 %v1781, %v1761
  %v1802 = vadd.f32 %v1782, %v1762
  %v1803 = vadd.f32 %v1783, %v1763
  %v1804 = vadd.f32 %v1784, %v1764
  %v1805 = vadd.f32 %v1785, %v1765
  %v1806 = vadd.f32 %v1786, %v1766
  %v1807 = vadd.f32 %v1787, %v1767
  %v1808 = vadd.f32 %v1788, %v1768
  %v1809 = vadd.f32 %v1789, %v1769
  %v1810 = vadd.f32 %v1790, %v1770
  %v1811 = vadd.f32 %v1791, %v1771
  %v1812 = vadd.f32 %v1792, %v1772
  %v1813 = vadd.f32 %v1793, %v1773
  %v1814 = vadd.f32 %v1794, %v1774
  %v1815 = vadd.f32 %v1795, %v1775
  %v1816 = vadd.f32 %v1796, %v1776
  %v1817 = vadd.f32 %v1797, %v1777
  %v1818 = vadd.f32 %v1798, %v1778
  %v1819 = vadd.f32 %v1799, %v1779
  %v1820 = vadd.f32 %v1800, %v1780
  %v1821 = vmul.f32 %v1801, %v1801
  %v1822 = vmul.f32 %v1802, %v1802
  %v1823 = vmul.f32 %v1803, %v1803
  %v1824 = vmul.f32 %v1804, %v1804
  %v1825 = vmul.f32 %v1805, %v1805
  %v1826 = vmul.f32 %v1806, %v1806
  %v1827 = vmul.f32 %v1807, %v1807
  %v1828 = vmul.f32 %v1808, %v1808
  %v1829 = vmul.f32 %v1809, %v1809
  %v1830 = vmul.f32 %v1810, %v1810
  %v1831 = vmul.f32 %v1811, %v1811
  %v1832 = vmul.f32 %v1812, %v1812
  %v1833 = vmul.f32 %v1813, %v1813
  %v1834 = vmul.f32 %v1814, %v1814
  %v1835 = vmul.f32 %v1815, %v1815
  %v1836 = vmul.f32 %v1816, %v1816
  %v1837 = vmul.f32 %v1817, %v1817
  %v1838 = vmul.f32 %v1818, %v1818
  %v1839 = vmul.f32 %v1819, %v1819
  %v1840 = vmul.f32 %v1820, %v1820
  %v1841 = vsel %vm48, %v1821, 0.0
  %1842 = vadd.xlane.f32.xlu0 %v1841
  %v1843 = vpop.xlane.xlu0 %1842
  %v1844 = vsel %vm48, %v1822, 0.0
  %1845 = vadd.xlane.f32.xlu0 %v1844
  %v1846 = vpop.xlane.xlu0 %1845
  %v1847 = vsel %vm48, %v1823, 0.0
  %1848 = vadd.xlane.f32.xlu0 %v1847
  %v1849 = vpop.xlane.xlu0 %1848
  %v1850 = vsel %vm48, %v1824, 0.0
  %1851 = vadd.xlane.f32.xlu0 %v1850
  %v1852 = vpop.xlane.xlu0 %1851
  %v1853 = vsel %vm48, %v1825, 0.0
  %1854 = vadd.xlane.f32.xlu0 %v1853
  %v1855 = vpop.xlane.xlu0 %1854
  %v1856 = vsel %vm48, %v1826, 0.0
  %1857 = vadd.xlane.f32.xlu0 %v1856
  %v1858 = vpop.xlane.xlu0 %1857
  %v1859 = vsel %vm48, %v1827, 0.0
  %1860 = vadd.xlane.f32.xlu0 %v1859
  %v1861 = vpop.xlane.xlu0 %1860
  %v1862 = vsel %vm48, %v1828, 0.0
  %1863 = vadd.xlane.f32.xlu0 %v1862
  %v1864 = vpop.xlane.xlu0 %1863
  %v1865 = vsel %vm48, %v1829, 0.0
  %1866 = vadd.xlane.f32.xlu0 %v1865
  %v1867 = vpop.xlane.xlu0 %1866
  %v1868 = vsel %vm48, %v1830, 0.0
  %1869 = vadd.xlane.f32.xlu0 %v1868
  %v1870 = vpop.xlane.xlu0 %1869
  %v1871 = vsel %vm48, %v1831, 0.0
  %1872 = vadd.xlane.f32.xlu0 %v1871
  %v1873 = vpop.xlane.xlu0 %1872
  %v1874 = vsel %vm48, %v1832, 0.0
  %1875 = vadd.xlane.f32.xlu0 %v1874
  %v1876 = vpop.xlane.xlu0 %1875
  %v1877 = vsel %vm48, %v1833, 0.0
  %1878 = vadd.xlane.f32.xlu0 %v1877
  %v1879 = vpop.xlane.xlu0 %1878
  %v1880 = vsel %vm48, %v1834, 0.0
  %1881 = vadd.xlane.f32.xlu0 %v1880
  %v1882 = vpop.xlane.xlu0 %1881
  %v1883 = vsel %vm48, %v1835, 0.0
  %1884 = vadd.xlane.f32.xlu0 %v1883
  %v1885 = vpop.xlane.xlu0 %1884
  %v1886 = vsel %vm48, %v1836, 0.0
  %1887 = vadd.xlane.f32.xlu0 %v1886
  %v1888 = vpop.xlane.xlu0 %1887
  %v1889 = vsel %vm48, %v1837, 0.0
  %1890 = vadd.xlane.f32.xlu0 %v1889
  %v1891 = vpop.xlane.xlu0 %1890
  %v1892 = vsel %vm48, %v1838, 0.0
  %1893 = vadd.xlane.f32.xlu0 %v1892
  %v1894 = vpop.xlane.xlu0 %1893
  %v1895 = vsel %vm48, %v1839, 0.0
  %1896 = vadd.xlane.f32.xlu0 %v1895
  %v1897 = vpop.xlane.xlu0 %1896
  %v1898 = vsel %vm48, %v1840, 0.0
  %1899 = vadd.xlane.f32.xlu0 %v1898
  %v1900 = vpop.xlane.xlu0 %1899
  %v1901 = vrcp.pop 32.0
  %v1902 = vmul.f32 %v1843, %v1901
  %v1903 = vmul.f32 %v1846, %v1901
  %v1904 = vmul.f32 %v1849, %v1901
  %v1905 = vmul.f32 %v1852, %v1901
  %v1906 = vmul.f32 %v1855, %v1901
  %v1907 = vmul.f32 %v1858, %v1901
  %v1908 = vmul.f32 %v1861, %v1901
  %v1909 = vmul.f32 %v1864, %v1901
  %v1910 = vmul.f32 %v1867, %v1901
  %v1911 = vmul.f32 %v1870, %v1901
  %v1912 = vmul.f32 %v1873, %v1901
  %v1913 = vmul.f32 %v1876, %v1901
  %v1914 = vmul.f32 %v1879, %v1901
  %v1915 = vmul.f32 %v1882, %v1901
  %v1916 = vmul.f32 %v1885, %v1901
  %v1917 = vmul.f32 %v1888, %v1901
  %v1918 = vmul.f32 %v1891, %v1901
  %v1919 = vmul.f32 %v1894, %v1901
  %v1920 = vmul.f32 %v1897, %v1901
  %v1921 = vmul.f32 %v1900, %v1901
  %v1922 = vadd.f32 %v1902, 0.25
  %v1923 = vadd.f32 %v1903, 0.25
  %v1924 = vadd.f32 %v1904, 0.25
  %v1925 = vadd.f32 %v1905, 0.25
  %v1926 = vadd.f32 %v1906, 0.25
  %v1927 = vadd.f32 %v1907, 0.25
  %v1928 = vadd.f32 %v1908, 0.25
  %v1929 = vadd.f32 %v1909, 0.25
  %v1930 = vadd.f32 %v1910, 0.25
  %v1931 = vadd.f32 %v1911, 0.25
  %v1932 = vadd.f32 %v1912, 0.25
  %v1933 = vadd.f32 %v1913, 0.25
  %v1934 = vadd.f32 %v1914, 0.25
  %v1935 = vadd.f32 %v1915, 0.25
  %v1936 = vadd.f32 %v1916, 0.25
  %v1937 = vadd.f32 %v1917, 0.25
  %v1938 = vadd.f32 %v1918, 0.25
  %v1939 = vadd.f32 %v1919, 0.25
  %v1940 = vadd.f32 %v1920, 0.25
  %v1941 = vadd.f32 %v1921, 0.25
  %v1942 = vrsqrt.pop %v1922
  %v1943 = vrsqrt.pop %v1923
  %v1944 = vrsqrt.pop %v1924
  %v1945 = vrsqrt.pop %v1925
  %v1946 = vrsqrt.pop %v1926
  %v1947 = vrsqrt.pop %v1927
  %v1948 = vrsqrt.pop %v1928
  %v1949 = vrsqrt.pop %v1929
  %v1950 = vrsqrt.pop %v1930
  %v1951 = vrsqrt.pop %v1931
  %v1952 = vrsqrt.pop %v1932
  %v1953 = vrsqrt.pop %v1933
  %v1954 = vrsqrt.pop %v1934
  %v1955 = vrsqrt.pop %v1935
  %v1956 = vrsqrt.pop %v1936
  %v1957 = vrsqrt.pop %v1937
  %v1958 = vrsqrt.pop %v1938
  %v1959 = vrsqrt.pop %v1939
  %v1960 = vrsqrt.pop %v1940
  %v1961 = vrsqrt.pop %v1941
  %v1962 = vmul.f32 %v1801, %v1942
  %v1963 = vmul.f32 %v1802, %v1943
  %v1964 = vmul.f32 %v1803, %v1944
  %v1965 = vmul.f32 %v1804, %v1945
  %v1966 = vmul.f32 %v1805, %v1946
  %v1967 = vmul.f32 %v1806, %v1947
  %v1968 = vmul.f32 %v1807, %v1948
  %v1969 = vmul.f32 %v1808, %v1949
  %v1970 = vmul.f32 %v1809, %v1950
  %v1971 = vmul.f32 %v1810, %v1951
  %v1972 = vmul.f32 %v1811, %v1952
  %v1973 = vmul.f32 %v1812, %v1953
  %v1974 = vmul.f32 %v1813, %v1954
  %v1975 = vmul.f32 %v1814, %v1955
  %v1976 = vmul.f32 %v1815, %v1956
  %v1977 = vmul.f32 %v1816, %v1957
  %v1978 = vmul.f32 %v1817, %v1958
  %v1979 = vmul.f32 %v1818, %v1959
  %v1980 = vmul.f32 %v1819, %v1960
  %v1981 = vmul.f32 %v1820, %v1961
  %1982 = vst.msk [vmem:[%s4] sm:$0xff] %vm48, %v1962
  %1983 = vst.msk [vmem:[%s4 + $0x8] sm:$0xff] %vm48, %v1963
  %1984 = vst.msk [vmem:[%s4 + $0x10] sm:$0xff] %vm48, %v1964
  %1985 = vst.msk [vmem:[%s4 + $0x18] sm:$0xff] %vm48, %v1965
  %1986 = vst.msk [vmem:[%s4 + $0x20] sm:$0xff] %vm48, %v1966
  %1987 = vst.msk [vmem:[%s4 + $0x28] sm:$0xff] %vm48, %v1967
  %1988 = vst.msk [vmem:[%s4 + $0x30] sm:$0xff] %vm48, %v1968
  %1989 = vst.msk [vmem:[%s4 + $0x38] sm:$0xff] %vm48, %v1969
  %1990 = vst.msk [vmem:[%s4 + $0x40] sm:$0xff] %vm48, %v1970
  %1991 = vst.msk [vmem:[%s4 + $0x48] sm:$0xff] %vm48, %v1971
  %1992 = vst.msk [vmem:[%s4 + $0x50] sm:$0xff] %vm48, %v1972
  %1993 = vst.msk [vmem:[%s4 + $0x58] sm:$0xff] %vm48, %v1973
  %1994 = vst.msk [vmem:[%s4 + $0x60] sm:$0xff] %vm48, %v1974
  %1995 = vst.msk [vmem:[%s4 + $0x68] sm:$0xff] %vm48, %v1975
  %1996 = vst.msk [vmem:[%s4 + $0x70] sm:$0xff] %vm48, %v1976
  %1997 = vst.msk [vmem:[%s4 + $0x78] sm:$0xff] %vm48, %v1977
  %1998 = vst.msk [vmem:[%s4 + $0x80] sm:$0xff] %vm48, %v1978
  %1999 = vst.msk [vmem:[%s4 + $0x88] sm:$0xff] %vm48, %v1979
  %2000 = vst.msk [vmem:[%s4 + $0x90] sm:$0xff] %vm48, %v1980
  %2001 = vst.msk [vmem:[%s4 + $0x98] sm:$0xff] %vm48, %v1981
  // Predicated region
  $region18: #{dprnn_forward.6} parent=0 // pred_check
    _
  $region19: #{dprnn_forward.6} parent=0 // pred_check_branch
    %2003 = sbr.rel (0) target = $region21
  $region20: #{dprnn_forward.6} parent=0 // pred_region
    _
  $region21: #{dprnn_forward.6} parent=0 // pred_fallthru
    _
  // Predicated region
  $region22: #{dprnn_forward.6} parent=0 // pred_check
    _
  $region23: #{dprnn_forward.6} parent=0 // pred_check_branch
    %2005 = sbr.rel (0) target = $region25
  $region24: #{dprnn_forward.6} parent=0 // pred_region
    _
  $region25: #{dprnn_forward.6} parent=0 // pred_fallthru
    _

// kernel: dprnn_forward.5
$region0: #{dprnn_forward.5}
  #allocation0 [shape = 'u32[]', space=smem, size = 0x4, offset = 0x4, fixed_abs, tag = 'smem constant byte address 0x4 - core index']
  #allocation1 [shape = 'u32[144,128]{1,0:T(1,128)}', space=vmem, size = 0x12000, scoped, tag = 'internal scratch']
  #allocation2 [shape = 'f32[192,64]{1,0:T(8,128)}', space=vmem, size = 0x18000, scoped, tag = 'scratch operand']
  #allocation3 [shape = 'f32[192,64]{1,0:T(8,128)}', space=vmem, size = 0x18000, scoped, tag = 'scratch operand']
  #allocation4 [shape = 'f32[192,16]{1,0:T(8,128)}', space=vmem, size = 0x18000, scoped, tag = 'scratch operand']
  #allocation5 [shape = 'f32[192,16]{1,0:T(8,128)}', space=vmem, size = 0x18000, scoped, tag = 'scratch operand']
  %s0 = inlined_call_operand.vmem [shape: f32[8,24,32], index: 0, kind: input, shape index: {}]
  %s1 = inlined_call_operand.vmem [shape: f32[32,128], index: 1, kind: input, shape index: {}]
  %s2 = inlined_call_operand.vmem [shape: f32[32,128], index: 2, kind: input, shape index: {}]
  %s3 = inlined_call_operand.vmem [shape: f32[1,128], index: 3, kind: input, shape index: {}]
  %s4 = inlined_call_operand.vmem [shape: f32[8,24,32], index: 4, kind: output, shape index: {}]
  %s5 = sld [smem:[#allocation0]]
  $region26: #{dprnn_forward.5} parent=0
    _
  %s7 = ssub.s32 1, %s5
  %s8 = scalar_select 0, %s7, %s5
  // Predicated region
  $region2: #{dprnn_forward.5} parent=0 // pred_check
    _
  $region3: #{dprnn_forward.5} parent=0 // pred_check_branch
    %10 = sbr.rel (0) target = $region5
  $region4: #{dprnn_forward.5} parent=0 // pred_region
    _
  $region5: #{dprnn_forward.5} parent=0 // pred_fallthru
    _
  // Predicated region
  $region6: #{dprnn_forward.5} parent=0 // pred_check
    _
  $region7: #{dprnn_forward.5} parent=0 // pred_check_branch
    %12 = sbr.rel (0) target = $region9
  $region8: #{dprnn_forward.5} parent=0 // pred_region
    _
  $region9: #{dprnn_forward.5} parent=0 // pred_fallthru
    _
  // Predicated region
  $region10: #{dprnn_forward.5} parent=0 // pred_check
    _
  $region11: #{dprnn_forward.5} parent=0 // pred_check_branch
    %14 = sbr.rel (0) target = $region13
  $region12: #{dprnn_forward.5} parent=0 // pred_region
    _
  $region13: #{dprnn_forward.5} parent=0 // pred_fallthru
    _
  // Predicated region
  $region14: #{dprnn_forward.5} parent=0 // pred_check
    _
  $region15: #{dprnn_forward.5} parent=0 // pred_check_branch
    %16 = sbr.rel (0) target = $region17
  $region16: #{dprnn_forward.5} parent=0 // pred_region
    _
  $region17: #{dprnn_forward.5} parent=0 // pred_fallthru
    _
  %v17 = vld [vmem:[%s0] sm:$0xff]
  %v18 = vld [vmem:[%s0 + $0x8] sm:$0xff]
  %v19 = vld [vmem:[%s0 + $0x10] sm:$0xff]
  %v20 = vld [vmem:[%s0 + $0x18] sm:$0xff]
  %v21 = vld [vmem:[%s0 + $0x20] sm:$0xff]
  %v22 = vld [vmem:[%s0 + $0x28] sm:$0xff]
  %v23 = vld [vmem:[%s0 + $0x30] sm:$0xff]
  %v24 = vld [vmem:[%s0 + $0x38] sm:$0xff]
  %v25 = vld [vmem:[%s0 + $0x40] sm:$0xff]
  %v26 = vld [vmem:[%s0 + $0x48] sm:$0xff]
  %v27 = vld [vmem:[%s0 + $0x50] sm:$0xff]
  %v28 = vld [vmem:[%s0 + $0x58] sm:$0xff]
  %v29 = vld [vmem:[%s0 + $0x60] sm:$0xff]
  %v30 = vld [vmem:[%s0 + $0x68] sm:$0xff]
  %v31 = vld [vmem:[%s0 + $0x70] sm:$0xff]
  %v32 = vld [vmem:[%s0 + $0x78] sm:$0xff]
  %v33 = vld [vmem:[%s0 + $0x80] sm:$0xff]
  %v34 = vld [vmem:[%s0 + $0x88] sm:$0xff]
  %v35 = vld [vmem:[%s0 + $0x90] sm:$0xff]
  %v36 = vld [vmem:[%s0 + $0x98] sm:$0xff]
  %v37 = vld [vmem:[%s0 + $0xa0] sm:$0xff]
  %v38 = vld [vmem:[%s0 + $0xa8] sm:$0xff]
  %v39 = vld [vmem:[%s0 + $0xb0] sm:$0xff]
  %v40 = vld [vmem:[%s0 + $0xb8] sm:$0xff]
  %v41 = vld [vmem:[%s1] sm:$0xff]
  %v42 = vld [vmem:[%s1 + $0x8] sm:$0xff]
  %v43 = vld [vmem:[%s1 + $0x10] sm:$0xff]
  %v44 = vld [vmem:[%s1 + $0x18] sm:$0xff]
  %v45 = vld [vmem:[%s3] sm:$0x1]
  %v47 = vlaneseq
  %v48 = vshrl.u32 %v47, 7
  %v49 = vsub.s32 0, %v48
  %v50 = vrot.slane %v45, %v49
  %vm52 = vcmask 261120
  %v54 = vsel %vm52, %v17, 0
  %v57 = vsel %vm52, %v18, 0
  %v60 = vsel %vm52, %v19, 0
  %v63 = vsel %vm52, %v20, 0
  %v66 = vsel %vm52, %v21, 0
  %v69 = vsel %vm52, %v22, 0
  %v72 = vsel %vm52, %v23, 0
  %v75 = vsel %vm52, %v24, 0
  %v78 = vsel %vm52, %v25, 0
  %v81 = vsel %vm52, %v26, 0
  %v84 = vsel %vm52, %v27, 0
  %v87 = vsel %vm52, %v28, 0
  %v90 = vsel %vm52, %v29, 0
  %v93 = vsel %vm52, %v30, 0
  %v96 = vsel %vm52, %v31, 0
  %v99 = vsel %vm52, %v32, 0
  %v102 = vsel %vm52, %v33, 0
  %v105 = vsel %vm52, %v34, 0
  %v108 = vsel %vm52, %v35, 0
  %v111 = vsel %vm52, %v36, 0
  %v114 = vsel %vm52, %v37, 0
  %v117 = vsel %vm52, %v38, 0
  %v120 = vsel %vm52, %v39, 0
  %v123 = vsel %vm52, %v40, 0
  %125 = vmatprep.subr.mxu0 0.0
  %126 = vmatpush1.msra.mxu0 %v41
  %127 = vmatprep.subr.mxu0 0.0
  %128 = vmatpush1.msra.mxu0 %v42
  %129 = vmatprep.subr.mxu0 0.0
  %130 = vmatpush1.msra.mxu0 %v43
  %131 = vmatprep.subr.mxu0 0.0
  %132 = vmatpush1.msra.mxu0 %v44
  %133 = vmatprep.subr.mxu0 0.0
  %134 = vmatpush1.msra.mxu0 0.0
  %135 = vmatprep.subr.mxu0 0.0
  %136 = vmatpush1.msra.mxu0 0.0
  %137 = vmatprep.subr.mxu0 0.0
  %138 = vmatpush1.msra.mxu0 0.0
  %139 = vmatprep.subr.mxu0 0.0
  %140 = vmatpush1.msra.mxu0 0.0
  %141 = vmatprep.subr.mxu0 0.0
  %142 = vmatpush1.msra.mxu0 0.0
  %143 = vmatprep.subr.mxu0 0.0
  %144 = vmatpush1.msra.mxu0 0.0
  %145 = vmatprep.subr.mxu0 0.0
  %146 = vmatpush1.msra.mxu0 0.0
  %147 = vmatprep.subr.mxu0 0.0
  %148 = vmatpush1.msra.mxu0 0.0
  %149 = vmatprep.subr.mxu0 0.0
  %150 = vmatpush1.msra.mxu0 0.0
  %151 = vmatprep.subr.mxu0 0.0
  %152 = vmatpush1.msra.mxu0 0.0
  %153 = vmatprep.subr.mxu0 0.0
  %154 = vmatpush1.msra.mxu0 0.0
  %155 = vmatprep.subr.mxu0 0.0
  %156 = vmatpush1.msra.mxu0 0.0
  %157 = vmatprep.subr.mxu0 0.0
  %158 = vmatpush1.msra.mxu0 0.0
  %159 = vmatprep.subr.mxu0 0.0
  %160 = vmatpush1.msra.mxu0 0.0
  %161 = vmatprep.subr.mxu0 0.0
  %162 = vmatpush1.msra.mxu0 0.0
  %163 = vmatprep.subr.mxu0 0.0
  %164 = vmatpush1.msra.mxu0 0.0
  %165 = vmatprep.subr.mxu0 0.0
  %166 = vmatpush1.msra.mxu0 0.0
  %167 = vmatprep.subr.mxu0 0.0
  %168 = vmatpush1.msra.mxu0 0.0
  %169 = vmatprep.subr.mxu0 0.0
  %170 = vmatpush1.msra.mxu0 0.0
  %171 = vmatprep.subr.mxu0 0.0
  %172 = vmatpush1.msra.mxu0 0.0
  %173 = vmatprep.subr.mxu0 0.0
  %174 = vmatpush1.msra.mxu0 0.0
  %175 = vmatprep.subr.mxu0 0.0
  %176 = vmatpush1.msra.mxu0 0.0
  %177 = vmatprep.subr.mxu0 0.0
  %178 = vmatpush1.msra.mxu0 0.0
  %179 = vmatprep.subr.mxu0 0.0
  %180 = vmatpush1.msra.mxu0 0.0
  %181 = vmatprep.subr.mxu0 0.0
  %182 = vmatpush1.msra.mxu0 0.0
  %183 = vmatprep.subr.mxu0 0.0
  %184 = vmatpush1.msra.mxu0 0.0
  %185 = vmatprep.subr.mxu0 0.0
  %186 = vmatpush1.msra.mxu0 0.0
  %187 = vmatprep.subr.mxu0 0.0
  %188 = vmatpush1.msra.mxu0 0.0
  %189 = vmatprep.mubr.f32.mxu0 0.0
  %190 = vmatmul.mubr.f32.gmra.mrb[0].mxu0 %v54
  %v191 = vpop.f32.mrb[0].mxu0
  %v192 = vadd.f32 %v50, %v191
  %v193 = vpop.f32.mrb[0].mxu0
  %194 = vmatprep.mubr.f32.mxu0 0.0
  %195 = vmatmul.mubr.f32.gmra.mrb[0].mxu0 %v57
  %v196 = vpop.f32.mrb[0].mxu0
  %v197 = vadd.f32 %v50, %v196
  %v198 = vpop.f32.mrb[0].mxu0
  %199 = vmatprep.mubr.f32.mxu0 0.0
  %200 = vmatmul.mubr.f32.gmra.mrb[0].mxu0 %v60
  %v201 = vpop.f32.mrb[0].mxu0
  %v202 = vadd.f32 %v50, %v201
  %v203 = vpop.f32.mrb[0].mxu0
  %204 = vmatprep.mubr.f32.mxu0 0.0
  %205 = vmatmul.mubr.f32.gmra.mrb[0].mxu0 %v63
  %v206 = vpop.f32.mrb[0].mxu0
  %v207 = vadd.f32 %v50, %v206
  %v208 = vpop.f32.mrb[0].mxu0
  %209 = vmatprep.mubr.f32.mxu0 0.0
  %210 = vmatmul.mubr.f32.gmra.mrb[0].mxu0 %v66
  %v211 = vpop.f32.mrb[0].mxu0
  %v212 = vadd.f32 %v50, %v211
  %v213 = vpop.f32.mrb[0].mxu0
  %214 = vmatprep.mubr.f32.mxu0 0.0
  %215 = vmatmul.mubr.f32.gmra.mrb[0].mxu0 %v69
  %v216 = vpop.f32.mrb[0].mxu0
  %v217 = vadd.f32 %v50, %v216
  %v218 = vpop.f32.mrb[0].mxu0
  %219 = vmatprep.mubr.f32.mxu0 0.0
  %220 = vmatmul.mubr.f32.gmra.mrb[0].mxu0 %v72
  %v221 = vpop.f32.mrb[0].mxu0
  %v222 = vadd.f32 %v50, %v221
  %v223 = vpop.f32.mrb[0].mxu0
  %224 = vmatprep.mubr.f32.mxu0 0.0
  %225 = vmatmul.mubr.f32.gmra.mrb[0].mxu0 %v75
  %v226 = vpop.f32.mrb[0].mxu0
  %v227 = vadd.f32 %v50, %v226
  %v228 = vpop.f32.mrb[0].mxu0
  %229 = vmatprep.mubr.f32.mxu0 0.0
  %230 = vmatmul.mubr.f32.gmra.mrb[0].mxu0 %v78
  %v231 = vpop.f32.mrb[0].mxu0
  %v232 = vadd.f32 %v50, %v231
  %v233 = vpop.f32.mrb[0].mxu0
  %234 = vmatprep.mubr.f32.mxu0 0.0
  %235 = vmatmul.mubr.f32.gmra.mrb[0].mxu0 %v81
  %v236 = vpop.f32.mrb[0].mxu0
  %v237 = vadd.f32 %v50, %v236
  %v238 = vpop.f32.mrb[0].mxu0
  %239 = vmatprep.mubr.f32.mxu0 0.0
  %240 = vmatmul.mubr.f32.gmra.mrb[0].mxu0 %v84
  %v241 = vpop.f32.mrb[0].mxu0
  %v242 = vadd.f32 %v50, %v241
  %v243 = vpop.f32.mrb[0].mxu0
  %244 = vmatprep.mubr.f32.mxu0 0.0
  %245 = vmatmul.mubr.f32.gmra.mrb[0].mxu0 %v87
  %v246 = vpop.f32.mrb[0].mxu0
  %v247 = vadd.f32 %v50, %v246
  %v248 = vpop.f32.mrb[0].mxu0
  %249 = vmatprep.mubr.f32.mxu0 0.0
  %250 = vmatmul.mubr.f32.gmra.mrb[0].mxu0 %v90
  %v251 = vpop.f32.mrb[0].mxu0
  %v252 = vadd.f32 %v50, %v251
  %v253 = vpop.f32.mrb[0].mxu0
  %254 = vmatprep.mubr.f32.mxu0 0.0
  %255 = vmatmul.mubr.f32.gmra.mrb[0].mxu0 %v93
  %v256 = vpop.f32.mrb[0].mxu0
  %v257 = vadd.f32 %v50, %v256
  %v258 = vpop.f32.mrb[0].mxu0
  %259 = vmatprep.mubr.f32.mxu0 0.0
  %260 = vmatmul.mubr.f32.gmra.mrb[0].mxu0 %v96
  %v261 = vpop.f32.mrb[0].mxu0
  %v262 = vadd.f32 %v50, %v261
  %v263 = vpop.f32.mrb[0].mxu0
  %264 = vmatprep.mubr.f32.mxu0 0.0
  %265 = vmatmul.mubr.f32.gmra.mrb[0].mxu0 %v99
  %v266 = vpop.f32.mrb[0].mxu0
  %v267 = vadd.f32 %v50, %v266
  %v268 = vpop.f32.mrb[0].mxu0
  %269 = vmatprep.mubr.f32.mxu0 0.0
  %270 = vmatmul.mubr.f32.gmra.mrb[0].mxu0 %v102
  %v271 = vpop.f32.mrb[0].mxu0
  %v272 = vadd.f32 %v50, %v271
  %v273 = vpop.f32.mrb[0].mxu0
  %274 = vmatprep.mubr.f32.mxu0 0.0
  %275 = vmatmul.mubr.f32.gmra.mrb[0].mxu0 %v105
  %v276 = vpop.f32.mrb[0].mxu0
  %v277 = vadd.f32 %v50, %v276
  %v278 = vpop.f32.mrb[0].mxu0
  %279 = vmatprep.mubr.f32.mxu0 0.0
  %280 = vmatmul.mubr.f32.gmra.mrb[0].mxu0 %v108
  %v281 = vpop.f32.mrb[0].mxu0
  %v282 = vadd.f32 %v50, %v281
  %v283 = vpop.f32.mrb[0].mxu0
  %284 = vmatprep.mubr.f32.mxu0 0.0
  %285 = vmatmul.mubr.f32.gmra.mrb[0].mxu0 %v111
  %v286 = vpop.f32.mrb[0].mxu0
  %v287 = vadd.f32 %v50, %v286
  %v288 = vpop.f32.mrb[0].mxu0
  %289 = vmatprep.mubr.f32.mxu0 0.0
  %290 = vmatmul.mubr.f32.gmra.mrb[0].mxu0 %v114
  %v291 = vpop.f32.mrb[0].mxu0
  %v292 = vadd.f32 %v50, %v291
  %v293 = vpop.f32.mrb[0].mxu0
  %294 = vmatprep.mubr.f32.mxu0 0.0
  %295 = vmatmul.mubr.f32.gmra.mrb[0].mxu0 %v117
  %v296 = vpop.f32.mrb[0].mxu0
  %v297 = vadd.f32 %v50, %v296
  %v298 = vpop.f32.mrb[0].mxu0
  %299 = vmatprep.mubr.f32.mxu0 0.0
  %300 = vmatmul.mubr.f32.gmra.mrb[0].mxu0 %v120
  %v301 = vpop.f32.mrb[0].mxu0
  %v302 = vadd.f32 %v50, %v301
  %v303 = vpop.f32.mrb[0].mxu0
  %304 = vmatprep.mubr.f32.mxu0 0.0
  %305 = vmatmul.mubr.f32.gmra.mrb[0].mxu0 %v123
  %v306 = vpop.f32.mrb[0].mxu0
  %v307 = vadd.f32 %v50, %v306
  %v308 = vpop.f32.mrb[0].mxu0
  %309 = vdwg.mxu0
  %vm310 = vcmask 523264
  %311 = vst.msk [vmem:[#allocation2] sm:$0xff] %vm310, %v192
  %312 = vst.msk [vmem:[#allocation2 + $0x8] sm:$0xff] %vm310, %v197
  %313 = vst.msk [vmem:[#allocation2 + $0x10] sm:$0xff] %vm310, %v202
  %314 = vst.msk [vmem:[#allocation2 + $0x18] sm:$0xff] %vm310, %v207
  %315 = vst.msk [vmem:[#allocation2 + $0x20] sm:$0xff] %vm310, %v212
  %316 = vst.msk [vmem:[#allocation2 + $0x28] sm:$0xff] %vm310, %v217
  %317 = vst.msk [vmem:[#allocation2 + $0x30] sm:$0xff] %vm310, %v222
  %318 = vst.msk [vmem:[#allocation2 + $0x38] sm:$0xff] %vm310, %v227
  %319 = vst.msk [vmem:[#allocation2 + $0x40] sm:$0xff] %vm310, %v232
  %320 = vst.msk [vmem:[#allocation2 + $0x48] sm:$0xff] %vm310, %v237
  %321 = vst.msk [vmem:[#allocation2 + $0x50] sm:$0xff] %vm310, %v242
  %322 = vst.msk [vmem:[#allocation2 + $0x58] sm:$0xff] %vm310, %v247
  %323 = vst.msk [vmem:[#allocation2 + $0x60] sm:$0xff] %vm310, %v252
  %324 = vst.msk [vmem:[#allocation2 + $0x68] sm:$0xff] %vm310, %v257
  %325 = vst.msk [vmem:[#allocation2 + $0x70] sm:$0xff] %vm310, %v262
  %326 = vst.msk [vmem:[#allocation2 + $0x78] sm:$0xff] %vm310, %v267
  %327 = vst.msk [vmem:[#allocation2 + $0x80] sm:$0xff] %vm310, %v272
  %328 = vst.msk [vmem:[#allocation2 + $0x88] sm:$0xff] %vm310, %v277
  %329 = vst.msk [vmem:[#allocation2 + $0x90] sm:$0xff] %vm310, %v282
  %330 = vst.msk [vmem:[#allocation2 + $0x98] sm:$0xff] %vm310, %v287
  %331 = vst.msk [vmem:[#allocation2 + $0xa0] sm:$0xff] %vm310, %v292
  %332 = vst.msk [vmem:[#allocation2 + $0xa8] sm:$0xff] %vm310, %v297
  %333 = vst.msk [vmem:[#allocation2 + $0xb0] sm:$0xff] %vm310, %v302
  %334 = vst.msk [vmem:[#allocation2 + $0xb8] sm:$0xff] %vm310, %v307
  %359 = vrot.lane.b32.xlu0 %v192, 64
  %v360 = vpop.permute.xlu0 %359
  %361 = vrot.lane.b32.xlu0 %v197, 64
  %v362 = vpop.permute.xlu0 %361
  %363 = vrot.lane.b32.xlu0 %v202, 64
  %v364 = vpop.permute.xlu0 %363
  %365 = vrot.lane.b32.xlu0 %v207, 64
  %v366 = vpop.permute.xlu0 %365
  %367 = vrot.lane.b32.xlu0 %v212, 64
  %v368 = vpop.permute.xlu0 %367
  %369 = vrot.lane.b32.xlu0 %v217, 64
  %v370 = vpop.permute.xlu0 %369
  %371 = vrot.lane.b32.xlu0 %v222, 64
  %v372 = vpop.permute.xlu0 %371
  %373 = vrot.lane.b32.xlu0 %v227, 64
  %v374 = vpop.permute.xlu0 %373
  %375 = vrot.lane.b32.xlu0 %v232, 64
  %v376 = vpop.permute.xlu0 %375
  %377 = vrot.lane.b32.xlu0 %v237, 64
  %v378 = vpop.permute.xlu0 %377
  %379 = vrot.lane.b32.xlu0 %v242, 64
  %v380 = vpop.permute.xlu0 %379
  %381 = vrot.lane.b32.xlu0 %v247, 64
  %v382 = vpop.permute.xlu0 %381
  %383 = vrot.lane.b32.xlu0 %v252, 64
  %v384 = vpop.permute.xlu0 %383
  %385 = vrot.lane.b32.xlu0 %v257, 64
  %v386 = vpop.permute.xlu0 %385
  %387 = vrot.lane.b32.xlu0 %v262, 64
  %v388 = vpop.permute.xlu0 %387
  %389 = vrot.lane.b32.xlu0 %v267, 64
  %v390 = vpop.permute.xlu0 %389
  %391 = vrot.lane.b32.xlu0 %v272, 64
  %v392 = vpop.permute.xlu0 %391
  %393 = vrot.lane.b32.xlu0 %v277, 64
  %v394 = vpop.permute.xlu0 %393
  %395 = vrot.lane.b32.xlu0 %v282, 64
  %v396 = vpop.permute.xlu0 %395
  %397 = vrot.lane.b32.xlu0 %v287, 64
  %v398 = vpop.permute.xlu0 %397
  %399 = vrot.lane.b32.xlu0 %v292, 64
  %v400 = vpop.permute.xlu0 %399
  %401 = vrot.lane.b32.xlu0 %v297, 64
  %v402 = vpop.permute.xlu0 %401
  %403 = vrot.lane.b32.xlu0 %v302, 64
  %v404 = vpop.permute.xlu0 %403
  %405 = vrot.lane.b32.xlu0 %v307, 64
  %v406 = vpop.permute.xlu0 %405
  %431 = vst.msk [vmem:[#allocation3] sm:$0xff] %vm310, %v360
  %432 = vst.msk [vmem:[#allocation3 + $0x8] sm:$0xff] %vm310, %v362
  %433 = vst.msk [vmem:[#allocation3 + $0x10] sm:$0xff] %vm310, %v364
  %434 = vst.msk [vmem:[#allocation3 + $0x18] sm:$0xff] %vm310, %v366
  %435 = vst.msk [vmem:[#allocation3 + $0x20] sm:$0xff] %vm310, %v368
  %436 = vst.msk [vmem:[#allocation3 + $0x28] sm:$0xff] %vm310, %v370
  %437 = vst.msk [vmem:[#allocation3 + $0x30] sm:$0xff] %vm310, %v372
  %438 = vst.msk [vmem:[#allocation3 + $0x38] sm:$0xff] %vm310, %v374
  %439 = vst.msk [vmem:[#allocation3 + $0x40] sm:$0xff] %vm310, %v376
  %440 = vst.msk [vmem:[#allocation3 + $0x48] sm:$0xff] %vm310, %v378
  %441 = vst.msk [vmem:[#allocation3 + $0x50] sm:$0xff] %vm310, %v380
  %442 = vst.msk [vmem:[#allocation3 + $0x58] sm:$0xff] %vm310, %v382
  %443 = vst.msk [vmem:[#allocation3 + $0x60] sm:$0xff] %vm310, %v384
  %444 = vst.msk [vmem:[#allocation3 + $0x68] sm:$0xff] %vm310, %v386
  %445 = vst.msk [vmem:[#allocation3 + $0x70] sm:$0xff] %vm310, %v388
  %446 = vst.msk [vmem:[#allocation3 + $0x78] sm:$0xff] %vm310, %v390
  %447 = vst.msk [vmem:[#allocation3 + $0x80] sm:$0xff] %vm310, %v392
  %448 = vst.msk [vmem:[#allocation3 + $0x88] sm:$0xff] %vm310, %v394
  %449 = vst.msk [vmem:[#allocation3 + $0x90] sm:$0xff] %vm310, %v396
  %450 = vst.msk [vmem:[#allocation3 + $0x98] sm:$0xff] %vm310, %v398
  %451 = vst.msk [vmem:[#allocation3 + $0xa0] sm:$0xff] %vm310, %v400
  %452 = vst.msk [vmem:[#allocation3 + $0xa8] sm:$0xff] %vm310, %v402
  %453 = vst.msk [vmem:[#allocation3 + $0xb0] sm:$0xff] %vm310, %v404
  %454 = vst.msk [vmem:[#allocation3 + $0xb8] sm:$0xff] %vm310, %v406
  %v455 = vld [vmem:[%s2] sm:$0xff]
  %v456 = vld [vmem:[%s2 + $0x8] sm:$0xff]
  %v457 = vld [vmem:[%s2 + $0x10] sm:$0xff]
  %v458 = vld [vmem:[%s2 + $0x18] sm:$0xff]
  %v460 = vsel %vm52, 0.0, 0
  %462 = vmatprep.subr.mxu0 0.0
  %463 = vmatpush1.msra.mxu0 %v455
  %464 = vmatprep.subr.mxu0 0.0
  %465 = vmatpush1.msra.mxu0 %v456
  %466 = vmatprep.subr.mxu0 0.0
  %467 = vmatpush1.msra.mxu0 %v457
  %468 = vmatprep.subr.mxu0 0.0
  %469 = vmatpush1.msra.mxu0 %v458
  %470 = vmatprep.subr.mxu0 0.0
  %471 = vmatpush1.msra.mxu0 0.0
  %472 = vmatprep.subr.mxu0 0.0
  %473 = vmatpush1.msra.mxu0 0.0
  %474 = vmatprep.subr.mxu0 0.0
  %475 = vmatpush1.msra.mxu0 0.0
  %476 = vmatprep.subr.mxu0 0.0
  %477 = vmatpush1.msra.mxu0 0.0
  %478 = vmatprep.subr.mxu0 0.0
  %479 = vmatpush1.msra.mxu0 0.0
  %480 = vmatprep.subr.mxu0 0.0
  %481 = vmatpush1.msra.mxu0 0.0
  %482 = vmatprep.subr.mxu0 0.0
  %483 = vmatpush1.msra.mxu0 0.0
  %484 = vmatprep.subr.mxu0 0.0
  %485 = vmatpush1.msra.mxu0 0.0
  %486 = vmatprep.subr.mxu0 0.0
  %487 = vmatpush1.msra.mxu0 0.0
  %488 = vmatprep.subr.mxu0 0.0
  %489 = vmatpush1.msra.mxu0 0.0
  %490 = vmatprep.subr.mxu0 0.0
  %491 = vmatpush1.msra.mxu0 0.0
  %492 = vmatprep.subr.mxu0 0.0
  %493 = vmatpush1.msra.mxu0 0.0
  %494 = vmatprep.subr.mxu0 0.0
  %495 = vmatpush1.msra.mxu0 0.0
  %496 = vmatprep.subr.mxu0 0.0
  %497 = vmatpush1.msra.mxu0 0.0
  %498 = vmatprep.subr.mxu0 0.0
  %499 = vmatpush1.msra.mxu0 0.0
  %500 = vmatprep.subr.mxu0 0.0
  %501 = vmatpush1.msra.mxu0 0.0
  %502 = vmatprep.subr.mxu0 0.0
  %503 = vmatpush1.msra.mxu0 0.0
  %504 = vmatprep.subr.mxu0 0.0
  %505 = vmatpush1.msra.mxu0 0.0
  %506 = vmatprep.subr.mxu0 0.0
  %507 = vmatpush1.msra.mxu0 0.0
  %508 = vmatprep.subr.mxu0 0.0
  %509 = vmatpush1.msra.mxu0 0.0
  %510 = vmatprep.subr.mxu0 0.0
  %511 = vmatpush1.msra.mxu0 0.0
  %512 = vmatprep.subr.mxu0 0.0
  %513 = vmatpush1.msra.mxu0 0.0
  %514 = vmatprep.subr.mxu0 0.0
  %515 = vmatpush1.msra.mxu0 0.0
  %516 = vmatprep.subr.mxu0 0.0
  %517 = vmatpush1.msra.mxu0 0.0
  %518 = vmatprep.subr.mxu0 0.0
  %519 = vmatpush1.msra.mxu0 0.0
  %520 = vmatprep.subr.mxu0 0.0
  %521 = vmatpush1.msra.mxu0 0.0
  %522 = vmatprep.subr.mxu0 0.0
  %523 = vmatpush1.msra.mxu0 0.0
  %524 = vmatprep.subr.mxu0 0.0
  %525 = vmatpush1.msra.mxu0 0.0
  %526 = vmatprep.mubr.f32.mxu0 0.0
  %527 = vmatmul.mubr.f32.gmra.mrb[0].mxu0 %v460
  %v528 = vpop.f32.mrb[0].mxu0
  %v529 = vadd.f32 0.0, %v528
  %v530 = vpop.f32.mrb[0].mxu0
  %531 = vmatprep.mubr.f32.mxu0 0.0
  %532 = vmatmul.mubr.f32.gmra.mrb[0].mxu0 %v460
  %v533 = vpop.f32.mrb[0].mxu0
  %v534 = vadd.f32 0.0, %v533
  %v535 = vpop.f32.mrb[0].mxu0
  %536 = vmatprep.mubr.f32.mxu0 0.0
  %537 = vmatmul.mubr.f32.gmra.mrb[0].mxu0 %v460
  %v538 = vpop.f32.mrb[0].mxu0
  %v539 = vadd.f32 0.0, %v538
  %v540 = vpop.f32.mrb[0].mxu0
  %541 = vdwg.mxu0
  %v542 = vld [vmem:[#allocation2] sm:$0xff]
  %v543 = vld [vmem:[#allocation2 + $0x8] sm:$0xff]
  %v544 = vld [vmem:[#allocation2 + $0x10] sm:$0xff]
  %v545 = vadd.f32 %v542, %v529
  %v546 = vadd.f32 %v543, %v534
  %v547 = vadd.f32 %v544, %v539
  %s548 = scalar_lea.vmem [#allocation3], 168
  %v549 = vld [vmem:[%s548] sm:$0xff]
  %v550 = vld [vmem:[%s548 + $0x8] sm:$0xff]
  %v551 = vld [vmem:[%s548 + $0x10] sm:$0xff]
  %555 = vrot.lane.b32.xlu0 %v529, 64
  %v556 = vpop.permute.xlu0 %555
  %557 = vrot.lane.b32.xlu0 %v534, 64
  %v558 = vpop.permute.xlu0 %557
  %559 = vrot.lane.b32.xlu0 %v539, 64
  %v560 = vpop.permute.xlu0 %559
  %v564 = vadd.f32 %v549, %v556
  %v565 = vadd.f32 %v550, %v558
  %v566 = vadd.f32 %v551, %v560
  %v567 = vxor.u32 %v545, 2147483648
  %v568 = vxor.u32 %v546, 2147483648
  %v569 = vxor.u32 %v547, 2147483648
  %v570 = vmul.f32 %v567, 1.442695
  %v571 = vpow.pop %v570
  %v572 = vmul.f32 %v568, 1.442695
  %v573 = vpow.pop %v572
  %v574 = vmul.f32 %v569, 1.442695
  %v575 = vpow.pop %v574
  %v576 = vadd.f32 %v571, 1.0
  %v577 = vadd.f32 %v573, 1.0
  %v578 = vadd.f32 %v575, 1.0
  %v579 = vrcp.pop %v576
  %v580 = vmul.f32 1.0, %v579
  %v581 = vrcp.pop %v577
  %v582 = vmul.f32 1.0, %v581
  %v583 = vrcp.pop %v578
  %v584 = vmul.f32 1.0, %v583
  %v585 = vtanh.pop %v545
  %v586 = vtanh.pop %v546
  %v587 = vtanh.pop %v547
  %v588 = vmul.f32 %v580, 0.0
  %v589 = vmul.f32 %v582, 0.0
  %v590 = vmul.f32 %v584, 0.0
  %594 = vrot.lane.b32.xlu0 %v585, 96
  %v595 = vpop.permute.xlu0 %594
  %596 = vrot.lane.b32.xlu0 %v586, 96
  %v597 = vpop.permute.xlu0 %596
  %598 = vrot.lane.b32.xlu0 %v587, 96
  %v599 = vpop.permute.xlu0 %598
  %v603 = vmul.f32 %v580, %v595
  %v604 = vmul.f32 %v582, %v597
  %v605 = vmul.f32 %v584, %v599
  %609 = vrot.lane.b32.xlu0 %v603, 16
  %v610 = vpop.permute.xlu0 %609
  %611 = vrot.lane.b32.xlu0 %v604, 16
  %v612 = vpop.permute.xlu0 %611
  %613 = vrot.lane.b32.xlu0 %v605, 16
  %v614 = vpop.permute.xlu0 %613
  %v618 = vadd.f32 %v588, %v610
  %v619 = vadd.f32 %v589, %v612
  %v620 = vadd.f32 %v590, %v614
  %v621 = vtanh.pop %v618
  %v622 = vtanh.pop %v619
  %v623 = vtanh.pop %v620
  %627 = vrot.lane.b32.xlu0 %v621, 32
  %v628 = vpop.permute.xlu0 %627
  %629 = vrot.lane.b32.xlu0 %v622, 32
  %v630 = vpop.permute.xlu0 %629
  %631 = vrot.lane.b32.xlu0 %v623, 32
  %v632 = vpop.permute.xlu0 %631
  %v636 = vmul.f32 %v580, %v628
  %v637 = vmul.f32 %v582, %v630
  %v638 = vmul.f32 %v584, %v632
  %v639 = vxor.u32 %v564, 2147483648
  %v640 = vxor.u32 %v565, 2147483648
  %v641 = vxor.u32 %v566, 2147483648
  %v642 = vmul.f32 %v639, 1.442695
  %v643 = vpow.pop %v642
  %v644 = vmul.f32 %v640, 1.442695
  %v645 = vpow.pop %v644
  %v646 = vmul.f32 %v641, 1.442695
  %v647 = vpow.pop %v646
  %v648 = vadd.f32 %v643, 1.0
  %v649 = vadd.f32 %v645, 1.0
  %v650 = vadd.f32 %v647, 1.0
  %v651 = vrcp.pop %v648
  %v652 = vmul.f32 1.0, %v651
  %v653 = vrcp.pop %v649
  %v654 = vmul.f32 1.0, %v653
  %v655 = vrcp.pop %v650
  %v656 = vmul.f32 1.0, %v655
  %v657 = vtanh.pop %v564
  %v658 = vtanh.pop %v565
  %v659 = vtanh.pop %v566
  %v660 = vmul.f32 %v652, 0.0
  %v661 = vmul.f32 %v654, 0.0
  %v662 = vmul.f32 %v656, 0.0
  %666 = vrot.lane.b32.xlu0 %v657, 96
  %v667 = vpop.permute.xlu0 %666
  %668 = vrot.lane.b32.xlu0 %v658, 96
  %v669 = vpop.permute.xlu0 %668
  %670 = vrot.lane.b32.xlu0 %v659, 96
  %v671 = vpop.permute.xlu0 %670
  %v675 = vmul.f32 %v652, %v667
  %v676 = vmul.f32 %v654, %v669
  %v677 = vmul.f32 %v656, %v671
  %681 = vrot.lane.b32.xlu0 %v675, 16
  %v682 = vpop.permute.xlu0 %681
  %683 = vrot.lane.b32.xlu0 %v676, 16
  %v684 = vpop.permute.xlu0 %683
  %685 = vrot.lane.b32.xlu0 %v677, 16
  %v686 = vpop.permute.xlu0 %685
  %v690 = vadd.f32 %v660, %v682
  %v691 = vadd.f32 %v661, %v684
  %v692 = vadd.f32 %v662, %v686
  %v693 = vtanh.pop %v690
  %v694 = vtanh.pop %v691
  %v695 = vtanh.pop %v692
  %699 = vrot.lane.b32.xlu0 %v693, 32
  %v700 = vpop.permute.xlu0 %699
  %701 = vrot.lane.b32.xlu0 %v694, 32
  %v702 = vpop.permute.xlu0 %701
  %703 = vrot.lane.b32.xlu0 %v695, 32
  %v704 = vpop.permute.xlu0 %703
  %v708 = vmul.f32 %v652, %v700
  %v709 = vmul.f32 %v654, %v702
  %v710 = vmul.f32 %v656, %v704
  %714 = vrot.lane.b32.xlu0 %v636, 80
  %v715 = vpop.permute.xlu0 %714
  %716 = vrot.lane.b32.xlu0 %v637, 80
  %v717 = vpop.permute.xlu0 %716
  %718 = vrot.lane.b32.xlu0 %v638, 80
  %v719 = vpop.permute.xlu0 %718
  %vm723 = vcmask 130048
  %724 = vst.msk [vmem:[#allocation4] sm:$0xff] %vm723, %v715
  %725 = vst.msk [vmem:[#allocation4 + $0x8] sm:$0xff] %vm723, %v717
  %726 = vst.msk [vmem:[#allocation4 + $0x10] sm:$0xff] %vm723, %v719
  %730 = vrot.lane.b32.xlu0 %v708, 80
  %v731 = vpop.permute.xlu0 %730
  %732 = vrot.lane.b32.xlu0 %v709, 80
  %v733 = vpop.permute.xlu0 %732
  %734 = vrot.lane.b32.xlu0 %v710, 80
  %v735 = vpop.permute.xlu0 %734
  %s739 = scalar_lea.vmem [#allocation5], 168
  %740 = vst.msk [vmem:[%s739] sm:$0xff] %vm723, %v731
  %741 = vst.msk [vmem:[%s739 + $0x8] sm:$0xff] %vm723, %v733
  %742 = vst.msk [vmem:[%s739 + $0x10] sm:$0xff] %vm723, %v735
  %743 = vrot.lane.b32.xlu0 %v708, 96
  %v744 = vpop.permute.xlu0 %743
  %745 = vrot.lane.b32.xlu0 %v709, 96
  %v746 = vpop.permute.xlu0 %745
  %747 = vrot.lane.b32.xlu0 %v710, 96
  %v748 = vpop.permute.xlu0 %747
  %v752 = vsel %vm723, %v715, %v744
  %v753 = vsel %vm723, %v717, %v746
  %v754 = vsel %vm723, %v719, %v748
  %v755 = vld [vmem:[%s2] sm:$0xff]
  %v756 = vld [vmem:[%s2 + $0x8] sm:$0xff]
  %v757 = vld [vmem:[%s2 + $0x10] sm:$0xff]
  %v758 = vld [vmem:[%s2 + $0x18] sm:$0xff]
  %v760 = vsel %vm52, %v752, 0
  %v763 = vsel %vm52, %v753, 0
  %v766 = vsel %vm52, %v754, 0
  %768 = vmatprep.subr.mxu0 0.0
  %769 = vmatpush1.msra.mxu0 %v755
  %770 = vmatprep.subr.mxu0 0.0
  %771 = vmatpush1.msra.mxu0 %v756
  %772 = vmatprep.subr.mxu0 0.0
  %773 = vmatpush1.msra.mxu0 %v757
  %774 = vmatprep.subr.mxu0 0.0
  %775 = vmatpush1.msra.mxu0 %v758
  %776 = vmatprep.subr.mxu0 0.0
  %777 = vmatpush1.msra.mxu0 0.0
  %778 = vmatprep.subr.mxu0 0.0
  %779 = vmatpush1.msra.mxu0 0.0
  %780 = vmatprep.subr.mxu0 0.0
  %781 = vmatpush1.msra.mxu0 0.0
  %782 = vmatprep.subr.mxu0 0.0
  %783 = vmatpush1.msra.mxu0 0.0
  %784 = vmatprep.subr.mxu0 0.0
  %785 = vmatpush1.msra.mxu0 0.0
  %786 = vmatprep.subr.mxu0 0.0
  %787 = vmatpush1.msra.mxu0 0.0
  %788 = vmatprep.subr.mxu0 0.0
  %789 = vmatpush1.msra.mxu0 0.0
  %790 = vmatprep.subr.mxu0 0.0
  %791 = vmatpush1.msra.mxu0 0.0
  %792 = vmatprep.subr.mxu0 0.0
  %793 = vmatpush1.msra.mxu0 0.0
  %794 = vmatprep.subr.mxu0 0.0
  %795 = vmatpush1.msra.mxu0 0.0
  %796 = vmatprep.subr.mxu0 0.0
  %797 = vmatpush1.msra.mxu0 0.0
  %798 = vmatprep.subr.mxu0 0.0
  %799 = vmatpush1.msra.mxu0 0.0
  %800 = vmatprep.subr.mxu0 0.0
  %801 = vmatpush1.msra.mxu0 0.0
  %802 = vmatprep.subr.mxu0 0.0
  %803 = vmatpush1.msra.mxu0 0.0
  %804 = vmatprep.subr.mxu0 0.0
  %805 = vmatpush1.msra.mxu0 0.0
  %806 = vmatprep.subr.mxu0 0.0
  %807 = vmatpush1.msra.mxu0 0.0
  %808 = vmatprep.subr.mxu0 0.0
  %809 = vmatpush1.msra.mxu0 0.0
  %810 = vmatprep.subr.mxu0 0.0
  %811 = vmatpush1.msra.mxu0 0.0
  %812 = vmatprep.subr.mxu0 0.0
  %813 = vmatpush1.msra.mxu0 0.0
  %814 = vmatprep.subr.mxu0 0.0
  %815 = vmatpush1.msra.mxu0 0.0
  %816 = vmatprep.subr.mxu0 0.0
  %817 = vmatpush1.msra.mxu0 0.0
  %818 = vmatprep.subr.mxu0 0.0
  %819 = vmatpush1.msra.mxu0 0.0
  %820 = vmatprep.subr.mxu0 0.0
  %821 = vmatpush1.msra.mxu0 0.0
  %822 = vmatprep.subr.mxu0 0.0
  %823 = vmatpush1.msra.mxu0 0.0
  %824 = vmatprep.subr.mxu0 0.0
  %825 = vmatpush1.msra.mxu0 0.0
  %826 = vmatprep.subr.mxu0 0.0
  %827 = vmatpush1.msra.mxu0 0.0
  %828 = vmatprep.subr.mxu0 0.0
  %829 = vmatpush1.msra.mxu0 0.0
  %830 = vmatprep.subr.mxu0 0.0
  %831 = vmatpush1.msra.mxu0 0.0
  %832 = vmatprep.mubr.f32.mxu0 0.0
  %833 = vmatmul.mubr.f32.gmra.mrb[0].mxu0 %v760
  %v834 = vpop.f32.mrb[0].mxu0
  %v835 = vadd.f32 0.0, %v834
  %v836 = vpop.f32.mrb[0].mxu0
  %837 = vmatprep.mubr.f32.mxu0 0.0
  %838 = vmatmul.mubr.f32.gmra.mrb[0].mxu0 %v763
  %v839 = vpop.f32.mrb[0].mxu0
  %v840 = vadd.f32 0.0, %v839
  %v841 = vpop.f32.mrb[0].mxu0
  %842 = vmatprep.mubr.f32.mxu0 0.0
  %843 = vmatmul.mubr.f32.gmra.mrb[0].mxu0 %v766
  %v844 = vpop.f32.mrb[0].mxu0
  %v845 = vadd.f32 0.0, %v844
  %v846 = vpop.f32.mrb[0].mxu0
  %847 = vdwg.mxu0
  %s848 = scalar_lea.vmem [#allocation2], 24
  %v849 = vld [vmem:[%s848] sm:$0xff]
  %v850 = vld [vmem:[%s848 + $0x8] sm:$0xff]
  %v851 = vld [vmem:[%s848 + $0x10] sm:$0xff]
  %v852 = vadd.f32 %v849, %v835
  %v853 = vadd.f32 %v850, %v840
  %v854 = vadd.f32 %v851, %v845
  %s855 = scalar_lea.vmem [#allocation3], 144
  %v856 = vld [vmem:[%s855] sm:$0xff]
  %v857 = vld [vmem:[%s855 + $0x8] sm:$0xff]
  %v858 = vld [vmem:[%s855 + $0x10] sm:$0xff]
  %862 = vrot.lane.b32.xlu0 %v835, 64
  %v863 = vpop.permute.xlu0 %862
  %864 = vrot.lane.b32.xlu0 %v840, 64
  %v865 = vpop.permute.xlu0 %864
  %866 = vrot.lane.b32.xlu0 %v845, 64
  %v867 = vpop.permute.xlu0 %866
  %v871 = vadd.f32 %v856, %v863
  %v872 = vadd.f32 %v857, %v865
  %v873 = vadd.f32 %v858, %v867
  %v874 = vxor.u32 %v852, 2147483648
  %v875 = vxor.u32 %v853, 2147483648
  %v876 = vxor.u32 %v854, 2147483648
  %v877 = vmul.f32 %v874, 1.442695
  %v878 = vpow.pop %v877
  %v879 = vmul.f32 %v875, 1.442695
  %v880 = vpow.pop %v879
  %v881 = vmul.f32 %v876, 1.442695
  %v882 = vpow.pop %v881
  %v883 = vadd.f32 %v878, 1.0
  %v884 = vadd.f32 %v880, 1.0
  %v885 = vadd.f32 %v882, 1.0
  %v886 = vrcp.pop %v883
  %v887 = vmul.f32 1.0, %v886
  %v888 = vrcp.pop %v884
  %v889 = vmul.f32 1.0, %v888
  %v890 = vrcp.pop %v885
  %v891 = vmul.f32 1.0, %v890
  %v892 = vtanh.pop %v852
  %v893 = vtanh.pop %v853
  %v894 = vtanh.pop %v854
  %v895 = vmul.f32 %v887, %v618
  %v896 = vmul.f32 %v889, %v619
  %v897 = vmul.f32 %v891, %v620
  %901 = vrot.lane.b32.xlu0 %v892, 96
  %v902 = vpop.permute.xlu0 %901
  %903 = vrot.lane.b32.xlu0 %v893, 96
  %v904 = vpop.permute.xlu0 %903
  %905 = vrot.lane.b32.xlu0 %v894, 96
  %v906 = vpop.permute.xlu0 %905
  %v910 = vmul.f32 %v887, %v902
  %v911 = vmul.f32 %v889, %v904
  %v912 = vmul.f32 %v891, %v906
  %916 = vrot.lane.b32.xlu0 %v910, 16
  %v917 = vpop.permute.xlu0 %916
  %918 = vrot.lane.b32.xlu0 %v911, 16
  %v919 = vpop.permute.xlu0 %918
  %920 = vrot.lane.b32.xlu0 %v912, 16
  %v921 = vpop.permute.xlu0 %920
  %v925 = vadd.f32 %v895, %v917
  %v926 = vadd.f32 %v896, %v919
  %v927 = vadd.f32 %v897, %v921
  %v928 = vtanh.pop %v925
  %v929 = vtanh.pop %v926
  %v930 = vtanh.pop %v927
  %934 = vrot.lane.b32.xlu0 %v928, 32
  %v935 = vpop.permute.xlu0 %934
  %936 = vrot.lane.b32.xlu0 %v929, 32
  %v937 = vpop.permute.xlu0 %936
  %938 = vrot.lane.b32.xlu0 %v930, 32
  %v939 = vpop.permute.xlu0 %938
  %v943 = vmul.f32 %v887, %v935
  %v944 = vmul.f32 %v889, %v937
  %v945 = vmul.f32 %v891, %v939
  %v946 = vxor.u32 %v871, 2147483648
  %v947 = vxor.u32 %v872, 2147483648
  %v948 = vxor.u32 %v873, 2147483648
  %v949 = vmul.f32 %v946, 1.442695
  %v950 = vpow.pop %v949
  %v951 = vmul.f32 %v947, 1.442695
  %v952 = vpow.pop %v951
  %v953 = vmul.f32 %v948, 1.442695
  %v954 = vpow.pop %v953
  %v955 = vadd.f32 %v950, 1.0
  %v956 = vadd.f32 %v952, 1.0
  %v957 = vadd.f32 %v954, 1.0
  %v958 = vrcp.pop %v955
  %v959 = vmul.f32 1.0, %v958
  %v960 = vrcp.pop %v956
  %v961 = vmul.f32 1.0, %v960
  %v962 = vrcp.pop %v957
  %v963 = vmul.f32 1.0, %v962
  %v964 = vtanh.pop %v871
  %v965 = vtanh.pop %v872
  %v966 = vtanh.pop %v873
  %v967 = vmul.f32 %v959, %v690
  %v968 = vmul.f32 %v961, %v691
  %v969 = vmul.f32 %v963, %v692
  %973 = vrot.lane.b32.xlu0 %v964, 96
  %v974 = vpop.permute.xlu0 %973
  %975 = vrot.lane.b32.xlu0 %v965, 96
  %v976 = vpop.permute.xlu0 %975
  %977 = vrot.lane.b32.xlu0 %v966, 96
  %v978 = vpop.permute.xlu0 %977
  %v982 = vmul.f32 %v959, %v974
  %v983 = vmul.f32 %v961, %v976
  %v984 = vmul.f32 %v963, %v978
  %988 = vrot.lane.b32.xlu0 %v982, 16
  %v989 = vpop.permute.xlu0 %988
  %990 = vrot.lane.b32.xlu0 %v983, 16
  %v991 = vpop.permute.xlu0 %990
  %992 = vrot.lane.b32.xlu0 %v984, 16
  %v993 = vpop.permute.xlu0 %992
  %v997 = vadd.f32 %v967, %v989
  %v998 = vadd.f32 %v968, %v991
  %v999 = vadd.f32 %v969, %v993
  %v1000 = vtanh.pop %v997
  %v1001 = vtanh.pop %v998
  %v1002 = vtanh.pop %v999
  %1006 = vrot.lane.b32.xlu0 %v1000, 32
  %v1007 = vpop.permute.xlu0 %1006
  %1008 = vrot.lane.b32.xlu0 %v1001, 32
  %v1009 = vpop.permute.xlu0 %1008
  %1010 = vrot.lane.b32.xlu0 %v1002, 32
  %v1011 = vpop.permute.xlu0 %1010
  %v1015 = vmul.f32 %v959, %v1007
  %v1016 = vmul.f32 %v961, %v1009
  %v1017 = vmul.f32 %v963, %v1011
  %1021 = vrot.lane.b32.xlu0 %v943, 80
  %v1022 = vpop.permute.xlu0 %1021
  %1023 = vrot.lane.b32.xlu0 %v944, 80
  %v1024 = vpop.permute.xlu0 %1023
  %1025 = vrot.lane.b32.xlu0 %v945, 80
  %v1026 = vpop.permute.xlu0 %1025
  %s1030 = scalar_lea.vmem [#allocation4], 24
  %1031 = vst.msk [vmem:[%s1030] sm:$0xff] %vm723, %v1022
  %1032 = vst.msk [vmem:[%s1030 + $0x8] sm:$0xff] %vm723, %v1024
  %1033 = vst.msk [vmem:[%s1030 + $0x10] sm:$0xff] %vm723, %v1026
  %1037 = vrot.lane.b32.xlu0 %v1015, 80
  %v1038 = vpop.permute.xlu0 %1037
  %1039 = vrot.lane.b32.xlu0 %v1016, 80
  %v1040 = vpop.permute.xlu0 %1039
  %1041 = vrot.lane.b32.xlu0 %v1017, 80
  %v1042 = vpop.permute.xlu0 %1041
  %s1046 = scalar_lea.vmem [#allocation5], 144
  %1047 = vst.msk [vmem:[%s1046] sm:$0xff] %vm723, %v1038
  %1048 = vst.msk [vmem:[%s1046 + $0x8] sm:$0xff] %vm723, %v1040
  %1049 = vst.msk [vmem:[%s1046 + $0x10] sm:$0xff] %vm723, %v1042
  %1050 = vrot.lane.b32.xlu0 %v1015, 96
  %v1051 = vpop.permute.xlu0 %1050
  %1052 = vrot.lane.b32.xlu0 %v1016, 96
  %v1053 = vpop.permute.xlu0 %1052
  %1054 = vrot.lane.b32.xlu0 %v1017, 96
  %v1055 = vpop.permute.xlu0 %1054
  %v1059 = vsel %vm723, %v1022, %v1051
  %v1060 = vsel %vm723, %v1024, %v1053
  %v1061 = vsel %vm723, %v1026, %v1055
  %v1062 = vld [vmem:[%s2] sm:$0xff]
  %v1063 = vld [vmem:[%s2 + $0x8] sm:$0xff]
  %v1064 = vld [vmem:[%s2 + $0x10] sm:$0xff]
  %v1065 = vld [vmem:[%s2 + $0x18] sm:$0xff]
  %v1067 = vsel %vm52, %v1059, 0
  %v1070 = vsel %vm52, %v1060, 0
  %v1073 = vsel %vm52, %v1061, 0
  %1075 = vmatprep.subr.mxu0 0.0
  %1076 = vmatpush1.msra.mxu0 %v1062
  %1077 = vmatprep.subr.mxu0 0.0
  %1078 = vmatpush1.msra.mxu0 %v1063
  %1079 = vmatprep.subr.mxu0 0.0
  %1080 = vmatpush1.msra.mxu0 %v1064
  %1081 = vmatprep.subr.mxu0 0.0
  %1082 = vmatpush1.msra.mxu0 %v1065
  %1083 = vmatprep.subr.mxu0 0.0
  %1084 = vmatpush1.msra.mxu0 0.0
  %1085 = vmatprep.subr.mxu0 0.0
  %1086 = vmatpush1.msra.mxu0 0.0
  %1087 = vmatprep.subr.mxu0 0.0
  %1088 = vmatpush1.msra.mxu0 0.0
  %1089 = vmatprep.subr.mxu0 0.0
  %1090 = vmatpush1.msra.mxu0 0.0
  %1091 = vmatprep.subr.mxu0 0.0
  %1092 = vmatpush1.msra.mxu0 0.0
  %1093 = vmatprep.subr.mxu0 0.0
  %1094 = vmatpush1.msra.mxu0 0.0
  %1095 = vmatprep.subr.mxu0 0.0
  %1096 = vmatpush1.msra.mxu0 0.0
  %1097 = vmatprep.subr.mxu0 0.0
  %1098 = vmatpush1.msra.mxu0 0.0
  %1099 = vmatprep.subr.mxu0 0.0
  %1100 = vmatpush1.msra.mxu0 0.0
  %1101 = vmatprep.subr.mxu0 0.0
  %1102 = vmatpush1.msra.mxu0 0.0
  %1103 = vmatprep.subr.mxu0 0.0
  %1104 = vmatpush1.msra.mxu0 0.0
  %1105 = vmatprep.subr.mxu0 0.0
  %1106 = vmatpush1.msra.mxu0 0.0
  %1107 = vmatprep.subr.mxu0 0.0
  %1108 = vmatpush1.msra.mxu0 0.0
  %1109 = vmatprep.subr.mxu0 0.0
  %1110 = vmatpush1.msra.mxu0 0.0
  %1111 = vmatprep.subr.mxu0 0.0
  %1112 = vmatpush1.msra.mxu0 0.0
  %1113 = vmatprep.subr.mxu0 0.0
  %1114 = vmatpush1.msra.mxu0 0.0
  %1115 = vmatprep.subr.mxu0 0.0
  %1116 = vmatpush1.msra.mxu0 0.0
  %1117 = vmatprep.subr.mxu0 0.0
  %1118 = vmatpush1.msra.mxu0 0.0
  %1119 = vmatprep.subr.mxu0 0.0
  %1120 = vmatpush1.msra.mxu0 0.0
  %1121 = vmatprep.subr.mxu0 0.0
  %1122 = vmatpush1.msra.mxu0 0.0
  %1123 = vmatprep.subr.mxu0 0.0
  %1124 = vmatpush1.msra.mxu0 0.0
  %1125 = vmatprep.subr.mxu0 0.0
  %1126 = vmatpush1.msra.mxu0 0.0
  %1127 = vmatprep.subr.mxu0 0.0
  %1128 = vmatpush1.msra.mxu0 0.0
  %1129 = vmatprep.subr.mxu0 0.0
  %1130 = vmatpush1.msra.mxu0 0.0
  %1131 = vmatprep.subr.mxu0 0.0
  %1132 = vmatpush1.msra.mxu0 0.0
  %1133 = vmatprep.subr.mxu0 0.0
  %1134 = vmatpush1.msra.mxu0 0.0
  %1135 = vmatprep.subr.mxu0 0.0
  %1136 = vmatpush1.msra.mxu0 0.0
  %1137 = vmatprep.subr.mxu0 0.0
  %1138 = vmatpush1.msra.mxu0 0.0
  %1139 = vmatprep.mubr.f32.mxu0 0.0
  %1140 = vmatmul.mubr.f32.gmra.mrb[0].mxu0 %v1067
  %v1141 = vpop.f32.mrb[0].mxu0
  %v1142 = vadd.f32 0.0, %v1141
  %v1143 = vpop.f32.mrb[0].mxu0
  %1144 = vmatprep.mubr.f32.mxu0 0.0
  %1145 = vmatmul.mubr.f32.gmra.mrb[0].mxu0 %v1070
  %v1146 = vpop.f32.mrb[0].mxu0
  %v1147 = vadd.f32 0.0, %v1146
  %v1148 = vpop.f32.mrb[0].mxu0
  %1149 = vmatprep.mubr.f32.mxu0 0.0
  %1150 = vmatmul.mubr.f32.gmra.mrb[0].mxu0 %v1073
  %v1151 = vpop.f32.mrb[0].mxu0
  %v1152 = vadd.f32 0.0, %v1151
  %v1153 = vpop.f32.mrb[0].mxu0
  %1154 = vdwg.mxu0
  %s1155 = scalar_lea.vmem [#allocation2], 48
  %v1156 = vld [vmem:[%s1155] sm:$0xff]
  %v1157 = vld [vmem:[%s1155 + $0x8] sm:$0xff]
  %v1158 = vld [vmem:[%s1155 + $0x10] sm:$0xff]
  %v1159 = vadd.f32 %v1156, %v1142
  %v1160 = vadd.f32 %v1157, %v1147
  %v1161 = vadd.f32 %v1158, %v1152
  %s1162 = scalar_lea.vmem [#allocation3], 120
  %v1163 = vld [vmem:[%s1162] sm:$0xff]
  %v1164 = vld [vmem:[%s1162 + $0x8] sm:$0xff]
  %v1165 = vld [vmem:[%s1162 + $0x10] sm:$0xff]
  %1169 = vrot.lane.b32.xlu0 %v1142, 64
  %v1170 = vpop.permute.xlu0 %1169
  %1171 = vrot.lane.b32.xlu0 %v1147, 64
  %v1172 = vpop.permute.xlu0 %1171
  %1173 = vrot.lane.b32.xlu0 %v1152, 64
  %v1174 = vpop.permute.xlu0 %1173
  %v1178 = vadd.f32 %v1163, %v1170
  %v1179 = vadd.f32 %v1164, %v1172
  %v1180 = vadd.f32 %v1165, %v1174
  %v1181 = vxor.u32 %v1159, 2147483648
  %v1182 = vxor.u32 %v1160, 2147483648
  %v1183 = vxor.u32 %v1161, 2147483648
  %v1184 = vmul.f32 %v1181, 1.442695
  %v1185 = vpow.pop %v1184
  %v1186 = vmul.f32 %v1182, 1.442695
  %v1187 = vpow.pop %v1186
  %v1188 = vmul.f32 %v1183, 1.442695
  %v1189 = vpow.pop %v1188
  %v1190 = vadd.f32 %v1185, 1.0
  %v1191 = vadd.f32 %v1187, 1.0
  %v1192 = vadd.f32 %v1189, 1.0
  %v1193 = vrcp.pop %v1190
  %v1194 = vmul.f32 1.0, %v1193
  %v1195 = vrcp.pop %v1191
  %v1196 = vmul.f32 1.0, %v1195
  %v1197 = vrcp.pop %v1192
  %v1198 = vmul.f32 1.0, %v1197
  %v1199 = vtanh.pop %v1159
  %v1200 = vtanh.pop %v1160
  %v1201 = vtanh.pop %v1161
  %v1202 = vmul.f32 %v1194, %v925
  %v1203 = vmul.f32 %v1196, %v926
  %v1204 = vmul.f32 %v1198, %v927
  %1208 = vrot.lane.b32.xlu0 %v1199, 96
  %v1209 = vpop.permute.xlu0 %1208
  %1210 = vrot.lane.b32.xlu0 %v1200, 96
  %v1211 = vpop.permute.xlu0 %1210
  %1212 = vrot.lane.b32.xlu0 %v1201, 96
  %v1213 = vpop.permute.xlu0 %1212
  %v1217 = vmul.f32 %v1194, %v1209
  %v1218 = vmul.f32 %v1196, %v1211
  %v1219 = vmul.f32 %v1198, %v1213
  %1223 = vrot.lane.b32.xlu0 %v1217, 16
  %v1224 = vpop.permute.xlu0 %1223
  %1225 = vrot.lane.b32.xlu0 %v1218, 16
  %v1226 = vpop.permute.xlu0 %1225
  %1227 = vrot.lane.b32.xlu0 %v1219, 16
  %v1228 = vpop.permute.xlu0 %1227
  %v1232 = vadd.f32 %v1202, %v1224
  %v1233 = vadd.f32 %v1203, %v1226
  %v1234 = vadd.f32 %v1204, %v1228
  %v1235 = vtanh.pop %v1232
  %v1236 = vtanh.pop %v1233
  %v1237 = vtanh.pop %v1234
  %1241 = vrot.lane.b32.xlu0 %v1235, 32
  %v1242 = vpop.permute.xlu0 %1241
  %1243 = vrot.lane.b32.xlu0 %v1236, 32
  %v1244 = vpop.permute.xlu0 %1243
  %1245 = vrot.lane.b32.xlu0 %v1237, 32
  %v1246 = vpop.permute.xlu0 %1245
  %v1250 = vmul.f32 %v1194, %v1242
  %v1251 = vmul.f32 %v1196, %v1244
  %v1252 = vmul.f32 %v1198, %v1246
  %v1253 = vxor.u32 %v1178, 2147483648
  %v1254 = vxor.u32 %v1179, 2147483648
  %v1255 = vxor.u32 %v1180, 2147483648
  %v1256 = vmul.f32 %v1253, 1.442695
  %v1257 = vpow.pop %v1256
  %v1258 = vmul.f32 %v1254, 1.442695
  %v1259 = vpow.pop %v1258
  %v1260 = vmul.f32 %v1255, 1.442695
  %v1261 = vpow.pop %v1260
  %v1262 = vadd.f32 %v1257, 1.0
  %v1263 = vadd.f32 %v1259, 1.0
  %v1264 = vadd.f32 %v1261, 1.0
  %v1265 = vrcp.pop %v1262
  %v1266 = vmul.f32 1.0, %v1265
  %v1267 = vrcp.pop %v1263
  %v1268 = vmul.f32 1.0, %v1267
  %v1269 = vrcp.pop %v1264
  %v1270 = vmul.f32 1.0, %v1269
  %v1271 = vtanh.pop %v1178
  %v1272 = vtanh.pop %v1179
  %v1273 = vtanh.pop %v1180
  %v1274 = vmul.f32 %v1266, %v997
  %v1275 = vmul.f32 %v1268, %v998
  %v1276 = vmul.f32 %v1270, %v999
  %1280 = vrot.lane.b32.xlu0 %v1271, 96
  %v1281 = vpop.permute.xlu0 %1280
  %1282 = vrot.lane.b32.xlu0 %v1272, 96
  %v1283 = vpop.permute.xlu0 %1282
  %1284 = vrot.lane.b32.xlu0 %v1273, 96
  %v1285 = vpop.permute.xlu0 %1284
  %v1289 = vmul.f32 %v1266, %v1281
  %v1290 = vmul.f32 %v1268, %v1283
  %v1291 = vmul.f32 %v1270, %v1285
  %1295 = vrot.lane.b32.xlu0 %v1289, 16
  %v1296 = vpop.permute.xlu0 %1295
  %1297 = vrot.lane.b32.xlu0 %v1290, 16
  %v1298 = vpop.permute.xlu0 %1297
  %1299 = vrot.lane.b32.xlu0 %v1291, 16
  %v1300 = vpop.permute.xlu0 %1299
  %v1304 = vadd.f32 %v1274, %v1296
  %v1305 = vadd.f32 %v1275, %v1298
  %v1306 = vadd.f32 %v1276, %v1300
  %v1307 = vtanh.pop %v1304
  %v1308 = vtanh.pop %v1305
  %v1309 = vtanh.pop %v1306
  %1313 = vrot.lane.b32.xlu0 %v1307, 32
  %v1314 = vpop.permute.xlu0 %1313
  %1315 = vrot.lane.b32.xlu0 %v1308, 32
  %v1316 = vpop.permute.xlu0 %1315
  %1317 = vrot.lane.b32.xlu0 %v1309, 32
  %v1318 = vpop.permute.xlu0 %1317
  %v1322 = vmul.f32 %v1266, %v1314
  %v1323 = vmul.f32 %v1268, %v1316
  %v1324 = vmul.f32 %v1270, %v1318
  %1328 = vrot.lane.b32.xlu0 %v1250, 80
  %v1329 = vpop.permute.xlu0 %1328
  %1330 = vrot.lane.b32.xlu0 %v1251, 80
  %v1331 = vpop.permute.xlu0 %1330
  %1332 = vrot.lane.b32.xlu0 %v1252, 80
  %v1333 = vpop.permute.xlu0 %1332
  %s1337 = scalar_lea.vmem [#allocation4], 48
  %1338 = vst.msk [vmem:[%s1337] sm:$0xff] %vm723, %v1329
  %1339 = vst.msk [vmem:[%s1337 + $0x8] sm:$0xff] %vm723, %v1331
  %1340 = vst.msk [vmem:[%s1337 + $0x10] sm:$0xff] %vm723, %v1333
  %1344 = vrot.lane.b32.xlu0 %v1322, 80
  %v1345 = vpop.permute.xlu0 %1344
  %1346 = vrot.lane.b32.xlu0 %v1323, 80
  %v1347 = vpop.permute.xlu0 %1346
  %1348 = vrot.lane.b32.xlu0 %v1324, 80
  %v1349 = vpop.permute.xlu0 %1348
  %s1353 = scalar_lea.vmem [#allocation5], 120
  %1354 = vst.msk [vmem:[%s1353] sm:$0xff] %vm723, %v1345
  %1355 = vst.msk [vmem:[%s1353 + $0x8] sm:$0xff] %vm723, %v1347
  %1356 = vst.msk [vmem:[%s1353 + $0x10] sm:$0xff] %vm723, %v1349
  %1357 = vrot.lane.b32.xlu0 %v1322, 96
  %v1358 = vpop.permute.xlu0 %1357
  %1359 = vrot.lane.b32.xlu0 %v1323, 96
  %v1360 = vpop.permute.xlu0 %1359
  %1361 = vrot.lane.b32.xlu0 %v1324, 96
  %v1362 = vpop.permute.xlu0 %1361
  %v1366 = vsel %vm723, %v1329, %v1358
  %v1367 = vsel %vm723, %v1331, %v1360
  %v1368 = vsel %vm723, %v1333, %v1362
  %v1369 = vld [vmem:[%s2] sm:$0xff]
  %v1370 = vld [vmem:[%s2 + $0x8] sm:$0xff]
  %v1371 = vld [vmem:[%s2 + $0x10] sm:$0xff]
  %v1372 = vld [vmem:[%s2 + $0x18] sm:$0xff]
  %v1374 = vsel %vm52, %v1366, 0
  %v1377 = vsel %vm52, %v1367, 0
  %v1380 = vsel %vm52, %v1368, 0
  %1382 = vmatprep.subr.mxu0 0.0
  %1383 = vmatpush1.msra.mxu0 %v1369
  %1384 = vmatprep.subr.mxu0 0.0
  %1385 = vmatpush1.msra.mxu0 %v1370
  %1386 = vmatprep.subr.mxu0 0.0
  %1387 = vmatpush1.msra.mxu0 %v1371
  %1388 = vmatprep.subr.mxu0 0.0
  %1389 = vmatpush1.msra.mxu0 %v1372
  %1390 = vmatprep.subr.mxu0 0.0
  %1391 = vmatpush1.msra.mxu0 0.0
  %1392 = vmatprep.subr.mxu0 0.0
  %1393 = vmatpush1.msra.mxu0 0.0
  %1394 = vmatprep.subr.mxu0 0.0
  %1395 = vmatpush1.msra.mxu0 0.0
  %1396 = vmatprep.subr.mxu0 0.0
  %1397 = vmatpush1.msra.mxu0 0.0
  %1398 = vmatprep.subr.mxu0 0.0
  %1399 = vmatpush1.msra.mxu0 0.0
  %1400 = vmatprep.subr.mxu0 0.0
  %1401 = vmatpush1.msra.mxu0 0.0
  %1402 = vmatprep.subr.mxu0 0.0
  %1403 = vmatpush1.msra.mxu0 0.0
  %1404 = vmatprep.subr.mxu0 0.0
  %1405 = vmatpush1.msra.mxu0 0.0
  %1406 = vmatprep.subr.mxu0 0.0
  %1407 = vmatpush1.msra.mxu0 0.0
  %1408 = vmatprep.subr.mxu0 0.0
  %1409 = vmatpush1.msra.mxu0 0.0
  %1410 = vmatprep.subr.mxu0 0.0
  %1411 = vmatpush1.msra.mxu0 0.0
  %1412 = vmatprep.subr.mxu0 0.0
  %1413 = vmatpush1.msra.mxu0 0.0
  %1414 = vmatprep.subr.mxu0 0.0
  %1415 = vmatpush1.msra.mxu0 0.0
  %1416 = vmatprep.subr.mxu0 0.0
  %1417 = vmatpush1.msra.mxu0 0.0
  %1418 = vmatprep.subr.mxu0 0.0
  %1419 = vmatpush1.msra.mxu0 0.0
  %1420 = vmatprep.subr.mxu0 0.0
  %1421 = vmatpush1.msra.mxu0 0.0
  %1422 = vmatprep.subr.mxu0 0.0
  %1423 = vmatpush1.msra.mxu0 0.0
  %1424 = vmatprep.subr.mxu0 0.0
  %1425 = vmatpush1.msra.mxu0 0.0
  %1426 = vmatprep.subr.mxu0 0.0
  %1427 = vmatpush1.msra.mxu0 0.0
  %1428 = vmatprep.subr.mxu0 0.0
  %1429 = vmatpush1.msra.mxu0 0.0
  %1430 = vmatprep.subr.mxu0 0.0
  %1431 = vmatpush1.msra.mxu0 0.0
  %1432 = vmatprep.subr.mxu0 0.0
  %1433 = vmatpush1.msra.mxu0 0.0
  %1434 = vmatprep.subr.mxu0 0.0
  %1435 = vmatpush1.msra.mxu0 0.0
  %1436 = vmatprep.subr.mxu0 0.0
  %1437 = vmatpush1.msra.mxu0 0.0
  %1438 = vmatprep.subr.mxu0 0.0
  %1439 = vmatpush1.msra.mxu0 0.0
  %1440 = vmatprep.subr.mxu0 0.0
  %1441 = vmatpush1.msra.mxu0 0.0
  %1442 = vmatprep.subr.mxu0 0.0
  %1443 = vmatpush1.msra.mxu0 0.0
  %1444 = vmatprep.subr.mxu0 0.0
  %1445 = vmatpush1.msra.mxu0 0.0
  %1446 = vmatprep.mubr.f32.mxu0 0.0
  %1447 = vmatmul.mubr.f32.gmra.mrb[0].mxu0 %v1374
  %v1448 = vpop.f32.mrb[0].mxu0
  %v1449 = vadd.f32 0.0, %v1448
  %v1450 = vpop.f32.mrb[0].mxu0
  %1451 = vmatprep.mubr.f32.mxu0 0.0
  %1452 = vmatmul.mubr.f32.gmra.mrb[0].mxu0 %v1377
  %v1453 = vpop.f32.mrb[0].mxu0
  %v1454 = vadd.f32 0.0, %v1453
  %v1455 = vpop.f32.mrb[0].mxu0
  %1456 = vmatprep.mubr.f32.mxu0 0.0
  %1457 = vmatmul.mubr.f32.gmra.mrb[0].mxu0 %v1380
  %v1458 = vpop.f32.mrb[0].mxu0
  %v1459 = vadd.f32 0.0, %v1458
  %v1460 = vpop.f32.mrb[0].mxu0
  %1461 = vdwg.mxu0
  %s1462 = scalar_lea.vmem [#allocation2], 72
  %v1463 = vld [vmem:[%s1462] sm:$0xff]
  %v1464 = vld [vmem:[%s1462 + $0x8] sm:$0xff]
  %v1465 = vld [vmem:[%s1462 + $0x10] sm:$0xff]
  %v1466 = vadd.f32 %v1463, %v1449
  %v1467 = vadd.f32 %v1464, %v1454
  %v1468 = vadd.f32 %v1465, %v1459
  %s1469 = scalar_lea.vmem [#allocation3], 96
  %v1470 = vld [vmem:[%s1469] sm:$0xff]
  %v1471 = vld [vmem:[%s1469 + $0x8] sm:$0xff]
  %v1472 = vld [vmem:[%s1469 + $0x10] sm:$0xff]
  %1476 = vrot.lane.b32.xlu0 %v1449, 64
  %v1477 = vpop.permute.xlu0 %1476
  %1478 = vrot.lane.b32.xlu0 %v1454, 64
  %v1479 = vpop.permute.xlu0 %1478
  %1480 = vrot.lane.b32.xlu0 %v1459, 64
  %v1481 = vpop.permute.xlu0 %1480
  %v1485 = vadd.f32 %v1470, %v1477
  %v1486 = vadd.f32 %v1471, %v1479
  %v1487 = vadd.f32 %v1472, %v1481
  %v1488 = vxor.u32 %v1466, 2147483648
  %v1489 = vxor.u32 %v1467, 2147483648
  %v1490 = vxor.u32 %v1468, 2147483648
  %v1491 = vmul.f32 %v1488, 1.442695
  %v1492 = vpow.pop %v1491
  %v1493 = vmul.f32 %v1489, 1.442695
  %v1494 = vpow.pop %v1493
  %v1495 = vmul.f32 %v1490, 1.442695
  %v1496 = vpow.pop %v1495
  %v1497 = vadd.f32 %v1492, 1.0
  %v1498 = vadd.f32 %v1494, 1.0
  %v1499 = vadd.f32 %v1496, 1.0
  %v1500 = vrcp.pop %v1497
  %v1501 = vmul.f32 1.0, %v1500
  %v1502 = vrcp.pop %v1498
  %v1503 = vmul.f32 1.0, %v1502
  %v1504 = vrcp.pop %v1499
  %v1505 = vmul.f32 1.0, %v1504
  %v1506 = vtanh.pop %v1466
  %v1507 = vtanh.pop %v1467
  %v1508 = vtanh.pop %v1468
  %v1509 = vmul.f32 %v1501, %v1232
  %v1510 = vmul.f32 %v1503, %v1233
  %v1511 = vmul.f32 %v1505, %v1234
  %1515 = vrot.lane.b32.xlu0 %v1506, 96
  %v1516 = vpop.permute.xlu0 %1515
  %1517 = vrot.lane.b32.xlu0 %v1507, 96
  %v1518 = vpop.permute.xlu0 %1517
  %1519 = vrot.lane.b32.xlu0 %v1508, 96
  %v1520 = vpop.permute.xlu0 %1519
  %v1524 = vmul.f32 %v1501, %v1516
  %v1525 = vmul.f32 %v1503, %v1518
  %v1526 = vmul.f32 %v1505, %v1520
  %1530 = vrot.lane.b32.xlu0 %v1524, 16
  %v1531 = vpop.permute.xlu0 %1530
  %1532 = vrot.lane.b32.xlu0 %v1525, 16
  %v1533 = vpop.permute.xlu0 %1532
  %1534 = vrot.lane.b32.xlu0 %v1526, 16
  %v1535 = vpop.permute.xlu0 %1534
  %v1539 = vadd.f32 %v1509, %v1531
  %v1540 = vadd.f32 %v1510, %v1533
  %v1541 = vadd.f32 %v1511, %v1535
  %v1542 = vtanh.pop %v1539
  %v1543 = vtanh.pop %v1540
  %v1544 = vtanh.pop %v1541
  %1548 = vrot.lane.b32.xlu0 %v1542, 32
  %v1549 = vpop.permute.xlu0 %1548
  %1550 = vrot.lane.b32.xlu0 %v1543, 32
  %v1551 = vpop.permute.xlu0 %1550
  %1552 = vrot.lane.b32.xlu0 %v1544, 32
  %v1553 = vpop.permute.xlu0 %1552
  %v1557 = vmul.f32 %v1501, %v1549
  %v1558 = vmul.f32 %v1503, %v1551
  %v1559 = vmul.f32 %v1505, %v1553
  %v1560 = vxor.u32 %v1485, 2147483648
  %v1561 = vxor.u32 %v1486, 2147483648
  %v1562 = vxor.u32 %v1487, 2147483648
  %v1563 = vmul.f32 %v1560, 1.442695
  %v1564 = vpow.pop %v1563
  %v1565 = vmul.f32 %v1561, 1.442695
  %v1566 = vpow.pop %v1565
  %v1567 = vmul.f32 %v1562, 1.442695
  %v1568 = vpow.pop %v1567
  %v1569 = vadd.f32 %v1564, 1.0
  %v1570 = vadd.f32 %v1566, 1.0
  %v1571 = vadd.f32 %v1568, 1.0
  %v1572 = vrcp.pop %v1569
  %v1573 = vmul.f32 1.0, %v1572
  %v1574 = vrcp.pop %v1570
  %v1575 = vmul.f32 1.0, %v1574
  %v1576 = vrcp.pop %v1571
  %v1577 = vmul.f32 1.0, %v1576
  %v1578 = vtanh.pop %v1485
  %v1579 = vtanh.pop %v1486
  %v1580 = vtanh.pop %v1487
  %v1581 = vmul.f32 %v1573, %v1304
  %v1582 = vmul.f32 %v1575, %v1305
  %v1583 = vmul.f32 %v1577, %v1306
  %1587 = vrot.lane.b32.xlu0 %v1578, 96
  %v1588 = vpop.permute.xlu0 %1587
  %1589 = vrot.lane.b32.xlu0 %v1579, 96
  %v1590 = vpop.permute.xlu0 %1589
  %1591 = vrot.lane.b32.xlu0 %v1580, 96
  %v1592 = vpop.permute.xlu0 %1591
  %v1596 = vmul.f32 %v1573, %v1588
  %v1597 = vmul.f32 %v1575, %v1590
  %v1598 = vmul.f32 %v1577, %v1592
  %1602 = vrot.lane.b32.xlu0 %v1596, 16
  %v1603 = vpop.permute.xlu0 %1602
  %1604 = vrot.lane.b32.xlu0 %v1597, 16
  %v1605 = vpop.permute.xlu0 %1604
  %1606 = vrot.lane.b32.xlu0 %v1598, 16
  %v1607 = vpop.permute.xlu0 %1606
  %v1611 = vadd.f32 %v1581, %v1603
  %v1612 = vadd.f32 %v1582, %v1605
  %v1613 = vadd.f32 %v1583, %v1607
  %v1614 = vtanh.pop %v1611
  %v1615 = vtanh.pop %v1612
  %v1616 = vtanh.pop %v1613
  %1620 = vrot.lane.b32.xlu0 %v1614, 32
  %v1621 = vpop.permute.xlu0 %1620
  %1622 = vrot.lane.b32.xlu0 %v1615, 32
  %v1623 = vpop.permute.xlu0 %1622
  %1624 = vrot.lane.b32.xlu0 %v1616, 32
  %v1625 = vpop.permute.xlu0 %1624
  %v1629 = vmul.f32 %v1573, %v1621
  %v1630 = vmul.f32 %v1575, %v1623
  %v1631 = vmul.f32 %v1577, %v1625
  %1635 = vrot.lane.b32.xlu0 %v1557, 80
  %v1636 = vpop.permute.xlu0 %1635
  %1637 = vrot.lane.b32.xlu0 %v1558, 80
  %v1638 = vpop.permute.xlu0 %1637
  %1639 = vrot.lane.b32.xlu0 %v1559, 80
  %v1640 = vpop.permute.xlu0 %1639
  %s1644 = scalar_lea.vmem [#allocation4], 72
  %1645 = vst.msk [vmem:[%s1644] sm:$0xff] %vm723, %v1636
  %1646 = vst.msk [vmem:[%s1644 + $0x8] sm:$0xff] %vm723, %v1638
  %1647 = vst.msk [vmem:[%s1644 + $0x10] sm:$0xff] %vm723, %v1640
  %1651 = vrot.lane.b32.xlu0 %v1629, 80
  %v1652 = vpop.permute.xlu0 %1651
  %1653 = vrot.lane.b32.xlu0 %v1630, 80
  %v1654 = vpop.permute.xlu0 %1653
  %1655 = vrot.lane.b32.xlu0 %v1631, 80
  %v1656 = vpop.permute.xlu0 %1655
  %s1660 = scalar_lea.vmem [#allocation5], 96
  %1661 = vst.msk [vmem:[%s1660] sm:$0xff] %vm723, %v1652
  %1662 = vst.msk [vmem:[%s1660 + $0x8] sm:$0xff] %vm723, %v1654
  %1663 = vst.msk [vmem:[%s1660 + $0x10] sm:$0xff] %vm723, %v1656
  %1664 = vrot.lane.b32.xlu0 %v1629, 96
  %v1665 = vpop.permute.xlu0 %1664
  %1666 = vrot.lane.b32.xlu0 %v1630, 96
  %v1667 = vpop.permute.xlu0 %1666
  %1668 = vrot.lane.b32.xlu0 %v1631, 96
  %v1669 = vpop.permute.xlu0 %1668
  %v1673 = vsel %vm723, %v1636, %v1665
  %v1674 = vsel %vm723, %v1638, %v1667
  %v1675 = vsel %vm723, %v1640, %v1669
  %v1676 = vld [vmem:[%s2] sm:$0xff]
  %v1677 = vld [vmem:[%s2 + $0x8] sm:$0xff]
  %v1678 = vld [vmem:[%s2 + $0x10] sm:$0xff]
  %v1679 = vld [vmem:[%s2 + $0x18] sm:$0xff]
  %v1681 = vsel %vm52, %v1673, 0
  %v1684 = vsel %vm52, %v1674, 0
  %v1687 = vsel %vm52, %v1675, 0
  %1689 = vmatprep.subr.mxu0 0.0
  %1690 = vmatpush1.msra.mxu0 %v1676
  %1691 = vmatprep.subr.mxu0 0.0
  %1692 = vmatpush1.msra.mxu0 %v1677
  %1693 = vmatprep.subr.mxu0 0.0
  %1694 = vmatpush1.msra.mxu0 %v1678
  %1695 = vmatprep.subr.mxu0 0.0
  %1696 = vmatpush1.msra.mxu0 %v1679
  %1697 = vmatprep.subr.mxu0 0.0
  %1698 = vmatpush1.msra.mxu0 0.0
  %1699 = vmatprep.subr.mxu0 0.0
  %1700 = vmatpush1.msra.mxu0 0.0
  %1701 = vmatprep.subr.mxu0 0.0
  %1702 = vmatpush1.msra.mxu0 0.0
  %1703 = vmatprep.subr.mxu0 0.0
  %1704 = vmatpush1.msra.mxu0 0.0
  %1705 = vmatprep.subr.mxu0 0.0
  %1706 = vmatpush1.msra.mxu0 0.0
  %1707 = vmatprep.subr.mxu0 0.0
  %1708 = vmatpush1.msra.mxu0 0.0
  %1709 = vmatprep.subr.mxu0 0.0
  %1710 = vmatpush1.msra.mxu0 0.0
  %1711 = vmatprep.subr.mxu0 0.0
  %1712 = vmatpush1.msra.mxu0 0.0
  %1713 = vmatprep.subr.mxu0 0.0
  %1714 = vmatpush1.msra.mxu0 0.0
  %1715 = vmatprep.subr.mxu0 0.0
  %1716 = vmatpush1.msra.mxu0 0.0
  %1717 = vmatprep.subr.mxu0 0.0
  %1718 = vmatpush1.msra.mxu0 0.0
  %1719 = vmatprep.subr.mxu0 0.0
  %1720 = vmatpush1.msra.mxu0 0.0
  %1721 = vmatprep.subr.mxu0 0.0
  %1722 = vmatpush1.msra.mxu0 0.0
  %1723 = vmatprep.subr.mxu0 0.0
  %1724 = vmatpush1.msra.mxu0 0.0
  %1725 = vmatprep.subr.mxu0 0.0
  %1726 = vmatpush1.msra.mxu0 0.0
  %1727 = vmatprep.subr.mxu0 0.0
  %1728 = vmatpush1.msra.mxu0 0.0
  %1729 = vmatprep.subr.mxu0 0.0
  %1730 = vmatpush1.msra.mxu0 0.0
  %1731 = vmatprep.subr.mxu0 0.0
  %1732 = vmatpush1.msra.mxu0 0.0
  %1733 = vmatprep.subr.mxu0 0.0
  %1734 = vmatpush1.msra.mxu0 0.0
  %1735 = vmatprep.subr.mxu0 0.0
  %1736 = vmatpush1.msra.mxu0 0.0
  %1737 = vmatprep.subr.mxu0 0.0
  %1738 = vmatpush1.msra.mxu0 0.0
  %1739 = vmatprep.subr.mxu0 0.0
  %1740 = vmatpush1.msra.mxu0 0.0
  %1741 = vmatprep.subr.mxu0 0.0
  %1742 = vmatpush1.msra.mxu0 0.0
  %1743 = vmatprep.subr.mxu0 0.0
  %1744 = vmatpush1.msra.mxu0 0.0
  %1745 = vmatprep.subr.mxu0 0.0
  %1746 = vmatpush1.msra.mxu0 0.0
  %1747 = vmatprep.subr.mxu0 0.0
  %1748 = vmatpush1.msra.mxu0 0.0
  %1749 = vmatprep.subr.mxu0 0.0
  %1750 = vmatpush1.msra.mxu0 0.0
  %1751 = vmatprep.subr.mxu0 0.0
  %1752 = vmatpush1.msra.mxu0 0.0
  %1753 = vmatprep.mubr.f32.mxu0 0.0
  %1754 = vmatmul.mubr.f32.gmra.mrb[0].mxu0 %v1681
  %v1755 = vpop.f32.mrb[0].mxu0
  %v1756 = vadd.f32 0.0, %v1755
  %v1757 = vpop.f32.mrb[0].mxu0
  %1758 = vmatprep.mubr.f32.mxu0 0.0
  %1759 = vmatmul.mubr.f32.gmra.mrb[0].mxu0 %v1684
  %v1760 = vpop.f32.mrb[0].mxu0
  %v1761 = vadd.f32 0.0, %v1760
  %v1762 = vpop.f32.mrb[0].mxu0
  %1763 = vmatprep.mubr.f32.mxu0 0.0
  %1764 = vmatmul.mubr.f32.gmra.mrb[0].mxu0 %v1687
  %v1765 = vpop.f32.mrb[0].mxu0
  %v1766 = vadd.f32 0.0, %v1765
  %v1767 = vpop.f32.mrb[0].mxu0
  %1768 = vdwg.mxu0
  %s1769 = scalar_lea.vmem [#allocation2], 96
  %v1770 = vld [vmem:[%s1769] sm:$0xff]
  %v1771 = vld [vmem:[%s1769 + $0x8] sm:$0xff]
  %v1772 = vld [vmem:[%s1769 + $0x10] sm:$0xff]
  %v1773 = vadd.f32 %v1770, %v1756
  %v1774 = vadd.f32 %v1771, %v1761
  %v1775 = vadd.f32 %v1772, %v1766
  %s1776 = scalar_lea.vmem [#allocation3], 72
  %v1777 = vld [vmem:[%s1776] sm:$0xff]
  %v1778 = vld [vmem:[%s1776 + $0x8] sm:$0xff]
  %v1779 = vld [vmem:[%s1776 + $0x10] sm:$0xff]
  %1783 = vrot.lane.b32.xlu0 %v1756, 64
  %v1784 = vpop.permute.xlu0 %1783
  %1785 = vrot.lane.b32.xlu0 %v1761, 64
  %v1786 = vpop.permute.xlu0 %1785
  %1787 = vrot.lane.b32.xlu0 %v1766, 64
  %v1788 = vpop.permute.xlu0 %1787
  %v1792 = vadd.f32 %v1777, %v1784
  %v1793 = vadd.f32 %v1778, %v1786
  %v1794 = vadd.f32 %v1779, %v1788
  %v1795 = vxor.u32 %v1773, 2147483648
  %v1796 = vxor.u32 %v1774, 2147483648
  %v1797 = vxor.u32 %v1775, 2147483648
  %v1798 = vmul.f32 %v1795, 1.442695
  %v1799 = vpow.pop %v1798
  %v1800 = vmul.f32 %v1796, 1.442695
  %v1801 = vpow.pop %v1800
  %v1802 = vmul.f32 %v1797, 1.442695
  %v1803 = vpow.pop %v1802
  %v1804 = vadd.f32 %v1799, 1.0
  %v1805 = vadd.f32 %v1801, 1.0
  %v1806 = vadd.f32 %v1803, 1.0
  %v1807 = vrcp.pop %v1804
  %v1808 = vmul.f32 1.0, %v1807
  %v1809 = vrcp.pop %v1805
  %v1810 = vmul.f32 1.0, %v1809
  %v1811 = vrcp.pop %v1806
  %v1812 = vmul.f32 1.0, %v1811
  %v1813 = vtanh.pop %v1773
  %v1814 = vtanh.pop %v1774
  %v1815 = vtanh.pop %v1775
  %v1816 = vmul.f32 %v1808, %v1539
  %v1817 = vmul.f32 %v1810, %v1540
  %v1818 = vmul.f32 %v1812, %v1541
  %1822 = vrot.lane.b32.xlu0 %v1813, 96
  %v1823 = vpop.permute.xlu0 %1822
  %1824 = vrot.lane.b32.xlu0 %v1814, 96
  %v1825 = vpop.permute.xlu0 %1824
  %1826 = vrot.lane.b32.xlu0 %v1815, 96
  %v1827 = vpop.permute.xlu0 %1826
  %v1831 = vmul.f32 %v1808, %v1823
  %v1832 = vmul.f32 %v1810, %v1825
  %v1833 = vmul.f32 %v1812, %v1827
  %1837 = vrot.lane.b32.xlu0 %v1831, 16
  %v1838 = vpop.permute.xlu0 %1837
  %1839 = vrot.lane.b32.xlu0 %v1832, 16
  %v1840 = vpop.permute.xlu0 %1839
  %1841 = vrot.lane.b32.xlu0 %v1833, 16
  %v1842 = vpop.permute.xlu0 %1841
  %v1846 = vadd.f32 %v1816, %v1838
  %v1847 = vadd.f32 %v1817, %v1840
  %v1848 = vadd.f32 %v1818, %v1842
  %v1849 = vtanh.pop %v1846
  %v1850 = vtanh.pop %v1847
  %v1851 = vtanh.pop %v1848
  %1855 = vrot.lane.b32.xlu0 %v1849, 32
  %v1856 = vpop.permute.xlu0 %1855
  %1857 = vrot.lane.b32.xlu0 %v1850, 32
  %v1858 = vpop.permute.xlu0 %1857
  %1859 = vrot.lane.b32.xlu0 %v1851, 32
  %v1860 = vpop.permute.xlu0 %1859
  %v1864 = vmul.f32 %v1808, %v1856
  %v1865 = vmul.f32 %v1810, %v1858
  %v1866 = vmul.f32 %v1812, %v1860
  %v1867 = vxor.u32 %v1792, 2147483648
  %v1868 = vxor.u32 %v1793, 2147483648
  %v1869 = vxor.u32 %v1794, 2147483648
  %v1870 = vmul.f32 %v1867, 1.442695
  %v1871 = vpow.pop %v1870
  %v1872 = vmul.f32 %v1868, 1.442695
  %v1873 = vpow.pop %v1872
  %v1874 = vmul.f32 %v1869, 1.442695
  %v1875 = vpow.pop %v1874
  %v1876 = vadd.f32 %v1871, 1.0
  %v1877 = vadd.f32 %v1873, 1.0
  %v1878 = vadd.f32 %v1875, 1.0
  %v1879 = vrcp.pop %v1876
  %v1880 = vmul.f32 1.0, %v1879
  %v1881 = vrcp.pop %v1877
  %v1882 = vmul.f32 1.0, %v1881
  %v1883 = vrcp.pop %v1878
  %v1884 = vmul.f32 1.0, %v1883
  %v1885 = vtanh.pop %v1792
  %v1886 = vtanh.pop %v1793
  %v1887 = vtanh.pop %v1794
  %v1888 = vmul.f32 %v1880, %v1611
  %v1889 = vmul.f32 %v1882, %v1612
  %v1890 = vmul.f32 %v1884, %v1613
  %1894 = vrot.lane.b32.xlu0 %v1885, 96
  %v1895 = vpop.permute.xlu0 %1894
  %1896 = vrot.lane.b32.xlu0 %v1886, 96
  %v1897 = vpop.permute.xlu0 %1896
  %1898 = vrot.lane.b32.xlu0 %v1887, 96
  %v1899 = vpop.permute.xlu0 %1898
  %v1903 = vmul.f32 %v1880, %v1895
  %v1904 = vmul.f32 %v1882, %v1897
  %v1905 = vmul.f32 %v1884, %v1899
  %1909 = vrot.lane.b32.xlu0 %v1903, 16
  %v1910 = vpop.permute.xlu0 %1909
  %1911 = vrot.lane.b32.xlu0 %v1904, 16
  %v1912 = vpop.permute.xlu0 %1911
  %1913 = vrot.lane.b32.xlu0 %v1905, 16
  %v1914 = vpop.permute.xlu0 %1913
  %v1918 = vadd.f32 %v1888, %v1910
  %v1919 = vadd.f32 %v1889, %v1912
  %v1920 = vadd.f32 %v1890, %v1914
  %v1921 = vtanh.pop %v1918
  %v1922 = vtanh.pop %v1919
  %v1923 = vtanh.pop %v1920
  %1927 = vrot.lane.b32.xlu0 %v1921, 32
  %v1928 = vpop.permute.xlu0 %1927
  %1929 = vrot.lane.b32.xlu0 %v1922, 32
  %v1930 = vpop.permute.xlu0 %1929
  %1931 = vrot.lane.b32.xlu0 %v1923, 32
  %v1932 = vpop.permute.xlu0 %1931
  %v1936 = vmul.f32 %v1880, %v1928
  %v1937 = vmul.f32 %v1882, %v1930
  %v1938 = vmul.f32 %v1884, %v1932
  %1942 = vrot.lane.b32.xlu0 %v1864, 80
  %v1943 = vpop.permute.xlu0 %1942
  %1944 = vrot.lane.b32.xlu0 %v1865, 80
  %v1945 = vpop.permute.xlu0 %1944
  %1946 = vrot.lane.b32.xlu0 %v1866, 80
  %v1947 = vpop.permute.xlu0 %1946
  %s1951 = scalar_lea.vmem [#allocation4], 96
  %1952 = vst.msk [vmem:[%s1951] sm:$0xff] %vm723, %v1943
  %1953 = vst.msk [vmem:[%s1951 + $0x8] sm:$0xff] %vm723, %v1945
  %1954 = vst.msk [vmem:[%s1951 + $0x10] sm:$0xff] %vm723, %v1947
  %1958 = vrot.lane.b32.xlu0 %v1936, 80
  %v1959 = vpop.permute.xlu0 %1958
  %1960 = vrot.lane.b32.xlu0 %v1937, 80
  %v1961 = vpop.permute.xlu0 %1960
  %1962 = vrot.lane.b32.xlu0 %v1938, 80
  %v1963 = vpop.permute.xlu0 %1962
  %s1967 = scalar_lea.vmem [#allocation5], 72
  %1968 = vst.msk [vmem:[%s1967] sm:$0xff] %vm723, %v1959
  %1969 = vst.msk [vmem:[%s1967 + $0x8] sm:$0xff] %vm723, %v1961
  %1970 = vst.msk [vmem:[%s1967 + $0x10] sm:$0xff] %vm723, %v1963
  %1971 = vrot.lane.b32.xlu0 %v1936, 96
  %v1972 = vpop.permute.xlu0 %1971
  %1973 = vrot.lane.b32.xlu0 %v1937, 96
  %v1974 = vpop.permute.xlu0 %1973
  %1975 = vrot.lane.b32.xlu0 %v1938, 96
  %v1976 = vpop.permute.xlu0 %1975
  %v1980 = vsel %vm723, %v1943, %v1972
  %v1981 = vsel %vm723, %v1945, %v1974
  %v1982 = vsel %vm723, %v1947, %v1976
  %v1983 = vld [vmem:[%s2] sm:$0xff]
  %v1984 = vld [vmem:[%s2 + $0x8] sm:$0xff]
  %v1985 = vld [vmem:[%s2 + $0x10] sm:$0xff]
  %v1986 = vld [vmem:[%s2 + $0x18] sm:$0xff]
  %v1988 = vsel %vm52, %v1980, 0
  %v1991 = vsel %vm52, %v1981, 0
  %v1994 = vsel %vm52, %v1982, 0
  %1996 = vmatprep.subr.mxu0 0.0
  %1997 = vmatpush1.msra.mxu0 %v1983
  %1998 = vmatprep.subr.mxu0 0.0
  %1999 = vmatpush1.msra.mxu0 %v1984
  %2000 = vmatprep.subr.mxu0 0.0
  %2001 = vmatpush1.msra.mxu0 %v1985
  %2002 = vmatprep.subr.mxu0 0.0
  %2003 = vmatpush1.msra.mxu0 %v1986
  %2004 = vmatprep.subr.mxu0 0.0
  %2005 = vmatpush1.msra.mxu0 0.0
  %2006 = vmatprep.subr.mxu0 0.0
  %2007 = vmatpush1.msra.mxu0 0.0
  %2008 = vmatprep.subr.mxu0 0.0
  %2009 = vmatpush1.msra.mxu0 0.0
  %2010 = vmatprep.subr.mxu0 0.0
  %2011 = vmatpush1.msra.mxu0 0.0
  %2012 = vmatprep.subr.mxu0 0.0
  %2013 = vmatpush1.msra.mxu0 0.0
  %2014 = vmatprep.subr.mxu0 0.0
  %2015 = vmatpush1.msra.mxu0 0.0
  %2016 = vmatprep.subr.mxu0 0.0
  %2017 = vmatpush1.msra.mxu0 0.0
  %2018 = vmatprep.subr.mxu0 0.0
  %2019 = vmatpush1.msra.mxu0 0.0
  %2020 = vmatprep.subr.mxu0 0.0
  %2021 = vmatpush1.msra.mxu0 0.0
  %2022 = vmatprep.subr.mxu0 0.0
  %2023 = vmatpush1.msra.mxu0 0.0
  %2024 = vmatprep.subr.mxu0 0.0
  %2025 = vmatpush1.msra.mxu0 0.0
  %2026 = vmatprep.subr.mxu0 0.0
  %2027 = vmatpush1.msra.mxu0 0.0
  %2028 = vmatprep.subr.mxu0 0.0
  %2029 = vmatpush1.msra.mxu0 0.0
  %2030 = vmatprep.subr.mxu0 0.0
  %2031 = vmatpush1.msra.mxu0 0.0
  %2032 = vmatprep.subr.mxu0 0.0
  %2033 = vmatpush1.msra.mxu0 0.0
  %2034 = vmatprep.subr.mxu0 0.0
  %2035 = vmatpush1.msra.mxu0 0.0
  %2036 = vmatprep.subr.mxu0 0.0
  %2037 = vmatpush1.msra.mxu0 0.0
  %2038 = vmatprep.subr.mxu0 0.0
  %2039 = vmatpush1.msra.mxu0 0.0
  %2040 = vmatprep.subr.mxu0 0.0
  %2041 = vmatpush1.msra.mxu0 0.0
  %2042 = vmatprep.subr.mxu0 0.0
  %2043 = vmatpush1.msra.mxu0 0.0
  %2044 = vmatprep.subr.mxu0 0.0
  %2045 = vmatpush1.msra.mxu0 0.0
  %2046 = vmatprep.subr.mxu0 0.0
  %2047 = vmatpush1.msra.mxu0 0.0
  %2048 = vmatprep.subr.mxu0 0.0
  %2049 = vmatpush1.msra.mxu0 0.0
  %2050 = vmatprep.subr.mxu0 0.0
  %2051 = vmatpush1.msra.mxu0 0.0
  %2052 = vmatprep.subr.mxu0 0.0
  %2053 = vmatpush1.msra.mxu0 0.0
  %2054 = vmatprep.subr.mxu0 0.0
  %2055 = vmatpush1.msra.mxu0 0.0
  %2056 = vmatprep.subr.mxu0 0.0
  %2057 = vmatpush1.msra.mxu0 0.0
  %2058 = vmatprep.subr.mxu0 0.0
  %2059 = vmatpush1.msra.mxu0 0.0
  %2060 = vmatprep.mubr.f32.mxu0 0.0
  %2061 = vmatmul.mubr.f32.gmra.mrb[0].mxu0 %v1988
  %v2062 = vpop.f32.mrb[0].mxu0
  %v2063 = vadd.f32 0.0, %v2062
  %v2064 = vpop.f32.mrb[0].mxu0
  %2065 = vmatprep.mubr.f32.mxu0 0.0
  %2066 = vmatmul.mubr.f32.gmra.mrb[0].mxu0 %v1991
  %v2067 = vpop.f32.mrb[0].mxu0
  %v2068 = vadd.f32 0.0, %v2067
  %v2069 = vpop.f32.mrb[0].mxu0
  %2070 = vmatprep.mubr.f32.mxu0 0.0
  %2071 = vmatmul.mubr.f32.gmra.mrb[0].mxu0 %v1994
  %v2072 = vpop.f32.mrb[0].mxu0
  %v2073 = vadd.f32 0.0, %v2072
  %v2074 = vpop.f32.mrb[0].mxu0
  %2075 = vdwg.mxu0
  %s2076 = scalar_lea.vmem [#allocation2], 120
  %v2077 = vld [vmem:[%s2076] sm:$0xff]
  %v2078 = vld [vmem:[%s2076 + $0x8] sm:$0xff]
  %v2079 = vld [vmem:[%s2076 + $0x10] sm:$0xff]
  %v2080 = vadd.f32 %v2077, %v2063
  %v2081 = vadd.f32 %v2078, %v2068
  %v2082 = vadd.f32 %v2079, %v2073
  %s2083 = scalar_lea.vmem [#allocation3], 48
  %v2084 = vld [vmem:[%s2083] sm:$0xff]
  %v2085 = vld [vmem:[%s2083 + $0x8] sm:$0xff]
  %v2086 = vld [vmem:[%s2083 + $0x10] sm:$0xff]
  %2090 = vrot.lane.b32.xlu0 %v2063, 64
  %v2091 = vpop.permute.xlu0 %2090
  %2092 = vrot.lane.b32.xlu0 %v2068, 64
  %v2093 = vpop.permute.xlu0 %2092
  %2094 = vrot.lane.b32.xlu0 %v2073, 64
  %v2095 = vpop.permute.xlu0 %2094
  %v2099 = vadd.f32 %v2084, %v2091
  %v2100 = vadd.f32 %v2085, %v2093
  %v2101 = vadd.f32 %v2086, %v2095
  %v2102 = vxor.u32 %v2080, 2147483648
  %v2103 = vxor.u32 %v2081, 2147483648
  %v2104 = vxor.u32 %v2082, 2147483648
  %v2105 = vmul.f32 %v2102, 1.442695
  %v2106 = vpow.pop %v2105
  %v2107 = vmul.f32 %v2103, 1.442695
  %v2108 = vpow.pop %v2107
  %v2109 = vmul.f32 %v2104, 1.442695
  %v2110 = vpow.pop %v2109
  %v2111 = vadd.f32 %v2106, 1.0
  %v2112 = vadd.f32 %v2108, 1.0
  %v2113 = vadd.f32 %v2110, 1.0
  %v2114 = vrcp.pop %v2111
  %v2115 = vmul.f32 1.0, %v2114
  %v2116 = vrcp.pop %v2112
  %v2117 = vmul.f32 1.0, %v2116
  %v2118 = vrcp.pop %v2113
  %v2119 = vmul.f32 1.0, %v2118
  %v2120 = vtanh.pop %v2080
  %v2121 = vtanh.pop %v2081
  %v2122 = vtanh.pop %v2082
  %v2123 = vmul.f32 %v2115, %v1846
  %v2124 = vmul.f32 %v2117, %v1847
  %v2125 = vmul.f32 %v2119, %v1848
  %2129 = vrot.lane.b32.xlu0 %v2120, 96
  %v2130 = vpop.permute.xlu0 %2129
  %2131 = vrot.lane.b32.xlu0 %v2121, 96
  %v2132 = vpop.permute.xlu0 %2131
  %2133 = vrot.lane.b32.xlu0 %v2122, 96
  %v2134 = vpop.permute.xlu0 %2133
  %v2138 = vmul.f32 %v2115, %v2130
  %v2139 = vmul.f32 %v2117, %v2132
  %v2140 = vmul.f32 %v2119, %v2134
  %2144 = vrot.lane.b32.xlu0 %v2138, 16
  %v2145 = vpop.permute.xlu0 %2144
  %2146 = vrot.lane.b32.xlu0 %v2139, 16
  %v2147 = vpop.permute.xlu0 %2146
  %2148 = vrot.lane.b32.xlu0 %v2140, 16
  %v2149 = vpop.permute.xlu0 %2148
  %v2153 = vadd.f32 %v2123, %v2145
  %v2154 = vadd.f32 %v2124, %v2147
  %v2155 = vadd.f32 %v2125, %v2149
  %v2156 = vtanh.pop %v2153
  %v2157 = vtanh.pop %v2154
  %v2158 = vtanh.pop %v2155
  %2162 = vrot.lane.b32.xlu0 %v2156, 32
  %v2163 = vpop.permute.xlu0 %2162
  %2164 = vrot.lane.b32.xlu0 %v2157, 32
  %v2165 = vpop.permute.xlu0 %2164
  %2166 = vrot.lane.b32.xlu0 %v2158, 32
  %v2167 = vpop.permute.xlu0 %2166
  %v2171 = vmul.f32 %v2115, %v2163
  %v2172 = vmul.f32 %v2117, %v2165
  %v2173 = vmul.f32 %v2119, %v2167
  %v2174 = vxor.u32 %v2099, 2147483648
  %v2175 = vxor.u32 %v2100, 2147483648
  %v2176 = vxor.u32 %v2101, 2147483648
  %v2177 = vmul.f32 %v2174, 1.442695
  %v2178 = vpow.pop %v2177
  %v2179 = vmul.f32 %v2175, 1.442695
  %v2180 = vpow.pop %v2179
  %v2181 = vmul.f32 %v2176, 1.442695
  %v2182 = vpow.pop %v2181
  %v2183 = vadd.f32 %v2178, 1.0
  %v2184 = vadd.f32 %v2180, 1.0
  %v2185 = vadd.f32 %v2182, 1.0
  %v2186 = vrcp.pop %v2183
  %v2187 = vmul.f32 1.0, %v2186
  %v2188 = vrcp.pop %v2184
  %v2189 = vmul.f32 1.0, %v2188
  %v2190 = vrcp.pop %v2185
  %v2191 = vmul.f32 1.0, %v2190
  %v2192 = vtanh.pop %v2099
  %v2193 = vtanh.pop %v2100
  %v2194 = vtanh.pop %v2101
  %v2195 = vmul.f32 %v2187, %v1918
  %v2196 = vmul.f32 %v2189, %v1919
  %v2197 = vmul.f32 %v2191, %v1920
  %2201 = vrot.lane.b32.xlu0 %v2192, 96
  %v2202 = vpop.permute.xlu0 %2201
  %2203 = vrot.lane.b32.xlu0 %v2193, 96
  %v2204 = vpop.permute.xlu0 %2203
  %2205 = vrot.lane.b32.xlu0 %v2194, 96
  %v2206 = vpop.permute.xlu0 %2205
  %v2210 = vmul.f32 %v2187, %v2202
  %v2211 = vmul.f32 %v2189, %v2204
  %v2212 = vmul.f32 %v2191, %v2206
  %2216 = vrot.lane.b32.xlu0 %v2210, 16
  %v2217 = vpop.permute.xlu0 %2216
  %2218 = vrot.lane.b32.xlu0 %v2211, 16
  %v2219 = vpop.permute.xlu0 %2218
  %2220 = vrot.lane.b32.xlu0 %v2212, 16
  %v2221 = vpop.permute.xlu0 %2220
  %v2225 = vadd.f32 %v2195, %v2217
  %v2226 = vadd.f32 %v2196, %v2219
  %v2227 = vadd.f32 %v2197, %v2221
  %v2228 = vtanh.pop %v2225
  %v2229 = vtanh.pop %v2226
  %v2230 = vtanh.pop %v2227
  %2234 = vrot.lane.b32.xlu0 %v2228, 32
  %v2235 = vpop.permute.xlu0 %2234
  %2236 = vrot.lane.b32.xlu0 %v2229, 32
  %v2237 = vpop.permute.xlu0 %2236
  %2238 = vrot.lane.b32.xlu0 %v2230, 32
  %v2239 = vpop.permute.xlu0 %2238
  %v2243 = vmul.f32 %v2187, %v2235
  %v2244 = vmul.f32 %v2189, %v2237
  %v2245 = vmul.f32 %v2191, %v2239
  %2249 = vrot.lane.b32.xlu0 %v2171, 80
  %v2250 = vpop.permute.xlu0 %2249
  %2251 = vrot.lane.b32.xlu0 %v2172, 80
  %v2252 = vpop.permute.xlu0 %2251
  %2253 = vrot.lane.b32.xlu0 %v2173, 80
  %v2254 = vpop.permute.xlu0 %2253
  %s2258 = scalar_lea.vmem [#allocation4], 120
  %2259 = vst.msk [vmem:[%s2258] sm:$0xff] %vm723, %v2250
  %2260 = vst.msk [vmem:[%s2258 + $0x8] sm:$0xff] %vm723, %v2252
  %2261 = vst.msk [vmem:[%s2258 + $0x10] sm:$0xff] %vm723, %v2254
  %2265 = vrot.lane.b32.xlu0 %v2243, 80
  %v2266 = vpop.permute.xlu0 %2265
  %2267 = vrot.lane.b32.xlu0 %v2244, 80
  %v2268 = vpop.permute.xlu0 %2267
  %2269 = vrot.lane.b32.xlu0 %v2245, 80
  %v2270 = vpop.permute.xlu0 %2269
  %s2274 = scalar_lea.vmem [#allocation5], 48
  %2275 = vst.msk [vmem:[%s2274] sm:$0xff] %vm723, %v2266
  %2276 = vst.msk [vmem:[%s2274 + $0x8] sm:$0xff] %vm723, %v2268
  %2277 = vst.msk [vmem:[%s2274 + $0x10] sm:$0xff] %vm723, %v2270
  %2278 = vrot.lane.b32.xlu0 %v2243, 96
  %v2279 = vpop.permute.xlu0 %2278
  %2280 = vrot.lane.b32.xlu0 %v2244, 96
  %v2281 = vpop.permute.xlu0 %2280
  %2282 = vrot.lane.b32.xlu0 %v2245, 96
  %v2283 = vpop.permute.xlu0 %2282
  %v2287 = vsel %vm723, %v2250, %v2279
  %v2288 = vsel %vm723, %v2252, %v2281
  %v2289 = vsel %vm723, %v2254, %v2283
  %v2290 = vld [vmem:[%s2] sm:$0xff]
  %v2291 = vld [vmem:[%s2 + $0x8] sm:$0xff]
  %v2292 = vld [vmem:[%s2 + $0x10] sm:$0xff]
  %v2293 = vld [vmem:[%s2 + $0x18] sm:$0xff]
  %v2295 = vsel %vm52, %v2287, 0
  %v2298 = vsel %vm52, %v2288, 0
  %v2301 = vsel %vm52, %v2289, 0
  %2303 = vmatprep.subr.mxu0 0.0
  %2304 = vmatpush1.msra.mxu0 %v2290
  %2305 = vmatprep.subr.mxu0 0.0
  %2306 = vmatpush1.msra.mxu0 %v2291
  %2307 = vmatprep.subr.mxu0 0.0
  %2308 = vmatpush1.msra.mxu0 %v2292
  %2309 = vmatprep.subr.mxu0 0.0
  %2310 = vmatpush1.msra.mxu0 %v2293
  %2311 = vmatprep.subr.mxu0 0.0
  %2312 = vmatpush1.msra.mxu0 0.0
  %2313 = vmatprep.subr.mxu0 0.0
  %2314 = vmatpush1.msra.mxu0 0.0
  %2315 = vmatprep.subr.mxu0 0.0
  %2316 = vmatpush1.msra.mxu0 0.0
  %2317 = vmatprep.subr.mxu0 0.0
  %2318 = vmatpush1.msra.mxu0 0.0
  %2319 = vmatprep.subr.mxu0 0.0
  %2320 = vmatpush1.msra.mxu0 0.0
  %2321 = vmatprep.subr.mxu0 0.0
  %2322 = vmatpush1.msra.mxu0 0.0
  %2323 = vmatprep.subr.mxu0 0.0
  %2324 = vmatpush1.msra.mxu0 0.0
  %2325 = vmatprep.subr.mxu0 0.0
  %2326 = vmatpush1.msra.mxu0 0.0
  %2327 = vmatprep.subr.mxu0 0.0
  %2328 = vmatpush1.msra.mxu0 0.0
  %2329 = vmatprep.subr.mxu0 0.0
  %2330 = vmatpush1.msra.mxu0 0.0
  %2331 = vmatprep.subr.mxu0 0.0
  %2332 = vmatpush1.msra.mxu0 0.0
  %2333 = vmatprep.subr.mxu0 0.0
  %2334 = vmatpush1.msra.mxu0 0.0
  %2335 = vmatprep.subr.mxu0 0.0
  %2336 = vmatpush1.msra.mxu0 0.0
  %2337 = vmatprep.subr.mxu0 0.0
  %2338 = vmatpush1.msra.mxu0 0.0
  %2339 = vmatprep.subr.mxu0 0.0
  %2340 = vmatpush1.msra.mxu0 0.0
  %2341 = vmatprep.subr.mxu0 0.0
  %2342 = vmatpush1.msra.mxu0 0.0
  %2343 = vmatprep.subr.mxu0 0.0
  %2344 = vmatpush1.msra.mxu0 0.0
  %2345 = vmatprep.subr.mxu0 0.0
  %2346 = vmatpush1.msra.mxu0 0.0
  %2347 = vmatprep.subr.mxu0 0.0
  %2348 = vmatpush1.msra.mxu0 0.0
  %2349 = vmatprep.subr.mxu0 0.0
  %2350 = vmatpush1.msra.mxu0 0.0
  %2351 = vmatprep.subr.mxu0 0.0
  %2352 = vmatpush1.msra.mxu0 0.0
  %2353 = vmatprep.subr.mxu0 0.0
  %2354 = vmatpush1.msra.mxu0 0.0
  %2355 = vmatprep.subr.mxu0 0.0
  %2356 = vmatpush1.msra.mxu0 0.0
  %2357 = vmatprep.subr.mxu0 0.0
  %2358 = vmatpush1.msra.mxu0 0.0
  %2359 = vmatprep.subr.mxu0 0.0
  %2360 = vmatpush1.msra.mxu0 0.0
  %2361 = vmatprep.subr.mxu0 0.0
  %2362 = vmatpush1.msra.mxu0 0.0
  %2363 = vmatprep.subr.mxu0 0.0
  %2364 = vmatpush1.msra.mxu0 0.0
  %2365 = vmatprep.subr.mxu0 0.0
  %2366 = vmatpush1.msra.mxu0 0.0
  %2367 = vmatprep.mubr.f32.mxu0 0.0
  %2368 = vmatmul.mubr.f32.gmra.mrb[0].mxu0 %v2295
  %v2369 = vpop.f32.mrb[0].mxu0
  %v2370 = vadd.f32 0.0, %v2369
  %v2371 = vpop.f32.mrb[0].mxu0
  %2372 = vmatprep.mubr.f32.mxu0 0.0
  %2373 = vmatmul.mubr.f32.gmra.mrb[0].mxu0 %v2298
  %v2374 = vpop.f32.mrb[0].mxu0
  %v2375 = vadd.f32 0.0, %v2374
  %v2376 = vpop.f32.mrb[0].mxu0
  %2377 = vmatprep.mubr.f32.mxu0 0.0
  %2378 = vmatmul.mubr.f32.gmra.mrb[0].mxu0 %v2301
  %v2379 = vpop.f32.mrb[0].mxu0
  %v2380 = vadd.f32 0.0, %v2379
  %v2381 = vpop.f32.mrb[0].mxu0
  %2382 = vdwg.mxu0
  %s2383 = scalar_lea.vmem [#allocation2], 144
  %v2384 = vld [vmem:[%s2383] sm:$0xff]
  %v2385 = vld [vmem:[%s2383 + $0x8] sm:$0xff]
  %v2386 = vld [vmem:[%s2383 + $0x10] sm:$0xff]
  %v2387 = vadd.f32 %v2384, %v2370
  %v2388 = vadd.f32 %v2385, %v2375
  %v2389 = vadd.f32 %v2386, %v2380
  %s2390 = scalar_lea.vmem [#allocation3], 24
  %v2391 = vld [vmem:[%s2390] sm:$0xff]
  %v2392 = vld [vmem:[%s2390 + $0x8] sm:$0xff]
  %v2393 = vld [vmem:[%s2390 + $0x10] sm:$0xff]
  %2397 = vrot.lane.b32.xlu0 %v2370, 64
  %v2398 = vpop.permute.xlu0 %2397
  %2399 = vrot.lane.b32.xlu0 %v2375, 64
  %v2400 = vpop.permute.xlu0 %2399
  %2401 = vrot.lane.b32.xlu0 %v2380, 64
  %v2402 = vpop.permute.xlu0 %2401
  %v2406 = vadd.f32 %v2391, %v2398
  %v2407 = vadd.f32 %v2392, %v2400
  %v2408 = vadd.f32 %v2393, %v2402
  %v2409 = vxor.u32 %v2387, 2147483648
  %v2410 = vxor.u32 %v2388, 2147483648
  %v2411 = vxor.u32 %v2389, 2147483648
  %v2412 = vmul.f32 %v2409, 1.442695
  %v2413 = vpow.pop %v2412
  %v2414 = vmul.f32 %v2410, 1.442695
  %v2415 = vpow.pop %v2414
  %v2416 = vmul.f32 %v2411, 1.442695
  %v2417 = vpow.pop %v2416
  %v2418 = vadd.f32 %v2413, 1.0
  %v2419 = vadd.f32 %v2415, 1.0
  %v2420 = vadd.f32 %v2417, 1.0
  %v2421 = vrcp.pop %v2418
  %v2422 = vmul.f32 1.0, %v2421
  %v2423 = vrcp.pop %v2419
  %v2424 = vmul.f32 1.0, %v2423
  %v2425 = vrcp.pop %v2420
  %v2426 = vmul.f32 1.0, %v2425
  %v2427 = vtanh.pop %v2387
  %v2428 = vtanh.pop %v2388
  %v2429 = vtanh.pop %v2389
  %v2430 = vmul.f32 %v2422, %v2153
  %v2431 = vmul.f32 %v2424, %v2154
  %v2432 = vmul.f32 %v2426, %v2155
  %2436 = vrot.lane.b32.xlu0 %v2427, 96
  %v2437 = vpop.permute.xlu0 %2436
  %2438 = vrot.lane.b32.xlu0 %v2428, 96
  %v2439 = vpop.permute.xlu0 %2438
  %2440 = vrot.lane.b32.xlu0 %v2429, 96
  %v2441 = vpop.permute.xlu0 %2440
  %v2445 = vmul.f32 %v2422, %v2437
  %v2446 = vmul.f32 %v2424, %v2439
  %v2447 = vmul.f32 %v2426, %v2441
  %2451 = vrot.lane.b32.xlu0 %v2445, 16
  %v2452 = vpop.permute.xlu0 %2451
  %2453 = vrot.lane.b32.xlu0 %v2446, 16
  %v2454 = vpop.permute.xlu0 %2453
  %2455 = vrot.lane.b32.xlu0 %v2447, 16
  %v2456 = vpop.permute.xlu0 %2455
  %v2460 = vadd.f32 %v2430, %v2452
  %v2461 = vadd.f32 %v2431, %v2454
  %v2462 = vadd.f32 %v2432, %v2456
  %v2463 = vtanh.pop %v2460
  %v2464 = vtanh.pop %v2461
  %v2465 = vtanh.pop %v2462
  %2469 = vrot.lane.b32.xlu0 %v2463, 32
  %v2470 = vpop.permute.xlu0 %2469
  %2471 = vrot.lane.b32.xlu0 %v2464, 32
  %v2472 = vpop.permute.xlu0 %2471
  %2473 = vrot.lane.b32.xlu0 %v2465, 32
  %v2474 = vpop.permute.xlu0 %2473
  %v2478 = vmul.f32 %v2422, %v2470
  %v2479 = vmul.f32 %v2424, %v2472
  %v2480 = vmul.f32 %v2426, %v2474
  %v2481 = vxor.u32 %v2406, 2147483648
  %v2482 = vxor.u32 %v2407, 2147483648
  %v2483 = vxor.u32 %v2408, 2147483648
  %v2484 = vmul.f32 %v2481, 1.442695
  %v2485 = vpow.pop %v2484
  %v2486 = vmul.f32 %v2482, 1.442695
  %v2487 = vpow.pop %v2486
  %v2488 = vmul.f32 %v2483, 1.442695
  %v2489 = vpow.pop %v2488
  %v2490 = vadd.f32 %v2485, 1.0
  %v2491 = vadd.f32 %v2487, 1.0
  %v2492 = vadd.f32 %v2489, 1.0
  %v2493 = vrcp.pop %v2490
  %v2494 = vmul.f32 1.0, %v2493
  %v2495 = vrcp.pop %v2491
  %v2496 = vmul.f32 1.0, %v2495
  %v2497 = vrcp.pop %v2492
  %v2498 = vmul.f32 1.0, %v2497
  %v2499 = vtanh.pop %v2406
  %v2500 = vtanh.pop %v2407
  %v2501 = vtanh.pop %v2408
  %v2502 = vmul.f32 %v2494, %v2225
  %v2503 = vmul.f32 %v2496, %v2226
  %v2504 = vmul.f32 %v2498, %v2227
  %2508 = vrot.lane.b32.xlu0 %v2499, 96
  %v2509 = vpop.permute.xlu0 %2508
  %2510 = vrot.lane.b32.xlu0 %v2500, 96
  %v2511 = vpop.permute.xlu0 %2510
  %2512 = vrot.lane.b32.xlu0 %v2501, 96
  %v2513 = vpop.permute.xlu0 %2512
  %v2517 = vmul.f32 %v2494, %v2509
  %v2518 = vmul.f32 %v2496, %v2511
  %v2519 = vmul.f32 %v2498, %v2513
  %2523 = vrot.lane.b32.xlu0 %v2517, 16
  %v2524 = vpop.permute.xlu0 %2523
  %2525 = vrot.lane.b32.xlu0 %v2518, 16
  %v2526 = vpop.permute.xlu0 %2525
  %2527 = vrot.lane.b32.xlu0 %v2519, 16
  %v2528 = vpop.permute.xlu0 %2527
  %v2532 = vadd.f32 %v2502, %v2524
  %v2533 = vadd.f32 %v2503, %v2526
  %v2534 = vadd.f32 %v2504, %v2528
  %v2535 = vtanh.pop %v2532
  %v2536 = vtanh.pop %v2533
  %v2537 = vtanh.pop %v2534
  %2541 = vrot.lane.b32.xlu0 %v2535, 32
  %v2542 = vpop.permute.xlu0 %2541
  %2543 = vrot.lane.b32.xlu0 %v2536, 32
  %v2544 = vpop.permute.xlu0 %2543
  %2545 = vrot.lane.b32.xlu0 %v2537, 32
  %v2546 = vpop.permute.xlu0 %2545
  %v2550 = vmul.f32 %v2494, %v2542
  %v2551 = vmul.f32 %v2496, %v2544
  %v2552 = vmul.f32 %v2498, %v2546
  %2556 = vrot.lane.b32.xlu0 %v2478, 80
  %v2557 = vpop.permute.xlu0 %2556
  %2558 = vrot.lane.b32.xlu0 %v2479, 80
  %v2559 = vpop.permute.xlu0 %2558
  %2560 = vrot.lane.b32.xlu0 %v2480, 80
  %v2561 = vpop.permute.xlu0 %2560
  %s2565 = scalar_lea.vmem [#allocation4], 144
  %2566 = vst.msk [vmem:[%s2565] sm:$0xff] %vm723, %v2557
  %2567 = vst.msk [vmem:[%s2565 + $0x8] sm:$0xff] %vm723, %v2559
  %2568 = vst.msk [vmem:[%s2565 + $0x10] sm:$0xff] %vm723, %v2561
  %2572 = vrot.lane.b32.xlu0 %v2550, 80
  %v2573 = vpop.permute.xlu0 %2572
  %2574 = vrot.lane.b32.xlu0 %v2551, 80
  %v2575 = vpop.permute.xlu0 %2574
  %2576 = vrot.lane.b32.xlu0 %v2552, 80
  %v2577 = vpop.permute.xlu0 %2576
  %s2581 = scalar_lea.vmem [#allocation5], 24
  %2582 = vst.msk [vmem:[%s2581] sm:$0xff] %vm723, %v2573
  %2583 = vst.msk [vmem:[%s2581 + $0x8] sm:$0xff] %vm723, %v2575
  %2584 = vst.msk [vmem:[%s2581 + $0x10] sm:$0xff] %vm723, %v2577
  %2585 = vrot.lane.b32.xlu0 %v2550, 96
  %v2586 = vpop.permute.xlu0 %2585
  %2587 = vrot.lane.b32.xlu0 %v2551, 96
  %v2588 = vpop.permute.xlu0 %2587
  %2589 = vrot.lane.b32.xlu0 %v2552, 96
  %v2590 = vpop.permute.xlu0 %2589
  %v2594 = vsel %vm723, %v2557, %v2586
  %v2595 = vsel %vm723, %v2559, %v2588
  %v2596 = vsel %vm723, %v2561, %v2590
  %v2597 = vld [vmem:[%s2] sm:$0xff]
  %v2598 = vld [vmem:[%s2 + $0x8] sm:$0xff]
  %v2599 = vld [vmem:[%s2 + $0x10] sm:$0xff]
  %v2600 = vld [vmem:[%s2 + $0x18] sm:$0xff]
  %v2602 = vsel %vm52, %v2594, 0
  %v2605 = vsel %vm52, %v2595, 0
  %v2608 = vsel %vm52, %v2596, 0
  %2610 = vmatprep.subr.mxu0 0.0
  %2611 = vmatpush1.msra.mxu0 %v2597
  %2612 = vmatprep.subr.mxu0 0.0
  %2613 = vmatpush1.msra.mxu0 %v2598
  %2614 = vmatprep.subr.mxu0 0.0
  %2615 = vmatpush1.msra.mxu0 %v2599
  %2616 = vmatprep.subr.mxu0 0.0
  %2617 = vmatpush1.msra.mxu0 %v2600
  %2618 = vmatprep.subr.mxu0 0.0
  %2619 = vmatpush1.msra.mxu0 0.0
  %2620 = vmatprep.subr.mxu0 0.0
  %2621 = vmatpush1.msra.mxu0 0.0
  %2622 = vmatprep.subr.mxu0 0.0
  %2623 = vmatpush1.msra.mxu0 0.0
  %2624 = vmatprep.subr.mxu0 0.0
  %2625 = vmatpush1.msra.mxu0 0.0
  %2626 = vmatprep.subr.mxu0 0.0
  %2627 = vmatpush1.msra.mxu0 0.0
  %2628 = vmatprep.subr.mxu0 0.0
  %2629 = vmatpush1.msra.mxu0 0.0
  %2630 = vmatprep.subr.mxu0 0.0
  %2631 = vmatpush1.msra.mxu0 0.0
  %2632 = vmatprep.subr.mxu0 0.0
  %2633 = vmatpush1.msra.mxu0 0.0
  %2634 = vmatprep.subr.mxu0 0.0
  %2635 = vmatpush1.msra.mxu0 0.0
  %2636 = vmatprep.subr.mxu0 0.0
  %2637 = vmatpush1.msra.mxu0 0.0
  %2638 = vmatprep.subr.mxu0 0.0
  %2639 = vmatpush1.msra.mxu0 0.0
  %2640 = vmatprep.subr.mxu0 0.0
  %2641 = vmatpush1.msra.mxu0 0.0
  %2642 = vmatprep.subr.mxu0 0.0
  %2643 = vmatpush1.msra.mxu0 0.0
  %2644 = vmatprep.subr.mxu0 0.0
  %2645 = vmatpush1.msra.mxu0 0.0
  %2646 = vmatprep.subr.mxu0 0.0
  %2647 = vmatpush1.msra.mxu0 0.0
  %2648 = vmatprep.subr.mxu0 0.0
  %2649 = vmatpush1.msra.mxu0 0.0
  %2650 = vmatprep.subr.mxu0 0.0
  %2651 = vmatpush1.msra.mxu0 0.0
  %2652 = vmatprep.subr.mxu0 0.0
  %2653 = vmatpush1.msra.mxu0 0.0
  %2654 = vmatprep.subr.mxu0 0.0
  %2655 = vmatpush1.msra.mxu0 0.0
  %2656 = vmatprep.subr.mxu0 0.0
  %2657 = vmatpush1.msra.mxu0 0.0
  %2658 = vmatprep.subr.mxu0 0.0
  %2659 = vmatpush1.msra.mxu0 0.0
  %2660 = vmatprep.subr.mxu0 0.0
  %2661 = vmatpush1.msra.mxu0 0.0
  %2662 = vmatprep.subr.mxu0 0.0
  %2663 = vmatpush1.msra.mxu0 0.0
  %2664 = vmatprep.subr.mxu0 0.0
  %2665 = vmatpush1.msra.mxu0 0.0
  %2666 = vmatprep.subr.mxu0 0.0
  %2667 = vmatpush1.msra.mxu0 0.0
  %2668 = vmatprep.subr.mxu0 0.0
  %2669 = vmatpush1.msra.mxu0 0.0
  %2670 = vmatprep.subr.mxu0 0.0
  %2671 = vmatpush1.msra.mxu0 0.0
  %2672 = vmatprep.subr.mxu0 0.0
  %2673 = vmatpush1.msra.mxu0 0.0
  %2674 = vmatprep.mubr.f32.mxu0 0.0
  %2675 = vmatmul.mubr.f32.gmra.mrb[0].mxu0 %v2602
  %v2676 = vpop.f32.mrb[0].mxu0
  %v2677 = vadd.f32 0.0, %v2676
  %v2678 = vpop.f32.mrb[0].mxu0
  %2679 = vmatprep.mubr.f32.mxu0 0.0
  %2680 = vmatmul.mubr.f32.gmra.mrb[0].mxu0 %v2605
  %v2681 = vpop.f32.mrb[0].mxu0
  %v2682 = vadd.f32 0.0, %v2681
  %v2683 = vpop.f32.mrb[0].mxu0
  %2684 = vmatprep.mubr.f32.mxu0 0.0
  %2685 = vmatmul.mubr.f32.gmra.mrb[0].mxu0 %v2608
  %v2686 = vpop.f32.mrb[0].mxu0
  %v2687 = vadd.f32 0.0, %v2686
  %v2688 = vpop.f32.mrb[0].mxu0
  %2689 = vdwg.mxu0
  %s2690 = scalar_lea.vmem [#allocation2], 168
  %v2691 = vld [vmem:[%s2690] sm:$0xff]
  %v2692 = vld [vmem:[%s2690 + $0x8] sm:$0xff]
  %v2693 = vld [vmem:[%s2690 + $0x10] sm:$0xff]
  %v2694 = vadd.f32 %v2691, %v2677
  %v2695 = vadd.f32 %v2692, %v2682
  %v2696 = vadd.f32 %v2693, %v2687
  %v2697 = vld [vmem:[#allocation3] sm:$0xff]
  %v2698 = vld [vmem:[#allocation3 + $0x8] sm:$0xff]
  %v2699 = vld [vmem:[#allocation3 + $0x10] sm:$0xff]
  %2703 = vrot.lane.b32.xlu0 %v2677, 64
  %v2704 = vpop.permute.xlu0 %2703
  %2705 = vrot.lane.b32.xlu0 %v2682, 64
  %v2706 = vpop.permute.xlu0 %2705
  %2707 = vrot.lane.b32.xlu0 %v2687, 64
  %v2708 = vpop.permute.xlu0 %2707
  %v2712 = vadd.f32 %v2697, %v2704
  %v2713 = vadd.f32 %v2698, %v2706
  %v2714 = vadd.f32 %v2699, %v2708
  %v2715 = vxor.u32 %v2694, 2147483648
  %v2716 = vxor.u32 %v2695, 2147483648
  %v2717 = vxor.u32 %v2696, 2147483648
  %v2718 = vmul.f32 %v2715, 1.442695
  %v2719 = vpow.pop %v2718
  %v2720 = vmul.f32 %v2716, 1.442695
  %v2721 = vpow.pop %v2720
  %v2722 = vmul.f32 %v2717, 1.442695
  %v2723 = vpow.pop %v2722
  %v2724 = vadd.f32 %v2719, 1.0
  %v2725 = vadd.f32 %v2721, 1.0
  %v2726 = vadd.f32 %v2723, 1.0
  %v2727 = vrcp.pop %v2724
  %v2728 = vmul.f32 1.0, %v2727
  %v2729 = vrcp.pop %v2725
  %v2730 = vmul.f32 1.0, %v2729
  %v2731 = vrcp.pop %v2726
  %v2732 = vmul.f32 1.0, %v2731
  %v2733 = vtanh.pop %v2694
  %v2734 = vtanh.pop %v2695
  %v2735 = vtanh.pop %v2696
  %v2736 = vmul.f32 %v2728, %v2460
  %v2737 = vmul.f32 %v2730, %v2461
  %v2738 = vmul.f32 %v2732, %v2462
  %2742 = vrot.lane.b32.xlu0 %v2733, 96
  %v2743 = vpop.permute.xlu0 %2742
  %2744 = vrot.lane.b32.xlu0 %v2734, 96
  %v2745 = vpop.permute.xlu0 %2744
  %2746 = vrot.lane.b32.xlu0 %v2735, 96
  %v2747 = vpop.permute.xlu0 %2746
  %v2751 = vmul.f32 %v2728, %v2743
  %v2752 = vmul.f32 %v2730, %v2745
  %v2753 = vmul.f32 %v2732, %v2747
  %2757 = vrot.lane.b32.xlu0 %v2751, 16
  %v2758 = vpop.permute.xlu0 %2757
  %2759 = vrot.lane.b32.xlu0 %v2752, 16
  %v2760 = vpop.permute.xlu0 %2759
  %2761 = vrot.lane.b32.xlu0 %v2753, 16
  %v2762 = vpop.permute.xlu0 %2761
  %v2766 = vadd.f32 %v2736, %v2758
  %v2767 = vadd.f32 %v2737, %v2760
  %v2768 = vadd.f32 %v2738, %v2762
  %v2769 = vtanh.pop %v2766
  %v2770 = vtanh.pop %v2767
  %v2771 = vtanh.pop %v2768
  %2775 = vrot.lane.b32.xlu0 %v2769, 32
  %v2776 = vpop.permute.xlu0 %2775
  %2777 = vrot.lane.b32.xlu0 %v2770, 32
  %v2778 = vpop.permute.xlu0 %2777
  %2779 = vrot.lane.b32.xlu0 %v2771, 32
  %v2780 = vpop.permute.xlu0 %2779
  %v2784 = vmul.f32 %v2728, %v2776
  %v2785 = vmul.f32 %v2730, %v2778
  %v2786 = vmul.f32 %v2732, %v2780
  %v2787 = vxor.u32 %v2712, 2147483648
  %v2788 = vxor.u32 %v2713, 2147483648
  %v2789 = vxor.u32 %v2714, 2147483648
  %v2790 = vmul.f32 %v2787, 1.442695
  %v2791 = vpow.pop %v2790
  %v2792 = vmul.f32 %v2788, 1.442695
  %v2793 = vpow.pop %v2792
  %v2794 = vmul.f32 %v2789, 1.442695
  %v2795 = vpow.pop %v2794
  %v2796 = vadd.f32 %v2791, 1.0
  %v2797 = vadd.f32 %v2793, 1.0
  %v2798 = vadd.f32 %v2795, 1.0
  %v2799 = vrcp.pop %v2796
  %v2800 = vmul.f32 1.0, %v2799
  %v2801 = vrcp.pop %v2797
  %v2802 = vmul.f32 1.0, %v2801
  %v2803 = vrcp.pop %v2798
  %v2804 = vmul.f32 1.0, %v2803
  %v2805 = vtanh.pop %v2712
  %v2806 = vtanh.pop %v2713
  %v2807 = vtanh.pop %v2714
  %v2808 = vmul.f32 %v2800, %v2532
  %v2809 = vmul.f32 %v2802, %v2533
  %v2810 = vmul.f32 %v2804, %v2534
  %2814 = vrot.lane.b32.xlu0 %v2805, 96
  %v2815 = vpop.permute.xlu0 %2814
  %2816 = vrot.lane.b32.xlu0 %v2806, 96
  %v2817 = vpop.permute.xlu0 %2816
  %2818 = vrot.lane.b32.xlu0 %v2807, 96
  %v2819 = vpop.permute.xlu0 %2818
  %v2823 = vmul.f32 %v2800, %v2815
  %v2824 = vmul.f32 %v2802, %v2817
  %v2825 = vmul.f32 %v2804, %v2819
  %2829 = vrot.lane.b32.xlu0 %v2823, 16
  %v2830 = vpop.permute.xlu0 %2829
  %2831 = vrot.lane.b32.xlu0 %v2824, 16
  %v2832 = vpop.permute.xlu0 %2831
  %2833 = vrot.lane.b32.xlu0 %v2825, 16
  %v2834 = vpop.permute.xlu0 %2833
  %v2838 = vadd.f32 %v2808, %v2830
  %v2839 = vadd.f32 %v2809, %v2832
  %v2840 = vadd.f32 %v2810, %v2834
  %v2841 = vtanh.pop %v2838
  %v2842 = vtanh.pop %v2839
  %v2843 = vtanh.pop %v2840
  %2847 = vrot.lane.b32.xlu0 %v2841, 32
  %v2848 = vpop.permute.xlu0 %2847
  %2849 = vrot.lane.b32.xlu0 %v2842, 32
  %v2850 = vpop.permute.xlu0 %2849
  %2851 = vrot.lane.b32.xlu0 %v2843, 32
  %v2852 = vpop.permute.xlu0 %2851
  %v2856 = vmul.f32 %v2800, %v2848
  %v2857 = vmul.f32 %v2802, %v2850
  %v2858 = vmul.f32 %v2804, %v2852
  %2862 = vrot.lane.b32.xlu0 %v2784, 80
  %v2863 = vpop.permute.xlu0 %2862
  %2864 = vrot.lane.b32.xlu0 %v2785, 80
  %v2865 = vpop.permute.xlu0 %2864
  %2866 = vrot.lane.b32.xlu0 %v2786, 80
  %v2867 = vpop.permute.xlu0 %2866
  %s2871 = scalar_lea.vmem [#allocation4], 168
  %2872 = vst.msk [vmem:[%s2871] sm:$0xff] %vm723, %v2863
  %2873 = vst.msk [vmem:[%s2871 + $0x8] sm:$0xff] %vm723, %v2865
  %2874 = vst.msk [vmem:[%s2871 + $0x10] sm:$0xff] %vm723, %v2867
  %2878 = vrot.lane.b32.xlu0 %v2856, 80
  %v2879 = vpop.permute.xlu0 %2878
  %2880 = vrot.lane.b32.xlu0 %v2857, 80
  %v2881 = vpop.permute.xlu0 %2880
  %2882 = vrot.lane.b32.xlu0 %v2858, 80
  %v2883 = vpop.permute.xlu0 %2882
  %2887 = vst.msk [vmem:[#allocation5] sm:$0xff] %vm723, %v2879
  %2888 = vst.msk [vmem:[#allocation5 + $0x8] sm:$0xff] %vm723, %v2881
  %2889 = vst.msk [vmem:[#allocation5 + $0x10] sm:$0xff] %vm723, %v2883
  %v2890 = vld [vmem:[%s0] sm:$0xff]
  %v2891 = vld [vmem:[%s0 + $0x8] sm:$0xff]
  %v2892 = vld [vmem:[%s0 + $0x10] sm:$0xff]
  %v2893 = vld [vmem:[%s0 + $0x18] sm:$0xff]
  %v2894 = vld [vmem:[%s0 + $0x20] sm:$0xff]
  %v2895 = vld [vmem:[%s0 + $0x28] sm:$0xff]
  %v2896 = vld [vmem:[%s0 + $0x30] sm:$0xff]
  %v2897 = vld [vmem:[%s0 + $0x38] sm:$0xff]
  %v2898 = vld [vmem:[%s0 + $0x40] sm:$0xff]
  %v2899 = vld [vmem:[%s0 + $0x48] sm:$0xff]
  %v2900 = vld [vmem:[%s0 + $0x50] sm:$0xff]
  %v2901 = vld [vmem:[%s0 + $0x58] sm:$0xff]
  %v2902 = vld [vmem:[%s0 + $0x60] sm:$0xff]
  %v2903 = vld [vmem:[%s0 + $0x68] sm:$0xff]
  %v2904 = vld [vmem:[%s0 + $0x70] sm:$0xff]
  %v2905 = vld [vmem:[%s0 + $0x78] sm:$0xff]
  %v2906 = vld [vmem:[%s0 + $0x80] sm:$0xff]
  %v2907 = vld [vmem:[%s0 + $0x88] sm:$0xff]
  %v2908 = vld [vmem:[%s0 + $0x90] sm:$0xff]
  %v2909 = vld [vmem:[%s0 + $0x98] sm:$0xff]
  %v2910 = vld [vmem:[%s0 + $0xa0] sm:$0xff]
  %v2911 = vld [vmem:[%s0 + $0xa8] sm:$0xff]
  %v2912 = vld [vmem:[%s0 + $0xb0] sm:$0xff]
  %v2913 = vld [vmem:[%s0 + $0xb8] sm:$0xff]
  %v2914 = vld [vmem:[#allocation4] sm:$0xff]
  %v2915 = vld [vmem:[#allocation4 + $0x8] sm:$0xff]
  %v2916 = vld [vmem:[#allocation4 + $0x10] sm:$0xff]
  %v2917 = vld [vmem:[#allocation4 + $0x18] sm:$0xff]
  %v2918 = vld [vmem:[#allocation4 + $0x20] sm:$0xff]
  %v2919 = vld [vmem:[#allocation4 + $0x28] sm:$0xff]
  %v2920 = vld [vmem:[#allocation4 + $0x30] sm:$0xff]
  %v2921 = vld [vmem:[#allocation4 + $0x38] sm:$0xff]
  %v2922 = vld [vmem:[#allocation4 + $0x40] sm:$0xff]
  %v2923 = vld [vmem:[#allocation4 + $0x48] sm:$0xff]
  %v2924 = vld [vmem:[#allocation4 + $0x50] sm:$0xff]
  %v2925 = vld [vmem:[#allocation4 + $0x58] sm:$0xff]
  %v2926 = vld [vmem:[#allocation4 + $0x60] sm:$0xff]
  %v2927 = vld [vmem:[#allocation4 + $0x68] sm:$0xff]
  %v2928 = vld [vmem:[#allocation4 + $0x70] sm:$0xff]
  %v2929 = vld [vmem:[#allocation4 + $0x78] sm:$0xff]
  %v2930 = vld [vmem:[#allocation4 + $0x80] sm:$0xff]
  %v2931 = vld [vmem:[#allocation4 + $0x88] sm:$0xff]
  %v2932 = vld [vmem:[#allocation4 + $0x90] sm:$0xff]
  %v2933 = vld [vmem:[#allocation4 + $0x98] sm:$0xff]
  %v2934 = vld [vmem:[#allocation4 + $0xa0] sm:$0xff]
  %v2935 = vld [vmem:[#allocation4 + $0xa8] sm:$0xff]
  %v2936 = vld [vmem:[#allocation4 + $0xb0] sm:$0xff]
  %v2937 = vld [vmem:[#allocation4 + $0xb8] sm:$0xff]
  %v2938 = vadd.f32 %v2914, %v2890
  %v2939 = vadd.f32 %v2915, %v2891
  %v2940 = vadd.f32 %v2916, %v2892
  %v2941 = vadd.f32 %v2917, %v2893
  %v2942 = vadd.f32 %v2918, %v2894
  %v2943 = vadd.f32 %v2919, %v2895
  %v2944 = vadd.f32 %v2920, %v2896
  %v2945 = vadd.f32 %v2921, %v2897
  %v2946 = vadd.f32 %v2922, %v2898
  %v2947 = vadd.f32 %v2923, %v2899
  %v2948 = vadd.f32 %v2924, %v2900
  %v2949 = vadd.f32 %v2925, %v2901
  %v2950 = vadd.f32 %v2926, %v2902
  %v2951 = vadd.f32 %v2927, %v2903
  %v2952 = vadd.f32 %v2928, %v2904
  %v2953 = vadd.f32 %v2929, %v2905
  %v2954 = vadd.f32 %v2930, %v2906
  %v2955 = vadd.f32 %v2931, %v2907
  %v2956 = vadd.f32 %v2932, %v2908
  %v2957 = vadd.f32 %v2933, %v2909
  %v2958 = vadd.f32 %v2934, %v2910
  %v2959 = vadd.f32 %v2935, %v2911
  %v2960 = vadd.f32 %v2936, %v2912
  %v2961 = vadd.f32 %v2937, %v2913
  %v2962 = vld [vmem:[#allocation5] sm:$0xff]
  %v2963 = vld [vmem:[#allocation5 + $0x8] sm:$0xff]
  %v2964 = vld [vmem:[#allocation5 + $0x10] sm:$0xff]
  %v2965 = vld [vmem:[#allocation5 + $0x18] sm:$0xff]
  %v2966 = vld [vmem:[#allocation5 + $0x20] sm:$0xff]
  %v2967 = vld [vmem:[#allocation5 + $0x28] sm:$0xff]
  %v2968 = vld [vmem:[#allocation5 + $0x30] sm:$0xff]
  %v2969 = vld [vmem:[#allocation5 + $0x38] sm:$0xff]
  %v2970 = vld [vmem:[#allocation5 + $0x40] sm:$0xff]
  %v2971 = vld [vmem:[#allocation5 + $0x48] sm:$0xff]
  %v2972 = vld [vmem:[#allocation5 + $0x50] sm:$0xff]
  %v2973 = vld [vmem:[#allocation5 + $0x58] sm:$0xff]
  %v2974 = vld [vmem:[#allocation5 + $0x60] sm:$0xff]
  %v2975 = vld [vmem:[#allocation5 + $0x68] sm:$0xff]
  %v2976 = vld [vmem:[#allocation5 + $0x70] sm:$0xff]
  %v2977 = vld [vmem:[#allocation5 + $0x78] sm:$0xff]
  %v2978 = vld [vmem:[#allocation5 + $0x80] sm:$0xff]
  %v2979 = vld [vmem:[#allocation5 + $0x88] sm:$0xff]
  %v2980 = vld [vmem:[#allocation5 + $0x90] sm:$0xff]
  %v2981 = vld [vmem:[#allocation5 + $0x98] sm:$0xff]
  %v2982 = vld [vmem:[#allocation5 + $0xa0] sm:$0xff]
  %v2983 = vld [vmem:[#allocation5 + $0xa8] sm:$0xff]
  %v2984 = vld [vmem:[#allocation5 + $0xb0] sm:$0xff]
  %v2985 = vld [vmem:[#allocation5 + $0xb8] sm:$0xff]
  %3010 = vrot.lane.b32.xlu0 %v2890, 112
  %v3011 = vpop.permute.xlu0 %3010
  %3012 = vrot.lane.b32.xlu0 %v2891, 112
  %v3013 = vpop.permute.xlu0 %3012
  %3014 = vrot.lane.b32.xlu0 %v2892, 112
  %v3015 = vpop.permute.xlu0 %3014
  %3016 = vrot.lane.b32.xlu0 %v2893, 112
  %v3017 = vpop.permute.xlu0 %3016
  %3018 = vrot.lane.b32.xlu0 %v2894, 112
  %v3019 = vpop.permute.xlu0 %3018
  %3020 = vrot.lane.b32.xlu0 %v2895, 112
  %v3021 = vpop.permute.xlu0 %3020
  %3022 = vrot.lane.b32.xlu0 %v2896, 112
  %v3023 = vpop.permute.xlu0 %3022
  %3024 = vrot.lane.b32.xlu0 %v2897, 112
  %v3025 = vpop.permute.xlu0 %3024
  %3026 = vrot.lane.b32.xlu0 %v2898, 112
  %v3027 = vpop.permute.xlu0 %3026
  %3028 = vrot.lane.b32.xlu0 %v2899, 112
  %v3029 = vpop.permute.xlu0 %3028
  %3030 = vrot.lane.b32.xlu0 %v2900, 112
  %v3031 = vpop.permute.xlu0 %3030
  %3032 = vrot.lane.b32.xlu0 %v2901, 112
  %v3033 = vpop.permute.xlu0 %3032
  %3034 = vrot.lane.b32.xlu0 %v2902, 112
  %v3035 = vpop.permute.xlu0 %3034
  %3036 = vrot.lane.b32.xlu0 %v2903, 112
  %v3037 = vpop.permute.xlu0 %3036
  %3038 = vrot.lane.b32.xlu0 %v2904, 112
  %v3039 = vpop.permute.xlu0 %3038
  %3040 = vrot.lane.b32.xlu0 %v2905, 112
  %v3041 = vpop.permute.xlu0 %3040
  %3042 = vrot.lane.b32.xlu0 %v2906, 112
  %v3043 = vpop.permute.xlu0 %3042
  %3044 = vrot.lane.b32.xlu0 %v2907, 112
  %v3045 = vpop.permute.xlu0 %3044
  %3046 = vrot.lane.b32.xlu0 %v2908, 112
  %v3047 = vpop.permute.xlu0 %3046
  %3048 = vrot.lane.b32.xlu0 %v2909, 112
  %v3049 = vpop.permute.xlu0 %3048
  %3050 = vrot.lane.b32.xlu0 %v2910, 112
  %v3051 = vpop.permute.xlu0 %3050
  %3052 = vrot.lane.b32.xlu0 %v2911, 112
  %v3053 = vpop.permute.xlu0 %3052
  %3054 = vrot.lane.b32.xlu0 %v2912, 112
  %v3055 = vpop.permute.xlu0 %3054
  %3056 = vrot.lane.b32.xlu0 %v2913, 112
  %v3057 = vpop.permute.xlu0 %3056
  %v3082 = vadd.f32 %v2962, %v3011
  %v3083 = vadd.f32 %v2963, %v3013
  %v3084 = vadd.f32 %v2964, %v3015
  %v3085 = vadd.f32 %v2965, %v3017
  %v3086 = vadd.f32 %v2966, %v3019
  %v3087 = vadd.f32 %v2967, %v3021
  %v3088 = vadd.f32 %v2968, %v3023
  %v3089 = vadd.f32 %v2969, %v3025
  %v3090 = vadd.f32 %v2970, %v3027
  %v3091 = vadd.f32 %v2971, %v3029
  %v3092 = vadd.f32 %v2972, %v3031
  %v3093 = vadd.f32 %v2973, %v3033
  %v3094 = vadd.f32 %v2974, %v3035
  %v3095 = vadd.f32 %v2975, %v3037
  %v3096 = vadd.f32 %v2976, %v3039
  %v3097 = vadd.f32 %v2977, %v3041
  %v3098 = vadd.f32 %v2978, %v3043
  %v3099 = vadd.f32 %v2979, %v3045
  %v3100 = vadd.f32 %v2980, %v3047
  %v3101 = vadd.f32 %v2981, %v3049
  %v3102 = vadd.f32 %v2982, %v3051
  %v3103 = vadd.f32 %v2983, %v3053
  %v3104 = vadd.f32 %v2984, %v3055
  %v3105 = vadd.f32 %v2985, %v3057
  %v3106 = vmul.f32 %v2938, %v2938
  %v3107 = vmul.f32 %v2939, %v2939
  %v3108 = vmul.f32 %v2940, %v2940
  %v3109 = vmul.f32 %v2941, %v2941
  %v3110 = vmul.f32 %v2942, %v2942
  %v3111 = vmul.f32 %v2943, %v2943
  %v3112 = vmul.f32 %v2944, %v2944
  %v3113 = vmul.f32 %v2945, %v2945
  %v3114 = vmul.f32 %v2946, %v2946
  %v3115 = vmul.f32 %v2947, %v2947
  %v3116 = vmul.f32 %v2948, %v2948
  %v3117 = vmul.f32 %v2949, %v2949
  %v3118 = vmul.f32 %v2950, %v2950
  %v3119 = vmul.f32 %v2951, %v2951
  %v3120 = vmul.f32 %v2952, %v2952
  %v3121 = vmul.f32 %v2953, %v2953
  %v3122 = vmul.f32 %v2954, %v2954
  %v3123 = vmul.f32 %v2955, %v2955
  %v3124 = vmul.f32 %v2956, %v2956
  %v3125 = vmul.f32 %v2957, %v2957
  %v3126 = vmul.f32 %v2958, %v2958
  %v3127 = vmul.f32 %v2959, %v2959
  %v3128 = vmul.f32 %v2960, %v2960
  %v3129 = vmul.f32 %v2961, %v2961
  %v3130 = vsel %vm723, %v3106, 0.0
  %3131 = vadd.xlane.f32.xlu0 %v3130
  %v3132 = vpop.xlane.xlu0 %3131
  %v3133 = vsel %vm723, %v3107, 0.0
  %3134 = vadd.xlane.f32.xlu0 %v3133
  %v3135 = vpop.xlane.xlu0 %3134
  %v3136 = vsel %vm723, %v3108, 0.0
  %3137 = vadd.xlane.f32.xlu0 %v3136
  %v3138 = vpop.xlane.xlu0 %3137
  %v3139 = vsel %vm723, %v3109, 0.0
  %3140 = vadd.xlane.f32.xlu0 %v3139
  %v3141 = vpop.xlane.xlu0 %3140
  %v3142 = vsel %vm723, %v3110, 0.0
  %3143 = vadd.xlane.f32.xlu0 %v3142
  %v3144 = vpop.xlane.xlu0 %3143
  %v3145 = vsel %vm723, %v3111, 0.0
  %3146 = vadd.xlane.f32.xlu0 %v3145
  %v3147 = vpop.xlane.xlu0 %3146
  %v3148 = vsel %vm723, %v3112, 0.0
  %3149 = vadd.xlane.f32.xlu0 %v3148
  %v3150 = vpop.xlane.xlu0 %3149
  %v3151 = vsel %vm723, %v3113, 0.0
  %3152 = vadd.xlane.f32.xlu0 %v3151
  %v3153 = vpop.xlane.xlu0 %3152
  %v3154 = vsel %vm723, %v3114, 0.0
  %3155 = vadd.xlane.f32.xlu0 %v3154
  %v3156 = vpop.xlane.xlu0 %3155
  %v3157 = vsel %vm723, %v3115, 0.0
  %3158 = vadd.xlane.f32.xlu0 %v3157
  %v3159 = vpop.xlane.xlu0 %3158
  %v3160 = vsel %vm723, %v3116, 0.0
  %3161 = vadd.xlane.f32.xlu0 %v3160
  %v3162 = vpop.xlane.xlu0 %3161
  %v3163 = vsel %vm723, %v3117, 0.0
  %3164 = vadd.xlane.f32.xlu0 %v3163
  %v3165 = vpop.xlane.xlu0 %3164
  %v3166 = vsel %vm723, %v3118, 0.0
  %3167 = vadd.xlane.f32.xlu0 %v3166
  %v3168 = vpop.xlane.xlu0 %3167
  %v3169 = vsel %vm723, %v3119, 0.0
  %3170 = vadd.xlane.f32.xlu0 %v3169
  %v3171 = vpop.xlane.xlu0 %3170
  %v3172 = vsel %vm723, %v3120, 0.0
  %3173 = vadd.xlane.f32.xlu0 %v3172
  %v3174 = vpop.xlane.xlu0 %3173
  %v3175 = vsel %vm723, %v3121, 0.0
  %3176 = vadd.xlane.f32.xlu0 %v3175
  %v3177 = vpop.xlane.xlu0 %3176
  %v3178 = vsel %vm723, %v3122, 0.0
  %3179 = vadd.xlane.f32.xlu0 %v3178
  %v3180 = vpop.xlane.xlu0 %3179
  %v3181 = vsel %vm723, %v3123, 0.0
  %3182 = vadd.xlane.f32.xlu0 %v3181
  %v3183 = vpop.xlane.xlu0 %3182
  %v3184 = vsel %vm723, %v3124, 0.0
  %3185 = vadd.xlane.f32.xlu0 %v3184
  %v3186 = vpop.xlane.xlu0 %3185
  %v3187 = vsel %vm723, %v3125, 0.0
  %3188 = vadd.xlane.f32.xlu0 %v3187
  %v3189 = vpop.xlane.xlu0 %3188
  %v3190 = vsel %vm723, %v3126, 0.0
  %3191 = vadd.xlane.f32.xlu0 %v3190
  %v3192 = vpop.xlane.xlu0 %3191
  %v3193 = vsel %vm723, %v3127, 0.0
  %3194 = vadd.xlane.f32.xlu0 %v3193
  %v3195 = vpop.xlane.xlu0 %3194
  %v3196 = vsel %vm723, %v3128, 0.0
  %3197 = vadd.xlane.f32.xlu0 %v3196
  %v3198 = vpop.xlane.xlu0 %3197
  %v3199 = vsel %vm723, %v3129, 0.0
  %3200 = vadd.xlane.f32.xlu0 %v3199
  %v3201 = vpop.xlane.xlu0 %3200
  %v3202 = vmul.f32 %v3082, %v3082
  %v3203 = vmul.f32 %v3083, %v3083
  %v3204 = vmul.f32 %v3084, %v3084
  %v3205 = vmul.f32 %v3085, %v3085
  %v3206 = vmul.f32 %v3086, %v3086
  %v3207 = vmul.f32 %v3087, %v3087
  %v3208 = vmul.f32 %v3088, %v3088
  %v3209 = vmul.f32 %v3089, %v3089
  %v3210 = vmul.f32 %v3090, %v3090
  %v3211 = vmul.f32 %v3091, %v3091
  %v3212 = vmul.f32 %v3092, %v3092
  %v3213 = vmul.f32 %v3093, %v3093
  %v3214 = vmul.f32 %v3094, %v3094
  %v3215 = vmul.f32 %v3095, %v3095
  %v3216 = vmul.f32 %v3096, %v3096
  %v3217 = vmul.f32 %v3097, %v3097
  %v3218 = vmul.f32 %v3098, %v3098
  %v3219 = vmul.f32 %v3099, %v3099
  %v3220 = vmul.f32 %v3100, %v3100
  %v3221 = vmul.f32 %v3101, %v3101
  %v3222 = vmul.f32 %v3102, %v3102
  %v3223 = vmul.f32 %v3103, %v3103
  %v3224 = vmul.f32 %v3104, %v3104
  %v3225 = vmul.f32 %v3105, %v3105
  %v3226 = vsel %vm723, %v3202, 0.0
  %3227 = vadd.xlane.f32.xlu0 %v3226
  %v3228 = vpop.xlane.xlu0 %3227
  %v3229 = vsel %vm723, %v3203, 0.0
  %3230 = vadd.xlane.f32.xlu0 %v3229
  %v3231 = vpop.xlane.xlu0 %3230
  %v3232 = vsel %vm723, %v3204, 0.0
  %3233 = vadd.xlane.f32.xlu0 %v3232
  %v3234 = vpop.xlane.xlu0 %3233
  %v3235 = vsel %vm723, %v3205, 0.0
  %3236 = vadd.xlane.f32.xlu0 %v3235
  %v3237 = vpop.xlane.xlu0 %3236
  %v3238 = vsel %vm723, %v3206, 0.0
  %3239 = vadd.xlane.f32.xlu0 %v3238
  %v3240 = vpop.xlane.xlu0 %3239
  %v3241 = vsel %vm723, %v3207, 0.0
  %3242 = vadd.xlane.f32.xlu0 %v3241
  %v3243 = vpop.xlane.xlu0 %3242
  %v3244 = vsel %vm723, %v3208, 0.0
  %3245 = vadd.xlane.f32.xlu0 %v3244
  %v3246 = vpop.xlane.xlu0 %3245
  %v3247 = vsel %vm723, %v3209, 0.0
  %3248 = vadd.xlane.f32.xlu0 %v3247
  %v3249 = vpop.xlane.xlu0 %3248
  %v3250 = vsel %vm723, %v3210, 0.0
  %3251 = vadd.xlane.f32.xlu0 %v3250
  %v3252 = vpop.xlane.xlu0 %3251
  %v3253 = vsel %vm723, %v3211, 0.0
  %3254 = vadd.xlane.f32.xlu0 %v3253
  %v3255 = vpop.xlane.xlu0 %3254
  %v3256 = vsel %vm723, %v3212, 0.0
  %3257 = vadd.xlane.f32.xlu0 %v3256
  %v3258 = vpop.xlane.xlu0 %3257
  %v3259 = vsel %vm723, %v3213, 0.0
  %3260 = vadd.xlane.f32.xlu0 %v3259
  %v3261 = vpop.xlane.xlu0 %3260
  %v3262 = vsel %vm723, %v3214, 0.0
  %3263 = vadd.xlane.f32.xlu0 %v3262
  %v3264 = vpop.xlane.xlu0 %3263
  %v3265 = vsel %vm723, %v3215, 0.0
  %3266 = vadd.xlane.f32.xlu0 %v3265
  %v3267 = vpop.xlane.xlu0 %3266
  %v3268 = vsel %vm723, %v3216, 0.0
  %3269 = vadd.xlane.f32.xlu0 %v3268
  %v3270 = vpop.xlane.xlu0 %3269
  %v3271 = vsel %vm723, %v3217, 0.0
  %3272 = vadd.xlane.f32.xlu0 %v3271
  %v3273 = vpop.xlane.xlu0 %3272
  %v3274 = vsel %vm723, %v3218, 0.0
  %3275 = vadd.xlane.f32.xlu0 %v3274
  %v3276 = vpop.xlane.xlu0 %3275
  %v3277 = vsel %vm723, %v3219, 0.0
  %3278 = vadd.xlane.f32.xlu0 %v3277
  %v3279 = vpop.xlane.xlu0 %3278
  %v3280 = vsel %vm723, %v3220, 0.0
  %3281 = vadd.xlane.f32.xlu0 %v3280
  %v3282 = vpop.xlane.xlu0 %3281
  %v3283 = vsel %vm723, %v3221, 0.0
  %3284 = vadd.xlane.f32.xlu0 %v3283
  %v3285 = vpop.xlane.xlu0 %3284
  %v3286 = vsel %vm723, %v3222, 0.0
  %3287 = vadd.xlane.f32.xlu0 %v3286
  %v3288 = vpop.xlane.xlu0 %3287
  %v3289 = vsel %vm723, %v3223, 0.0
  %3290 = vadd.xlane.f32.xlu0 %v3289
  %v3291 = vpop.xlane.xlu0 %3290
  %v3292 = vsel %vm723, %v3224, 0.0
  %3293 = vadd.xlane.f32.xlu0 %v3292
  %v3294 = vpop.xlane.xlu0 %3293
  %v3295 = vsel %vm723, %v3225, 0.0
  %3296 = vadd.xlane.f32.xlu0 %v3295
  %v3297 = vpop.xlane.xlu0 %3296
  %v3298 = vadd.f32 %v3132, %v3228
  %v3299 = vadd.f32 %v3135, %v3231
  %v3300 = vadd.f32 %v3138, %v3234
  %v3301 = vadd.f32 %v3141, %v3237
  %v3302 = vadd.f32 %v3144, %v3240
  %v3303 = vadd.f32 %v3147, %v3243
  %v3304 = vadd.f32 %v3150, %v3246
  %v3305 = vadd.f32 %v3153, %v3249
  %v3306 = vadd.f32 %v3156, %v3252
  %v3307 = vadd.f32 %v3159, %v3255
  %v3308 = vadd.f32 %v3162, %v3258
  %v3309 = vadd.f32 %v3165, %v3261
  %v3310 = vadd.f32 %v3168, %v3264
  %v3311 = vadd.f32 %v3171, %v3267
  %v3312 = vadd.f32 %v3174, %v3270
  %v3313 = vadd.f32 %v3177, %v3273
  %v3314 = vadd.f32 %v3180, %v3276
  %v3315 = vadd.f32 %v3183, %v3279
  %v3316 = vadd.f32 %v3186, %v3282
  %v3317 = vadd.f32 %v3189, %v3285
  %v3318 = vadd.f32 %v3192, %v3288
  %v3319 = vadd.f32 %v3195, %v3291
  %v3320 = vadd.f32 %v3198, %v3294
  %v3321 = vadd.f32 %v3201, %v3297
  %v3322 = vrcp.pop 32.0
  %v3323 = vmul.f32 %v3298, %v3322
  %v3324 = vmul.f32 %v3299, %v3322
  %v3325 = vmul.f32 %v3300, %v3322
  %v3326 = vmul.f32 %v3301, %v3322
  %v3327 = vmul.f32 %v3302, %v3322
  %v3328 = vmul.f32 %v3303, %v3322
  %v3329 = vmul.f32 %v3304, %v3322
  %v3330 = vmul.f32 %v3305, %v3322
  %v3331 = vmul.f32 %v3306, %v3322
  %v3332 = vmul.f32 %v3307, %v3322
  %v3333 = vmul.f32 %v3308, %v3322
  %v3334 = vmul.f32 %v3309, %v3322
  %v3335 = vmul.f32 %v3310, %v3322
  %v3336 = vmul.f32 %v3311, %v3322
  %v3337 = vmul.f32 %v3312, %v3322
  %v3338 = vmul.f32 %v3313, %v3322
  %v3339 = vmul.f32 %v3314, %v3322
  %v3340 = vmul.f32 %v3315, %v3322
  %v3341 = vmul.f32 %v3316, %v3322
  %v3342 = vmul.f32 %v3317, %v3322
  %v3343 = vmul.f32 %v3318, %v3322
  %v3344 = vmul.f32 %v3319, %v3322
  %v3345 = vmul.f32 %v3320, %v3322
  %v3346 = vmul.f32 %v3321, %v3322
  %v3347 = vadd.f32 %v3323, 0.25
  %v3348 = vadd.f32 %v3324, 0.25
  %v3349 = vadd.f32 %v3325, 0.25
  %v3350 = vadd.f32 %v3326, 0.25
  %v3351 = vadd.f32 %v3327, 0.25
  %v3352 = vadd.f32 %v3328, 0.25
  %v3353 = vadd.f32 %v3329, 0.25
  %v3354 = vadd.f32 %v3330, 0.25
  %v3355 = vadd.f32 %v3331, 0.25
  %v3356 = vadd.f32 %v3332, 0.25
  %v3357 = vadd.f32 %v3333, 0.25
  %v3358 = vadd.f32 %v3334, 0.25
  %v3359 = vadd.f32 %v3335, 0.25
  %v3360 = vadd.f32 %v3336, 0.25
  %v3361 = vadd.f32 %v3337, 0.25
  %v3362 = vadd.f32 %v3338, 0.25
  %v3363 = vadd.f32 %v3339, 0.25
  %v3364 = vadd.f32 %v3340, 0.25
  %v3365 = vadd.f32 %v3341, 0.25
  %v3366 = vadd.f32 %v3342, 0.25
  %v3367 = vadd.f32 %v3343, 0.25
  %v3368 = vadd.f32 %v3344, 0.25
  %v3369 = vadd.f32 %v3345, 0.25
  %v3370 = vadd.f32 %v3346, 0.25
  %v3371 = vrsqrt.pop %v3347
  %v3372 = vrsqrt.pop %v3348
  %v3373 = vrsqrt.pop %v3349
  %v3374 = vrsqrt.pop %v3350
  %v3375 = vrsqrt.pop %v3351
  %v3376 = vrsqrt.pop %v3352
  %v3377 = vrsqrt.pop %v3353
  %v3378 = vrsqrt.pop %v3354
  %v3379 = vrsqrt.pop %v3355
  %v3380 = vrsqrt.pop %v3356
  %v3381 = vrsqrt.pop %v3357
  %v3382 = vrsqrt.pop %v3358
  %v3383 = vrsqrt.pop %v3359
  %v3384 = vrsqrt.pop %v3360
  %v3385 = vrsqrt.pop %v3361
  %v3386 = vrsqrt.pop %v3362
  %v3387 = vrsqrt.pop %v3363
  %v3388 = vrsqrt.pop %v3364
  %v3389 = vrsqrt.pop %v3365
  %v3390 = vrsqrt.pop %v3366
  %v3391 = vrsqrt.pop %v3367
  %v3392 = vrsqrt.pop %v3368
  %v3393 = vrsqrt.pop %v3369
  %v3394 = vrsqrt.pop %v3370
  %v3395 = vmul.f32 %v2938, %v3371
  %v3396 = vmul.f32 %v2939, %v3372
  %v3397 = vmul.f32 %v2940, %v3373
  %v3398 = vmul.f32 %v2941, %v3374
  %v3399 = vmul.f32 %v2942, %v3375
  %v3400 = vmul.f32 %v2943, %v3376
  %v3401 = vmul.f32 %v2944, %v3377
  %v3402 = vmul.f32 %v2945, %v3378
  %v3403 = vmul.f32 %v2946, %v3379
  %v3404 = vmul.f32 %v2947, %v3380
  %v3405 = vmul.f32 %v2948, %v3381
  %v3406 = vmul.f32 %v2949, %v3382
  %v3407 = vmul.f32 %v2950, %v3383
  %v3408 = vmul.f32 %v2951, %v3384
  %v3409 = vmul.f32 %v2952, %v3385
  %v3410 = vmul.f32 %v2953, %v3386
  %v3411 = vmul.f32 %v2954, %v3387
  %v3412 = vmul.f32 %v2955, %v3388
  %v3413 = vmul.f32 %v2956, %v3389
  %v3414 = vmul.f32 %v2957, %v3390
  %v3415 = vmul.f32 %v2958, %v3391
  %v3416 = vmul.f32 %v2959, %v3392
  %v3417 = vmul.f32 %v2960, %v3393
  %v3418 = vmul.f32 %v2961, %v3394
  %v3419 = vmul.f32 %v3082, %v3371
  %v3420 = vmul.f32 %v3083, %v3372
  %v3421 = vmul.f32 %v3084, %v3373
  %v3422 = vmul.f32 %v3085, %v3374
  %v3423 = vmul.f32 %v3086, %v3375
  %v3424 = vmul.f32 %v3087, %v3376
  %v3425 = vmul.f32 %v3088, %v3377
  %v3426 = vmul.f32 %v3089, %v3378
  %v3427 = vmul.f32 %v3090, %v3379
  %v3428 = vmul.f32 %v3091, %v3380
  %v3429 = vmul.f32 %v3092, %v3381
  %v3430 = vmul.f32 %v3093, %v3382
  %v3431 = vmul.f32 %v3094, %v3383
  %v3432 = vmul.f32 %v3095, %v3384
  %v3433 = vmul.f32 %v3096, %v3385
  %v3434 = vmul.f32 %v3097, %v3386
  %v3435 = vmul.f32 %v3098, %v3387
  %v3436 = vmul.f32 %v3099, %v3388
  %v3437 = vmul.f32 %v3100, %v3389
  %v3438 = vmul.f32 %v3101, %v3390
  %v3439 = vmul.f32 %v3102, %v3391
  %v3440 = vmul.f32 %v3103, %v3392
  %v3441 = vmul.f32 %v3104, %v3393
  %v3442 = vmul.f32 %v3105, %v3394
  %3467 = vrot.lane.b32.xlu0 %v3419, 16
  %v3468 = vpop.permute.xlu0 %3467
  %3469 = vrot.lane.b32.xlu0 %v3420, 16
  %v3470 = vpop.permute.xlu0 %3469
  %3471 = vrot.lane.b32.xlu0 %v3421, 16
  %v3472 = vpop.permute.xlu0 %3471
  %3473 = vrot.lane.b32.xlu0 %v3422, 16
  %v3474 = vpop.permute.xlu0 %3473
  %3475 = vrot.lane.b32.xlu0 %v3423, 16
  %v3476 = vpop.permute.xlu0 %3475
  %3477 = vrot.lane.b32.xlu0 %v3424, 16
  %v3478 = vpop.permute.xlu0 %3477
  %3479 = vrot.lane.b32.xlu0 %v3425, 16
  %v3480 = vpop.permute.xlu0 %3479
  %3481 = vrot.lane.b32.xlu0 %v3426, 16
  %v3482 = vpop.permute.xlu0 %3481
  %3483 = vrot.lane.b32.xlu0 %v3427, 16
  %v3484 = vpop.permute.xlu0 %3483
  %3485 = vrot.lane.b32.xlu0 %v3428, 16
  %v3486 = vpop.permute.xlu0 %3485
  %3487 = vrot.lane.b32.xlu0 %v3429, 16
  %v3488 = vpop.permute.xlu0 %3487
  %3489 = vrot.lane.b32.xlu0 %v3430, 16
  %v3490 = vpop.permute.xlu0 %3489
  %3491 = vrot.lane.b32.xlu0 %v3431, 16
  %v3492 = vpop.permute.xlu0 %3491
  %3493 = vrot.lane.b32.xlu0 %v3432, 16
  %v3494 = vpop.permute.xlu0 %3493
  %3495 = vrot.lane.b32.xlu0 %v3433, 16
  %v3496 = vpop.permute.xlu0 %3495
  %3497 = vrot.lane.b32.xlu0 %v3434, 16
  %v3498 = vpop.permute.xlu0 %3497
  %3499 = vrot.lane.b32.xlu0 %v3435, 16
  %v3500 = vpop.permute.xlu0 %3499
  %3501 = vrot.lane.b32.xlu0 %v3436, 16
  %v3502 = vpop.permute.xlu0 %3501
  %3503 = vrot.lane.b32.xlu0 %v3437, 16
  %v3504 = vpop.permute.xlu0 %3503
  %3505 = vrot.lane.b32.xlu0 %v3438, 16
  %v3506 = vpop.permute.xlu0 %3505
  %3507 = vrot.lane.b32.xlu0 %v3439, 16
  %v3508 = vpop.permute.xlu0 %3507
  %3509 = vrot.lane.b32.xlu0 %v3440, 16
  %v3510 = vpop.permute.xlu0 %3509
  %3511 = vrot.lane.b32.xlu0 %v3441, 16
  %v3512 = vpop.permute.xlu0 %3511
  %3513 = vrot.lane.b32.xlu0 %v3442, 16
  %v3514 = vpop.permute.xlu0 %3513
  %v3539 = vsel %vm723, %v3395, %v3468
  %v3540 = vsel %vm723, %v3396, %v3470
  %v3541 = vsel %vm723, %v3397, %v3472
  %v3542 = vsel %vm723, %v3398, %v3474
  %v3543 = vsel %vm723, %v3399, %v3476
  %v3544 = vsel %vm723, %v3400, %v3478
  %v3545 = vsel %vm723, %v3401, %v3480
  %v3546 = vsel %vm723, %v3402, %v3482
  %v3547 = vsel %vm723, %v3403, %v3484
  %v3548 = vsel %vm723, %v3404, %v3486
  %v3549 = vsel %vm723, %v3405, %v3488
  %v3550 = vsel %vm723, %v3406, %v3490
  %v3551 = vsel %vm723, %v3407, %v3492
  %v3552 = vsel %vm723, %v3408, %v3494
  %v3553 = vsel %vm723, %v3409, %v3496
  %v3554 = vsel %vm723, %v3410, %v3498
  %v3555 = vsel %vm723, %v3411, %v3500
  %v3556 = vsel %vm723, %v3412, %v3502
  %v3557 = vsel %vm723, %v3413, %v3504
  %v3558 = vsel %vm723, %v3414, %v3506
  %v3559 = vsel %vm723, %v3415, %v3508
  %v3560 = vsel %vm723, %v3416, %v3510
  %v3561 = vsel %vm723, %v3417, %v3512
  %v3562 = vsel %vm723, %v3418, %v3514
  %3563 = vst.msk [vmem:[%s4] sm:$0xff] %vm52, %v3539
  %3564 = vst.msk [vmem:[%s4 + $0x8] sm:$0xff] %vm52, %v3540
  %3565 = vst.msk [vmem:[%s4 + $0x10] sm:$0xff] %vm52, %v3541
  %3566 = vst.msk [vmem:[%s4 + $0x18] sm:$0xff] %vm52, %v3542
  %3567 = vst.msk [vmem:[%s4 + $0x20] sm:$0xff] %vm52, %v3543
  %3568 = vst.msk [vmem:[%s4 + $0x28] sm:$0xff] %vm52, %v3544
  %3569 = vst.msk [vmem:[%s4 + $0x30] sm:$0xff] %vm52, %v3545
  %3570 = vst.msk [vmem:[%s4 + $0x38] sm:$0xff] %vm52, %v3546
  %3571 = vst.msk [vmem:[%s4 + $0x40] sm:$0xff] %vm52, %v3547
  %3572 = vst.msk [vmem:[%s4 + $0x48] sm:$0xff] %vm52, %v3548
  %3573 = vst.msk [vmem:[%s4 + $0x50] sm:$0xff] %vm52, %v3549
  %3574 = vst.msk [vmem:[%s4 + $0x58] sm:$0xff] %vm52, %v3550
  %3575 = vst.msk [vmem:[%s4 + $0x60] sm:$0xff] %vm52, %v3551
  %3576 = vst.msk [vmem:[%s4 + $0x68] sm:$0xff] %vm52, %v3552
  %3577 = vst.msk [vmem:[%s4 + $0x70] sm:$0xff] %vm52, %v3553
  %3578 = vst.msk [vmem:[%s4 + $0x78] sm:$0xff] %vm52, %v3554
  %3579 = vst.msk [vmem:[%s4 + $0x80] sm:$0xff] %vm52, %v3555
  %3580 = vst.msk [vmem:[%s4 + $0x88] sm:$0xff] %vm52, %v3556
  %3581 = vst.msk [vmem:[%s4 + $0x90] sm:$0xff] %vm52, %v3557
  %3582 = vst.msk [vmem:[%s4 + $0x98] sm:$0xff] %vm52, %v3558
  %3583 = vst.msk [vmem:[%s4 + $0xa0] sm:$0xff] %vm52, %v3559
  %3584 = vst.msk [vmem:[%s4 + $0xa8] sm:$0xff] %vm52, %v3560
  %3585 = vst.msk [vmem:[%s4 + $0xb0] sm:$0xff] %vm52, %v3561
  %3586 = vst.msk [vmem:[%s4 + $0xb8] sm:$0xff] %vm52, %v3562
  // Predicated region
  $region18: #{dprnn_forward.5} parent=0 // pred_check
    _
  $region19: #{dprnn_forward.5} parent=0 // pred_check_branch
    %3588 = sbr.rel (0) target = $region21
  $region20: #{dprnn_forward.5} parent=0 // pred_region
    _
  $region21: #{dprnn_forward.5} parent=0 // pred_fallthru
    _
  // Predicated region
  $region22: #{dprnn_forward.5} parent=0 // pred_check
    _
  $region23: #{dprnn_forward.5} parent=0 // pred_check_branch
    %3590 = sbr.rel (0) target = $region25
  $region24: #{dprnn_forward.5} parent=0 // pred_region
    _
  $region25: #{dprnn_forward.5} parent=0 // pred_fallthru
    _

</llo_original>
